<compile_context>
chip_gen: v6e
topology: v6e:2x2x1
jax: 0.10.0
libtpu: 0.0.40
codegen_flags: <defaults>
</compile_context>

<pallas_src>
import functools

import jax
import jax.numpy as jnp
from jax import lax
from jax.experimental import pallas as pl
from jax.experimental.pallas import tpu as pltpu

NEG_SLOPE = 0.01  # nn.LeakyReLU default negative_slope


def _leaky_relu(x):
    return jnp.where(x > 0, x, NEG_SLOPE * x)


def _down_block_kernel(xpad_ref, w1c_ref, w2_ref, o_ref,
                       pad2_ref, slab1_ref, slab2_ref, vpa_ref, vpb_ref,
                       *, pool_max):
    # xpad_ref : (1, H+2, W+2, Cin) f32   zero-padded input, one batch element
    # w1c_ref  : (9*Cin, res_off+Cout) bf16  conv1 im2col weights with the 1x1
    #            residual fused in as columns [res_off:] (center-tap rows only)
    # w2_ref   : (9*Cout, Cout) bf16     conv2 im2col weights
    # o_ref    : (1, Ho, Wo*Cout) f32    lane-dense output block
    # pad2_ref : VMEM (H+2, W+2, Cout) f32   padded intermediate activation
    # slab1/2  : VMEM bf16 im2col slabs, (H*W, 9*Cin) / (H*W, 9*Cout)
    # vpa/vpb  : VMEM (Ho, W, Cout) f32  row-pooled partials
    _, Hp, Wp, Cin = xpad_ref.shape
    H, W = Hp - 2, Wp - 2
    Cout = w2_ref.shape[1]
    Ho, Wo = H // 2, W // 2
    nf = w1c_ref.shape[1]
    res_off = nf - Cout               # 128-aligned start of residual columns

    # ---- conv1 (3x3, pad 1) + 1x1 residual: ONE fused matmul, K = 9*Cin.
    # im2col slab built tap-by-tap, cast to bf16 at each strip write.
    for k in range(9):
        kh, kw = divmod(k, 3)
        slab1_ref[:, k * Cin:(k + 1) * Cin] = (
            xpad_ref[0, kh:kh + H, kw:kw + W, :]
            .reshape(H * W, Cin).astype(jnp.bfloat16))
    y = jnp.dot(slab1_ref[...], w1c_ref[...],
                preferred_element_type=jnp.float32)        # (H*W, nf)
    y1 = y[:, :Cout]                                       # conv1 branch
    res = y[:, res_off:]                                   # 1x1 residual branch

    # ---- LeakyReLU, place activation in a padded scratch.  Only the 1-wide
    # halo is zeroed; done every step so the kernel stays correct when the
    # batch axis is sharded across TensorCores (scratch is per-core).
    b = _leaky_relu(y1).reshape(H, W, Cout)
    pad2_ref[0:1, :, :] = jnp.zeros((1, Wp, Cout), jnp.float32)
    pad2_ref[H + 1:H + 2, :, :] = jnp.zeros((1, Wp, Cout), jnp.float32)
    pad2_ref[:, 0:1, :] = jnp.zeros((Hp, 1, Cout), jnp.float32)
    pad2_ref[:, W + 1:W + 2, :] = jnp.zeros((Hp, 1, Cout), jnp.float32)
    pad2_ref[1:H + 1, 1:W + 1, :] = b

    # ---- conv2 (3x3, pad 1): bf16 im2col slab, one matmul, LeakyReLU.
    for k in range(9):
        kh, kw = divmod(k, 3)
        slab2_ref[:, k * Cout:(k + 1) * Cout] = (
            pad2_ref[kh:kh + H, kw:kw + W, :]
            .reshape(H * W, Cout).astype(jnp.bfloat16))
    y2 = _leaky_relu(jnp.dot(slab2_ref[...], w2_ref[...],
                             preferred_element_type=jnp.float32))   # (H*W, Cout)

    # ---- 2x2 pooling on the VPU (no dense pooling matrix).
    # Row pairs via an aligned reshape reduction; column pairs via static
    # scratch reads, packed into the lane-dense output block (last dim Wo*Cout
    # is a multiple of 128 -> dense, unmasked writeback DMA).
    def row_pool(v, use_max):                 # (H*W, C) -> (Ho, W, C)
        v = v.reshape(Ho, 2, W, Cout)
        return jnp.maximum(v[:, 0], v[:, 1]) if use_max else v[:, 0] + v[:, 1]

    if pool_max:     # Content: MaxPool2d -> pool each branch, then add.
        vpa_ref[...] = row_pool(y2, True)
        vpb_ref[...] = row_pool(res, True)
        for j in range(Wo):
            col = (jnp.maximum(vpa_ref[:, 2 * j, :], vpa_ref[:, 2 * j + 1, :]) +
                   jnp.maximum(vpb_ref[:, 2 * j, :], vpb_ref[:, 2 * j + 1, :]))
            o_ref[0, :, j * Cout:(j + 1) * Cout] = col.astype(o_ref.dtype)
    else:            # Style: AvgPool2d is linear -> pool the sum once.
        vpa_ref[...] = row_pool(y2 + res, False)
        for j in range(Wo):
            col = (vpa_ref[:, 2 * j, :] + vpa_ref[:, 2 * j + 1, :]) * 0.25
            o_ref[0, :, j * Cout:(j + 1) * Cout] = col.astype(o_ref.dtype)


def down_block(x_nchw, w_conv1, w_conv2, w_conv3, *, pool, vmem_limit_bytes=None):
    """One `Content` (pool='max') or `Style` (pool='avg') block of `Generator`.

    x_nchw:(B,Cin,H,W)  w_conv1:(Cout,Cin,3,3)  w_conv2:(Cout,Cout,3,3)
    w_conv3:(Cout,Cin,1,1).  Returns (B, Cout, H//2, W//2) ==
    pool(lrelu(conv2(lrelu(conv1(x))))) + pool(conv3(x)).
    """
    assert pool in ("max", "avg")
    B, Cin, H, W = x_nchw.shape
    assert H % 2 == 0 and W % 2 == 0, "2x2 pooling requires even H and W"
    Cout = w_conv1.shape[0]
    Ho, Wo = H // 2, W // 2

    # NHWC + one-time zero pad (conv halo) in the wrapper; kernel reads windows.
    x_nhwc = jnp.transpose(x_nchw, (0, 2, 3, 1)).astype(jnp.float32)
    x_pad = jnp.pad(x_nhwc, ((0, 0), (1, 1), (1, 1), (0, 0)))

    # Weight glue: conv1 in im2col (tap-major, channel-minor) order with the
    # 1x1 residual fused in as extra output columns starting at a 128-lane
    # boundary (only the center-tap rows are non-zero), all bf16 for the MXU.
    res_off = ((Cout + 127) // 128) * 128
    nf = res_off + Cout
    w1 = jnp.transpose(w_conv1, (2, 3, 1, 0)).reshape(9 * Cin, Cout)
    wl = jnp.transpose(w_conv3[:, :, 0, 0], (1, 0))                 # (Cin, Cout)
    w1c = jnp.zeros((9 * Cin, nf), jnp.float32)
    w1c = w1c.at[:, :Cout].set(w1)
    w1c = w1c.at[4 * Cin:5 * Cin, res_off:].set(wl)                 # center tap
    w1c = w1c.astype(jnp.bfloat16)
    w2 = jnp.transpose(w_conv2, (2, 3, 1, 0)).reshape(9 * Cout, Cout)
    w2 = w2.astype(jnp.bfloat16)

    # Raise the scoped-VMEM limit on v5e/v6e for real Generator resolutions;
    # on v7x (64 MiB physical) use spatial row-strip tiling instead (TODO).
    cp_kwargs = dict(dimension_semantics=("parallel",))
    if vmem_limit_bytes is not None:
        cp_kwargs["vmem_limit_bytes"] = vmem_limit_bytes

    kernel = functools.partial(_down_block_kernel, pool_max=(pool == "max"))
    out = pl.pallas_call(
        kernel,
        out_shape=jax.ShapeDtypeStruct((B, Ho, Wo * Cout), jnp.float32),
        grid_spec=pltpu.PrefetchScalarGridSpec(
            num_scalar_prefetch=0,
            grid=(B,),
            in_specs=[
                pl.BlockSpec((1, H + 2, W + 2, Cin), lambda b: (b, 0, 0, 0)),
                pl.BlockSpec((9 * Cin, nf), lambda b: (0, 0)),
                pl.BlockSpec((9 * Cout, Cout), lambda b: (0, 0)),
            ],
            out_specs=pl.BlockSpec((1, Ho, Wo * Cout), lambda b: (b, 0, 0)),
            scratch_shapes=[
                pltpu.VMEM((H + 2, W + 2, Cout), jnp.float32),   # padded act
                pltpu.VMEM((H * W, 9 * Cin), jnp.bfloat16),      # im2col slab 1
                pltpu.VMEM((H * W, 9 * Cout), jnp.bfloat16),     # im2col slab 2
                pltpu.VMEM((Ho, W, Cout), jnp.float32),          # row-pooled a
                pltpu.VMEM((Ho, W, Cout), jnp.float32),          # row-pooled b
            ],
        ),
        compiler_params=pltpu.CompilerParams(**cp_kwargs),
    )(x_pad, w1c, w2)

    out = out.reshape(B, Ho, Wo, Cout)
    return jnp.transpose(out, (0, 3, 1, 2))   # back to NCHW


def spectral_normalize(w_oihw, key, n_iter=1, eps=1e-12):
    """Deterministic stand-in for nn.utils.spectral_norm (one power iteration)."""
    o = w_oihw.shape[0]
    w_mat = w_oihw.reshape(o, -1)
    u = jax.random.normal(key, (o,), jnp.float32)
    u = u / (jnp.linalg.norm(u) + eps)
    v = None
    for _ in range(n_iter):
        v = w_mat.T @ u
        v = v / (jnp.linalg.norm(v) + eps)
        u = w_mat @ v
        u = u / (jnp.linalg.norm(u) + eps)
    sigma = u @ (w_mat @ v)
    return w_oihw / sigma


def _round_bf16(a):
    return a.astype(jnp.bfloat16).astype(jnp.float32)


def reference_block(x_nchw, w_conv1, w_conv2, w_conv3, *, pool):
    """Pure-JAX reference (NCHW).  Conv operands rounded to bf16 to mirror the
    kernel's bf16-in / f32-accumulate MXU precision."""
    def conv(v, w, p):
        return lax.conv_general_dilated(
            _round_bf16(v), _round_bf16(w), (1, 1), ((p, p), (p, p)),
            dimension_numbers=("NCHW", "OIHW", "NCHW"),
            precision=lax.Precision.HIGHEST)

    def pool2(v):
        if pool == "max":
            return lax.reduce_window(v, -jnp.inf, lax.max,
                                     (1, 1, 2, 2), (1, 1, 2, 2), "VALID")
        return lax.reduce_window(v, 0.0, lax.add,
                                 (1, 1, 2, 2), (1, 1, 2, 2), "VALID") * 0.25

    res = conv(x_nchw, w_conv3, 0)
    out = _leaky_relu(conv(x_nchw, w_conv1, 1))
    out = _leaky_relu(conv(out, w_conv2, 1))
    return pool2(out) + pool2(res)


if __name__ == "__main__":
    key = jax.random.PRNGKey(0)
    k_land, k_style, kc1, kc2, ks1, ks2 = jax.random.split(key, 6)

    B, H, W = 2, 16, 16
    landmark = jax.random.normal(k_land, (B, 3, H, W), jnp.float32)
    style = jax.random.normal(k_style, (B, 3, H, W), jnp.float32)

    def make_block_weights(cin, cout, wkey):
        k1, k2, k3, u1, u2, u3 = jax.random.split(wkey, 6)
        w1 = jax.random.normal(k1, (cout, cin, 3, 3), jnp.float32) * 0.2
        w2 = jax.random.normal(k2, (cout, cout, 3, 3), jnp.float32) * 0.2
        w3 = jax.random.normal(k3, (cout, cin, 1, 1), jnp.float32) * 0.5
        return (spectral_normalize(w1, u1), spectral_normalize(w2, u2),
                spectral_normalize(w3, u3))

    # First two stages of each Generator encoder branch at a small spatial size:
    #   content128 = Content(3, 16) -> content64 = Content(16, 32)
    #   style128   = Style(3, 16)   -> style64   = Style(16, 32)
    c128_w = make_block_weights(3, 16, kc1)
    c64_w = make_block_weights(16, 32, kc2)
    s128_w = make_block_weights(3, 16, ks1)
    s64_w = make_block_weights(16, 32, ks2)

    content1 = down_block(landmark, *c128_w, pool="max")
    content2 = down_block(content1, *c64_w, pool="max")
    style1 = down_block(style, *s128_w, pool="avg")
    style2 = down_block(style1, *s64_w, pool="avg")
    content1, content2, style1, style2 = jax.block_until_ready(
        (content1, content2, style1, style2))

    checks = [
        ("content128", content1,
         reference_block(landmark, *c128_w, pool="max"), (B, 16, 8, 8)),
        ("content64", content2,
         reference_block(content1, *c64_w, pool="max"), (B, 32, 4, 4)),
        ("style128", style1,
         reference_block(style, *s128_w, pool="avg"), (B, 16, 8, 8)),
        ("style64", style2,
         reference_block(style1, *s64_w, pool="avg"), (B, 32, 4, 4)),
    ]
    for name, got, want, shape in checks:
        assert got.shape == shape, (name, got.shape, shape)
        if not jnp.allclose(got, want, atol=1e-2, rtol=1e-2):
            raise AssertionError(
                f"{name} mismatch: max abs diff = "
                f"{float(jnp.max(jnp.abs(got - want)))}")
    print("KERNEL_OK")
</pallas_src>

<mosaic_0001>
module attributes {stable_mosaic.version = 11 : i64} {
  func.func @_down_block_kernel(%arg0: i32, %arg1: memref<1x18x18x3xf32, #tpu.memory_space<vmem>>, %arg2: memref<27x144xbf16, #tpu.memory_space<vmem>>, %arg3: memref<144x16xbf16, #tpu.memory_space<vmem>>, %arg4: memref<1x8x128xf32, #tpu.memory_space<vmem>>, %arg5: memref<18x18x16xf32, #tpu.memory_space<vmem>>, %arg6: memref<256x27xbf16, #tpu.memory_space<vmem>>, %arg7: memref<256x144xbf16, #tpu.memory_space<vmem>>, %arg8: memref<8x16x16xf32, #tpu.memory_space<vmem>>, %arg9: memref<8x16x16xf32, #tpu.memory_space<vmem>>) attributes {dimension_semantics = [#tpu.dimension_semantics<parallel>], iteration_bounds = array<i64: 2>, scalar_prefetch = 0 : i64, scratch_operands = 5 : i64, tpu.core_type = #tpu.core_type<tc>, window_params = [{transform_indices = @transform_0, window_bounds = array<i64: 1, 18, 18, 3>}, {pipeline_mode = #tpu.pipeline_mode<synchronous>, transform_indices = @transform_1, window_bounds = array<i64: 27, 144>}, {pipeline_mode = #tpu.pipeline_mode<synchronous>, transform_indices = @transform_2, window_bounds = array<i64: 144, 16>}, {transform_indices = @transform_3, window_bounds = array<i64: 1, 8, 128>}]} {
    %c0 = arith.constant 0 : index
    %c0_0 = arith.constant 0 : index
    %c0_1 = arith.constant 0 : index
    %c0_2 = arith.constant 0 : index
    %0 = vector.load %arg1[%c0, %c0_0, %c0_1, %c0_2] : memref<1x18x18x3xf32, #tpu.memory_space<vmem>>, vector<1x16x16x3xf32>
    %1 = vector.shape_cast %0 : vector<1x16x16x3xf32> to vector<16x16x3xf32>
    %2 = vector.shape_cast %1 : vector<16x16x3xf32> to vector<256x3xf32>
    %3 = arith.truncf %2 : vector<256x3xf32> to vector<256x3xbf16>
    %c0_3 = arith.constant 0 : index
    %c0_4 = arith.constant 0 : index
    %4 = vector.load %arg6[%c0_3, %c0_4] : memref<256x27xbf16, #tpu.memory_space<vmem>>, vector<256x3xbf16>
    tpu.vector_store %arg6[%c0_3, %c0_4], %3 {strides = array<i32>} : memref<256x27xbf16, #tpu.memory_space<vmem>>, vector<256x3xbf16>,
    %c0_5 = arith.constant 0 : index
    %c0_6 = arith.constant 0 : index
    %c1 = arith.constant 1 : index
    %c0_7 = arith.constant 0 : index
    %5 = vector.load %arg1[%c0_5, %c0_6, %c1, %c0_7] : memref<1x18x18x3xf32, #tpu.memory_space<vmem>>, vector<1x16x16x3xf32>
    %6 = vector.shape_cast %5 : vector<1x16x16x3xf32> to vector<16x16x3xf32>
    %7 = vector.shape_cast %6 : vector<16x16x3xf32> to vector<256x3xf32>
    %8 = arith.truncf %7 : vector<256x3xf32> to vector<256x3xbf16>
    %c0_8 = arith.constant 0 : index
    %c3 = arith.constant 3 : index
    %9 = vector.load %arg6[%c0_8, %c3] : memref<256x27xbf16, #tpu.memory_space<vmem>>, vector<256x3xbf16>
    tpu.vector_store %arg6[%c0_8, %c3], %8 {strides = array<i32>} : memref<256x27xbf16, #tpu.memory_space<vmem>>, vector<256x3xbf16>,
    %c0_9 = arith.constant 0 : index
    %c0_10 = arith.constant 0 : index
    %c2 = arith.constant 2 : index
    %c0_11 = arith.constant 0 : index
    %10 = vector.load %arg1[%c0_9, %c0_10, %c2, %c0_11] : memref<1x18x18x3xf32, #tpu.memory_space<vmem>>, vector<1x16x16x3xf32>
    %11 = vector.shape_cast %10 : vector<1x16x16x3xf32> to vector<16x16x3xf32>
    %12 = vector.shape_cast %11 : vector<16x16x3xf32> to vector<256x3xf32>
    %13 = arith.truncf %12 : vector<256x3xf32> to vector<256x3xbf16>
    %c0_12 = arith.constant 0 : index
    %c6 = arith.constant 6 : index
    %14 = vector.load %arg6[%c0_12, %c6] : memref<256x27xbf16, #tpu.memory_space<vmem>>, vector<256x3xbf16>
    tpu.vector_store %arg6[%c0_12, %c6], %13 {strides = array<i32>} : memref<256x27xbf16, #tpu.memory_space<vmem>>, vector<256x3xbf16>,
    %c0_13 = arith.constant 0 : index
    %c1_14 = arith.constant 1 : index
    %c0_15 = arith.constant 0 : index
    %c0_16 = arith.constant 0 : index
    %15 = vector.load %arg1[%c0_13, %c1_14, %c0_15, %c0_16] : memref<1x18x18x3xf32, #tpu.memory_space<vmem>>, vector<1x16x16x3xf32>
    %16 = vector.shape_cast %15 : vector<1x16x16x3xf32> to vector<16x16x3xf32>
    %17 = vector.shape_cast %16 : vector<16x16x3xf32> to vector<256x3xf32>
    %18 = arith.truncf %17 : vector<256x3xf32> to vector<256x3xbf16>
    %c0_17 = arith.constant 0 : index
    %c9 = arith.constant 9 : index
    %19 = vector.load %arg6[%c0_17, %c9] : memref<256x27xbf16, #tpu.memory_space<vmem>>, vector<256x3xbf16>
    tpu.vector_store %arg6[%c0_17, %c9], %18 {strides = array<i32>} : memref<256x27xbf16, #tpu.memory_space<vmem>>, vector<256x3xbf16>,
    %c0_18 = arith.constant 0 : index
    %c1_19 = arith.constant 1 : index
    %c1_20 = arith.constant 1 : index
    %c0_21 = arith.constant 0 : index
    %20 = vector.load %arg1[%c0_18, %c1_19, %c1_20, %c0_21] : memref<1x18x18x3xf32, #tpu.memory_space<vmem>>, vector<1x16x16x3xf32>
    %21 = vector.shape_cast %20 : vector<1x16x16x3xf32> to vector<16x16x3xf32>
    %22 = vector.shape_cast %21 : vector<16x16x3xf32> to vector<256x3xf32>
    %23 = arith.truncf %22 : vector<256x3xf32> to vector<256x3xbf16>
    %c0_22 = arith.constant 0 : index
    %c12 = arith.constant 12 : index
    %24 = vector.load %arg6[%c0_22, %c12] : memref<256x27xbf16, #tpu.memory_space<vmem>>, vector<256x3xbf16>
    tpu.vector_store %arg6[%c0_22, %c12], %23 {strides = array<i32>} : memref<256x27xbf16, #tpu.memory_space<vmem>>, vector<256x3xbf16>,
    %c0_23 = arith.constant 0 : index
    %c1_24 = arith.constant 1 : index
    %c2_25 = arith.constant 2 : index
    %c0_26 = arith.constant 0 : index
    %25 = vector.load %arg1[%c0_23, %c1_24, %c2_25, %c0_26] : memref<1x18x18x3xf32, #tpu.memory_space<vmem>>, vector<1x16x16x3xf32>
    %26 = vector.shape_cast %25 : vector<1x16x16x3xf32> to vector<16x16x3xf32>
    %27 = vector.shape_cast %26 : vector<16x16x3xf32> to vector<256x3xf32>
    %28 = arith.truncf %27 : vector<256x3xf32> to vector<256x3xbf16>
    %c0_27 = arith.constant 0 : index
    %c15 = arith.constant 15 : index
    %29 = vector.load %arg6[%c0_27, %c15] : memref<256x27xbf16, #tpu.memory_space<vmem>>, vector<256x3xbf16>
    tpu.vector_store %arg6[%c0_27, %c15], %28 {strides = array<i32>} : memref<256x27xbf16, #tpu.memory_space<vmem>>, vector<256x3xbf16>,
    %c0_28 = arith.constant 0 : index
    %c2_29 = arith.constant 2 : index
    %c0_30 = arith.constant 0 : index
    %c0_31 = arith.constant 0 : index
    %30 = vector.load %arg1[%c0_28, %c2_29, %c0_30, %c0_31] : memref<1x18x18x3xf32, #tpu.memory_space<vmem>>, vector<1x16x16x3xf32>
    %31 = vector.shape_cast %30 : vector<1x16x16x3xf32> to vector<16x16x3xf32>
    %32 = vector.shape_cast %31 : vector<16x16x3xf32> to vector<256x3xf32>
    %33 = arith.truncf %32 : vector<256x3xf32> to vector<256x3xbf16>
    %c0_32 = arith.constant 0 : index
    %c18 = arith.constant 18 : index
    %34 = vector.load %arg6[%c0_32, %c18] : memref<256x27xbf16, #tpu.memory_space<vmem>>, vector<256x3xbf16>
    tpu.vector_store %arg6[%c0_32, %c18], %33 {strides = array<i32>} : memref<256x27xbf16, #tpu.memory_space<vmem>>, vector<256x3xbf16>,
    %c0_33 = arith.constant 0 : index
    %c2_34 = arith.constant 2 : index
    %c1_35 = arith.constant 1 : index
    %c0_36 = arith.constant 0 : index
    %35 = vector.load %arg1[%c0_33, %c2_34, %c1_35, %c0_36] : memref<1x18x18x3xf32, #tpu.memory_space<vmem>>, vector<1x16x16x3xf32>
    %36 = vector.shape_cast %35 : vector<1x16x16x3xf32> to vector<16x16x3xf32>
    %37 = vector.shape_cast %36 : vector<16x16x3xf32> to vector<256x3xf32>
    %38 = arith.truncf %37 : vector<256x3xf32> to vector<256x3xbf16>
    %c0_37 = arith.constant 0 : index
    %c21 = arith.constant 21 : index
    %39 = vector.load %arg6[%c0_37, %c21] : memref<256x27xbf16, #tpu.memory_space<vmem>>, vector<256x3xbf16>
    tpu.vector_store %arg6[%c0_37, %c21], %38 {strides = array<i32>} : memref<256x27xbf16, #tpu.memory_space<vmem>>, vector<256x3xbf16>,
    %c0_38 = arith.constant 0 : index
    %c2_39 = arith.constant 2 : index
    %c2_40 = arith.constant 2 : index
    %c0_41 = arith.constant 0 : index
    %40 = vector.load %arg1[%c0_38, %c2_39, %c2_40, %c0_41] : memref<1x18x18x3xf32, #tpu.memory_space<vmem>>, vector<1x16x16x3xf32>
    %41 = vector.shape_cast %40 : vector<1x16x16x3xf32> to vector<16x16x3xf32>
    %42 = vector.shape_cast %41 : vector<16x16x3xf32> to vector<256x3xf32>
    %43 = arith.truncf %42 : vector<256x3xf32> to vector<256x3xbf16>
    %c0_42 = arith.constant 0 : index
    %c24 = arith.constant 24 : index
    %44 = vector.load %arg6[%c0_42, %c24] : memref<256x27xbf16, #tpu.memory_space<vmem>>, vector<256x3xbf16>
    tpu.vector_store %arg6[%c0_42, %c24], %43 {strides = array<i32>} : memref<256x27xbf16, #tpu.memory_space<vmem>>, vector<256x3xbf16>,
    %c0_43 = arith.constant 0 : index
    %c0_44 = arith.constant 0 : index
    %45 = vector.load %arg6[%c0_43, %c0_44] : memref<256x27xbf16, #tpu.memory_space<vmem>>, vector<256x27xbf16>
    %c0_45 = arith.constant 0 : index
    %c0_46 = arith.constant 0 : index
    %46 = vector.load %arg2[%c0_45, %c0_46] : memref<27x144xbf16, #tpu.memory_space<vmem>>, vector<27x144xbf16>
    %cst = arith.constant dense<0.000000e+00> : vector<256x144xf32>
    %47 = tpu.matmul %45, %46, %cst {dimension_numbers = #tpu.dot_dimension_numbers<[1], [0], [0], [1], [0, 0, 1, 1], [], []>} : vector<256x27xbf16>, vector<27x144xbf16>, vector<256x144xf32> -> vector<256x144xf32>
    %48 = vector.extract_strided_slice %47 {offsets = [0, 0], sizes = [256, 16], strides = [1, 1]} : vector<256x144xf32> to vector<256x16xf32>
    %49 = vector.extract_strided_slice %47 {offsets = [0, 128], sizes = [256, 16], strides = [1, 1]} : vector<256x144xf32> to vector<256x16xf32>
    %cst_47 = arith.constant 0.000000e+00 : f32
    %50 = vector.broadcast %cst_47 : f32 to vector<256x16xf32>
    %51 = arith.cmpf ogt, %48, %50 : vector<256x16xf32>
    %cst_48 = arith.constant 0.00999999977 : f32
    %52 = vector.broadcast %cst_48 : f32 to vector<256x16xf32>
    %53 = arith.mulf %52, %48 : vector<256x16xf32>
    %54 = arith.select %51, %48, %53 : vector<256x16xi1>, vector<256x16xf32>
    %55 = vector.shape_cast %54 : vector<256x16xf32> to vector<16x16x16xf32>
    %cst_49 = arith.constant 0.000000e+00 : f32
    %56 = vector.broadcast %cst_49 : f32 to vector<1x18x16xf32>
    %c0_50 = arith.constant 0 : index
    %c0_51 = arith.constant 0 : index
    %c0_52 = arith.constant 0 : index
    %57 = vector.load %arg5[%c0_50, %c0_51, %c0_52] : memref<18x18x16xf32, #tpu.memory_space<vmem>>, vector<1x18x16xf32>
    tpu.vector_store %arg5[%c0_50, %c0_51, %c0_52], %56 {strides = array<i32>} : memref<18x18x16xf32, #tpu.memory_space<vmem>>, vector<1x18x16xf32>,
    %cst_53 = arith.constant 0.000000e+00 : f32
    %58 = vector.broadcast %cst_53 : f32 to vector<1x18x16xf32>
    %c17 = arith.constant 17 : index
    %c0_54 = arith.constant 0 : index
    %c0_55 = arith.constant 0 : index
    %59 = vector.load %arg5[%c17, %c0_54, %c0_55] : memref<18x18x16xf32, #tpu.memory_space<vmem>>, vector<1x18x16xf32>
    tpu.vector_store %arg5[%c17, %c0_54, %c0_55], %58 {strides = array<i32>} : memref<18x18x16xf32, #tpu.memory_space<vmem>>, vector<1x18x16xf32>,
    %cst_56 = arith.constant 0.000000e+00 : f32
    %60 = vector.broadcast %cst_56 : f32 to vector<18x1x16xf32>
    %c0_57 = arith.constant 0 : index
    %c0_58 = arith.constant 0 : index
    %c0_59 = arith.constant 0 : index
    %61 = vector.load %arg5[%c0_57, %c0_58, %c0_59] : memref<18x18x16xf32, #tpu.memory_space<vmem>>, vector<18x1x16xf32>
    tpu.vector_store %arg5[%c0_57, %c0_58, %c0_59], %60 {strides = array<i32>} : memref<18x18x16xf32, #tpu.memory_space<vmem>>, vector<18x1x16xf32>,
    %cst_60 = arith.constant 0.000000e+00 : f32
    %62 = vector.broadcast %cst_60 : f32 to vector<18x1x16xf32>
    %c0_61 = arith.constant 0 : index
    %c17_62 = arith.constant 17 : index
    %c0_63 = arith.constant 0 : index
    %63 = vector.load %arg5[%c0_61, %c17_62, %c0_63] : memref<18x18x16xf32, #tpu.memory_space<vmem>>, vector<18x1x16xf32>
    tpu.vector_store %arg5[%c0_61, %c17_62, %c0_63], %62 {strides = array<i32>} : memref<18x18x16xf32, #tpu.memory_space<vmem>>, vector<18x1x16xf32>,
    %c1_64 = arith.constant 1 : index
    %c1_65 = arith.constant 1 : index
    %c0_66 = arith.constant 0 : index
    %64 = vector.load %arg5[%c1_64, %c1_65, %c0_66] : memref<18x18x16xf32, #tpu.memory_space<vmem>>, vector<16x16x16xf32>
    tpu.vector_store %arg5[%c1_64, %c1_65, %c0_66], %55 {strides = array<i32>} : memref<18x18x16xf32, #tpu.memory_space<vmem>>, vector<16x16x16xf32>,
    %c0_67 = arith.constant 0 : index
    %c0_68 = arith.constant 0 : index
    %c0_69 = arith.constant 0 : index
    %65 = vector.load %arg5[%c0_67, %c0_68, %c0_69] : memref<18x18x16xf32, #tpu.memory_space<vmem>>, vector<16x16x16xf32>
    %66 = vector.shape_cast %65 : vector<16x16x16xf32> to vector<256x16xf32>
    %67 = arith.truncf %66 : vector<256x16xf32> to vector<256x16xbf16>
    %c0_70 = arith.constant 0 : index
    %c0_71 = arith.constant 0 : index
    %68 = vector.load %arg7[%c0_70, %c0_71] : memref<256x144xbf16, #tpu.memory_space<vmem>>, vector<256x16xbf16>
    tpu.vector_store %arg7[%c0_70, %c0_71], %67 {strides = array<i32>} : memref<256x144xbf16, #tpu.memory_space<vmem>>, vector<256x16xbf16>,
    %c0_72 = arith.constant 0 : index
    %c1_73 = arith.constant 1 : index
    %c0_74 = arith.constant 0 : index
    %69 = vector.load %arg5[%c0_72, %c1_73, %c0_74] : memref<18x18x16xf32, #tpu.memory_space<vmem>>, vector<16x16x16xf32>
    %70 = vector.shape_cast %69 : vector<16x16x16xf32> to vector<256x16xf32>
    %71 = arith.truncf %70 : vector<256x16xf32> to vector<256x16xbf16>
    %c0_75 = arith.constant 0 : index
    %c16 = arith.constant 16 : index
    %72 = vector.load %arg7[%c0_75, %c16] : memref<256x144xbf16, #tpu.memory_space<vmem>>, vector<256x16xbf16>
    tpu.vector_store %arg7[%c0_75, %c16], %71 {strides = array<i32>} : memref<256x144xbf16, #tpu.memory_space<vmem>>, vector<256x16xbf16>,
    %c0_76 = arith.constant 0 : index
    %c2_77 = arith.constant 2 : index
    %c0_78 = arith.constant 0 : index
    %73 = vector.load %arg5[%c0_76, %c2_77, %c0_78] : memref<18x18x16xf32, #tpu.memory_space<vmem>>, vector<16x16x16xf32>
    %74 = vector.shape_cast %73 : vector<16x16x16xf32> to vector<256x16xf32>
    %75 = arith.truncf %74 : vector<256x16xf32> to vector<256x16xbf16>
    %c0_79 = arith.constant 0 : index
    %c32 = arith.constant 32 : index
    %76 = vector.load %arg7[%c0_79, %c32] : memref<256x144xbf16, #tpu.memory_space<vmem>>, vector<256x16xbf16>
    tpu.vector_store %arg7[%c0_79, %c32], %75 {strides = array<i32>} : memref<256x144xbf16, #tpu.memory_space<vmem>>, vector<256x16xbf16>,
    %c1_80 = arith.constant 1 : index
    %c0_81 = arith.constant 0 : index
    %c0_82 = arith.constant 0 : index
    %77 = vector.load %arg5[%c1_80, %c0_81, %c0_82] : memref<18x18x16xf32, #tpu.memory_space<vmem>>, vector<16x16x16xf32>
    %78 = vector.shape_cast %77 : vector<16x16x16xf32> to vector<256x16xf32>
    %79 = arith.truncf %78 : vector<256x16xf32> to vector<256x16xbf16>
    %c0_83 = arith.constant 0 : index
    %c48 = arith.constant 48 : index
    %80 = vector.load %arg7[%c0_83, %c48] : memref<256x144xbf16, #tpu.memory_space<vmem>>, vector<256x16xbf16>
    tpu.vector_store %arg7[%c0_83, %c48], %79 {strides = array<i32>} : memref<256x144xbf16, #tpu.memory_space<vmem>>, vector<256x16xbf16>,
    %c1_84 = arith.constant 1 : index
    %c1_85 = arith.constant 1 : index
    %c0_86 = arith.constant 0 : index
    %81 = vector.load %arg5[%c1_84, %c1_85, %c0_86] : memref<18x18x16xf32, #tpu.memory_space<vmem>>, vector<16x16x16xf32>
    %82 = vector.shape_cast %81 : vector<16x16x16xf32> to vector<256x16xf32>
    %83 = arith.truncf %82 : vector<256x16xf32> to vector<256x16xbf16>
    %c0_87 = arith.constant 0 : index
    %c64 = arith.constant 64 : index
    %84 = vector.load %arg7[%c0_87, %c64] : memref<256x144xbf16, #tpu.memory_space<vmem>>, vector<256x16xbf16>
    tpu.vector_store %arg7[%c0_87, %c64], %83 {strides = array<i32>} : memref<256x144xbf16, #tpu.memory_space<vmem>>, vector<256x16xbf16>,
    %c1_88 = arith.constant 1 : index
    %c2_89 = arith.constant 2 : index
    %c0_90 = arith.constant 0 : index
    %85 = vector.load %arg5[%c1_88, %c2_89, %c0_90] : memref<18x18x16xf32, #tpu.memory_space<vmem>>, vector<16x16x16xf32>
    %86 = vector.shape_cast %85 : vector<16x16x16xf32> to vector<256x16xf32>
    %87 = arith.truncf %86 : vector<256x16xf32> to vector<256x16xbf16>
    %c0_91 = arith.constant 0 : index
    %c80 = arith.constant 80 : index
    %88 = vector.load %arg7[%c0_91, %c80] : memref<256x144xbf16, #tpu.memory_space<vmem>>, vector<256x16xbf16>
    tpu.vector_store %arg7[%c0_91, %c80], %87 {strides = array<i32>} : memref<256x144xbf16, #tpu.memory_space<vmem>>, vector<256x16xbf16>,
    %c2_92 = arith.constant 2 : index
    %c0_93 = arith.constant 0 : index
    %c0_94 = arith.constant 0 : index
    %89 = vector.load %arg5[%c2_92, %c0_93, %c0_94] : memref<18x18x16xf32, #tpu.memory_space<vmem>>, vector<16x16x16xf32>
    %90 = vector.shape_cast %89 : vector<16x16x16xf32> to vector<256x16xf32>
    %91 = arith.truncf %90 : vector<256x16xf32> to vector<256x16xbf16>
    %c0_95 = arith.constant 0 : index
    %c96 = arith.constant 96 : index
    %92 = vector.load %arg7[%c0_95, %c96] : memref<256x144xbf16, #tpu.memory_space<vmem>>, vector<256x16xbf16>
    tpu.vector_store %arg7[%c0_95, %c96], %91 {strides = array<i32>} : memref<256x144xbf16, #tpu.memory_space<vmem>>, vector<256x16xbf16>,
    %c2_96 = arith.constant 2 : index
    %c1_97 = arith.constant 1 : index
    %c0_98 = arith.constant 0 : index
    %93 = vector.load %arg5[%c2_96, %c1_97, %c0_98] : memref<18x18x16xf32, #tpu.memory_space<vmem>>, vector<16x16x16xf32>
    %94 = vector.shape_cast %93 : vector<16x16x16xf32> to vector<256x16xf32>
    %95 = arith.truncf %94 : vector<256x16xf32> to vector<256x16xbf16>
    %c0_99 = arith.constant 0 : index
    %c112 = arith.constant 112 : index
    %96 = vector.load %arg7[%c0_99, %c112] : memref<256x144xbf16, #tpu.memory_space<vmem>>, vector<256x16xbf16>
    tpu.vector_store %arg7[%c0_99, %c112], %95 {strides = array<i32>} : memref<256x144xbf16, #tpu.memory_space<vmem>>, vector<256x16xbf16>,
    %c2_100 = arith.constant 2 : index
    %c2_101 = arith.constant 2 : index
    %c0_102 = arith.constant 0 : index
    %97 = vector.load %arg5[%c2_100, %c2_101, %c0_102] : memref<18x18x16xf32, #tpu.memory_space<vmem>>, vector<16x16x16xf32>
    %98 = vector.shape_cast %97 : vector<16x16x16xf32> to vector<256x16xf32>
    %99 = arith.truncf %98 : vector<256x16xf32> to vector<256x16xbf16>
    %c0_103 = arith.constant 0 : index
    %c128 = arith.constant 128 : index
    %100 = vector.load %arg7[%c0_103, %c128] : memref<256x144xbf16, #tpu.memory_space<vmem>>, vector<256x16xbf16>
    tpu.vector_store %arg7[%c0_103, %c128], %99 {strides = array<i32>} : memref<256x144xbf16, #tpu.memory_space<vmem>>, vector<256x16xbf16>,
    %c0_104 = arith.constant 0 : index
    %c0_105 = arith.constant 0 : index
    %101 = vector.load %arg7[%c0_104, %c0_105] : memref<256x144xbf16, #tpu.memory_space<vmem>>, vector<256x144xbf16>
    %c0_106 = arith.constant 0 : index
    %c0_107 = arith.constant 0 : index
    %102 = vector.load %arg3[%c0_106, %c0_107] : memref<144x16xbf16, #tpu.memory_space<vmem>>, vector<144x16xbf16>
    %cst_108 = arith.constant dense<0.000000e+00> : vector<256x16xf32>
    %103 = tpu.matmul %101, %102, %cst_108 {dimension_numbers = #tpu.dot_dimension_numbers<[1], [0], [0], [1], [0, 0, 1, 1], [], []>} : vector<256x144xbf16>, vector<144x16xbf16>, vector<256x16xf32> -> vector<256x16xf32>
    %cst_109 = arith.constant 0.000000e+00 : f32
    %104 = vector.broadcast %cst_109 : f32 to vector<256x16xf32>
    %105 = arith.cmpf ogt, %103, %104 : vector<256x16xf32>
    %cst_110 = arith.constant 0.00999999977 : f32
    %106 = vector.broadcast %cst_110 : f32 to vector<256x16xf32>
    %107 = arith.mulf %106, %103 : vector<256x16xf32>
    %108 = arith.select %105, %103, %107 : vector<256x16xi1>, vector<256x16xf32>
    %109 = vector.shape_cast %108 : vector<256x16xf32> to vector<8x2x16x16xf32>
    %110 = vector.extract_strided_slice %109 {offsets = [0, 0, 0, 0], sizes = [8, 1, 16, 16], strides = [1, 1, 1, 1]} : vector<8x2x16x16xf32> to vector<8x1x16x16xf32>
    %111 = vector.shape_cast %110 : vector<8x1x16x16xf32> to vector<8x16x16xf32>
    %112 = vector.extract_strided_slice %109 {offsets = [0, 1, 0, 0], sizes = [8, 1, 16, 16], strides = [1, 1, 1, 1]} : vector<8x2x16x16xf32> to vector<8x1x16x16xf32>
    %113 = vector.shape_cast %112 : vector<8x1x16x16xf32> to vector<8x16x16xf32>
    %114 = arith.maximumf %111, %113 : vector<8x16x16xf32>
    %c0_111 = arith.constant 0 : index
    %c0_112 = arith.constant 0 : index
    %c0_113 = arith.constant 0 : index
    %115 = vector.load %arg8[%c0_111, %c0_112, %c0_113] : memref<8x16x16xf32, #tpu.memory_space<vmem>>, vector<8x16x16xf32>
    tpu.vector_store %arg8[%c0_111, %c0_112, %c0_113], %114 {strides = array<i32>} : memref<8x16x16xf32, #tpu.memory_space<vmem>>, vector<8x16x16xf32>,
    %116 = vector.shape_cast %49 : vector<256x16xf32> to vector<8x2x16x16xf32>
    %117 = vector.extract_strided_slice %116 {offsets = [0, 0, 0, 0], sizes = [8, 1, 16, 16], strides = [1, 1, 1, 1]} : vector<8x2x16x16xf32> to vector<8x1x16x16xf32>
    %118 = vector.shape_cast %117 : vector<8x1x16x16xf32> to vector<8x16x16xf32>
    %119 = vector.extract_strided_slice %116 {offsets = [0, 1, 0, 0], sizes = [8, 1, 16, 16], strides = [1, 1, 1, 1]} : vector<8x2x16x16xf32> to vector<8x1x16x16xf32>
    %120 = vector.shape_cast %119 : vector<8x1x16x16xf32> to vector<8x16x16xf32>
    %121 = arith.maximumf %118, %120 : vector<8x16x16xf32>
    %c0_114 = arith.constant 0 : index
    %c0_115 = arith.constant 0 : index
    %c0_116 = arith.constant 0 : index
    %122 = vector.load %arg9[%c0_114, %c0_115, %c0_116] : memref<8x16x16xf32, #tpu.memory_space<vmem>>, vector<8x16x16xf32>
    tpu.vector_store %arg9[%c0_114, %c0_115, %c0_116], %121 {strides = array<i32>} : memref<8x16x16xf32, #tpu.memory_space<vmem>>, vector<8x16x16xf32>,
    %c0_117 = arith.constant 0 : index
    %c0_118 = arith.constant 0 : index
    %c0_119 = arith.constant 0 : index
    %123 = vector.load %arg8[%c0_117, %c0_118, %c0_119] : memref<8x16x16xf32, #tpu.memory_space<vmem>>, vector<8x1x16xf32>
    %124 = vector.shape_cast %123 : vector<8x1x16xf32> to vector<8x16xf32>
    %c0_120 = arith.constant 0 : index
    %c1_121 = arith.constant 1 : index
    %c0_122 = arith.constant 0 : index
    %125 = vector.load %arg8[%c0_120, %c1_121, %c0_122] : memref<8x16x16xf32, #tpu.memory_space<vmem>>, vector<8x1x16xf32>
    %126 = vector.shape_cast %125 : vector<8x1x16xf32> to vector<8x16xf32>
    %127 = arith.maximumf %124, %126 : vector<8x16xf32>
    %c0_123 = arith.constant 0 : index
    %c0_124 = arith.constant 0 : index
    %c0_125 = arith.constant 0 : index
    %128 = vector.load %arg9[%c0_123, %c0_124, %c0_125] : memref<8x16x16xf32, #tpu.memory_space<vmem>>, vector<8x1x16xf32>
    %129 = vector.shape_cast %128 : vector<8x1x16xf32> to vector<8x16xf32>
    %c0_126 = arith.constant 0 : index
    %c1_127 = arith.constant 1 : index
    %c0_128 = arith.constant 0 : index
    %130 = vector.load %arg9[%c0_126, %c1_127, %c0_128] : memref<8x16x16xf32, #tpu.memory_space<vmem>>, vector<8x1x16xf32>
    %131 = vector.shape_cast %130 : vector<8x1x16xf32> to vector<8x16xf32>
    %132 = arith.maximumf %129, %131 : vector<8x16xf32>
    %133 = arith.addf %127, %132 : vector<8x16xf32>
    %c0_129 = arith.constant 0 : index
    %c0_130 = arith.constant 0 : index
    %c0_131 = arith.constant 0 : index
    %134 = vector.load %arg4[%c0_129, %c0_130, %c0_131] : memref<1x8x128xf32, #tpu.memory_space<vmem>>, vector<1x8x16xf32>
    %135 = vector.shape_cast %134 : vector<1x8x16xf32> to vector<8x16xf32>
    %136 = vector.shape_cast %133 : vector<8x16xf32> to vector<1x8x16xf32>
    tpu.vector_store %arg4[%c0_129, %c0_130, %c0_131], %136 {strides = array<i32>} : memref<1x8x128xf32, #tpu.memory_space<vmem>>, vector<1x8x16xf32>,
    %c0_132 = arith.constant 0 : index
    %c2_133 = arith.constant 2 : index
    %c0_134 = arith.constant 0 : index
    %137 = vector.load %arg8[%c0_132, %c2_133, %c0_134] : memref<8x16x16xf32, #tpu.memory_space<vmem>>, vector<8x1x16xf32>
    %138 = vector.shape_cast %137 : vector<8x1x16xf32> to vector<8x16xf32>
    %c0_135 = arith.constant 0 : index
    %c3_136 = arith.constant 3 : index
    %c0_137 = arith.constant 0 : index
    %139 = vector.load %arg8[%c0_135, %c3_136, %c0_137] : memref<8x16x16xf32, #tpu.memory_space<vmem>>, vector<8x1x16xf32>
    %140 = vector.shape_cast %139 : vector<8x1x16xf32> to vector<8x16xf32>
    %141 = arith.maximumf %138, %140 : vector<8x16xf32>
    %c0_138 = arith.constant 0 : index
    %c2_139 = arith.constant 2 : index
    %c0_140 = arith.constant 0 : index
    %142 = vector.load %arg9[%c0_138, %c2_139, %c0_140] : memref<8x16x16xf32, #tpu.memory_space<vmem>>, vector<8x1x16xf32>
    %143 = vector.shape_cast %142 : vector<8x1x16xf32> to vector<8x16xf32>
    %c0_141 = arith.constant 0 : index
    %c3_142 = arith.constant 3 : index
    %c0_143 = arith.constant 0 : index
    %144 = vector.load %arg9[%c0_141, %c3_142, %c0_143] : memref<8x16x16xf32, #tpu.memory_space<vmem>>, vector<8x1x16xf32>
    %145 = vector.shape_cast %144 : vector<8x1x16xf32> to vector<8x16xf32>
    %146 = arith.maximumf %143, %145 : vector<8x16xf32>
    %147 = arith.addf %141, %146 : vector<8x16xf32>
    %c0_144 = arith.constant 0 : index
    %c0_145 = arith.constant 0 : index
    %c16_146 = arith.constant 16 : index
    %148 = vector.load %arg4[%c0_144, %c0_145, %c16_146] : memref<1x8x128xf32, #tpu.memory_space<vmem>>, vector<1x8x16xf32>
    %149 = vector.shape_cast %148 : vector<1x8x16xf32> to vector<8x16xf32>
    %150 = vector.shape_cast %147 : vector<8x16xf32> to vector<1x8x16xf32>
    tpu.vector_store %arg4[%c0_144, %c0_145, %c16_146], %150 {strides = array<i32>} : memref<1x8x128xf32, #tpu.memory_space<vmem>>, vector<1x8x16xf32>,
    %c0_147 = arith.constant 0 : index
    %c4 = arith.constant 4 : index
    %c0_148 = arith.constant 0 : index
    %151 = vector.load %arg8[%c0_147, %c4, %c0_148] : memref<8x16x16xf32, #tpu.memory_space<vmem>>, vector<8x1x16xf32>
    %152 = vector.shape_cast %151 : vector<8x1x16xf32> to vector<8x16xf32>
    %c0_149 = arith.constant 0 : index
    %c5 = arith.constant 5 : index
    %c0_150 = arith.constant 0 : index
    %153 = vector.load %arg8[%c0_149, %c5, %c0_150] : memref<8x16x16xf32, #tpu.memory_space<vmem>>, vector<8x1x16xf32>
    %154 = vector.shape_cast %153 : vector<8x1x16xf32> to vector<8x16xf32>
    %155 = arith.maximumf %152, %154 : vector<8x16xf32>
    %c0_151 = arith.constant 0 : index
    %c4_152 = arith.constant 4 : index
    %c0_153 = arith.constant 0 : index
    %156 = vector.load %arg9[%c0_151, %c4_152, %c0_153] : memref<8x16x16xf32, #tpu.memory_space<vmem>>, vector<8x1x16xf32>
    %157 = vector.shape_cast %156 : vector<8x1x16xf32> to vector<8x16xf32>
    %c0_154 = arith.constant 0 : index
    %c5_155 = arith.constant 5 : index
    %c0_156 = arith.constant 0 : index
    %158 = vector.load %arg9[%c0_154, %c5_155, %c0_156] : memref<8x16x16xf32, #tpu.memory_space<vmem>>, vector<8x1x16xf32>
    %159 = vector.shape_cast %158 : vector<8x1x16xf32> to vector<8x16xf32>
    %160 = arith.maximumf %157, %159 : vector<8x16xf32>
    %161 = arith.addf %155, %160 : vector<8x16xf32>
    %c0_157 = arith.constant 0 : index
    %c0_158 = arith.constant 0 : index
    %c32_159 = arith.constant 32 : index
    %162 = vector.load %arg4[%c0_157, %c0_158, %c32_159] : memref<1x8x128xf32, #tpu.memory_space<vmem>>, vector<1x8x16xf32>
    %163 = vector.shape_cast %162 : vector<1x8x16xf32> to vector<8x16xf32>
    %164 = vector.shape_cast %161 : vector<8x16xf32> to vector<1x8x16xf32>
    tpu.vector_store %arg4[%c0_157, %c0_158, %c32_159], %164 {strides = array<i32>} : memref<1x8x128xf32, #tpu.memory_space<vmem>>, vector<1x8x16xf32>,
    %c0_160 = arith.constant 0 : index
    %c6_161 = arith.constant 6 : index
    %c0_162 = arith.constant 0 : index
    %165 = vector.load %arg8[%c0_160, %c6_161, %c0_162] : memref<8x16x16xf32, #tpu.memory_space<vmem>>, vector<8x1x16xf32>
    %166 = vector.shape_cast %165 : vector<8x1x16xf32> to vector<8x16xf32>
    %c0_163 = arith.constant 0 : index
    %c7 = arith.constant 7 : index
    %c0_164 = arith.constant 0 : index
    %167 = vector.load %arg8[%c0_163, %c7, %c0_164] : memref<8x16x16xf32, #tpu.memory_space<vmem>>, vector<8x1x16xf32>
    %168 = vector.shape_cast %167 : vector<8x1x16xf32> to vector<8x16xf32>
    %169 = arith.maximumf %166, %168 : vector<8x16xf32>
    %c0_165 = arith.constant 0 : index
    %c6_166 = arith.constant 6 : index
    %c0_167 = arith.constant 0 : index
    %170 = vector.load %arg9[%c0_165, %c6_166, %c0_167] : memref<8x16x16xf32, #tpu.memory_space<vmem>>, vector<8x1x16xf32>
    %171 = vector.shape_cast %170 : vector<8x1x16xf32> to vector<8x16xf32>
    %c0_168 = arith.constant 0 : index
    %c7_169 = arith.constant 7 : index
    %c0_170 = arith.constant 0 : index
    %172 = vector.load %arg9[%c0_168, %c7_169, %c0_170] : memref<8x16x16xf32, #tpu.memory_space<vmem>>, vector<8x1x16xf32>
    %173 = vector.shape_cast %172 : vector<8x1x16xf32> to vector<8x16xf32>
    %174 = arith.maximumf %171, %173 : vector<8x16xf32>
    %175 = arith.addf %169, %174 : vector<8x16xf32>
    %c0_171 = arith.constant 0 : index
    %c0_172 = arith.constant 0 : index
    %c48_173 = arith.constant 48 : index
    %176 = vector.load %arg4[%c0_171, %c0_172, %c48_173] : memref<1x8x128xf32, #tpu.memory_space<vmem>>, vector<1x8x16xf32>
    %177 = vector.shape_cast %176 : vector<1x8x16xf32> to vector<8x16xf32>
    %178 = vector.shape_cast %175 : vector<8x16xf32> to vector<1x8x16xf32>
    tpu.vector_store %arg4[%c0_171, %c0_172, %c48_173], %178 {strides = array<i32>} : memref<1x8x128xf32, #tpu.memory_space<vmem>>, vector<1x8x16xf32>,
    %c0_174 = arith.constant 0 : index
    %c8 = arith.constant 8 : index
    %c0_175 = arith.constant 0 : index
    %179 = vector.load %arg8[%c0_174, %c8, %c0_175] : memref<8x16x16xf32, #tpu.memory_space<vmem>>, vector<8x1x16xf32>
    %180 = vector.shape_cast %179 : vector<8x1x16xf32> to vector<8x16xf32>
    %c0_176 = arith.constant 0 : index
    %c9_177 = arith.constant 9 : index
    %c0_178 = arith.constant 0 : index
    %181 = vector.load %arg8[%c0_176, %c9_177, %c0_178] : memref<8x16x16xf32, #tpu.memory_space<vmem>>, vector<8x1x16xf32>
    %182 = vector.shape_cast %181 : vector<8x1x16xf32> to vector<8x16xf32>
    %183 = arith.maximumf %180, %182 : vector<8x16xf32>
    %c0_179 = arith.constant 0 : index
    %c8_180 = arith.constant 8 : index
    %c0_181 = arith.constant 0 : index
    %184 = vector.load %arg9[%c0_179, %c8_180, %c0_181] : memref<8x16x16xf32, #tpu.memory_space<vmem>>, vector<8x1x16xf32>
    %185 = vector.shape_cast %184 : vector<8x1x16xf32> to vector<8x16xf32>
    %c0_182 = arith.constant 0 : index
    %c9_183 = arith.constant 9 : index
    %c0_184 = arith.constant 0 : index
    %186 = vector.load %arg9[%c0_182, %c9_183, %c0_184] : memref<8x16x16xf32, #tpu.memory_space<vmem>>, vector<8x1x16xf32>
    %187 = vector.shape_cast %186 : vector<8x1x16xf32> to vector<8x16xf32>
    %188 = arith.maximumf %185, %187 : vector<8x16xf32>
    %189 = arith.addf %183, %188 : vector<8x16xf32>
    %c0_185 = arith.constant 0 : index
    %c0_186 = arith.constant 0 : index
    %c64_187 = arith.constant 64 : index
    %190 = vector.load %arg4[%c0_185, %c0_186, %c64_187] : memref<1x8x128xf32, #tpu.memory_space<vmem>>, vector<1x8x16xf32>
    %191 = vector.shape_cast %190 : vector<1x8x16xf32> to vector<8x16xf32>
    %192 = vector.shape_cast %189 : vector<8x16xf32> to vector<1x8x16xf32>
    tpu.vector_store %arg4[%c0_185, %c0_186, %c64_187], %192 {strides = array<i32>} : memref<1x8x128xf32, #tpu.memory_space<vmem>>, vector<1x8x16xf32>,
    %c0_188 = arith.constant 0 : index
    %c10 = arith.constant 10 : index
    %c0_189 = arith.constant 0 : index
    %193 = vector.load %arg8[%c0_188, %c10, %c0_189] : memref<8x16x16xf32, #tpu.memory_space<vmem>>, vector<8x1x16xf32>
    %194 = vector.shape_cast %193 : vector<8x1x16xf32> to vector<8x16xf32>
    %c0_190 = arith.constant 0 : index
    %c11 = arith.constant 11 : index
    %c0_191 = arith.constant 0 : index
    %195 = vector.load %arg8[%c0_190, %c11, %c0_191] : memref<8x16x16xf32, #tpu.memory_space<vmem>>, vector<8x1x16xf32>
    %196 = vector.shape_cast %195 : vector<8x1x16xf32> to vector<8x16xf32>
    %197 = arith.maximumf %194, %196 : vector<8x16xf32>
    %c0_192 = arith.constant 0 : index
    %c10_193 = arith.constant 10 : index
    %c0_194 = arith.constant 0 : index
    %198 = vector.load %arg9[%c0_192, %c10_193, %c0_194] : memref<8x16x16xf32, #tpu.memory_space<vmem>>, vector<8x1x16xf32>
    %199 = vector.shape_cast %198 : vector<8x1x16xf32> to vector<8x16xf32>
    %c0_195 = arith.constant 0 : index
    %c11_196 = arith.constant 11 : index
    %c0_197 = arith.constant 0 : index
    %200 = vector.load %arg9[%c0_195, %c11_196, %c0_197] : memref<8x16x16xf32, #tpu.memory_space<vmem>>, vector<8x1x16xf32>
    %201 = vector.shape_cast %200 : vector<8x1x16xf32> to vector<8x16xf32>
    %202 = arith.maximumf %199, %201 : vector<8x16xf32>
    %203 = arith.addf %197, %202 : vector<8x16xf32>
    %c0_198 = arith.constant 0 : index
    %c0_199 = arith.constant 0 : index
    %c80_200 = arith.constant 80 : index
    %204 = vector.load %arg4[%c0_198, %c0_199, %c80_200] : memref<1x8x128xf32, #tpu.memory_space<vmem>>, vector<1x8x16xf32>
    %205 = vector.shape_cast %204 : vector<1x8x16xf32> to vector<8x16xf32>
    %206 = vector.shape_cast %203 : vector<8x16xf32> to vector<1x8x16xf32>
    tpu.vector_store %arg4[%c0_198, %c0_199, %c80_200], %206 {strides = array<i32>} : memref<1x8x128xf32, #tpu.memory_space<vmem>>, vector<1x8x16xf32>,
    %c0_201 = arith.constant 0 : index
    %c12_202 = arith.constant 12 : index
    %c0_203 = arith.constant 0 : index
    %207 = vector.load %arg8[%c0_201, %c12_202, %c0_203] : memref<8x16x16xf32, #tpu.memory_space<vmem>>, vector<8x1x16xf32>
    %208 = vector.shape_cast %207 : vector<8x1x16xf32> to vector<8x16xf32>
    %c0_204 = arith.constant 0 : index
    %c13 = arith.constant 13 : index
    %c0_205 = arith.constant 0 : index
    %209 = vector.load %arg8[%c0_204, %c13, %c0_205] : memref<8x16x16xf32, #tpu.memory_space<vmem>>, vector<8x1x16xf32>
    %210 = vector.shape_cast %209 : vector<8x1x16xf32> to vector<8x16xf32>
    %211 = arith.maximumf %208, %210 : vector<8x16xf32>
    %c0_206 = arith.constant 0 : index
    %c12_207 = arith.constant 12 : index
    %c0_208 = arith.constant 0 : index
    %212 = vector.load %arg9[%c0_206, %c12_207, %c0_208] : memref<8x16x16xf32, #tpu.memory_space<vmem>>, vector<8x1x16xf32>
    %213 = vector.shape_cast %212 : vector<8x1x16xf32> to vector<8x16xf32>
    %c0_209 = arith.constant 0 : index
    %c13_210 = arith.constant 13 : index
    %c0_211 = arith.constant 0 : index
    %214 = vector.load %arg9[%c0_209, %c13_210, %c0_211] : memref<8x16x16xf32, #tpu.memory_space<vmem>>, vector<8x1x16xf32>
    %215 = vector.shape_cast %214 : vector<8x1x16xf32> to vector<8x16xf32>
    %216 = arith.maximumf %213, %215 : vector<8x16xf32>
    %217 = arith.addf %211, %216 : vector<8x16xf32>
    %c0_212 = arith.constant 0 : index
    %c0_213 = arith.constant 0 : index
    %c96_214 = arith.constant 96 : index
    %218 = vector.load %arg4[%c0_212, %c0_213, %c96_214] : memref<1x8x128xf32, #tpu.memory_space<vmem>>, vector<1x8x16xf32>
    %219 = vector.shape_cast %218 : vector<1x8x16xf32> to vector<8x16xf32>
    %220 = vector.shape_cast %217 : vector<8x16xf32> to vector<1x8x16xf32>
    tpu.vector_store %arg4[%c0_212, %c0_213, %c96_214], %220 {strides = array<i32>} : memref<1x8x128xf32, #tpu.memory_space<vmem>>, vector<1x8x16xf32>,
    %c0_215 = arith.constant 0 : index
    %c14 = arith.constant 14 : index
    %c0_216 = arith.constant 0 : index
    %221 = vector.load %arg8[%c0_215, %c14, %c0_216] : memref<8x16x16xf32, #tpu.memory_space<vmem>>, vector<8x1x16xf32>
    %222 = vector.shape_cast %221 : vector<8x1x16xf32> to vector<8x16xf32>
    %c0_217 = arith.constant 0 : index
    %c15_218 = arith.constant 15 : index
    %c0_219 = arith.constant 0 : index
    %223 = vector.load %arg8[%c0_217, %c15_218, %c0_219] : memref<8x16x16xf32, #tpu.memory_space<vmem>>, vector<8x1x16xf32>
    %224 = vector.shape_cast %223 : vector<8x1x16xf32> to vector<8x16xf32>
    %225 = arith.maximumf %222, %224 : vector<8x16xf32>
    %c0_220 = arith.constant 0 : index
    %c14_221 = arith.constant 14 : index
    %c0_222 = arith.constant 0 : index
    %226 = vector.load %arg9[%c0_220, %c14_221, %c0_222] : memref<8x16x16xf32, #tpu.memory_space<vmem>>, vector<8x1x16xf32>
    %227 = vector.shape_cast %226 : vector<8x1x16xf32> to vector<8x16xf32>
    %c0_223 = arith.constant 0 : index
    %c15_224 = arith.constant 15 : index
    %c0_225 = arith.constant 0 : index
    %228 = vector.load %arg9[%c0_223, %c15_224, %c0_225] : memref<8x16x16xf32, #tpu.memory_space<vmem>>, vector<8x1x16xf32>
    %229 = vector.shape_cast %228 : vector<8x1x16xf32> to vector<8x16xf32>
    %230 = arith.maximumf %227, %229 : vector<8x16xf32>
    %231 = arith.addf %225, %230 : vector<8x16xf32>
    %c0_226 = arith.constant 0 : index
    %c0_227 = arith.constant 0 : index
    %c112_228 = arith.constant 112 : index
    %232 = vector.load %arg4[%c0_226, %c0_227, %c112_228] : memref<1x8x128xf32, #tpu.memory_space<vmem>>, vector<1x8x16xf32>
    %233 = vector.shape_cast %232 : vector<1x8x16xf32> to vector<8x16xf32>
    %234 = vector.shape_cast %231 : vector<8x16xf32> to vector<1x8x16xf32>
    tpu.vector_store %arg4[%c0_226, %c0_227, %c112_228], %234 {strides = array<i32>} : memref<1x8x128xf32, #tpu.memory_space<vmem>>, vector<1x8x16xf32>,
    return
  }
  func.func @transform_0(%arg0: i32) -> (i32, i32, i32, i32) {
    %c0_i32 = arith.constant 0 : i32
    %c0_i32_0 = arith.constant 0 : i32
    %c0_i32_1 = arith.constant 0 : i32
    %c0_i32_2 = arith.constant 0 : i32
    return %arg0, %c0_i32, %c0_i32_0, %c0_i32_1 : i32, i32, i32, i32
  }
  func.func @transform_1(%arg0: i32) -> (i32, i32) {
    %c0_i32 = arith.constant 0 : i32
    %c0_i32_0 = arith.constant 0 : i32
    %c0_i32_1 = arith.constant 0 : i32
    return %c0_i32, %c0_i32_0 : i32, i32
  }
  func.func @transform_2(%arg0: i32) -> (i32, i32) {
    %c0_i32 = arith.constant 0 : i32
    %c0_i32_0 = arith.constant 0 : i32
    %c0_i32_1 = arith.constant 0 : i32
    return %c0_i32, %c0_i32_0 : i32, i32
  }
  func.func @transform_3(%arg0: i32) -> (i32, i32, i32) {
    %c0_i32 = arith.constant 0 : i32
    %c0_i32_0 = arith.constant 0 : i32
    %c0_i32_1 = arith.constant 0 : i32
    return %arg0, %c0_i32, %c0_i32_0 : i32, i32, i32
  }
}

</mosaic_0001>

<llo_original>
// kernel: tpu_custom_call.1
$region0: #{tpu_custom_call.1}
  #allocation0 [shape = 'u32[]', space=smem, size = 0x4, offset = 0x4, fixed_abs, tag = 'smem constant byte address 0x4 - core index']
  #allocation1 [shape = 'u32[144,128]{1,0:T(1,128)}', space=vmem, size = 0x12000, scoped, tag = 'internal scratch']
  #allocation2 [shape = 'f32[18,18,16]{2,1,0:T(8,128)}', space=vmem, size = 0x36000, scoped, tag = 'scratch operand']
  #allocation3 [shape = 'bf16[256,27]{1,0:T(8,128)(2,1)}', space=vmem, size = 0x10000, scoped, tag = 'scratch operand']
  #allocation4 [shape = 'bf16[256,144]{1,0:T(8,128)(2,1)}', space=vmem, size = 0x20000, scoped, tag = 'scratch operand']
  #allocation5 [shape = 'f32[8,16,16]{2,1,0:T(8,128)}', space=vmem, size = 0x10000, scoped, tag = 'scratch operand']
  #allocation6 [shape = 'f32[8,16,16]{2,1,0:T(8,128)}', space=vmem, size = 0x10000, scoped, tag = 'scratch operand']
  %s0 = inlined_call_operand.vmem [shape: f32[2,18,18,3], index: 0, kind: input, shape index: {}]
  %s1 = inlined_call_operand.vmem [shape: bf16[27,144], index: 1, kind: input, shape index: {}]
  %s2 = inlined_call_operand.vmem [shape: bf16[144,16], index: 2, kind: input, shape index: {}]
  %s3 = inlined_call_operand.hbm [shape: f32[2,8,128], index: 3, kind: output, shape index: {}]
  %s4 = sld [smem:[#allocation0]]
  $region45: #{tpu_custom_call.1} parent=0
    _
  %s6 = ssub.s32 1, %s4
  %s7 = scalar_select 0, %s6, %s4
  $region1: #{tpu_custom_call.1} parent=0
    #allocation7 [shape = 'u8[8192]{0}', space=vmem, size = 0x2000, scoped, tag = 'output window, operand 0']
    #allocation8 [shape = 's32[2]{0}', space=sflag, size = 0x8, scoped, tag = 'scoped memory for tpu_custom_call.1']
    %8 = vsyncpa [#allocation8], 0
    %s9 = scalar_lea.sflag [#allocation8], 1
    %10 = vsyncpa %s9, 0
    loop: start=0, step=1, limit=4
    $region2: #{tpu_custom_call.1} parent=1 // loop_pre_header
      _
    $region3: #{tpu_custom_call.1} parent=1 // loop_header
      %s12 = sphi 0, %s16
      %p13 = scmp.ge.s32.totalorder %s12, 4
      %s22 = sphi 0, %s24
      %s25 = sphi 0, %s22
      %s26 = sphi 0, %s25
      %s42 = sphi 0, %s26
      %s46 = sphi 0, %s46
      %s48 = sphi 0, %s46
      %s49 = sphi 0, %s48
      %s63 = sphi 0, %s49
      %s67 = sphi 0, %s67
      %s69 = sphi 0, %s67
      %s70 = sphi 0, %s69
      %s84 = sphi 0, %s70
      %s90 = sphi 0, %s92
      %s93 = sphi 0, %s90
      %s94 = sphi 0, %s93
      %s110 = sphi 0, %s94
    $region4: #{tpu_custom_call.1} parent=1 // loop_header_branch
      %15 = sbr.rel (%p13) target = $region8
    $region5: #{tpu_custom_call.1} parent=1 // loop_body
      %s17 = ssub.s32 %s12, 1
      %s18 = ssub.s32 %s12, 2
      %s19 = sadd.s32 %s12, 1
      %s20 = ssub.s32 %s12, %s19
      %p21 = scmp.eq.s32.totalorder %s20, 0
      %s23 = sadd.s32 %s22, 1
      %s24 = scalar_select %p21, %s22, %s23
      %p27 = pneg %p21
      %p28 = scmp.eq.s32.totalorder %s12, 1
      %p29 = por %p27, %p28
      %p30 = scmp.ne.s32.totalorder %s22, %s25
      %p31 = scmp.eq.s32.totalorder %s12, 0
      %p32 = por %p30, %p31
      %p33 = scmp.ne.s32.totalorder %s22, %s25
      %p34 = scmp.eq.s32.totalorder %s17, 1
      %p35 = por %p33, %p34
      %p36 = scmp.ne.s32.totalorder %s25, %s26
      %p37 = scmp.eq.s32.totalorder %s17, 0
      %p38 = por %p36, %p37
      %p39 = scmp.ne.s32.totalorder %s25, %s26
      %p40 = scmp.eq.s32.totalorder %s18, 1
      %p41 = por %p39, %p40
      %p43 = scmp.ne.s32.totalorder %s26, %s42
      %p44 = scmp.eq.s32.totalorder %s18, 0
      %p45 = por %p43, %p44
      %s47 = sadd.s32 %s46, 1
      %p50 = scmp.eq.s32.totalorder %s12, 1
      %p51 = scmp.ne.s32.totalorder %s46, %s48
      %p52 = scmp.eq.s32.totalorder %s12, 0
      %p53 = por %p51, %p52
      %p54 = scmp.ne.s32.totalorder %s46, %s48
      %p55 = scmp.eq.s32.totalorder %s17, 1
      %p56 = por %p54, %p55
      %p57 = scmp.ne.s32.totalorder %s48, %s49
      %p58 = scmp.eq.s32.totalorder %s17, 0
      %p59 = por %p57, %p58
      %p60 = scmp.ne.s32.totalorder %s48, %s49
      %p61 = scmp.eq.s32.totalorder %s18, 1
      %p62 = por %p60, %p61
      %p64 = scmp.ne.s32.totalorder %s49, %s63
      %p65 = scmp.eq.s32.totalorder %s18, 0
      %p66 = por %p64, %p65
      %s68 = sadd.s32 %s67, 1
      %p71 = scmp.eq.s32.totalorder %s12, 1
      %p72 = scmp.ne.s32.totalorder %s67, %s69
      %p73 = scmp.eq.s32.totalorder %s12, 0
      %p74 = por %p72, %p73
      %p75 = scmp.ne.s32.totalorder %s67, %s69
      %p76 = scmp.eq.s32.totalorder %s17, 1
      %p77 = por %p75, %p76
      %p78 = scmp.ne.s32.totalorder %s69, %s70
      %p79 = scmp.eq.s32.totalorder %s17, 0
      %p80 = por %p78, %p79
      %p81 = scmp.ne.s32.totalorder %s69, %s70
      %p82 = scmp.eq.s32.totalorder %s18, 1
      %p83 = por %p81, %p82
      %p85 = scmp.ne.s32.totalorder %s70, %s84
      %p86 = scmp.eq.s32.totalorder %s18, 0
      %p87 = por %p85, %p86
      %s88 = ssub.s32 %s12, %s19
      %p89 = scmp.eq.s32.totalorder %s88, 0
      %s91 = sadd.s32 %s90, 1
      %s92 = scalar_select %p89, %s90, %s91
      %p95 = pneg %p89
      %p96 = scmp.eq.s32.totalorder %s12, 1
      %p97 = por %p95, %p96
      %p98 = scmp.ne.s32.totalorder %s90, %s93
      %p99 = scmp.eq.s32.totalorder %s12, 0
      %p100 = por %p98, %p99
      %p101 = scmp.ne.s32.totalorder %s90, %s93
      %p102 = scmp.eq.s32.totalorder %s17, 1
      %p103 = por %p101, %p102
      %p104 = scmp.ne.s32.totalorder %s93, %s94
      %p105 = scmp.eq.s32.totalorder %s17, 0
      %p106 = por %p104, %p105
      %p107 = scmp.ne.s32.totalorder %s93, %s94
      %p108 = scmp.eq.s32.totalorder %s18, 1
      %p109 = por %p107, %p108
      %p111 = scmp.ne.s32.totalorder %s94, %s110
      %p112 = scmp.eq.s32.totalorder %s18, 0
      %p113 = por %p111, %p112
      %p114 = scmp.le.s32.totalorder 1, %s12
      %p115 = scmp.lt.s32.totalorder %s12, 3
      %p116 = pnand %p114, %p115
      %p117 = pneg %p116
      // Predicated region
      $region9: #{tpu_custom_call.1} parent=5 // pred_check
        _
      $region10: #{tpu_custom_call.1} parent=5 // pred_check_branch
        %119 = sbr.rel (%p116) target = $region12
      $region11: #{tpu_custom_call.1} parent=5 // pred_region
        %s120 = ssub.s32 %s12, 1
        // Predicated region
        $region13: #{tpu_custom_call.1} parent=11 // pred_check
          %p121 = pneg %p59
        $region14: #{tpu_custom_call.1} parent=11 // pred_check_branch
          %123 = sbr.rel (%p121) target = $region16
        $region15: #{tpu_custom_call.1} parent=11 // pred_region
          _
        $region16: #{tpu_custom_call.1} parent=11 // pred_fallthru
          _
        // Predicated region
        $region17: #{tpu_custom_call.1} parent=11 // pred_check
          %p124 = pneg %p80
        $region18: #{tpu_custom_call.1} parent=11 // pred_check_branch
          %126 = sbr.rel (%p124) target = $region20
        $region19: #{tpu_custom_call.1} parent=11 // pred_region
          _
        $region20: #{tpu_custom_call.1} parent=11 // pred_fallthru
          _
      $region12: #{tpu_custom_call.1} parent=5 // pred_fallthru
        _
      %p127 = scmp.lt.s32.totalorder %s12, 2
      // Predicated region
      $region21: #{tpu_custom_call.1} parent=5 // pred_check
        %p128 = pneg %p127
      $region22: #{tpu_custom_call.1} parent=5 // pred_check_branch
        %130 = sbr.rel (%p128) target = $region24
      $region23: #{tpu_custom_call.1} parent=5 // pred_region
        // Predicated region
        $region25: #{tpu_custom_call.1} parent=23 // pred_check
          %p131 = pneg %p32
        $region26: #{tpu_custom_call.1} parent=23 // pred_check_branch
          %133 = sbr.rel (%p131) target = $region28
        $region27: #{tpu_custom_call.1} parent=23 // pred_region
          %p134 = scmp.lt.s32.totalorder %s12, 1
          %s135 = scalar_select %p134, %s12, 1
          %s136 = smul.addr %s135, 54
          %s137 = smul.addr %s136, 8
          %s138 = scalar_lea.vmem %s0, %s137
        $region28: #{tpu_custom_call.1} parent=23 // pred_fallthru
          _
      $region24: #{tpu_custom_call.1} parent=5 // pred_fallthru
        _
      %p139 = scmp.le.s32.totalorder 1, %s12
      %p140 = scmp.lt.s32.totalorder %s12, 3
      %p141 = pnand %p139, %p140
      %p142 = pneg %p141
      // Predicated region
      $region29: #{tpu_custom_call.1} parent=5 // pred_check
        _
      $region30: #{tpu_custom_call.1} parent=5 // pred_check_branch
        %144 = sbr.rel (%p141) target = $region32
      $region31: #{tpu_custom_call.1} parent=5 // pred_region
        %s145 = ssub.s32 %s12, 1
        %p146 = scmp.lt.s32.totalorder %s17, 1
        %s147 = scalar_select %p146, %s17, 1
        %s148 = smul.addr %s147, 54
        %s149 = smul.addr %s148, 8
        %s150 = scalar_lea.vmem %s0, %s149
        %p151 = pneg %p38
        %p152 = pneg %p35
        %p153 = pneg %p59
        %p154 = pneg %p56
        %p155 = pneg %p80
        %p156 = pneg %p77
        %p157 = pneg %p106
        %p158 = pneg %p103
        %s159 = sand.u32 %s93, 1
        %s160 = scalar_lea.sflag [#allocation8], %s159
        %s161 = sand.u32 %s93, 1
        %s162 = smul.addr %s161, 8
        %s163 = scalar_lea.vmem [#allocation7], %s162
        %p164 = scmp.lt.s32.totalorder %s17, 1
        %s165 = scalar_select %p164, %s17, 1
        %s166 = smul.addr %s165, 54
        %s167 = smul.addr %s166, 8
        %s168 = scalar_lea.vmem %s0, %s167
        %v170 = vld [vmem:[%s168] sm:$0xff]
        %v171 = vld [vmem:[%s168 + $0x8] sm:$0xff]
        %v172 = vld [vmem:[%s168 + $0x18] sm:$0xff]
        %v173 = vld [vmem:[%s168 + $0x20] sm:$0xff]
        %v174 = vld [vmem:[%s168 + $0x30] sm:$0xff]
        %v175 = vld [vmem:[%s168 + $0x38] sm:$0xff]
        %v176 = vld [vmem:[%s168 + $0x48] sm:$0xff]
        %v177 = vld [vmem:[%s168 + $0x50] sm:$0xff]
        %v178 = vld [vmem:[%s168 + $0x60] sm:$0xff]
        %v179 = vld [vmem:[%s168 + $0x68] sm:$0xff]
        %v180 = vld [vmem:[%s168 + $0x78] sm:$0xff]
        %v181 = vld [vmem:[%s168 + $0x80] sm:$0xff]
        %v182 = vld [vmem:[%s168 + $0x90] sm:$0xff]
        %v183 = vld [vmem:[%s168 + $0x98] sm:$0xff]
        %v184 = vld [vmem:[%s168 + $0xa8] sm:$0xff]
        %v185 = vld [vmem:[%s168 + $0xb0] sm:$0xff]
        %v186 = vld [vmem:[%s168 + $0xc0] sm:$0xff]
        %v187 = vld [vmem:[%s168 + $0xc8] sm:$0xff]
        %v188 = vld [vmem:[%s168 + $0xd8] sm:$0xff]
        %v189 = vld [vmem:[%s168 + $0xe0] sm:$0xff]
        %v190 = vld [vmem:[%s168 + $0xf0] sm:$0xff]
        %v191 = vld [vmem:[%s168 + $0xf8] sm:$0xff]
        %v192 = vld [vmem:[%s168 + $0x108] sm:$0xff]
        %v193 = vld [vmem:[%s168 + $0x110] sm:$0xff]
        %v194 = vld [vmem:[%s168 + $0x120] sm:$0xff]
        %v195 = vld [vmem:[%s168 + $0x128] sm:$0xff]
        %v196 = vld [vmem:[%s168 + $0x138] sm:$0xff]
        %v197 = vld [vmem:[%s168 + $0x140] sm:$0xff]
        %v198 = vld [vmem:[%s168 + $0x150] sm:$0xff]
        %v199 = vld [vmem:[%s168 + $0x158] sm:$0xff]
        %v200 = vld [vmem:[%s168 + $0x168] sm:$0xff]
        %v201 = vld [vmem:[%s168 + $0x170] sm:$0xff]
        %v202 = vpack.c.bf16 %v171, %v170
        %v203 = vpack.c.bf16 %v173, %v172
        %v204 = vpack.c.bf16 %v175, %v174
        %v205 = vpack.c.bf16 %v177, %v176
        %v206 = vpack.c.bf16 %v179, %v178
        %v207 = vpack.c.bf16 %v181, %v180
        %v208 = vpack.c.bf16 %v183, %v182
        %v209 = vpack.c.bf16 %v185, %v184
        %v210 = vpack.c.bf16 %v187, %v186
        %v211 = vpack.c.bf16 %v189, %v188
        %v212 = vpack.c.bf16 %v191, %v190
        %v213 = vpack.c.bf16 %v193, %v192
        %v214 = vpack.c.bf16 %v195, %v194
        %v215 = vpack.c.bf16 %v197, %v196
        %v216 = vpack.c.bf16 %v199, %v198
        %v217 = vpack.c.bf16 %v201, %v200
        %v234 = vunpack.c.l.b16 %v202
        %v235 = vunpack.c.h.b16 %v202
        %v236 = vunpack.c.l.b16 %v203
        %v237 = vunpack.c.h.b16 %v203
        %v238 = vunpack.c.l.b16 %v204
        %v239 = vunpack.c.h.b16 %v204
        %v240 = vunpack.c.l.b16 %v205
        %v241 = vunpack.c.h.b16 %v205
        %v242 = vunpack.c.l.b16 %v206
        %v243 = vunpack.c.h.b16 %v206
        %v244 = vunpack.c.l.b16 %v207
        %v245 = vunpack.c.h.b16 %v207
        %v246 = vunpack.c.l.b16 %v208
        %v247 = vunpack.c.h.b16 %v208
        %v248 = vunpack.c.l.b16 %v209
        %v249 = vunpack.c.h.b16 %v209
        %v250 = vunpack.c.l.b16 %v210
        %v251 = vunpack.c.h.b16 %v210
        %v252 = vunpack.c.l.b16 %v211
        %v253 = vunpack.c.h.b16 %v211
        %v254 = vunpack.c.l.b16 %v212
        %v255 = vunpack.c.h.b16 %v212
        %v256 = vunpack.c.l.b16 %v213
        %v257 = vunpack.c.h.b16 %v213
        %v258 = vunpack.c.l.b16 %v214
        %v259 = vunpack.c.h.b16 %v214
        %v260 = vunpack.c.l.b16 %v215
        %v261 = vunpack.c.h.b16 %v215
        %v262 = vunpack.c.l.b16 %v216
        %v263 = vunpack.c.h.b16 %v216
        %v264 = vunpack.c.l.b16 %v217
        %v265 = vunpack.c.h.b16 %v217
        %v266 = vpack.c.b16 %v234, %v234
        %v267 = vpack.c.b16 %v235, %v235
        %v268 = vpack.c.b16 %v236, %v236
        %v269 = vpack.c.b16 %v237, %v237
        %v270 = vpack.c.b16 %v238, %v238
        %v271 = vpack.c.b16 %v239, %v239
        %v272 = vpack.c.b16 %v240, %v240
        %v273 = vpack.c.b16 %v241, %v241
        %v274 = vpack.c.b16 %v242, %v242
        %v275 = vpack.c.b16 %v243, %v243
        %v276 = vpack.c.b16 %v244, %v244
        %v277 = vpack.c.b16 %v245, %v245
        %v278 = vpack.c.b16 %v246, %v246
        %v279 = vpack.c.b16 %v247, %v247
        %v280 = vpack.c.b16 %v248, %v248
        %v281 = vpack.c.b16 %v249, %v249
        %v282 = vpack.c.b16 %v250, %v250
        %v283 = vpack.c.b16 %v251, %v251
        %v284 = vpack.c.b16 %v252, %v252
        %v285 = vpack.c.b16 %v253, %v253
        %v286 = vpack.c.b16 %v254, %v254
        %v287 = vpack.c.b16 %v255, %v255
        %v288 = vpack.c.b16 %v256, %v256
        %v289 = vpack.c.b16 %v257, %v257
        %v290 = vpack.c.b16 %v258, %v258
        %v291 = vpack.c.b16 %v259, %v259
        %v292 = vpack.c.b16 %v260, %v260
        %v293 = vpack.c.b16 %v261, %v261
        %v294 = vpack.c.b16 %v262, %v262
        %v295 = vpack.c.b16 %v263, %v263
        %v296 = vpack.c.b16 %v264, %v264
        %v297 = vpack.c.b16 %v265, %v265
        %vm330 = vcmask 19456
        %331 = vst.msk [vmem:[#allocation3] sm:$0xf] %vm330, %v266
        %332 = vst.msk [vmem:[#allocation3 + $0x4] sm:$0xf] %vm330, %v267
        %333 = vst.msk [vmem:[#allocation3 + $0x8] sm:$0xf] %vm330, %v268
        %334 = vst.msk [vmem:[#allocation3 + $0xc] sm:$0xf] %vm330, %v269
        %335 = vst.msk [vmem:[#allocation3 + $0x10] sm:$0xf] %vm330, %v270
        %336 = vst.msk [vmem:[#allocation3 + $0x14] sm:$0xf] %vm330, %v271
        %337 = vst.msk [vmem:[#allocation3 + $0x18] sm:$0xf] %vm330, %v272
        %338 = vst.msk [vmem:[#allocation3 + $0x1c] sm:$0xf] %vm330, %v273
        %339 = vst.msk [vmem:[#allocation3 + $0x20] sm:$0xf] %vm330, %v274
        %340 = vst.msk [vmem:[#allocation3 + $0x24] sm:$0xf] %vm330, %v275
        %341 = vst.msk [vmem:[#allocation3 + $0x28] sm:$0xf] %vm330, %v276
        %342 = vst.msk [vmem:[#allocation3 + $0x2c] sm:$0xf] %vm330, %v277
        %343 = vst.msk [vmem:[#allocation3 + $0x30] sm:$0xf] %vm330, %v278
        %344 = vst.msk [vmem:[#allocation3 + $0x34] sm:$0xf] %vm330, %v279
        %345 = vst.msk [vmem:[#allocation3 + $0x38] sm:$0xf] %vm330, %v280
        %346 = vst.msk [vmem:[#allocation3 + $0x3c] sm:$0xf] %vm330, %v281
        %347 = vst.msk [vmem:[#allocation3 + $0x40] sm:$0xf] %vm330, %v282
        %348 = vst.msk [vmem:[#allocation3 + $0x44] sm:$0xf] %vm330, %v283
        %349 = vst.msk [vmem:[#allocation3 + $0x48] sm:$0xf] %vm330, %v284
        %350 = vst.msk [vmem:[#allocation3 + $0x4c] sm:$0xf] %vm330, %v285
        %351 = vst.msk [vmem:[#allocation3 + $0x50] sm:$0xf] %vm330, %v286
        %352 = vst.msk [vmem:[#allocation3 + $0x54] sm:$0xf] %vm330, %v287
        %353 = vst.msk [vmem:[#allocation3 + $0x58] sm:$0xf] %vm330, %v288
        %354 = vst.msk [vmem:[#allocation3 + $0x5c] sm:$0xf] %vm330, %v289
        %355 = vst.msk [vmem:[#allocation3 + $0x60] sm:$0xf] %vm330, %v290
        %356 = vst.msk [vmem:[#allocation3 + $0x64] sm:$0xf] %vm330, %v291
        %357 = vst.msk [vmem:[#allocation3 + $0x68] sm:$0xf] %vm330, %v292
        %358 = vst.msk [vmem:[#allocation3 + $0x6c] sm:$0xf] %vm330, %v293
        %359 = vst.msk [vmem:[#allocation3 + $0x70] sm:$0xf] %vm330, %v294
        %360 = vst.msk [vmem:[#allocation3 + $0x74] sm:$0xf] %vm330, %v295
        %361 = vst.msk [vmem:[#allocation3 + $0x78] sm:$0xf] %vm330, %v296
        %362 = vst.msk [vmem:[#allocation3 + $0x7c] sm:$0xf] %vm330, %v297
        %v363 = vld [vmem:[%s168 + $0x1] sm:$0xff]
        %v364 = vld [vmem:[%s168 + $0x9] sm:$0xff]
        %v365 = vld [vmem:[%s168 + $0x19] sm:$0xff]
        %v366 = vld [vmem:[%s168 + $0x21] sm:$0xff]
        %v367 = vld [vmem:[%s168 + $0x31] sm:$0xff]
        %v368 = vld [vmem:[%s168 + $0x39] sm:$0xff]
        %v369 = vld [vmem:[%s168 + $0x49] sm:$0xff]
        %v370 = vld [vmem:[%s168 + $0x51] sm:$0xff]
        %v371 = vld [vmem:[%s168 + $0x61] sm:$0xff]
        %v372 = vld [vmem:[%s168 + $0x69] sm:$0xff]
        %v373 = vld [vmem:[%s168 + $0x79] sm:$0xff]
        %v374 = vld [vmem:[%s168 + $0x81] sm:$0xff]
        %v375 = vld [vmem:[%s168 + $0x91] sm:$0xff]
        %v376 = vld [vmem:[%s168 + $0x99] sm:$0xff]
        %v377 = vld [vmem:[%s168 + $0xa9] sm:$0xff]
        %v378 = vld [vmem:[%s168 + $0xb1] sm:$0xff]
        %v379 = vld [vmem:[%s168 + $0xc1] sm:$0xff]
        %v380 = vld [vmem:[%s168 + $0xc9] sm:$0xff]
        %v381 = vld [vmem:[%s168 + $0xd9] sm:$0xff]
        %v382 = vld [vmem:[%s168 + $0xe1] sm:$0xff]
        %v383 = vld [vmem:[%s168 + $0xf1] sm:$0xff]
        %v384 = vld [vmem:[%s168 + $0xf9] sm:$0xff]
        %v385 = vld [vmem:[%s168 + $0x109] sm:$0xff]
        %v386 = vld [vmem:[%s168 + $0x111] sm:$0xff]
        %v387 = vld [vmem:[%s168 + $0x121] sm:$0xff]
        %v388 = vld [vmem:[%s168 + $0x129] sm:$0xff]
        %v389 = vld [vmem:[%s168 + $0x139] sm:$0xff]
        %v390 = vld [vmem:[%s168 + $0x141] sm:$0xff]
        %v391 = vld [vmem:[%s168 + $0x151] sm:$0xff]
        %v392 = vld [vmem:[%s168 + $0x159] sm:$0xff]
        %v393 = vld [vmem:[%s168 + $0x169] sm:$0xff]
        %v394 = vld [vmem:[%s168 + $0x171] sm:$0xff]
        %v395 = vpack.c.bf16 %v364, %v363
        %v396 = vpack.c.bf16 %v366, %v365
        %v397 = vpack.c.bf16 %v368, %v367
        %v398 = vpack.c.bf16 %v370, %v369
        %v399 = vpack.c.bf16 %v372, %v371
        %v400 = vpack.c.bf16 %v374, %v373
        %v401 = vpack.c.bf16 %v376, %v375
        %v402 = vpack.c.bf16 %v378, %v377
        %v403 = vpack.c.bf16 %v380, %v379
        %v404 = vpack.c.bf16 %v382, %v381
        %v405 = vpack.c.bf16 %v384, %v383
        %v406 = vpack.c.bf16 %v386, %v385
        %v407 = vpack.c.bf16 %v388, %v387
        %v408 = vpack.c.bf16 %v390, %v389
        %v409 = vpack.c.bf16 %v392, %v391
        %v410 = vpack.c.bf16 %v394, %v393
        %v427 = vunpack.c.l.b16 %v395
        %v428 = vunpack.c.h.b16 %v395
        %v429 = vunpack.c.l.b16 %v396
        %v430 = vunpack.c.h.b16 %v396
        %v431 = vunpack.c.l.b16 %v397
        %v432 = vunpack.c.h.b16 %v397
        %v433 = vunpack.c.l.b16 %v398
        %v434 = vunpack.c.h.b16 %v398
        %v435 = vunpack.c.l.b16 %v399
        %v436 = vunpack.c.h.b16 %v399
        %v437 = vunpack.c.l.b16 %v400
        %v438 = vunpack.c.h.b16 %v400
        %v439 = vunpack.c.l.b16 %v401
        %v440 = vunpack.c.h.b16 %v401
        %v441 = vunpack.c.l.b16 %v402
        %v442 = vunpack.c.h.b16 %v402
        %v443 = vunpack.c.l.b16 %v403
        %v444 = vunpack.c.h.b16 %v403
        %v445 = vunpack.c.l.b16 %v404
        %v446 = vunpack.c.h.b16 %v404
        %v447 = vunpack.c.l.b16 %v405
        %v448 = vunpack.c.h.b16 %v405
        %v449 = vunpack.c.l.b16 %v406
        %v450 = vunpack.c.h.b16 %v406
        %v451 = vunpack.c.l.b16 %v407
        %v452 = vunpack.c.h.b16 %v407
        %v453 = vunpack.c.l.b16 %v408
        %v454 = vunpack.c.h.b16 %v408
        %v455 = vunpack.c.l.b16 %v409
        %v456 = vunpack.c.h.b16 %v409
        %v457 = vunpack.c.l.b16 %v410
        %v458 = vunpack.c.h.b16 %v410
        %v459 = vpack.c.b16 %v427, %v427
        %v460 = vpack.c.b16 %v428, %v428
        %v461 = vpack.c.b16 %v429, %v429
        %v462 = vpack.c.b16 %v430, %v430
        %v463 = vpack.c.b16 %v431, %v431
        %v464 = vpack.c.b16 %v432, %v432
        %v465 = vpack.c.b16 %v433, %v433
        %v466 = vpack.c.b16 %v434, %v434
        %v467 = vpack.c.b16 %v435, %v435
        %v468 = vpack.c.b16 %v436, %v436
        %v469 = vpack.c.b16 %v437, %v437
        %v470 = vpack.c.b16 %v438, %v438
        %v471 = vpack.c.b16 %v439, %v439
        %v472 = vpack.c.b16 %v440, %v440
        %v473 = vpack.c.b16 %v441, %v441
        %v474 = vpack.c.b16 %v442, %v442
        %v475 = vpack.c.b16 %v443, %v443
        %v476 = vpack.c.b16 %v444, %v444
        %v477 = vpack.c.b16 %v445, %v445
        %v478 = vpack.c.b16 %v446, %v446
        %v479 = vpack.c.b16 %v447, %v447
        %v480 = vpack.c.b16 %v448, %v448
        %v481 = vpack.c.b16 %v449, %v449
        %v482 = vpack.c.b16 %v450, %v450
        %v483 = vpack.c.b16 %v451, %v451
        %v484 = vpack.c.b16 %v452, %v452
        %v485 = vpack.c.b16 %v453, %v453
        %v486 = vpack.c.b16 %v454, %v454
        %v487 = vpack.c.b16 %v455, %v455
        %v488 = vpack.c.b16 %v456, %v456
        %v489 = vpack.c.b16 %v457, %v457
        %v490 = vpack.c.b16 %v458, %v458
        %491 = vrot.lane.b32.xlu0 %v459, 3
        %v492 = vpop.permute.xlu0 %491
        %493 = vrot.lane.b32.xlu0 %v460, 3
        %v494 = vpop.permute.xlu0 %493
        %495 = vrot.lane.b32.xlu0 %v461, 3
        %v496 = vpop.permute.xlu0 %495
        %497 = vrot.lane.b32.xlu0 %v462, 3
        %v498 = vpop.permute.xlu0 %497
        %499 = vrot.lane.b32.xlu0 %v463, 3
        %v500 = vpop.permute.xlu0 %499
        %501 = vrot.lane.b32.xlu0 %v464, 3
        %v502 = vpop.permute.xlu0 %501
        %503 = vrot.lane.b32.xlu0 %v465, 3
        %v504 = vpop.permute.xlu0 %503
        %505 = vrot.lane.b32.xlu0 %v466, 3
        %v506 = vpop.permute.xlu0 %505
        %507 = vrot.lane.b32.xlu0 %v467, 3
        %v508 = vpop.permute.xlu0 %507
        %509 = vrot.lane.b32.xlu0 %v468, 3
        %v510 = vpop.permute.xlu0 %509
        %511 = vrot.lane.b32.xlu0 %v469, 3
        %v512 = vpop.permute.xlu0 %511
        %513 = vrot.lane.b32.xlu0 %v470, 3
        %v514 = vpop.permute.xlu0 %513
        %515 = vrot.lane.b32.xlu0 %v471, 3
        %v516 = vpop.permute.xlu0 %515
        %517 = vrot.lane.b32.xlu0 %v472, 3
        %v518 = vpop.permute.xlu0 %517
        %519 = vrot.lane.b32.xlu0 %v473, 3
        %v520 = vpop.permute.xlu0 %519
        %521 = vrot.lane.b32.xlu0 %v474, 3
        %v522 = vpop.permute.xlu0 %521
        %523 = vrot.lane.b32.xlu0 %v475, 3
        %v524 = vpop.permute.xlu0 %523
        %525 = vrot.lane.b32.xlu0 %v476, 3
        %v526 = vpop.permute.xlu0 %525
        %527 = vrot.lane.b32.xlu0 %v477, 3
        %v528 = vpop.permute.xlu0 %527
        %529 = vrot.lane.b32.xlu0 %v478, 3
        %v530 = vpop.permute.xlu0 %529
        %531 = vrot.lane.b32.xlu0 %v479, 3
        %v532 = vpop.permute.xlu0 %531
        %533 = vrot.lane.b32.xlu0 %v480, 3
        %v534 = vpop.permute.xlu0 %533
        %535 = vrot.lane.b32.xlu0 %v481, 3
        %v536 = vpop.permute.xlu0 %535
        %537 = vrot.lane.b32.xlu0 %v482, 3
        %v538 = vpop.permute.xlu0 %537
        %539 = vrot.lane.b32.xlu0 %v483, 3
        %v540 = vpop.permute.xlu0 %539
        %541 = vrot.lane.b32.xlu0 %v484, 3
        %v542 = vpop.permute.xlu0 %541
        %543 = vrot.lane.b32.xlu0 %v485, 3
        %v544 = vpop.permute.xlu0 %543
        %545 = vrot.lane.b32.xlu0 %v486, 3
        %v546 = vpop.permute.xlu0 %545
        %547 = vrot.lane.b32.xlu0 %v487, 3
        %v548 = vpop.permute.xlu0 %547
        %549 = vrot.lane.b32.xlu0 %v488, 3
        %v550 = vpop.permute.xlu0 %549
        %551 = vrot.lane.b32.xlu0 %v489, 3
        %v552 = vpop.permute.xlu0 %551
        %553 = vrot.lane.b32.xlu0 %v490, 3
        %v554 = vpop.permute.xlu0 %553
        %vm587 = vcmask 44056
        %588 = vst.msk [vmem:[#allocation3] sm:$0xf] %vm587, %v492
        %589 = vst.msk [vmem:[#allocation3 + $0x4] sm:$0xf] %vm587, %v494
        %590 = vst.msk [vmem:[#allocation3 + $0x8] sm:$0xf] %vm587, %v496
        %591 = vst.msk [vmem:[#allocation3 + $0xc] sm:$0xf] %vm587, %v498
        %592 = vst.msk [vmem:[#allocation3 + $0x10] sm:$0xf] %vm587, %v500
        %593 = vst.msk [vmem:[#allocation3 + $0x14] sm:$0xf] %vm587, %v502
        %594 = vst.msk [vmem:[#allocation3 + $0x18] sm:$0xf] %vm587, %v504
        %595 = vst.msk [vmem:[#allocation3 + $0x1c] sm:$0xf] %vm587, %v506
        %596 = vst.msk [vmem:[#allocation3 + $0x20] sm:$0xf] %vm587, %v508
        %597 = vst.msk [vmem:[#allocation3 + $0x24] sm:$0xf] %vm587, %v510
        %598 = vst.msk [vmem:[#allocation3 + $0x28] sm:$0xf] %vm587, %v512
        %599 = vst.msk [vmem:[#allocation3 + $0x2c] sm:$0xf] %vm587, %v514
        %600 = vst.msk [vmem:[#allocation3 + $0x30] sm:$0xf] %vm587, %v516
        %601 = vst.msk [vmem:[#allocation3 + $0x34] sm:$0xf] %vm587, %v518
        %602 = vst.msk [vmem:[#allocation3 + $0x38] sm:$0xf] %vm587, %v520
        %603 = vst.msk [vmem:[#allocation3 + $0x3c] sm:$0xf] %vm587, %v522
        %604 = vst.msk [vmem:[#allocation3 + $0x40] sm:$0xf] %vm587, %v524
        %605 = vst.msk [vmem:[#allocation3 + $0x44] sm:$0xf] %vm587, %v526
        %606 = vst.msk [vmem:[#allocation3 + $0x48] sm:$0xf] %vm587, %v528
        %607 = vst.msk [vmem:[#allocation3 + $0x4c] sm:$0xf] %vm587, %v530
        %608 = vst.msk [vmem:[#allocation3 + $0x50] sm:$0xf] %vm587, %v532
        %609 = vst.msk [vmem:[#allocation3 + $0x54] sm:$0xf] %vm587, %v534
        %610 = vst.msk [vmem:[#allocation3 + $0x58] sm:$0xf] %vm587, %v536
        %611 = vst.msk [vmem:[#allocation3 + $0x5c] sm:$0xf] %vm587, %v538
        %612 = vst.msk [vmem:[#allocation3 + $0x60] sm:$0xf] %vm587, %v540
        %613 = vst.msk [vmem:[#allocation3 + $0x64] sm:$0xf] %vm587, %v542
        %614 = vst.msk [vmem:[#allocation3 + $0x68] sm:$0xf] %vm587, %v544
        %615 = vst.msk [vmem:[#allocation3 + $0x6c] sm:$0xf] %vm587, %v546
        %616 = vst.msk [vmem:[#allocation3 + $0x70] sm:$0xf] %vm587, %v548
        %617 = vst.msk [vmem:[#allocation3 + $0x74] sm:$0xf] %vm587, %v550
        %618 = vst.msk [vmem:[#allocation3 + $0x78] sm:$0xf] %vm587, %v552
        %619 = vst.msk [vmem:[#allocation3 + $0x7c] sm:$0xf] %vm587, %v554
        %v620 = vld [vmem:[%s168 + $0x2] sm:$0xff]
        %v621 = vld [vmem:[%s168 + $0xa] sm:$0xff]
        %v622 = vld [vmem:[%s168 + $0x1a] sm:$0xff]
        %v623 = vld [vmem:[%s168 + $0x22] sm:$0xff]
        %v624 = vld [vmem:[%s168 + $0x32] sm:$0xff]
        %v625 = vld [vmem:[%s168 + $0x3a] sm:$0xff]
        %v626 = vld [vmem:[%s168 + $0x4a] sm:$0xff]
        %v627 = vld [vmem:[%s168 + $0x52] sm:$0xff]
        %v628 = vld [vmem:[%s168 + $0x62] sm:$0xff]
        %v629 = vld [vmem:[%s168 + $0x6a] sm:$0xff]
        %v630 = vld [vmem:[%s168 + $0x7a] sm:$0xff]
        %v631 = vld [vmem:[%s168 + $0x82] sm:$0xff]
        %v632 = vld [vmem:[%s168 + $0x92] sm:$0xff]
        %v633 = vld [vmem:[%s168 + $0x9a] sm:$0xff]
        %v634 = vld [vmem:[%s168 + $0xaa] sm:$0xff]
        %v635 = vld [vmem:[%s168 + $0xb2] sm:$0xff]
        %v636 = vld [vmem:[%s168 + $0xc2] sm:$0xff]
        %v637 = vld [vmem:[%s168 + $0xca] sm:$0xff]
        %v638 = vld [vmem:[%s168 + $0xda] sm:$0xff]
        %v639 = vld [vmem:[%s168 + $0xe2] sm:$0xff]
        %v640 = vld [vmem:[%s168 + $0xf2] sm:$0xff]
        %v641 = vld [vmem:[%s168 + $0xfa] sm:$0xff]
        %v642 = vld [vmem:[%s168 + $0x10a] sm:$0xff]
        %v643 = vld [vmem:[%s168 + $0x112] sm:$0xff]
        %v644 = vld [vmem:[%s168 + $0x122] sm:$0xff]
        %v645 = vld [vmem:[%s168 + $0x12a] sm:$0xff]
        %v646 = vld [vmem:[%s168 + $0x13a] sm:$0xff]
        %v647 = vld [vmem:[%s168 + $0x142] sm:$0xff]
        %v648 = vld [vmem:[%s168 + $0x152] sm:$0xff]
        %v649 = vld [vmem:[%s168 + $0x15a] sm:$0xff]
        %v650 = vld [vmem:[%s168 + $0x16a] sm:$0xff]
        %v651 = vld [vmem:[%s168 + $0x172] sm:$0xff]
        %v652 = vpack.c.bf16 %v621, %v620
        %v653 = vpack.c.bf16 %v623, %v622
        %v654 = vpack.c.bf16 %v625, %v624
        %v655 = vpack.c.bf16 %v627, %v626
        %v656 = vpack.c.bf16 %v629, %v628
        %v657 = vpack.c.bf16 %v631, %v630
        %v658 = vpack.c.bf16 %v633, %v632
        %v659 = vpack.c.bf16 %v635, %v634
        %v660 = vpack.c.bf16 %v637, %v636
        %v661 = vpack.c.bf16 %v639, %v638
        %v662 = vpack.c.bf16 %v641, %v640
        %v663 = vpack.c.bf16 %v643, %v642
        %v664 = vpack.c.bf16 %v645, %v644
        %v665 = vpack.c.bf16 %v647, %v646
        %v666 = vpack.c.bf16 %v649, %v648
        %v667 = vpack.c.bf16 %v651, %v650
        %v684 = vunpack.c.l.b16 %v652
        %v685 = vunpack.c.h.b16 %v652
        %v686 = vunpack.c.l.b16 %v653
        %v687 = vunpack.c.h.b16 %v653
        %v688 = vunpack.c.l.b16 %v654
        %v689 = vunpack.c.h.b16 %v654
        %v690 = vunpack.c.l.b16 %v655
        %v691 = vunpack.c.h.b16 %v655
        %v692 = vunpack.c.l.b16 %v656
        %v693 = vunpack.c.h.b16 %v656
        %v694 = vunpack.c.l.b16 %v657
        %v695 = vunpack.c.h.b16 %v657
        %v696 = vunpack.c.l.b16 %v658
        %v697 = vunpack.c.h.b16 %v658
        %v698 = vunpack.c.l.b16 %v659
        %v699 = vunpack.c.h.b16 %v659
        %v700 = vunpack.c.l.b16 %v660
        %v701 = vunpack.c.h.b16 %v660
        %v702 = vunpack.c.l.b16 %v661
        %v703 = vunpack.c.h.b16 %v661
        %v704 = vunpack.c.l.b16 %v662
        %v705 = vunpack.c.h.b16 %v662
        %v706 = vunpack.c.l.b16 %v663
        %v707 = vunpack.c.h.b16 %v663
        %v708 = vunpack.c.l.b16 %v664
        %v709 = vunpack.c.h.b16 %v664
        %v710 = vunpack.c.l.b16 %v665
        %v711 = vunpack.c.h.b16 %v665
        %v712 = vunpack.c.l.b16 %v666
        %v713 = vunpack.c.h.b16 %v666
        %v714 = vunpack.c.l.b16 %v667
        %v715 = vunpack.c.h.b16 %v667
        %v716 = vpack.c.b16 %v684, %v684
        %v717 = vpack.c.b16 %v685, %v685
        %v718 = vpack.c.b16 %v686, %v686
        %v719 = vpack.c.b16 %v687, %v687
        %v720 = vpack.c.b16 %v688, %v688
        %v721 = vpack.c.b16 %v689, %v689
        %v722 = vpack.c.b16 %v690, %v690
        %v723 = vpack.c.b16 %v691, %v691
        %v724 = vpack.c.b16 %v692, %v692
        %v725 = vpack.c.b16 %v693, %v693
        %v726 = vpack.c.b16 %v694, %v694
        %v727 = vpack.c.b16 %v695, %v695
        %v728 = vpack.c.b16 %v696, %v696
        %v729 = vpack.c.b16 %v697, %v697
        %v730 = vpack.c.b16 %v698, %v698
        %v731 = vpack.c.b16 %v699, %v699
        %v732 = vpack.c.b16 %v700, %v700
        %v733 = vpack.c.b16 %v701, %v701
        %v734 = vpack.c.b16 %v702, %v702
        %v735 = vpack.c.b16 %v703, %v703
        %v736 = vpack.c.b16 %v704, %v704
        %v737 = vpack.c.b16 %v705, %v705
        %v738 = vpack.c.b16 %v706, %v706
        %v739 = vpack.c.b16 %v707, %v707
        %v740 = vpack.c.b16 %v708, %v708
        %v741 = vpack.c.b16 %v709, %v709
        %v742 = vpack.c.b16 %v710, %v710
        %v743 = vpack.c.b16 %v711, %v711
        %v744 = vpack.c.b16 %v712, %v712
        %v745 = vpack.c.b16 %v713, %v713
        %v746 = vpack.c.b16 %v714, %v714
        %v747 = vpack.c.b16 %v715, %v715
        %748 = vrot.lane.b32.xlu0 %v716, 6
        %v749 = vpop.permute.xlu0 %748
        %750 = vrot.lane.b32.xlu0 %v717, 6
        %v751 = vpop.permute.xlu0 %750
        %752 = vrot.lane.b32.xlu0 %v718, 6
        %v753 = vpop.permute.xlu0 %752
        %754 = vrot.lane.b32.xlu0 %v719, 6
        %v755 = vpop.permute.xlu0 %754
        %756 = vrot.lane.b32.xlu0 %v720, 6
        %v757 = vpop.permute.xlu0 %756
        %758 = vrot.lane.b32.xlu0 %v721, 6
        %v759 = vpop.permute.xlu0 %758
        %760 = vrot.lane.b32.xlu0 %v722, 6
        %v761 = vpop.permute.xlu0 %760
        %762 = vrot.lane.b32.xlu0 %v723, 6
        %v763 = vpop.permute.xlu0 %762
        %764 = vrot.lane.b32.xlu0 %v724, 6
        %v765 = vpop.permute.xlu0 %764
        %766 = vrot.lane.b32.xlu0 %v725, 6
        %v767 = vpop.permute.xlu0 %766
        %768 = vrot.lane.b32.xlu0 %v726, 6
        %v769 = vpop.permute.xlu0 %768
        %770 = vrot.lane.b32.xlu0 %v727, 6
        %v771 = vpop.permute.xlu0 %770
        %772 = vrot.lane.b32.xlu0 %v728, 6
        %v773 = vpop.permute.xlu0 %772
        %774 = vrot.lane.b32.xlu0 %v729, 6
        %v775 = vpop.permute.xlu0 %774
        %776 = vrot.lane.b32.xlu0 %v730, 6
        %v777 = vpop.permute.xlu0 %776
        %778 = vrot.lane.b32.xlu0 %v731, 6
        %v779 = vpop.permute.xlu0 %778
        %780 = vrot.lane.b32.xlu0 %v732, 6
        %v781 = vpop.permute.xlu0 %780
        %782 = vrot.lane.b32.xlu0 %v733, 6
        %v783 = vpop.permute.xlu0 %782
        %784 = vrot.lane.b32.xlu0 %v734, 6
        %v785 = vpop.permute.xlu0 %784
        %786 = vrot.lane.b32.xlu0 %v735, 6
        %v787 = vpop.permute.xlu0 %786
        %788 = vrot.lane.b32.xlu0 %v736, 6
        %v789 = vpop.permute.xlu0 %788
        %790 = vrot.lane.b32.xlu0 %v737, 6
        %v791 = vpop.permute.xlu0 %790
        %792 = vrot.lane.b32.xlu0 %v738, 6
        %v793 = vpop.permute.xlu0 %792
        %794 = vrot.lane.b32.xlu0 %v739, 6
        %v795 = vpop.permute.xlu0 %794
        %796 = vrot.lane.b32.xlu0 %v740, 6
        %v797 = vpop.permute.xlu0 %796
        %798 = vrot.lane.b32.xlu0 %v741, 6
        %v799 = vpop.permute.xlu0 %798
        %800 = vrot.lane.b32.xlu0 %v742, 6
        %v801 = vpop.permute.xlu0 %800
        %802 = vrot.lane.b32.xlu0 %v743, 6
        %v803 = vpop.permute.xlu0 %802
        %804 = vrot.lane.b32.xlu0 %v744, 6
        %v805 = vpop.permute.xlu0 %804
        %806 = vrot.lane.b32.xlu0 %v745, 6
        %v807 = vpop.permute.xlu0 %806
        %808 = vrot.lane.b32.xlu0 %v746, 6
        %v809 = vpop.permute.xlu0 %808
        %810 = vrot.lane.b32.xlu0 %v747, 6
        %v811 = vpop.permute.xlu0 %810
        %vm844 = vcmask 68656
        %845 = vst.msk [vmem:[#allocation3] sm:$0xf] %vm844, %v749
        %846 = vst.msk [vmem:[#allocation3 + $0x4] sm:$0xf] %vm844, %v751
        %847 = vst.msk [vmem:[#allocation3 + $0x8] sm:$0xf] %vm844, %v753
        %848 = vst.msk [vmem:[#allocation3 + $0xc] sm:$0xf] %vm844, %v755
        %849 = vst.msk [vmem:[#allocation3 + $0x10] sm:$0xf] %vm844, %v757
        %850 = vst.msk [vmem:[#allocation3 + $0x14] sm:$0xf] %vm844, %v759
        %851 = vst.msk [vmem:[#allocation3 + $0x18] sm:$0xf] %vm844, %v761
        %852 = vst.msk [vmem:[#allocation3 + $0x1c] sm:$0xf] %vm844, %v763
        %853 = vst.msk [vmem:[#allocation3 + $0x20] sm:$0xf] %vm844, %v765
        %854 = vst.msk [vmem:[#allocation3 + $0x24] sm:$0xf] %vm844, %v767
        %855 = vst.msk [vmem:[#allocation3 + $0x28] sm:$0xf] %vm844, %v769
        %856 = vst.msk [vmem:[#allocation3 + $0x2c] sm:$0xf] %vm844, %v771
        %857 = vst.msk [vmem:[#allocation3 + $0x30] sm:$0xf] %vm844, %v773
        %858 = vst.msk [vmem:[#allocation3 + $0x34] sm:$0xf] %vm844, %v775
        %859 = vst.msk [vmem:[#allocation3 + $0x38] sm:$0xf] %vm844, %v777
        %860 = vst.msk [vmem:[#allocation3 + $0x3c] sm:$0xf] %vm844, %v779
        %861 = vst.msk [vmem:[#allocation3 + $0x40] sm:$0xf] %vm844, %v781
        %862 = vst.msk [vmem:[#allocation3 + $0x44] sm:$0xf] %vm844, %v783
        %863 = vst.msk [vmem:[#allocation3 + $0x48] sm:$0xf] %vm844, %v785
        %864 = vst.msk [vmem:[#allocation3 + $0x4c] sm:$0xf] %vm844, %v787
        %865 = vst.msk [vmem:[#allocation3 + $0x50] sm:$0xf] %vm844, %v789
        %866 = vst.msk [vmem:[#allocation3 + $0x54] sm:$0xf] %vm844, %v791
        %867 = vst.msk [vmem:[#allocation3 + $0x58] sm:$0xf] %vm844, %v793
        %868 = vst.msk [vmem:[#allocation3 + $0x5c] sm:$0xf] %vm844, %v795
        %869 = vst.msk [vmem:[#allocation3 + $0x60] sm:$0xf] %vm844, %v797
        %870 = vst.msk [vmem:[#allocation3 + $0x64] sm:$0xf] %vm844, %v799
        %871 = vst.msk [vmem:[#allocation3 + $0x68] sm:$0xf] %vm844, %v801
        %872 = vst.msk [vmem:[#allocation3 + $0x6c] sm:$0xf] %vm844, %v803
        %873 = vst.msk [vmem:[#allocation3 + $0x70] sm:$0xf] %vm844, %v805
        %874 = vst.msk [vmem:[#allocation3 + $0x74] sm:$0xf] %vm844, %v807
        %875 = vst.msk [vmem:[#allocation3 + $0x78] sm:$0xf] %vm844, %v809
        %876 = vst.msk [vmem:[#allocation3 + $0x7c] sm:$0xf] %vm844, %v811
        %s877 = scalar_lea.vmem %s168, 24
        %v878 = vld [vmem:[%s877] sm:$0xff]
        %v879 = vld [vmem:[%s877 + $0x8] sm:$0xff]
        %v880 = vld [vmem:[%s877 + $0x18] sm:$0xff]
        %v881 = vld [vmem:[%s877 + $0x20] sm:$0xff]
        %v882 = vld [vmem:[%s877 + $0x30] sm:$0xff]
        %v883 = vld [vmem:[%s877 + $0x38] sm:$0xff]
        %v884 = vld [vmem:[%s877 + $0x48] sm:$0xff]
        %v885 = vld [vmem:[%s877 + $0x50] sm:$0xff]
        %v886 = vld [vmem:[%s877 + $0x60] sm:$0xff]
        %v887 = vld [vmem:[%s877 + $0x68] sm:$0xff]
        %v888 = vld [vmem:[%s877 + $0x78] sm:$0xff]
        %v889 = vld [vmem:[%s877 + $0x80] sm:$0xff]
        %v890 = vld [vmem:[%s877 + $0x90] sm:$0xff]
        %v891 = vld [vmem:[%s877 + $0x98] sm:$0xff]
        %v892 = vld [vmem:[%s877 + $0xa8] sm:$0xff]
        %v893 = vld [vmem:[%s877 + $0xb0] sm:$0xff]
        %v894 = vld [vmem:[%s877 + $0xc0] sm:$0xff]
        %v895 = vld [vmem:[%s877 + $0xc8] sm:$0xff]
        %v896 = vld [vmem:[%s877 + $0xd8] sm:$0xff]
        %v897 = vld [vmem:[%s877 + $0xe0] sm:$0xff]
        %v898 = vld [vmem:[%s877 + $0xf0] sm:$0xff]
        %v899 = vld [vmem:[%s877 + $0xf8] sm:$0xff]
        %v900 = vld [vmem:[%s877 + $0x108] sm:$0xff]
        %v901 = vld [vmem:[%s877 + $0x110] sm:$0xff]
        %v902 = vld [vmem:[%s877 + $0x120] sm:$0xff]
        %v903 = vld [vmem:[%s877 + $0x128] sm:$0xff]
        %v904 = vld [vmem:[%s877 + $0x138] sm:$0xff]
        %v905 = vld [vmem:[%s877 + $0x140] sm:$0xff]
        %v906 = vld [vmem:[%s877 + $0x150] sm:$0xff]
        %v907 = vld [vmem:[%s877 + $0x158] sm:$0xff]
        %v908 = vld [vmem:[%s877 + $0x168] sm:$0xff]
        %v909 = vld [vmem:[%s877 + $0x170] sm:$0xff]
        %v910 = vpack.c.bf16 %v879, %v878
        %v911 = vpack.c.bf16 %v881, %v880
        %v912 = vpack.c.bf16 %v883, %v882
        %v913 = vpack.c.bf16 %v885, %v884
        %v914 = vpack.c.bf16 %v887, %v886
        %v915 = vpack.c.bf16 %v889, %v888
        %v916 = vpack.c.bf16 %v891, %v890
        %v917 = vpack.c.bf16 %v893, %v892
        %v918 = vpack.c.bf16 %v895, %v894
        %v919 = vpack.c.bf16 %v897, %v896
        %v920 = vpack.c.bf16 %v899, %v898
        %v921 = vpack.c.bf16 %v901, %v900
        %v922 = vpack.c.bf16 %v903, %v902
        %v923 = vpack.c.bf16 %v905, %v904
        %v924 = vpack.c.bf16 %v907, %v906
        %v925 = vpack.c.bf16 %v909, %v908
        %v942 = vunpack.c.l.b16 %v910
        %v943 = vunpack.c.h.b16 %v910
        %v944 = vunpack.c.l.b16 %v911
        %v945 = vunpack.c.h.b16 %v911
        %v946 = vunpack.c.l.b16 %v912
        %v947 = vunpack.c.h.b16 %v912
        %v948 = vunpack.c.l.b16 %v913
        %v949 = vunpack.c.h.b16 %v913
        %v950 = vunpack.c.l.b16 %v914
        %v951 = vunpack.c.h.b16 %v914
        %v952 = vunpack.c.l.b16 %v915
        %v953 = vunpack.c.h.b16 %v915
        %v954 = vunpack.c.l.b16 %v916
        %v955 = vunpack.c.h.b16 %v916
        %v956 = vunpack.c.l.b16 %v917
        %v957 = vunpack.c.h.b16 %v917
        %v958 = vunpack.c.l.b16 %v918
        %v959 = vunpack.c.h.b16 %v918
        %v960 = vunpack.c.l.b16 %v919
        %v961 = vunpack.c.h.b16 %v919
        %v962 = vunpack.c.l.b16 %v920
        %v963 = vunpack.c.h.b16 %v920
        %v964 = vunpack.c.l.b16 %v921
        %v965 = vunpack.c.h.b16 %v921
        %v966 = vunpack.c.l.b16 %v922
        %v967 = vunpack.c.h.b16 %v922
        %v968 = vunpack.c.l.b16 %v923
        %v969 = vunpack.c.h.b16 %v923
        %v970 = vunpack.c.l.b16 %v924
        %v971 = vunpack.c.h.b16 %v924
        %v972 = vunpack.c.l.b16 %v925
        %v973 = vunpack.c.h.b16 %v925
        %v974 = vpack.c.b16 %v942, %v942
        %v975 = vpack.c.b16 %v943, %v943
        %v976 = vpack.c.b16 %v944, %v944
        %v977 = vpack.c.b16 %v945, %v945
        %v978 = vpack.c.b16 %v946, %v946
        %v979 = vpack.c.b16 %v947, %v947
        %v980 = vpack.c.b16 %v948, %v948
        %v981 = vpack.c.b16 %v949, %v949
        %v982 = vpack.c.b16 %v950, %v950
        %v983 = vpack.c.b16 %v951, %v951
        %v984 = vpack.c.b16 %v952, %v952
        %v985 = vpack.c.b16 %v953, %v953
        %v986 = vpack.c.b16 %v954, %v954
        %v987 = vpack.c.b16 %v955, %v955
        %v988 = vpack.c.b16 %v956, %v956
        %v989 = vpack.c.b16 %v957, %v957
        %v990 = vpack.c.b16 %v958, %v958
        %v991 = vpack.c.b16 %v959, %v959
        %v992 = vpack.c.b16 %v960, %v960
        %v993 = vpack.c.b16 %v961, %v961
        %v994 = vpack.c.b16 %v962, %v962
        %v995 = vpack.c.b16 %v963, %v963
        %v996 = vpack.c.b16 %v964, %v964
        %v997 = vpack.c.b16 %v965, %v965
        %v998 = vpack.c.b16 %v966, %v966
        %v999 = vpack.c.b16 %v967, %v967
        %v1000 = vpack.c.b16 %v968, %v968
        %v1001 = vpack.c.b16 %v969, %v969
        %v1002 = vpack.c.b16 %v970, %v970
        %v1003 = vpack.c.b16 %v971, %v971
        %v1004 = vpack.c.b16 %v972, %v972
        %v1005 = vpack.c.b16 %v973, %v973
        %1006 = vrot.lane.b32.xlu0 %v974, 9
        %v1007 = vpop.permute.xlu0 %1006
        %1008 = vrot.lane.b32.xlu0 %v975, 9
        %v1009 = vpop.permute.xlu0 %1008
        %1010 = vrot.lane.b32.xlu0 %v976, 9
        %v1011 = vpop.permute.xlu0 %1010
        %1012 = vrot.lane.b32.xlu0 %v977, 9
        %v1013 = vpop.permute.xlu0 %1012
        %1014 = vrot.lane.b32.xlu0 %v978, 9
        %v1015 = vpop.permute.xlu0 %1014
        %1016 = vrot.lane.b32.xlu0 %v979, 9
        %v1017 = vpop.permute.xlu0 %1016
        %1018 = vrot.lane.b32.xlu0 %v980, 9
        %v1019 = vpop.permute.xlu0 %1018
        %1020 = vrot.lane.b32.xlu0 %v981, 9
        %v1021 = vpop.permute.xlu0 %1020
        %1022 = vrot.lane.b32.xlu0 %v982, 9
        %v1023 = vpop.permute.xlu0 %1022
        %1024 = vrot.lane.b32.xlu0 %v983, 9
        %v1025 = vpop.permute.xlu0 %1024
        %1026 = vrot.lane.b32.xlu0 %v984, 9
        %v1027 = vpop.permute.xlu0 %1026
        %1028 = vrot.lane.b32.xlu0 %v985, 9
        %v1029 = vpop.permute.xlu0 %1028
        %1030 = vrot.lane.b32.xlu0 %v986, 9
        %v1031 = vpop.permute.xlu0 %1030
        %1032 = vrot.lane.b32.xlu0 %v987, 9
        %v1033 = vpop.permute.xlu0 %1032
        %1034 = vrot.lane.b32.xlu0 %v988, 9
        %v1035 = vpop.permute.xlu0 %1034
        %1036 = vrot.lane.b32.xlu0 %v989, 9
        %v1037 = vpop.permute.xlu0 %1036
        %1038 = vrot.lane.b32.xlu0 %v990, 9
        %v1039 = vpop.permute.xlu0 %1038
        %1040 = vrot.lane.b32.xlu0 %v991, 9
        %v1041 = vpop.permute.xlu0 %1040
        %1042 = vrot.lane.b32.xlu0 %v992, 9
        %v1043 = vpop.permute.xlu0 %1042
        %1044 = vrot.lane.b32.xlu0 %v993, 9
        %v1045 = vpop.permute.xlu0 %1044
        %1046 = vrot.lane.b32.xlu0 %v994, 9
        %v1047 = vpop.permute.xlu0 %1046
        %1048 = vrot.lane.b32.xlu0 %v995, 9
        %v1049 = vpop.permute.xlu0 %1048
        %1050 = vrot.lane.b32.xlu0 %v996, 9
        %v1051 = vpop.permute.xlu0 %1050
        %1052 = vrot.lane.b32.xlu0 %v997, 9
        %v1053 = vpop.permute.xlu0 %1052
        %1054 = vrot.lane.b32.xlu0 %v998, 9
        %v1055 = vpop.permute.xlu0 %1054
        %1056 = vrot.lane.b32.xlu0 %v999, 9
        %v1057 = vpop.permute.xlu0 %1056
        %1058 = vrot.lane.b32.xlu0 %v1000, 9
        %v1059 = vpop.permute.xlu0 %1058
        %1060 = vrot.lane.b32.xlu0 %v1001, 9
        %v1061 = vpop.permute.xlu0 %1060
        %1062 = vrot.lane.b32.xlu0 %v1002, 9
        %v1063 = vpop.permute.xlu0 %1062
        %1064 = vrot.lane.b32.xlu0 %v1003, 9
        %v1065 = vpop.permute.xlu0 %1064
        %1066 = vrot.lane.b32.xlu0 %v1004, 9
        %v1067 = vpop.permute.xlu0 %1066
        %1068 = vrot.lane.b32.xlu0 %v1005, 9
        %v1069 = vpop.permute.xlu0 %1068
        %vm1102 = vcmask 93256
        %1103 = vst.msk [vmem:[#allocation3] sm:$0xf] %vm1102, %v1007
        %1104 = vst.msk [vmem:[#allocation3 + $0x4] sm:$0xf] %vm1102, %v1009
        %1105 = vst.msk [vmem:[#allocation3 + $0x8] sm:$0xf] %vm1102, %v1011
        %1106 = vst.msk [vmem:[#allocation3 + $0xc] sm:$0xf] %vm1102, %v1013
        %1107 = vst.msk [vmem:[#allocation3 + $0x10] sm:$0xf] %vm1102, %v1015
        %1108 = vst.msk [vmem:[#allocation3 + $0x14] sm:$0xf] %vm1102, %v1017
        %1109 = vst.msk [vmem:[#allocation3 + $0x18] sm:$0xf] %vm1102, %v1019
        %1110 = vst.msk [vmem:[#allocation3 + $0x1c] sm:$0xf] %vm1102, %v1021
        %1111 = vst.msk [vmem:[#allocation3 + $0x20] sm:$0xf] %vm1102, %v1023
        %1112 = vst.msk [vmem:[#allocation3 + $0x24] sm:$0xf] %vm1102, %v1025
        %1113 = vst.msk [vmem:[#allocation3 + $0x28] sm:$0xf] %vm1102, %v1027
        %1114 = vst.msk [vmem:[#allocation3 + $0x2c] sm:$0xf] %vm1102, %v1029
        %1115 = vst.msk [vmem:[#allocation3 + $0x30] sm:$0xf] %vm1102, %v1031
        %1116 = vst.msk [vmem:[#allocation3 + $0x34] sm:$0xf] %vm1102, %v1033
        %1117 = vst.msk [vmem:[#allocation3 + $0x38] sm:$0xf] %vm1102, %v1035
        %1118 = vst.msk [vmem:[#allocation3 + $0x3c] sm:$0xf] %vm1102, %v1037
        %1119 = vst.msk [vmem:[#allocation3 + $0x40] sm:$0xf] %vm1102, %v1039
        %1120 = vst.msk [vmem:[#allocation3 + $0x44] sm:$0xf] %vm1102, %v1041
        %1121 = vst.msk [vmem:[#allocation3 + $0x48] sm:$0xf] %vm1102, %v1043
        %1122 = vst.msk [vmem:[#allocation3 + $0x4c] sm:$0xf] %vm1102, %v1045
        %1123 = vst.msk [vmem:[#allocation3 + $0x50] sm:$0xf] %vm1102, %v1047
        %1124 = vst.msk [vmem:[#allocation3 + $0x54] sm:$0xf] %vm1102, %v1049
        %1125 = vst.msk [vmem:[#allocation3 + $0x58] sm:$0xf] %vm1102, %v1051
        %1126 = vst.msk [vmem:[#allocation3 + $0x5c] sm:$0xf] %vm1102, %v1053
        %1127 = vst.msk [vmem:[#allocation3 + $0x60] sm:$0xf] %vm1102, %v1055
        %1128 = vst.msk [vmem:[#allocation3 + $0x64] sm:$0xf] %vm1102, %v1057
        %1129 = vst.msk [vmem:[#allocation3 + $0x68] sm:$0xf] %vm1102, %v1059
        %1130 = vst.msk [vmem:[#allocation3 + $0x6c] sm:$0xf] %vm1102, %v1061
        %1131 = vst.msk [vmem:[#allocation3 + $0x70] sm:$0xf] %vm1102, %v1063
        %1132 = vst.msk [vmem:[#allocation3 + $0x74] sm:$0xf] %vm1102, %v1065
        %1133 = vst.msk [vmem:[#allocation3 + $0x78] sm:$0xf] %vm1102, %v1067
        %1134 = vst.msk [vmem:[#allocation3 + $0x7c] sm:$0xf] %vm1102, %v1069
        %v1135 = vld [vmem:[%s877 + $0x1] sm:$0xff]
        %v1136 = vld [vmem:[%s877 + $0x9] sm:$0xff]
        %v1137 = vld [vmem:[%s877 + $0x19] sm:$0xff]
        %v1138 = vld [vmem:[%s877 + $0x21] sm:$0xff]
        %v1139 = vld [vmem:[%s877 + $0x31] sm:$0xff]
        %v1140 = vld [vmem:[%s877 + $0x39] sm:$0xff]
        %v1141 = vld [vmem:[%s877 + $0x49] sm:$0xff]
        %v1142 = vld [vmem:[%s877 + $0x51] sm:$0xff]
        %v1143 = vld [vmem:[%s877 + $0x61] sm:$0xff]
        %v1144 = vld [vmem:[%s877 + $0x69] sm:$0xff]
        %v1145 = vld [vmem:[%s877 + $0x79] sm:$0xff]
        %v1146 = vld [vmem:[%s877 + $0x81] sm:$0xff]
        %v1147 = vld [vmem:[%s877 + $0x91] sm:$0xff]
        %v1148 = vld [vmem:[%s877 + $0x99] sm:$0xff]
        %v1149 = vld [vmem:[%s877 + $0xa9] sm:$0xff]
        %v1150 = vld [vmem:[%s877 + $0xb1] sm:$0xff]
        %v1151 = vld [vmem:[%s877 + $0xc1] sm:$0xff]
        %v1152 = vld [vmem:[%s877 + $0xc9] sm:$0xff]
        %v1153 = vld [vmem:[%s877 + $0xd9] sm:$0xff]
        %v1154 = vld [vmem:[%s877 + $0xe1] sm:$0xff]
        %v1155 = vld [vmem:[%s877 + $0xf1] sm:$0xff]
        %v1156 = vld [vmem:[%s877 + $0xf9] sm:$0xff]
        %v1157 = vld [vmem:[%s877 + $0x109] sm:$0xff]
        %v1158 = vld [vmem:[%s877 + $0x111] sm:$0xff]
        %v1159 = vld [vmem:[%s877 + $0x121] sm:$0xff]
        %v1160 = vld [vmem:[%s877 + $0x129] sm:$0xff]
        %v1161 = vld [vmem:[%s877 + $0x139] sm:$0xff]
        %v1162 = vld [vmem:[%s877 + $0x141] sm:$0xff]
        %v1163 = vld [vmem:[%s877 + $0x151] sm:$0xff]
        %v1164 = vld [vmem:[%s877 + $0x159] sm:$0xff]
        %v1165 = vld [vmem:[%s877 + $0x169] sm:$0xff]
        %v1166 = vld [vmem:[%s877 + $0x171] sm:$0xff]
        %v1167 = vpack.c.bf16 %v1136, %v1135
        %v1168 = vpack.c.bf16 %v1138, %v1137
        %v1169 = vpack.c.bf16 %v1140, %v1139
        %v1170 = vpack.c.bf16 %v1142, %v1141
        %v1171 = vpack.c.bf16 %v1144, %v1143
        %v1172 = vpack.c.bf16 %v1146, %v1145
        %v1173 = vpack.c.bf16 %v1148, %v1147
        %v1174 = vpack.c.bf16 %v1150, %v1149
        %v1175 = vpack.c.bf16 %v1152, %v1151
        %v1176 = vpack.c.bf16 %v1154, %v1153
        %v1177 = vpack.c.bf16 %v1156, %v1155
        %v1178 = vpack.c.bf16 %v1158, %v1157
        %v1179 = vpack.c.bf16 %v1160, %v1159
        %v1180 = vpack.c.bf16 %v1162, %v1161
        %v1181 = vpack.c.bf16 %v1164, %v1163
        %v1182 = vpack.c.bf16 %v1166, %v1165
        %v1199 = vunpack.c.l.b16 %v1167
        %v1200 = vunpack.c.h.b16 %v1167
        %v1201 = vunpack.c.l.b16 %v1168
        %v1202 = vunpack.c.h.b16 %v1168
        %v1203 = vunpack.c.l.b16 %v1169
        %v1204 = vunpack.c.h.b16 %v1169
        %v1205 = vunpack.c.l.b16 %v1170
        %v1206 = vunpack.c.h.b16 %v1170
        %v1207 = vunpack.c.l.b16 %v1171
        %v1208 = vunpack.c.h.b16 %v1171
        %v1209 = vunpack.c.l.b16 %v1172
        %v1210 = vunpack.c.h.b16 %v1172
        %v1211 = vunpack.c.l.b16 %v1173
        %v1212 = vunpack.c.h.b16 %v1173
        %v1213 = vunpack.c.l.b16 %v1174
        %v1214 = vunpack.c.h.b16 %v1174
        %v1215 = vunpack.c.l.b16 %v1175
        %v1216 = vunpack.c.h.b16 %v1175
        %v1217 = vunpack.c.l.b16 %v1176
        %v1218 = vunpack.c.h.b16 %v1176
        %v1219 = vunpack.c.l.b16 %v1177
        %v1220 = vunpack.c.h.b16 %v1177
        %v1221 = vunpack.c.l.b16 %v1178
        %v1222 = vunpack.c.h.b16 %v1178
        %v1223 = vunpack.c.l.b16 %v1179
        %v1224 = vunpack.c.h.b16 %v1179
        %v1225 = vunpack.c.l.b16 %v1180
        %v1226 = vunpack.c.h.b16 %v1180
        %v1227 = vunpack.c.l.b16 %v1181
        %v1228 = vunpack.c.h.b16 %v1181
        %v1229 = vunpack.c.l.b16 %v1182
        %v1230 = vunpack.c.h.b16 %v1182
        %v1231 = vpack.c.b16 %v1199, %v1199
        %v1232 = vpack.c.b16 %v1200, %v1200
        %v1233 = vpack.c.b16 %v1201, %v1201
        %v1234 = vpack.c.b16 %v1202, %v1202
        %v1235 = vpack.c.b16 %v1203, %v1203
        %v1236 = vpack.c.b16 %v1204, %v1204
        %v1237 = vpack.c.b16 %v1205, %v1205
        %v1238 = vpack.c.b16 %v1206, %v1206
        %v1239 = vpack.c.b16 %v1207, %v1207
        %v1240 = vpack.c.b16 %v1208, %v1208
        %v1241 = vpack.c.b16 %v1209, %v1209
        %v1242 = vpack.c.b16 %v1210, %v1210
        %v1243 = vpack.c.b16 %v1211, %v1211
        %v1244 = vpack.c.b16 %v1212, %v1212
        %v1245 = vpack.c.b16 %v1213, %v1213
        %v1246 = vpack.c.b16 %v1214, %v1214
        %v1247 = vpack.c.b16 %v1215, %v1215
        %v1248 = vpack.c.b16 %v1216, %v1216
        %v1249 = vpack.c.b16 %v1217, %v1217
        %v1250 = vpack.c.b16 %v1218, %v1218
        %v1251 = vpack.c.b16 %v1219, %v1219
        %v1252 = vpack.c.b16 %v1220, %v1220
        %v1253 = vpack.c.b16 %v1221, %v1221
        %v1254 = vpack.c.b16 %v1222, %v1222
        %v1255 = vpack.c.b16 %v1223, %v1223
        %v1256 = vpack.c.b16 %v1224, %v1224
        %v1257 = vpack.c.b16 %v1225, %v1225
        %v1258 = vpack.c.b16 %v1226, %v1226
        %v1259 = vpack.c.b16 %v1227, %v1227
        %v1260 = vpack.c.b16 %v1228, %v1228
        %v1261 = vpack.c.b16 %v1229, %v1229
        %v1262 = vpack.c.b16 %v1230, %v1230
        %1263 = vrot.lane.b32.xlu0 %v1231, 12
        %v1264 = vpop.permute.xlu0 %1263
        %1265 = vrot.lane.b32.xlu0 %v1232, 12
        %v1266 = vpop.permute.xlu0 %1265
        %1267 = vrot.lane.b32.xlu0 %v1233, 12
        %v1268 = vpop.permute.xlu0 %1267
        %1269 = vrot.lane.b32.xlu0 %v1234, 12
        %v1270 = vpop.permute.xlu0 %1269
        %1271 = vrot.lane.b32.xlu0 %v1235, 12
        %v1272 = vpop.permute.xlu0 %1271
        %1273 = vrot.lane.b32.xlu0 %v1236, 12
        %v1274 = vpop.permute.xlu0 %1273
        %1275 = vrot.lane.b32.xlu0 %v1237, 12
        %v1276 = vpop.permute.xlu0 %1275
        %1277 = vrot.lane.b32.xlu0 %v1238, 12
        %v1278 = vpop.permute.xlu0 %1277
        %1279 = vrot.lane.b32.xlu0 %v1239, 12
        %v1280 = vpop.permute.xlu0 %1279
        %1281 = vrot.lane.b32.xlu0 %v1240, 12
        %v1282 = vpop.permute.xlu0 %1281
        %1283 = vrot.lane.b32.xlu0 %v1241, 12
        %v1284 = vpop.permute.xlu0 %1283
        %1285 = vrot.lane.b32.xlu0 %v1242, 12
        %v1286 = vpop.permute.xlu0 %1285
        %1287 = vrot.lane.b32.xlu0 %v1243, 12
        %v1288 = vpop.permute.xlu0 %1287
        %1289 = vrot.lane.b32.xlu0 %v1244, 12
        %v1290 = vpop.permute.xlu0 %1289
        %1291 = vrot.lane.b32.xlu0 %v1245, 12
        %v1292 = vpop.permute.xlu0 %1291
        %1293 = vrot.lane.b32.xlu0 %v1246, 12
        %v1294 = vpop.permute.xlu0 %1293
        %1295 = vrot.lane.b32.xlu0 %v1247, 12
        %v1296 = vpop.permute.xlu0 %1295
        %1297 = vrot.lane.b32.xlu0 %v1248, 12
        %v1298 = vpop.permute.xlu0 %1297
        %1299 = vrot.lane.b32.xlu0 %v1249, 12
        %v1300 = vpop.permute.xlu0 %1299
        %1301 = vrot.lane.b32.xlu0 %v1250, 12
        %v1302 = vpop.permute.xlu0 %1301
        %1303 = vrot.lane.b32.xlu0 %v1251, 12
        %v1304 = vpop.permute.xlu0 %1303
        %1305 = vrot.lane.b32.xlu0 %v1252, 12
        %v1306 = vpop.permute.xlu0 %1305
        %1307 = vrot.lane.b32.xlu0 %v1253, 12
        %v1308 = vpop.permute.xlu0 %1307
        %1309 = vrot.lane.b32.xlu0 %v1254, 12
        %v1310 = vpop.permute.xlu0 %1309
        %1311 = vrot.lane.b32.xlu0 %v1255, 12
        %v1312 = vpop.permute.xlu0 %1311
        %1313 = vrot.lane.b32.xlu0 %v1256, 12
        %v1314 = vpop.permute.xlu0 %1313
        %1315 = vrot.lane.b32.xlu0 %v1257, 12
        %v1316 = vpop.permute.xlu0 %1315
        %1317 = vrot.lane.b32.xlu0 %v1258, 12
        %v1318 = vpop.permute.xlu0 %1317
        %1319 = vrot.lane.b32.xlu0 %v1259, 12
        %v1320 = vpop.permute.xlu0 %1319
        %1321 = vrot.lane.b32.xlu0 %v1260, 12
        %v1322 = vpop.permute.xlu0 %1321
        %1323 = vrot.lane.b32.xlu0 %v1261, 12
        %v1324 = vpop.permute.xlu0 %1323
        %1325 = vrot.lane.b32.xlu0 %v1262, 12
        %v1326 = vpop.permute.xlu0 %1325
        %vm1359 = vcmask 117856
        %1360 = vst.msk [vmem:[#allocation3] sm:$0xf] %vm1359, %v1264
        %1361 = vst.msk [vmem:[#allocation3 + $0x4] sm:$0xf] %vm1359, %v1266
        %1362 = vst.msk [vmem:[#allocation3 + $0x8] sm:$0xf] %vm1359, %v1268
        %1363 = vst.msk [vmem:[#allocation3 + $0xc] sm:$0xf] %vm1359, %v1270
        %1364 = vst.msk [vmem:[#allocation3 + $0x10] sm:$0xf] %vm1359, %v1272
        %1365 = vst.msk [vmem:[#allocation3 + $0x14] sm:$0xf] %vm1359, %v1274
        %1366 = vst.msk [vmem:[#allocation3 + $0x18] sm:$0xf] %vm1359, %v1276
        %1367 = vst.msk [vmem:[#allocation3 + $0x1c] sm:$0xf] %vm1359, %v1278
        %1368 = vst.msk [vmem:[#allocation3 + $0x20] sm:$0xf] %vm1359, %v1280
        %1369 = vst.msk [vmem:[#allocation3 + $0x24] sm:$0xf] %vm1359, %v1282
        %1370 = vst.msk [vmem:[#allocation3 + $0x28] sm:$0xf] %vm1359, %v1284
        %1371 = vst.msk [vmem:[#allocation3 + $0x2c] sm:$0xf] %vm1359, %v1286
        %1372 = vst.msk [vmem:[#allocation3 + $0x30] sm:$0xf] %vm1359, %v1288
        %1373 = vst.msk [vmem:[#allocation3 + $0x34] sm:$0xf] %vm1359, %v1290
        %1374 = vst.msk [vmem:[#allocation3 + $0x38] sm:$0xf] %vm1359, %v1292
        %1375 = vst.msk [vmem:[#allocation3 + $0x3c] sm:$0xf] %vm1359, %v1294
        %1376 = vst.msk [vmem:[#allocation3 + $0x40] sm:$0xf] %vm1359, %v1296
        %1377 = vst.msk [vmem:[#allocation3 + $0x44] sm:$0xf] %vm1359, %v1298
        %1378 = vst.msk [vmem:[#allocation3 + $0x48] sm:$0xf] %vm1359, %v1300
        %1379 = vst.msk [vmem:[#allocation3 + $0x4c] sm:$0xf] %vm1359, %v1302
        %1380 = vst.msk [vmem:[#allocation3 + $0x50] sm:$0xf] %vm1359, %v1304
        %1381 = vst.msk [vmem:[#allocation3 + $0x54] sm:$0xf] %vm1359, %v1306
        %1382 = vst.msk [vmem:[#allocation3 + $0x58] sm:$0xf] %vm1359, %v1308
        %1383 = vst.msk [vmem:[#allocation3 + $0x5c] sm:$0xf] %vm1359, %v1310
        %1384 = vst.msk [vmem:[#allocation3 + $0x60] sm:$0xf] %vm1359, %v1312
        %1385 = vst.msk [vmem:[#allocation3 + $0x64] sm:$0xf] %vm1359, %v1314
        %1386 = vst.msk [vmem:[#allocation3 + $0x68] sm:$0xf] %vm1359, %v1316
        %1387 = vst.msk [vmem:[#allocation3 + $0x6c] sm:$0xf] %vm1359, %v1318
        %1388 = vst.msk [vmem:[#allocation3 + $0x70] sm:$0xf] %vm1359, %v1320
        %1389 = vst.msk [vmem:[#allocation3 + $0x74] sm:$0xf] %vm1359, %v1322
        %1390 = vst.msk [vmem:[#allocation3 + $0x78] sm:$0xf] %vm1359, %v1324
        %1391 = vst.msk [vmem:[#allocation3 + $0x7c] sm:$0xf] %vm1359, %v1326
        %v1392 = vld [vmem:[%s877 + $0x2] sm:$0xff]
        %v1393 = vld [vmem:[%s877 + $0xa] sm:$0xff]
        %v1394 = vld [vmem:[%s877 + $0x1a] sm:$0xff]
        %v1395 = vld [vmem:[%s877 + $0x22] sm:$0xff]
        %v1396 = vld [vmem:[%s877 + $0x32] sm:$0xff]
        %v1397 = vld [vmem:[%s877 + $0x3a] sm:$0xff]
        %v1398 = vld [vmem:[%s877 + $0x4a] sm:$0xff]
        %v1399 = vld [vmem:[%s877 + $0x52] sm:$0xff]
        %v1400 = vld [vmem:[%s877 + $0x62] sm:$0xff]
        %v1401 = vld [vmem:[%s877 + $0x6a] sm:$0xff]
        %v1402 = vld [vmem:[%s877 + $0x7a] sm:$0xff]
        %v1403 = vld [vmem:[%s877 + $0x82] sm:$0xff]
        %v1404 = vld [vmem:[%s877 + $0x92] sm:$0xff]
        %v1405 = vld [vmem:[%s877 + $0x9a] sm:$0xff]
        %v1406 = vld [vmem:[%s877 + $0xaa] sm:$0xff]
        %v1407 = vld [vmem:[%s877 + $0xb2] sm:$0xff]
        %v1408 = vld [vmem:[%s877 + $0xc2] sm:$0xff]
        %v1409 = vld [vmem:[%s877 + $0xca] sm:$0xff]
        %v1410 = vld [vmem:[%s877 + $0xda] sm:$0xff]
        %v1411 = vld [vmem:[%s877 + $0xe2] sm:$0xff]
        %v1412 = vld [vmem:[%s877 + $0xf2] sm:$0xff]
        %v1413 = vld [vmem:[%s877 + $0xfa] sm:$0xff]
        %v1414 = vld [vmem:[%s877 + $0x10a] sm:$0xff]
        %v1415 = vld [vmem:[%s877 + $0x112] sm:$0xff]
        %v1416 = vld [vmem:[%s877 + $0x122] sm:$0xff]
        %v1417 = vld [vmem:[%s877 + $0x12a] sm:$0xff]
        %v1418 = vld [vmem:[%s877 + $0x13a] sm:$0xff]
        %v1419 = vld [vmem:[%s877 + $0x142] sm:$0xff]
        %v1420 = vld [vmem:[%s877 + $0x152] sm:$0xff]
        %v1421 = vld [vmem:[%s877 + $0x15a] sm:$0xff]
        %v1422 = vld [vmem:[%s877 + $0x16a] sm:$0xff]
        %v1423 = vld [vmem:[%s877 + $0x172] sm:$0xff]
        %v1424 = vpack.c.bf16 %v1393, %v1392
        %v1425 = vpack.c.bf16 %v1395, %v1394
        %v1426 = vpack.c.bf16 %v1397, %v1396
        %v1427 = vpack.c.bf16 %v1399, %v1398
        %v1428 = vpack.c.bf16 %v1401, %v1400
        %v1429 = vpack.c.bf16 %v1403, %v1402
        %v1430 = vpack.c.bf16 %v1405, %v1404
        %v1431 = vpack.c.bf16 %v1407, %v1406
        %v1432 = vpack.c.bf16 %v1409, %v1408
        %v1433 = vpack.c.bf16 %v1411, %v1410
        %v1434 = vpack.c.bf16 %v1413, %v1412
        %v1435 = vpack.c.bf16 %v1415, %v1414
        %v1436 = vpack.c.bf16 %v1417, %v1416
        %v1437 = vpack.c.bf16 %v1419, %v1418
        %v1438 = vpack.c.bf16 %v1421, %v1420
        %v1439 = vpack.c.bf16 %v1423, %v1422
        %v1456 = vunpack.c.l.b16 %v1424
        %v1457 = vunpack.c.h.b16 %v1424
        %v1458 = vunpack.c.l.b16 %v1425
        %v1459 = vunpack.c.h.b16 %v1425
        %v1460 = vunpack.c.l.b16 %v1426
        %v1461 = vunpack.c.h.b16 %v1426
        %v1462 = vunpack.c.l.b16 %v1427
        %v1463 = vunpack.c.h.b16 %v1427
        %v1464 = vunpack.c.l.b16 %v1428
        %v1465 = vunpack.c.h.b16 %v1428
        %v1466 = vunpack.c.l.b16 %v1429
        %v1467 = vunpack.c.h.b16 %v1429
        %v1468 = vunpack.c.l.b16 %v1430
        %v1469 = vunpack.c.h.b16 %v1430
        %v1470 = vunpack.c.l.b16 %v1431
        %v1471 = vunpack.c.h.b16 %v1431
        %v1472 = vunpack.c.l.b16 %v1432
        %v1473 = vunpack.c.h.b16 %v1432
        %v1474 = vunpack.c.l.b16 %v1433
        %v1475 = vunpack.c.h.b16 %v1433
        %v1476 = vunpack.c.l.b16 %v1434
        %v1477 = vunpack.c.h.b16 %v1434
        %v1478 = vunpack.c.l.b16 %v1435
        %v1479 = vunpack.c.h.b16 %v1435
        %v1480 = vunpack.c.l.b16 %v1436
        %v1481 = vunpack.c.h.b16 %v1436
        %v1482 = vunpack.c.l.b16 %v1437
        %v1483 = vunpack.c.h.b16 %v1437
        %v1484 = vunpack.c.l.b16 %v1438
        %v1485 = vunpack.c.h.b16 %v1438
        %v1486 = vunpack.c.l.b16 %v1439
        %v1487 = vunpack.c.h.b16 %v1439
        %v1488 = vpack.c.b16 %v1456, %v1456
        %v1489 = vpack.c.b16 %v1457, %v1457
        %v1490 = vpack.c.b16 %v1458, %v1458
        %v1491 = vpack.c.b16 %v1459, %v1459
        %v1492 = vpack.c.b16 %v1460, %v1460
        %v1493 = vpack.c.b16 %v1461, %v1461
        %v1494 = vpack.c.b16 %v1462, %v1462
        %v1495 = vpack.c.b16 %v1463, %v1463
        %v1496 = vpack.c.b16 %v1464, %v1464
        %v1497 = vpack.c.b16 %v1465, %v1465
        %v1498 = vpack.c.b16 %v1466, %v1466
        %v1499 = vpack.c.b16 %v1467, %v1467
        %v1500 = vpack.c.b16 %v1468, %v1468
        %v1501 = vpack.c.b16 %v1469, %v1469
        %v1502 = vpack.c.b16 %v1470, %v1470
        %v1503 = vpack.c.b16 %v1471, %v1471
        %v1504 = vpack.c.b16 %v1472, %v1472
        %v1505 = vpack.c.b16 %v1473, %v1473
        %v1506 = vpack.c.b16 %v1474, %v1474
        %v1507 = vpack.c.b16 %v1475, %v1475
        %v1508 = vpack.c.b16 %v1476, %v1476
        %v1509 = vpack.c.b16 %v1477, %v1477
        %v1510 = vpack.c.b16 %v1478, %v1478
        %v1511 = vpack.c.b16 %v1479, %v1479
        %v1512 = vpack.c.b16 %v1480, %v1480
        %v1513 = vpack.c.b16 %v1481, %v1481
        %v1514 = vpack.c.b16 %v1482, %v1482
        %v1515 = vpack.c.b16 %v1483, %v1483
        %v1516 = vpack.c.b16 %v1484, %v1484
        %v1517 = vpack.c.b16 %v1485, %v1485
        %v1518 = vpack.c.b16 %v1486, %v1486
        %v1519 = vpack.c.b16 %v1487, %v1487
        %1520 = vrot.lane.b32.xlu0 %v1488, 15
        %v1521 = vpop.permute.xlu0 %1520
        %1522 = vrot.lane.b32.xlu0 %v1489, 15
        %v1523 = vpop.permute.xlu0 %1522
        %1524 = vrot.lane.b32.xlu0 %v1490, 15
        %v1525 = vpop.permute.xlu0 %1524
        %1526 = vrot.lane.b32.xlu0 %v1491, 15
        %v1527 = vpop.permute.xlu0 %1526
        %1528 = vrot.lane.b32.xlu0 %v1492, 15
        %v1529 = vpop.permute.xlu0 %1528
        %1530 = vrot.lane.b32.xlu0 %v1493, 15
        %v1531 = vpop.permute.xlu0 %1530
        %1532 = vrot.lane.b32.xlu0 %v1494, 15
        %v1533 = vpop.permute.xlu0 %1532
        %1534 = vrot.lane.b32.xlu0 %v1495, 15
        %v1535 = vpop.permute.xlu0 %1534
        %1536 = vrot.lane.b32.xlu0 %v1496, 15
        %v1537 = vpop.permute.xlu0 %1536
        %1538 = vrot.lane.b32.xlu0 %v1497, 15
        %v1539 = vpop.permute.xlu0 %1538
        %1540 = vrot.lane.b32.xlu0 %v1498, 15
        %v1541 = vpop.permute.xlu0 %1540
        %1542 = vrot.lane.b32.xlu0 %v1499, 15
        %v1543 = vpop.permute.xlu0 %1542
        %1544 = vrot.lane.b32.xlu0 %v1500, 15
        %v1545 = vpop.permute.xlu0 %1544
        %1546 = vrot.lane.b32.xlu0 %v1501, 15
        %v1547 = vpop.permute.xlu0 %1546
        %1548 = vrot.lane.b32.xlu0 %v1502, 15
        %v1549 = vpop.permute.xlu0 %1548
        %1550 = vrot.lane.b32.xlu0 %v1503, 15
        %v1551 = vpop.permute.xlu0 %1550
        %1552 = vrot.lane.b32.xlu0 %v1504, 15
        %v1553 = vpop.permute.xlu0 %1552
        %1554 = vrot.lane.b32.xlu0 %v1505, 15
        %v1555 = vpop.permute.xlu0 %1554
        %1556 = vrot.lane.b32.xlu0 %v1506, 15
        %v1557 = vpop.permute.xlu0 %1556
        %1558 = vrot.lane.b32.xlu0 %v1507, 15
        %v1559 = vpop.permute.xlu0 %1558
        %1560 = vrot.lane.b32.xlu0 %v1508, 15
        %v1561 = vpop.permute.xlu0 %1560
        %1562 = vrot.lane.b32.xlu0 %v1509, 15
        %v1563 = vpop.permute.xlu0 %1562
        %1564 = vrot.lane.b32.xlu0 %v1510, 15
        %v1565 = vpop.permute.xlu0 %1564
        %1566 = vrot.lane.b32.xlu0 %v1511, 15
        %v1567 = vpop.permute.xlu0 %1566
        %1568 = vrot.lane.b32.xlu0 %v1512, 15
        %v1569 = vpop.permute.xlu0 %1568
        %1570 = vrot.lane.b32.xlu0 %v1513, 15
        %v1571 = vpop.permute.xlu0 %1570
        %1572 = vrot.lane.b32.xlu0 %v1514, 15
        %v1573 = vpop.permute.xlu0 %1572
        %1574 = vrot.lane.b32.xlu0 %v1515, 15
        %v1575 = vpop.permute.xlu0 %1574
        %1576 = vrot.lane.b32.xlu0 %v1516, 15
        %v1577 = vpop.permute.xlu0 %1576
        %1578 = vrot.lane.b32.xlu0 %v1517, 15
        %v1579 = vpop.permute.xlu0 %1578
        %1580 = vrot.lane.b32.xlu0 %v1518, 15
        %v1581 = vpop.permute.xlu0 %1580
        %1582 = vrot.lane.b32.xlu0 %v1519, 15
        %v1583 = vpop.permute.xlu0 %1582
        %vm1616 = vcmask 142456
        %1617 = vst.msk [vmem:[#allocation3] sm:$0xf] %vm1616, %v1521
        %1618 = vst.msk [vmem:[#allocation3 + $0x4] sm:$0xf] %vm1616, %v1523
        %1619 = vst.msk [vmem:[#allocation3 + $0x8] sm:$0xf] %vm1616, %v1525
        %1620 = vst.msk [vmem:[#allocation3 + $0xc] sm:$0xf] %vm1616, %v1527
        %1621 = vst.msk [vmem:[#allocation3 + $0x10] sm:$0xf] %vm1616, %v1529
        %1622 = vst.msk [vmem:[#allocation3 + $0x14] sm:$0xf] %vm1616, %v1531
        %1623 = vst.msk [vmem:[#allocation3 + $0x18] sm:$0xf] %vm1616, %v1533
        %1624 = vst.msk [vmem:[#allocation3 + $0x1c] sm:$0xf] %vm1616, %v1535
        %1625 = vst.msk [vmem:[#allocation3 + $0x20] sm:$0xf] %vm1616, %v1537
        %1626 = vst.msk [vmem:[#allocation3 + $0x24] sm:$0xf] %vm1616, %v1539
        %1627 = vst.msk [vmem:[#allocation3 + $0x28] sm:$0xf] %vm1616, %v1541
        %1628 = vst.msk [vmem:[#allocation3 + $0x2c] sm:$0xf] %vm1616, %v1543
        %1629 = vst.msk [vmem:[#allocation3 + $0x30] sm:$0xf] %vm1616, %v1545
        %1630 = vst.msk [vmem:[#allocation3 + $0x34] sm:$0xf] %vm1616, %v1547
        %1631 = vst.msk [vmem:[#allocation3 + $0x38] sm:$0xf] %vm1616, %v1549
        %1632 = vst.msk [vmem:[#allocation3 + $0x3c] sm:$0xf] %vm1616, %v1551
        %1633 = vst.msk [vmem:[#allocation3 + $0x40] sm:$0xf] %vm1616, %v1553
        %1634 = vst.msk [vmem:[#allocation3 + $0x44] sm:$0xf] %vm1616, %v1555
        %1635 = vst.msk [vmem:[#allocation3 + $0x48] sm:$0xf] %vm1616, %v1557
        %1636 = vst.msk [vmem:[#allocation3 + $0x4c] sm:$0xf] %vm1616, %v1559
        %1637 = vst.msk [vmem:[#allocation3 + $0x50] sm:$0xf] %vm1616, %v1561
        %1638 = vst.msk [vmem:[#allocation3 + $0x54] sm:$0xf] %vm1616, %v1563
        %1639 = vst.msk [vmem:[#allocation3 + $0x58] sm:$0xf] %vm1616, %v1565
        %1640 = vst.msk [vmem:[#allocation3 + $0x5c] sm:$0xf] %vm1616, %v1567
        %1641 = vst.msk [vmem:[#allocation3 + $0x60] sm:$0xf] %vm1616, %v1569
        %1642 = vst.msk [vmem:[#allocation3 + $0x64] sm:$0xf] %vm1616, %v1571
        %1643 = vst.msk [vmem:[#allocation3 + $0x68] sm:$0xf] %vm1616, %v1573
        %1644 = vst.msk [vmem:[#allocation3 + $0x6c] sm:$0xf] %vm1616, %v1575
        %1645 = vst.msk [vmem:[#allocation3 + $0x70] sm:$0xf] %vm1616, %v1577
        %1646 = vst.msk [vmem:[#allocation3 + $0x74] sm:$0xf] %vm1616, %v1579
        %1647 = vst.msk [vmem:[#allocation3 + $0x78] sm:$0xf] %vm1616, %v1581
        %1648 = vst.msk [vmem:[#allocation3 + $0x7c] sm:$0xf] %vm1616, %v1583
        %s1649 = scalar_lea.vmem %s168, 48
        %v1650 = vld [vmem:[%s1649] sm:$0xff]
        %v1651 = vld [vmem:[%s1649 + $0x8] sm:$0xff]
        %v1652 = vld [vmem:[%s1649 + $0x18] sm:$0xff]
        %v1653 = vld [vmem:[%s1649 + $0x20] sm:$0xff]
        %v1654 = vld [vmem:[%s1649 + $0x30] sm:$0xff]
        %v1655 = vld [vmem:[%s1649 + $0x38] sm:$0xff]
        %v1656 = vld [vmem:[%s1649 + $0x48] sm:$0xff]
        %v1657 = vld [vmem:[%s1649 + $0x50] sm:$0xff]
        %v1658 = vld [vmem:[%s1649 + $0x60] sm:$0xff]
        %v1659 = vld [vmem:[%s1649 + $0x68] sm:$0xff]
        %v1660 = vld [vmem:[%s1649 + $0x78] sm:$0xff]
        %v1661 = vld [vmem:[%s1649 + $0x80] sm:$0xff]
        %v1662 = vld [vmem:[%s1649 + $0x90] sm:$0xff]
        %v1663 = vld [vmem:[%s1649 + $0x98] sm:$0xff]
        %v1664 = vld [vmem:[%s1649 + $0xa8] sm:$0xff]
        %v1665 = vld [vmem:[%s1649 + $0xb0] sm:$0xff]
        %v1666 = vld [vmem:[%s1649 + $0xc0] sm:$0xff]
        %v1667 = vld [vmem:[%s1649 + $0xc8] sm:$0xff]
        %v1668 = vld [vmem:[%s1649 + $0xd8] sm:$0xff]
        %v1669 = vld [vmem:[%s1649 + $0xe0] sm:$0xff]
        %v1670 = vld [vmem:[%s1649 + $0xf0] sm:$0xff]
        %v1671 = vld [vmem:[%s1649 + $0xf8] sm:$0xff]
        %v1672 = vld [vmem:[%s1649 + $0x108] sm:$0xff]
        %v1673 = vld [vmem:[%s1649 + $0x110] sm:$0xff]
        %v1674 = vld [vmem:[%s1649 + $0x120] sm:$0xff]
        %v1675 = vld [vmem:[%s1649 + $0x128] sm:$0xff]
        %v1676 = vld [vmem:[%s1649 + $0x138] sm:$0xff]
        %v1677 = vld [vmem:[%s1649 + $0x140] sm:$0xff]
        %v1678 = vld [vmem:[%s1649 + $0x150] sm:$0xff]
        %v1679 = vld [vmem:[%s1649 + $0x158] sm:$0xff]
        %v1680 = vld [vmem:[%s1649 + $0x168] sm:$0xff]
        %v1681 = vld [vmem:[%s1649 + $0x170] sm:$0xff]
        %v1682 = vpack.c.bf16 %v1651, %v1650
        %v1683 = vpack.c.bf16 %v1653, %v1652
        %v1684 = vpack.c.bf16 %v1655, %v1654
        %v1685 = vpack.c.bf16 %v1657, %v1656
        %v1686 = vpack.c.bf16 %v1659, %v1658
        %v1687 = vpack.c.bf16 %v1661, %v1660
        %v1688 = vpack.c.bf16 %v1663, %v1662
        %v1689 = vpack.c.bf16 %v1665, %v1664
        %v1690 = vpack.c.bf16 %v1667, %v1666
        %v1691 = vpack.c.bf16 %v1669, %v1668
        %v1692 = vpack.c.bf16 %v1671, %v1670
        %v1693 = vpack.c.bf16 %v1673, %v1672
        %v1694 = vpack.c.bf16 %v1675, %v1674
        %v1695 = vpack.c.bf16 %v1677, %v1676
        %v1696 = vpack.c.bf16 %v1679, %v1678
        %v1697 = vpack.c.bf16 %v1681, %v1680
        %v1714 = vunpack.c.l.b16 %v1682
        %v1715 = vunpack.c.h.b16 %v1682
        %v1716 = vunpack.c.l.b16 %v1683
        %v1717 = vunpack.c.h.b16 %v1683
        %v1718 = vunpack.c.l.b16 %v1684
        %v1719 = vunpack.c.h.b16 %v1684
        %v1720 = vunpack.c.l.b16 %v1685
        %v1721 = vunpack.c.h.b16 %v1685
        %v1722 = vunpack.c.l.b16 %v1686
        %v1723 = vunpack.c.h.b16 %v1686
        %v1724 = vunpack.c.l.b16 %v1687
        %v1725 = vunpack.c.h.b16 %v1687
        %v1726 = vunpack.c.l.b16 %v1688
        %v1727 = vunpack.c.h.b16 %v1688
        %v1728 = vunpack.c.l.b16 %v1689
        %v1729 = vunpack.c.h.b16 %v1689
        %v1730 = vunpack.c.l.b16 %v1690
        %v1731 = vunpack.c.h.b16 %v1690
        %v1732 = vunpack.c.l.b16 %v1691
        %v1733 = vunpack.c.h.b16 %v1691
        %v1734 = vunpack.c.l.b16 %v1692
        %v1735 = vunpack.c.h.b16 %v1692
        %v1736 = vunpack.c.l.b16 %v1693
        %v1737 = vunpack.c.h.b16 %v1693
        %v1738 = vunpack.c.l.b16 %v1694
        %v1739 = vunpack.c.h.b16 %v1694
        %v1740 = vunpack.c.l.b16 %v1695
        %v1741 = vunpack.c.h.b16 %v1695
        %v1742 = vunpack.c.l.b16 %v1696
        %v1743 = vunpack.c.h.b16 %v1696
        %v1744 = vunpack.c.l.b16 %v1697
        %v1745 = vunpack.c.h.b16 %v1697
        %v1746 = vpack.c.b16 %v1714, %v1714
        %v1747 = vpack.c.b16 %v1715, %v1715
        %v1748 = vpack.c.b16 %v1716, %v1716
        %v1749 = vpack.c.b16 %v1717, %v1717
        %v1750 = vpack.c.b16 %v1718, %v1718
        %v1751 = vpack.c.b16 %v1719, %v1719
        %v1752 = vpack.c.b16 %v1720, %v1720
        %v1753 = vpack.c.b16 %v1721, %v1721
        %v1754 = vpack.c.b16 %v1722, %v1722
        %v1755 = vpack.c.b16 %v1723, %v1723
        %v1756 = vpack.c.b16 %v1724, %v1724
        %v1757 = vpack.c.b16 %v1725, %v1725
        %v1758 = vpack.c.b16 %v1726, %v1726
        %v1759 = vpack.c.b16 %v1727, %v1727
        %v1760 = vpack.c.b16 %v1728, %v1728
        %v1761 = vpack.c.b16 %v1729, %v1729
        %v1762 = vpack.c.b16 %v1730, %v1730
        %v1763 = vpack.c.b16 %v1731, %v1731
        %v1764 = vpack.c.b16 %v1732, %v1732
        %v1765 = vpack.c.b16 %v1733, %v1733
        %v1766 = vpack.c.b16 %v1734, %v1734
        %v1767 = vpack.c.b16 %v1735, %v1735
        %v1768 = vpack.c.b16 %v1736, %v1736
        %v1769 = vpack.c.b16 %v1737, %v1737
        %v1770 = vpack.c.b16 %v1738, %v1738
        %v1771 = vpack.c.b16 %v1739, %v1739
        %v1772 = vpack.c.b16 %v1740, %v1740
        %v1773 = vpack.c.b16 %v1741, %v1741
        %v1774 = vpack.c.b16 %v1742, %v1742
        %v1775 = vpack.c.b16 %v1743, %v1743
        %v1776 = vpack.c.b16 %v1744, %v1744
        %v1777 = vpack.c.b16 %v1745, %v1745
        %1778 = vrot.lane.b32.xlu0 %v1746, 18
        %v1779 = vpop.permute.xlu0 %1778
        %1780 = vrot.lane.b32.xlu0 %v1747, 18
        %v1781 = vpop.permute.xlu0 %1780
        %1782 = vrot.lane.b32.xlu0 %v1748, 18
        %v1783 = vpop.permute.xlu0 %1782
        %1784 = vrot.lane.b32.xlu0 %v1749, 18
        %v1785 = vpop.permute.xlu0 %1784
        %1786 = vrot.lane.b32.xlu0 %v1750, 18
        %v1787 = vpop.permute.xlu0 %1786
        %1788 = vrot.lane.b32.xlu0 %v1751, 18
        %v1789 = vpop.permute.xlu0 %1788
        %1790 = vrot.lane.b32.xlu0 %v1752, 18
        %v1791 = vpop.permute.xlu0 %1790
        %1792 = vrot.lane.b32.xlu0 %v1753, 18
        %v1793 = vpop.permute.xlu0 %1792
        %1794 = vrot.lane.b32.xlu0 %v1754, 18
        %v1795 = vpop.permute.xlu0 %1794
        %1796 = vrot.lane.b32.xlu0 %v1755, 18
        %v1797 = vpop.permute.xlu0 %1796
        %1798 = vrot.lane.b32.xlu0 %v1756, 18
        %v1799 = vpop.permute.xlu0 %1798
        %1800 = vrot.lane.b32.xlu0 %v1757, 18
        %v1801 = vpop.permute.xlu0 %1800
        %1802 = vrot.lane.b32.xlu0 %v1758, 18
        %v1803 = vpop.permute.xlu0 %1802
        %1804 = vrot.lane.b32.xlu0 %v1759, 18
        %v1805 = vpop.permute.xlu0 %1804
        %1806 = vrot.lane.b32.xlu0 %v1760, 18
        %v1807 = vpop.permute.xlu0 %1806
        %1808 = vrot.lane.b32.xlu0 %v1761, 18
        %v1809 = vpop.permute.xlu0 %1808
        %1810 = vrot.lane.b32.xlu0 %v1762, 18
        %v1811 = vpop.permute.xlu0 %1810
        %1812 = vrot.lane.b32.xlu0 %v1763, 18
        %v1813 = vpop.permute.xlu0 %1812
        %1814 = vrot.lane.b32.xlu0 %v1764, 18
        %v1815 = vpop.permute.xlu0 %1814
        %1816 = vrot.lane.b32.xlu0 %v1765, 18
        %v1817 = vpop.permute.xlu0 %1816
        %1818 = vrot.lane.b32.xlu0 %v1766, 18
        %v1819 = vpop.permute.xlu0 %1818
        %1820 = vrot.lane.b32.xlu0 %v1767, 18
        %v1821 = vpop.permute.xlu0 %1820
        %1822 = vrot.lane.b32.xlu0 %v1768, 18
        %v1823 = vpop.permute.xlu0 %1822
        %1824 = vrot.lane.b32.xlu0 %v1769, 18
        %v1825 = vpop.permute.xlu0 %1824
        %1826 = vrot.lane.b32.xlu0 %v1770, 18
        %v1827 = vpop.permute.xlu0 %1826
        %1828 = vrot.lane.b32.xlu0 %v1771, 18
        %v1829 = vpop.permute.xlu0 %1828
        %1830 = vrot.lane.b32.xlu0 %v1772, 18
        %v1831 = vpop.permute.xlu0 %1830
        %1832 = vrot.lane.b32.xlu0 %v1773, 18
        %v1833 = vpop.permute.xlu0 %1832
        %1834 = vrot.lane.b32.xlu0 %v1774, 18
        %v1835 = vpop.permute.xlu0 %1834
        %1836 = vrot.lane.b32.xlu0 %v1775, 18
        %v1837 = vpop.permute.xlu0 %1836
        %1838 = vrot.lane.b32.xlu0 %v1776, 18
        %v1839 = vpop.permute.xlu0 %1838
        %1840 = vrot.lane.b32.xlu0 %v1777, 18
        %v1841 = vpop.permute.xlu0 %1840
        %vm1874 = vcmask 167056
        %1875 = vst.msk [vmem:[#allocation3] sm:$0xf] %vm1874, %v1779
        %1876 = vst.msk [vmem:[#allocation3 + $0x4] sm:$0xf] %vm1874, %v1781
        %1877 = vst.msk [vmem:[#allocation3 + $0x8] sm:$0xf] %vm1874, %v1783
        %1878 = vst.msk [vmem:[#allocation3 + $0xc] sm:$0xf] %vm1874, %v1785
        %1879 = vst.msk [vmem:[#allocation3 + $0x10] sm:$0xf] %vm1874, %v1787
        %1880 = vst.msk [vmem:[#allocation3 + $0x14] sm:$0xf] %vm1874, %v1789
        %1881 = vst.msk [vmem:[#allocation3 + $0x18] sm:$0xf] %vm1874, %v1791
        %1882 = vst.msk [vmem:[#allocation3 + $0x1c] sm:$0xf] %vm1874, %v1793
        %1883 = vst.msk [vmem:[#allocation3 + $0x20] sm:$0xf] %vm1874, %v1795
        %1884 = vst.msk [vmem:[#allocation3 + $0x24] sm:$0xf] %vm1874, %v1797
        %1885 = vst.msk [vmem:[#allocation3 + $0x28] sm:$0xf] %vm1874, %v1799
        %1886 = vst.msk [vmem:[#allocation3 + $0x2c] sm:$0xf] %vm1874, %v1801
        %1887 = vst.msk [vmem:[#allocation3 + $0x30] sm:$0xf] %vm1874, %v1803
        %1888 = vst.msk [vmem:[#allocation3 + $0x34] sm:$0xf] %vm1874, %v1805
        %1889 = vst.msk [vmem:[#allocation3 + $0x38] sm:$0xf] %vm1874, %v1807
        %1890 = vst.msk [vmem:[#allocation3 + $0x3c] sm:$0xf] %vm1874, %v1809
        %1891 = vst.msk [vmem:[#allocation3 + $0x40] sm:$0xf] %vm1874, %v1811
        %1892 = vst.msk [vmem:[#allocation3 + $0x44] sm:$0xf] %vm1874, %v1813
        %1893 = vst.msk [vmem:[#allocation3 + $0x48] sm:$0xf] %vm1874, %v1815
        %1894 = vst.msk [vmem:[#allocation3 + $0x4c] sm:$0xf] %vm1874, %v1817
        %1895 = vst.msk [vmem:[#allocation3 + $0x50] sm:$0xf] %vm1874, %v1819
        %1896 = vst.msk [vmem:[#allocation3 + $0x54] sm:$0xf] %vm1874, %v1821
        %1897 = vst.msk [vmem:[#allocation3 + $0x58] sm:$0xf] %vm1874, %v1823
        %1898 = vst.msk [vmem:[#allocation3 + $0x5c] sm:$0xf] %vm1874, %v1825
        %1899 = vst.msk [vmem:[#allocation3 + $0x60] sm:$0xf] %vm1874, %v1827
        %1900 = vst.msk [vmem:[#allocation3 + $0x64] sm:$0xf] %vm1874, %v1829
        %1901 = vst.msk [vmem:[#allocation3 + $0x68] sm:$0xf] %vm1874, %v1831
        %1902 = vst.msk [vmem:[#allocation3 + $0x6c] sm:$0xf] %vm1874, %v1833
        %1903 = vst.msk [vmem:[#allocation3 + $0x70] sm:$0xf] %vm1874, %v1835
        %1904 = vst.msk [vmem:[#allocation3 + $0x74] sm:$0xf] %vm1874, %v1837
        %1905 = vst.msk [vmem:[#allocation3 + $0x78] sm:$0xf] %vm1874, %v1839
        %1906 = vst.msk [vmem:[#allocation3 + $0x7c] sm:$0xf] %vm1874, %v1841
        %v1907 = vld [vmem:[%s1649 + $0x1] sm:$0xff]
        %v1908 = vld [vmem:[%s1649 + $0x9] sm:$0xff]
        %v1909 = vld [vmem:[%s1649 + $0x19] sm:$0xff]
        %v1910 = vld [vmem:[%s1649 + $0x21] sm:$0xff]
        %v1911 = vld [vmem:[%s1649 + $0x31] sm:$0xff]
        %v1912 = vld [vmem:[%s1649 + $0x39] sm:$0xff]
        %v1913 = vld [vmem:[%s1649 + $0x49] sm:$0xff]
        %v1914 = vld [vmem:[%s1649 + $0x51] sm:$0xff]
        %v1915 = vld [vmem:[%s1649 + $0x61] sm:$0xff]
        %v1916 = vld [vmem:[%s1649 + $0x69] sm:$0xff]
        %v1917 = vld [vmem:[%s1649 + $0x79] sm:$0xff]
        %v1918 = vld [vmem:[%s1649 + $0x81] sm:$0xff]
        %v1919 = vld [vmem:[%s1649 + $0x91] sm:$0xff]
        %v1920 = vld [vmem:[%s1649 + $0x99] sm:$0xff]
        %v1921 = vld [vmem:[%s1649 + $0xa9] sm:$0xff]
        %v1922 = vld [vmem:[%s1649 + $0xb1] sm:$0xff]
        %v1923 = vld [vmem:[%s1649 + $0xc1] sm:$0xff]
        %v1924 = vld [vmem:[%s1649 + $0xc9] sm:$0xff]
        %v1925 = vld [vmem:[%s1649 + $0xd9] sm:$0xff]
        %v1926 = vld [vmem:[%s1649 + $0xe1] sm:$0xff]
        %v1927 = vld [vmem:[%s1649 + $0xf1] sm:$0xff]
        %v1928 = vld [vmem:[%s1649 + $0xf9] sm:$0xff]
        %v1929 = vld [vmem:[%s1649 + $0x109] sm:$0xff]
        %v1930 = vld [vmem:[%s1649 + $0x111] sm:$0xff]
        %v1931 = vld [vmem:[%s1649 + $0x121] sm:$0xff]
        %v1932 = vld [vmem:[%s1649 + $0x129] sm:$0xff]
        %v1933 = vld [vmem:[%s1649 + $0x139] sm:$0xff]
        %v1934 = vld [vmem:[%s1649 + $0x141] sm:$0xff]
        %v1935 = vld [vmem:[%s1649 + $0x151] sm:$0xff]
        %v1936 = vld [vmem:[%s1649 + $0x159] sm:$0xff]
        %v1937 = vld [vmem:[%s1649 + $0x169] sm:$0xff]
        %v1938 = vld [vmem:[%s1649 + $0x171] sm:$0xff]
        %v1939 = vpack.c.bf16 %v1908, %v1907
        %v1940 = vpack.c.bf16 %v1910, %v1909
        %v1941 = vpack.c.bf16 %v1912, %v1911
        %v1942 = vpack.c.bf16 %v1914, %v1913
        %v1943 = vpack.c.bf16 %v1916, %v1915
        %v1944 = vpack.c.bf16 %v1918, %v1917
        %v1945 = vpack.c.bf16 %v1920, %v1919
        %v1946 = vpack.c.bf16 %v1922, %v1921
        %v1947 = vpack.c.bf16 %v1924, %v1923
        %v1948 = vpack.c.bf16 %v1926, %v1925
        %v1949 = vpack.c.bf16 %v1928, %v1927
        %v1950 = vpack.c.bf16 %v1930, %v1929
        %v1951 = vpack.c.bf16 %v1932, %v1931
        %v1952 = vpack.c.bf16 %v1934, %v1933
        %v1953 = vpack.c.bf16 %v1936, %v1935
        %v1954 = vpack.c.bf16 %v1938, %v1937
        %v1971 = vunpack.c.l.b16 %v1939
        %v1972 = vunpack.c.h.b16 %v1939
        %v1973 = vunpack.c.l.b16 %v1940
        %v1974 = vunpack.c.h.b16 %v1940
        %v1975 = vunpack.c.l.b16 %v1941
        %v1976 = vunpack.c.h.b16 %v1941
        %v1977 = vunpack.c.l.b16 %v1942
        %v1978 = vunpack.c.h.b16 %v1942
        %v1979 = vunpack.c.l.b16 %v1943
        %v1980 = vunpack.c.h.b16 %v1943
        %v1981 = vunpack.c.l.b16 %v1944
        %v1982 = vunpack.c.h.b16 %v1944
        %v1983 = vunpack.c.l.b16 %v1945
        %v1984 = vunpack.c.h.b16 %v1945
        %v1985 = vunpack.c.l.b16 %v1946
        %v1986 = vunpack.c.h.b16 %v1946
        %v1987 = vunpack.c.l.b16 %v1947
        %v1988 = vunpack.c.h.b16 %v1947
        %v1989 = vunpack.c.l.b16 %v1948
        %v1990 = vunpack.c.h.b16 %v1948
        %v1991 = vunpack.c.l.b16 %v1949
        %v1992 = vunpack.c.h.b16 %v1949
        %v1993 = vunpack.c.l.b16 %v1950
        %v1994 = vunpack.c.h.b16 %v1950
        %v1995 = vunpack.c.l.b16 %v1951
        %v1996 = vunpack.c.h.b16 %v1951
        %v1997 = vunpack.c.l.b16 %v1952
        %v1998 = vunpack.c.h.b16 %v1952
        %v1999 = vunpack.c.l.b16 %v1953
        %v2000 = vunpack.c.h.b16 %v1953
        %v2001 = vunpack.c.l.b16 %v1954
        %v2002 = vunpack.c.h.b16 %v1954
        %v2003 = vpack.c.b16 %v1971, %v1971
        %v2004 = vpack.c.b16 %v1972, %v1972
        %v2005 = vpack.c.b16 %v1973, %v1973
        %v2006 = vpack.c.b16 %v1974, %v1974
        %v2007 = vpack.c.b16 %v1975, %v1975
        %v2008 = vpack.c.b16 %v1976, %v1976
        %v2009 = vpack.c.b16 %v1977, %v1977
        %v2010 = vpack.c.b16 %v1978, %v1978
        %v2011 = vpack.c.b16 %v1979, %v1979
        %v2012 = vpack.c.b16 %v1980, %v1980
        %v2013 = vpack.c.b16 %v1981, %v1981
        %v2014 = vpack.c.b16 %v1982, %v1982
        %v2015 = vpack.c.b16 %v1983, %v1983
        %v2016 = vpack.c.b16 %v1984, %v1984
        %v2017 = vpack.c.b16 %v1985, %v1985
        %v2018 = vpack.c.b16 %v1986, %v1986
        %v2019 = vpack.c.b16 %v1987, %v1987
        %v2020 = vpack.c.b16 %v1988, %v1988
        %v2021 = vpack.c.b16 %v1989, %v1989
        %v2022 = vpack.c.b16 %v1990, %v1990
        %v2023 = vpack.c.b16 %v1991, %v1991
        %v2024 = vpack.c.b16 %v1992, %v1992
        %v2025 = vpack.c.b16 %v1993, %v1993
        %v2026 = vpack.c.b16 %v1994, %v1994
        %v2027 = vpack.c.b16 %v1995, %v1995
        %v2028 = vpack.c.b16 %v1996, %v1996
        %v2029 = vpack.c.b16 %v1997, %v1997
        %v2030 = vpack.c.b16 %v1998, %v1998
        %v2031 = vpack.c.b16 %v1999, %v1999
        %v2032 = vpack.c.b16 %v2000, %v2000
        %v2033 = vpack.c.b16 %v2001, %v2001
        %v2034 = vpack.c.b16 %v2002, %v2002
        %2035 = vrot.lane.b32.xlu0 %v2003, 21
        %v2036 = vpop.permute.xlu0 %2035
        %2037 = vrot.lane.b32.xlu0 %v2004, 21
        %v2038 = vpop.permute.xlu0 %2037
        %2039 = vrot.lane.b32.xlu0 %v2005, 21
        %v2040 = vpop.permute.xlu0 %2039
        %2041 = vrot.lane.b32.xlu0 %v2006, 21
        %v2042 = vpop.permute.xlu0 %2041
        %2043 = vrot.lane.b32.xlu0 %v2007, 21
        %v2044 = vpop.permute.xlu0 %2043
        %2045 = vrot.lane.b32.xlu0 %v2008, 21
        %v2046 = vpop.permute.xlu0 %2045
        %2047 = vrot.lane.b32.xlu0 %v2009, 21
        %v2048 = vpop.permute.xlu0 %2047
        %2049 = vrot.lane.b32.xlu0 %v2010, 21
        %v2050 = vpop.permute.xlu0 %2049
        %2051 = vrot.lane.b32.xlu0 %v2011, 21
        %v2052 = vpop.permute.xlu0 %2051
        %2053 = vrot.lane.b32.xlu0 %v2012, 21
        %v2054 = vpop.permute.xlu0 %2053
        %2055 = vrot.lane.b32.xlu0 %v2013, 21
        %v2056 = vpop.permute.xlu0 %2055
        %2057 = vrot.lane.b32.xlu0 %v2014, 21
        %v2058 = vpop.permute.xlu0 %2057
        %2059 = vrot.lane.b32.xlu0 %v2015, 21
        %v2060 = vpop.permute.xlu0 %2059
        %2061 = vrot.lane.b32.xlu0 %v2016, 21
        %v2062 = vpop.permute.xlu0 %2061
        %2063 = vrot.lane.b32.xlu0 %v2017, 21
        %v2064 = vpop.permute.xlu0 %2063
        %2065 = vrot.lane.b32.xlu0 %v2018, 21
        %v2066 = vpop.permute.xlu0 %2065
        %2067 = vrot.lane.b32.xlu0 %v2019, 21
        %v2068 = vpop.permute.xlu0 %2067
        %2069 = vrot.lane.b32.xlu0 %v2020, 21
        %v2070 = vpop.permute.xlu0 %2069
        %2071 = vrot.lane.b32.xlu0 %v2021, 21
        %v2072 = vpop.permute.xlu0 %2071
        %2073 = vrot.lane.b32.xlu0 %v2022, 21
        %v2074 = vpop.permute.xlu0 %2073
        %2075 = vrot.lane.b32.xlu0 %v2023, 21
        %v2076 = vpop.permute.xlu0 %2075
        %2077 = vrot.lane.b32.xlu0 %v2024, 21
        %v2078 = vpop.permute.xlu0 %2077
        %2079 = vrot.lane.b32.xlu0 %v2025, 21
        %v2080 = vpop.permute.xlu0 %2079
        %2081 = vrot.lane.b32.xlu0 %v2026, 21
        %v2082 = vpop.permute.xlu0 %2081
        %2083 = vrot.lane.b32.xlu0 %v2027, 21
        %v2084 = vpop.permute.xlu0 %2083
        %2085 = vrot.lane.b32.xlu0 %v2028, 21
        %v2086 = vpop.permute.xlu0 %2085
        %2087 = vrot.lane.b32.xlu0 %v2029, 21
        %v2088 = vpop.permute.xlu0 %2087
        %2089 = vrot.lane.b32.xlu0 %v2030, 21
        %v2090 = vpop.permute.xlu0 %2089
        %2091 = vrot.lane.b32.xlu0 %v2031, 21
        %v2092 = vpop.permute.xlu0 %2091
        %2093 = vrot.lane.b32.xlu0 %v2032, 21
        %v2094 = vpop.permute.xlu0 %2093
        %2095 = vrot.lane.b32.xlu0 %v2033, 21
        %v2096 = vpop.permute.xlu0 %2095
        %2097 = vrot.lane.b32.xlu0 %v2034, 21
        %v2098 = vpop.permute.xlu0 %2097
        %vm2131 = vcmask 191656
        %2132 = vst.msk [vmem:[#allocation3] sm:$0xf] %vm2131, %v2036
        %2133 = vst.msk [vmem:[#allocation3 + $0x4] sm:$0xf] %vm2131, %v2038
        %2134 = vst.msk [vmem:[#allocation3 + $0x8] sm:$0xf] %vm2131, %v2040
        %2135 = vst.msk [vmem:[#allocation3 + $0xc] sm:$0xf] %vm2131, %v2042
        %2136 = vst.msk [vmem:[#allocation3 + $0x10] sm:$0xf] %vm2131, %v2044
        %2137 = vst.msk [vmem:[#allocation3 + $0x14] sm:$0xf] %vm2131, %v2046
        %2138 = vst.msk [vmem:[#allocation3 + $0x18] sm:$0xf] %vm2131, %v2048
        %2139 = vst.msk [vmem:[#allocation3 + $0x1c] sm:$0xf] %vm2131, %v2050
        %2140 = vst.msk [vmem:[#allocation3 + $0x20] sm:$0xf] %vm2131, %v2052
        %2141 = vst.msk [vmem:[#allocation3 + $0x24] sm:$0xf] %vm2131, %v2054
        %2142 = vst.msk [vmem:[#allocation3 + $0x28] sm:$0xf] %vm2131, %v2056
        %2143 = vst.msk [vmem:[#allocation3 + $0x2c] sm:$0xf] %vm2131, %v2058
        %2144 = vst.msk [vmem:[#allocation3 + $0x30] sm:$0xf] %vm2131, %v2060
        %2145 = vst.msk [vmem:[#allocation3 + $0x34] sm:$0xf] %vm2131, %v2062
        %2146 = vst.msk [vmem:[#allocation3 + $0x38] sm:$0xf] %vm2131, %v2064
        %2147 = vst.msk [vmem:[#allocation3 + $0x3c] sm:$0xf] %vm2131, %v2066
        %2148 = vst.msk [vmem:[#allocation3 + $0x40] sm:$0xf] %vm2131, %v2068
        %2149 = vst.msk [vmem:[#allocation3 + $0x44] sm:$0xf] %vm2131, %v2070
        %2150 = vst.msk [vmem:[#allocation3 + $0x48] sm:$0xf] %vm2131, %v2072
        %2151 = vst.msk [vmem:[#allocation3 + $0x4c] sm:$0xf] %vm2131, %v2074
        %2152 = vst.msk [vmem:[#allocation3 + $0x50] sm:$0xf] %vm2131, %v2076
        %2153 = vst.msk [vmem:[#allocation3 + $0x54] sm:$0xf] %vm2131, %v2078
        %2154 = vst.msk [vmem:[#allocation3 + $0x58] sm:$0xf] %vm2131, %v2080
        %2155 = vst.msk [vmem:[#allocation3 + $0x5c] sm:$0xf] %vm2131, %v2082
        %2156 = vst.msk [vmem:[#allocation3 + $0x60] sm:$0xf] %vm2131, %v2084
        %2157 = vst.msk [vmem:[#allocation3 + $0x64] sm:$0xf] %vm2131, %v2086
        %2158 = vst.msk [vmem:[#allocation3 + $0x68] sm:$0xf] %vm2131, %v2088
        %2159 = vst.msk [vmem:[#allocation3 + $0x6c] sm:$0xf] %vm2131, %v2090
        %2160 = vst.msk [vmem:[#allocation3 + $0x70] sm:$0xf] %vm2131, %v2092
        %2161 = vst.msk [vmem:[#allocation3 + $0x74] sm:$0xf] %vm2131, %v2094
        %2162 = vst.msk [vmem:[#allocation3 + $0x78] sm:$0xf] %vm2131, %v2096
        %2163 = vst.msk [vmem:[#allocation3 + $0x7c] sm:$0xf] %vm2131, %v2098
        %v2164 = vld [vmem:[%s1649 + $0x2] sm:$0xff]
        %v2165 = vld [vmem:[%s1649 + $0xa] sm:$0xff]
        %v2166 = vld [vmem:[%s1649 + $0x1a] sm:$0xff]
        %v2167 = vld [vmem:[%s1649 + $0x22] sm:$0xff]
        %v2168 = vld [vmem:[%s1649 + $0x32] sm:$0xff]
        %v2169 = vld [vmem:[%s1649 + $0x3a] sm:$0xff]
        %v2170 = vld [vmem:[%s1649 + $0x4a] sm:$0xff]
        %v2171 = vld [vmem:[%s1649 + $0x52] sm:$0xff]
        %v2172 = vld [vmem:[%s1649 + $0x62] sm:$0xff]
        %v2173 = vld [vmem:[%s1649 + $0x6a] sm:$0xff]
        %v2174 = vld [vmem:[%s1649 + $0x7a] sm:$0xff]
        %v2175 = vld [vmem:[%s1649 + $0x82] sm:$0xff]
        %v2176 = vld [vmem:[%s1649 + $0x92] sm:$0xff]
        %v2177 = vld [vmem:[%s1649 + $0x9a] sm:$0xff]
        %v2178 = vld [vmem:[%s1649 + $0xaa] sm:$0xff]
        %v2179 = vld [vmem:[%s1649 + $0xb2] sm:$0xff]
        %v2180 = vld [vmem:[%s1649 + $0xc2] sm:$0xff]
        %v2181 = vld [vmem:[%s1649 + $0xca] sm:$0xff]
        %v2182 = vld [vmem:[%s1649 + $0xda] sm:$0xff]
        %v2183 = vld [vmem:[%s1649 + $0xe2] sm:$0xff]
        %v2184 = vld [vmem:[%s1649 + $0xf2] sm:$0xff]
        %v2185 = vld [vmem:[%s1649 + $0xfa] sm:$0xff]
        %v2186 = vld [vmem:[%s1649 + $0x10a] sm:$0xff]
        %v2187 = vld [vmem:[%s1649 + $0x112] sm:$0xff]
        %v2188 = vld [vmem:[%s1649 + $0x122] sm:$0xff]
        %v2189 = vld [vmem:[%s1649 + $0x12a] sm:$0xff]
        %v2190 = vld [vmem:[%s1649 + $0x13a] sm:$0xff]
        %v2191 = vld [vmem:[%s1649 + $0x142] sm:$0xff]
        %v2192 = vld [vmem:[%s1649 + $0x152] sm:$0xff]
        %v2193 = vld [vmem:[%s1649 + $0x15a] sm:$0xff]
        %v2194 = vld [vmem:[%s1649 + $0x16a] sm:$0xff]
        %v2195 = vld [vmem:[%s1649 + $0x172] sm:$0xff]
        %v2196 = vpack.c.bf16 %v2165, %v2164
        %v2197 = vpack.c.bf16 %v2167, %v2166
        %v2198 = vpack.c.bf16 %v2169, %v2168
        %v2199 = vpack.c.bf16 %v2171, %v2170
        %v2200 = vpack.c.bf16 %v2173, %v2172
        %v2201 = vpack.c.bf16 %v2175, %v2174
        %v2202 = vpack.c.bf16 %v2177, %v2176
        %v2203 = vpack.c.bf16 %v2179, %v2178
        %v2204 = vpack.c.bf16 %v2181, %v2180
        %v2205 = vpack.c.bf16 %v2183, %v2182
        %v2206 = vpack.c.bf16 %v2185, %v2184
        %v2207 = vpack.c.bf16 %v2187, %v2186
        %v2208 = vpack.c.bf16 %v2189, %v2188
        %v2209 = vpack.c.bf16 %v2191, %v2190
        %v2210 = vpack.c.bf16 %v2193, %v2192
        %v2211 = vpack.c.bf16 %v2195, %v2194
        %v2228 = vunpack.c.l.b16 %v2196
        %v2229 = vunpack.c.h.b16 %v2196
        %v2230 = vunpack.c.l.b16 %v2197
        %v2231 = vunpack.c.h.b16 %v2197
        %v2232 = vunpack.c.l.b16 %v2198
        %v2233 = vunpack.c.h.b16 %v2198
        %v2234 = vunpack.c.l.b16 %v2199
        %v2235 = vunpack.c.h.b16 %v2199
        %v2236 = vunpack.c.l.b16 %v2200
        %v2237 = vunpack.c.h.b16 %v2200
        %v2238 = vunpack.c.l.b16 %v2201
        %v2239 = vunpack.c.h.b16 %v2201
        %v2240 = vunpack.c.l.b16 %v2202
        %v2241 = vunpack.c.h.b16 %v2202
        %v2242 = vunpack.c.l.b16 %v2203
        %v2243 = vunpack.c.h.b16 %v2203
        %v2244 = vunpack.c.l.b16 %v2204
        %v2245 = vunpack.c.h.b16 %v2204
        %v2246 = vunpack.c.l.b16 %v2205
        %v2247 = vunpack.c.h.b16 %v2205
        %v2248 = vunpack.c.l.b16 %v2206
        %v2249 = vunpack.c.h.b16 %v2206
        %v2250 = vunpack.c.l.b16 %v2207
        %v2251 = vunpack.c.h.b16 %v2207
        %v2252 = vunpack.c.l.b16 %v2208
        %v2253 = vunpack.c.h.b16 %v2208
        %v2254 = vunpack.c.l.b16 %v2209
        %v2255 = vunpack.c.h.b16 %v2209
        %v2256 = vunpack.c.l.b16 %v2210
        %v2257 = vunpack.c.h.b16 %v2210
        %v2258 = vunpack.c.l.b16 %v2211
        %v2259 = vunpack.c.h.b16 %v2211
        %v2260 = vpack.c.b16 %v2228, %v2228
        %v2261 = vpack.c.b16 %v2229, %v2229
        %v2262 = vpack.c.b16 %v2230, %v2230
        %v2263 = vpack.c.b16 %v2231, %v2231
        %v2264 = vpack.c.b16 %v2232, %v2232
        %v2265 = vpack.c.b16 %v2233, %v2233
        %v2266 = vpack.c.b16 %v2234, %v2234
        %v2267 = vpack.c.b16 %v2235, %v2235
        %v2268 = vpack.c.b16 %v2236, %v2236
        %v2269 = vpack.c.b16 %v2237, %v2237
        %v2270 = vpack.c.b16 %v2238, %v2238
        %v2271 = vpack.c.b16 %v2239, %v2239
        %v2272 = vpack.c.b16 %v2240, %v2240
        %v2273 = vpack.c.b16 %v2241, %v2241
        %v2274 = vpack.c.b16 %v2242, %v2242
        %v2275 = vpack.c.b16 %v2243, %v2243
        %v2276 = vpack.c.b16 %v2244, %v2244
        %v2277 = vpack.c.b16 %v2245, %v2245
        %v2278 = vpack.c.b16 %v2246, %v2246
        %v2279 = vpack.c.b16 %v2247, %v2247
        %v2280 = vpack.c.b16 %v2248, %v2248
        %v2281 = vpack.c.b16 %v2249, %v2249
        %v2282 = vpack.c.b16 %v2250, %v2250
        %v2283 = vpack.c.b16 %v2251, %v2251
        %v2284 = vpack.c.b16 %v2252, %v2252
        %v2285 = vpack.c.b16 %v2253, %v2253
        %v2286 = vpack.c.b16 %v2254, %v2254
        %v2287 = vpack.c.b16 %v2255, %v2255
        %v2288 = vpack.c.b16 %v2256, %v2256
        %v2289 = vpack.c.b16 %v2257, %v2257
        %v2290 = vpack.c.b16 %v2258, %v2258
        %v2291 = vpack.c.b16 %v2259, %v2259
        %2292 = vrot.lane.b32.xlu0 %v2260, 24
        %v2293 = vpop.permute.xlu0 %2292
        %2294 = vrot.lane.b32.xlu0 %v2261, 24
        %v2295 = vpop.permute.xlu0 %2294
        %2296 = vrot.lane.b32.xlu0 %v2262, 24
        %v2297 = vpop.permute.xlu0 %2296
        %2298 = vrot.lane.b32.xlu0 %v2263, 24
        %v2299 = vpop.permute.xlu0 %2298
        %2300 = vrot.lane.b32.xlu0 %v2264, 24
        %v2301 = vpop.permute.xlu0 %2300
        %2302 = vrot.lane.b32.xlu0 %v2265, 24
        %v2303 = vpop.permute.xlu0 %2302
        %2304 = vrot.lane.b32.xlu0 %v2266, 24
        %v2305 = vpop.permute.xlu0 %2304
        %2306 = vrot.lane.b32.xlu0 %v2267, 24
        %v2307 = vpop.permute.xlu0 %2306
        %2308 = vrot.lane.b32.xlu0 %v2268, 24
        %v2309 = vpop.permute.xlu0 %2308
        %2310 = vrot.lane.b32.xlu0 %v2269, 24
        %v2311 = vpop.permute.xlu0 %2310
        %2312 = vrot.lane.b32.xlu0 %v2270, 24
        %v2313 = vpop.permute.xlu0 %2312
        %2314 = vrot.lane.b32.xlu0 %v2271, 24
        %v2315 = vpop.permute.xlu0 %2314
        %2316 = vrot.lane.b32.xlu0 %v2272, 24
        %v2317 = vpop.permute.xlu0 %2316
        %2318 = vrot.lane.b32.xlu0 %v2273, 24
        %v2319 = vpop.permute.xlu0 %2318
        %2320 = vrot.lane.b32.xlu0 %v2274, 24
        %v2321 = vpop.permute.xlu0 %2320
        %2322 = vrot.lane.b32.xlu0 %v2275, 24
        %v2323 = vpop.permute.xlu0 %2322
        %2324 = vrot.lane.b32.xlu0 %v2276, 24
        %v2325 = vpop.permute.xlu0 %2324
        %2326 = vrot.lane.b32.xlu0 %v2277, 24
        %v2327 = vpop.permute.xlu0 %2326
        %2328 = vrot.lane.b32.xlu0 %v2278, 24
        %v2329 = vpop.permute.xlu0 %2328
        %2330 = vrot.lane.b32.xlu0 %v2279, 24
        %v2331 = vpop.permute.xlu0 %2330
        %2332 = vrot.lane.b32.xlu0 %v2280, 24
        %v2333 = vpop.permute.xlu0 %2332
        %2334 = vrot.lane.b32.xlu0 %v2281, 24
        %v2335 = vpop.permute.xlu0 %2334
        %2336 = vrot.lane.b32.xlu0 %v2282, 24
        %v2337 = vpop.permute.xlu0 %2336
        %2338 = vrot.lane.b32.xlu0 %v2283, 24
        %v2339 = vpop.permute.xlu0 %2338
        %2340 = vrot.lane.b32.xlu0 %v2284, 24
        %v2341 = vpop.permute.xlu0 %2340
        %2342 = vrot.lane.b32.xlu0 %v2285, 24
        %v2343 = vpop.permute.xlu0 %2342
        %2344 = vrot.lane.b32.xlu0 %v2286, 24
        %v2345 = vpop.permute.xlu0 %2344
        %2346 = vrot.lane.b32.xlu0 %v2287, 24
        %v2347 = vpop.permute.xlu0 %2346
        %2348 = vrot.lane.b32.xlu0 %v2288, 24
        %v2349 = vpop.permute.xlu0 %2348
        %2350 = vrot.lane.b32.xlu0 %v2289, 24
        %v2351 = vpop.permute.xlu0 %2350
        %2352 = vrot.lane.b32.xlu0 %v2290, 24
        %v2353 = vpop.permute.xlu0 %2352
        %2354 = vrot.lane.b32.xlu0 %v2291, 24
        %v2355 = vpop.permute.xlu0 %2354
        %vm2388 = vcmask 216256
        %2389 = vst.msk [vmem:[#allocation3] sm:$0xf] %vm2388, %v2293
        %2390 = vst.msk [vmem:[#allocation3 + $0x4] sm:$0xf] %vm2388, %v2295
        %2391 = vst.msk [vmem:[#allocation3 + $0x8] sm:$0xf] %vm2388, %v2297
        %2392 = vst.msk [vmem:[#allocation3 + $0xc] sm:$0xf] %vm2388, %v2299
        %2393 = vst.msk [vmem:[#allocation3 + $0x10] sm:$0xf] %vm2388, %v2301
        %2394 = vst.msk [vmem:[#allocation3 + $0x14] sm:$0xf] %vm2388, %v2303
        %2395 = vst.msk [vmem:[#allocation3 + $0x18] sm:$0xf] %vm2388, %v2305
        %2396 = vst.msk [vmem:[#allocation3 + $0x1c] sm:$0xf] %vm2388, %v2307
        %2397 = vst.msk [vmem:[#allocation3 + $0x20] sm:$0xf] %vm2388, %v2309
        %2398 = vst.msk [vmem:[#allocation3 + $0x24] sm:$0xf] %vm2388, %v2311
        %2399 = vst.msk [vmem:[#allocation3 + $0x28] sm:$0xf] %vm2388, %v2313
        %2400 = vst.msk [vmem:[#allocation3 + $0x2c] sm:$0xf] %vm2388, %v2315
        %2401 = vst.msk [vmem:[#allocation3 + $0x30] sm:$0xf] %vm2388, %v2317
        %2402 = vst.msk [vmem:[#allocation3 + $0x34] sm:$0xf] %vm2388, %v2319
        %2403 = vst.msk [vmem:[#allocation3 + $0x38] sm:$0xf] %vm2388, %v2321
        %2404 = vst.msk [vmem:[#allocation3 + $0x3c] sm:$0xf] %vm2388, %v2323
        %2405 = vst.msk [vmem:[#allocation3 + $0x40] sm:$0xf] %vm2388, %v2325
        %2406 = vst.msk [vmem:[#allocation3 + $0x44] sm:$0xf] %vm2388, %v2327
        %2407 = vst.msk [vmem:[#allocation3 + $0x48] sm:$0xf] %vm2388, %v2329
        %2408 = vst.msk [vmem:[#allocation3 + $0x4c] sm:$0xf] %vm2388, %v2331
        %2409 = vst.msk [vmem:[#allocation3 + $0x50] sm:$0xf] %vm2388, %v2333
        %2410 = vst.msk [vmem:[#allocation3 + $0x54] sm:$0xf] %vm2388, %v2335
        %2411 = vst.msk [vmem:[#allocation3 + $0x58] sm:$0xf] %vm2388, %v2337
        %2412 = vst.msk [vmem:[#allocation3 + $0x5c] sm:$0xf] %vm2388, %v2339
        %2413 = vst.msk [vmem:[#allocation3 + $0x60] sm:$0xf] %vm2388, %v2341
        %2414 = vst.msk [vmem:[#allocation3 + $0x64] sm:$0xf] %vm2388, %v2343
        %2415 = vst.msk [vmem:[#allocation3 + $0x68] sm:$0xf] %vm2388, %v2345
        %2416 = vst.msk [vmem:[#allocation3 + $0x6c] sm:$0xf] %vm2388, %v2347
        %2417 = vst.msk [vmem:[#allocation3 + $0x70] sm:$0xf] %vm2388, %v2349
        %2418 = vst.msk [vmem:[#allocation3 + $0x74] sm:$0xf] %vm2388, %v2351
        %2419 = vst.msk [vmem:[#allocation3 + $0x78] sm:$0xf] %vm2388, %v2353
        %2420 = vst.msk [vmem:[#allocation3 + $0x7c] sm:$0xf] %vm2388, %v2355
        %v2421 = vld [vmem:[#allocation3] sm:$0xf]
        %v2422 = vld [vmem:[#allocation3 + $0x4] sm:$0xf]
        %v2423 = vld [vmem:[#allocation3 + $0x8] sm:$0xf]
        %v2424 = vld [vmem:[#allocation3 + $0xc] sm:$0xf]
        %v2425 = vld [vmem:[#allocation3 + $0x10] sm:$0xf]
        %v2426 = vld [vmem:[#allocation3 + $0x14] sm:$0xf]
        %v2427 = vld [vmem:[#allocation3 + $0x18] sm:$0xf]
        %v2428 = vld [vmem:[#allocation3 + $0x1c] sm:$0xf]
        %v2429 = vld [vmem:[#allocation3 + $0x20] sm:$0xf]
        %v2430 = vld [vmem:[#allocation3 + $0x24] sm:$0xf]
        %v2431 = vld [vmem:[#allocation3 + $0x28] sm:$0xf]
        %v2432 = vld [vmem:[#allocation3 + $0x2c] sm:$0xf]
        %v2433 = vld [vmem:[#allocation3 + $0x30] sm:$0xf]
        %v2434 = vld [vmem:[#allocation3 + $0x34] sm:$0xf]
        %v2435 = vld [vmem:[#allocation3 + $0x38] sm:$0xf]
        %v2436 = vld [vmem:[#allocation3 + $0x3c] sm:$0xf]
        %v2437 = vld [vmem:[#allocation3 + $0x40] sm:$0xf]
        %v2438 = vld [vmem:[#allocation3 + $0x44] sm:$0xf]
        %v2439 = vld [vmem:[#allocation3 + $0x48] sm:$0xf]
        %v2440 = vld [vmem:[#allocation3 + $0x4c] sm:$0xf]
        %v2441 = vld [vmem:[#allocation3 + $0x50] sm:$0xf]
        %v2442 = vld [vmem:[#allocation3 + $0x54] sm:$0xf]
        %v2443 = vld [vmem:[#allocation3 + $0x58] sm:$0xf]
        %v2444 = vld [vmem:[#allocation3 + $0x5c] sm:$0xf]
        %v2445 = vld [vmem:[#allocation3 + $0x60] sm:$0xf]
        %v2446 = vld [vmem:[#allocation3 + $0x64] sm:$0xf]
        %v2447 = vld [vmem:[#allocation3 + $0x68] sm:$0xf]
        %v2448 = vld [vmem:[#allocation3 + $0x6c] sm:$0xf]
        %v2449 = vld [vmem:[#allocation3 + $0x70] sm:$0xf]
        %v2450 = vld [vmem:[#allocation3 + $0x74] sm:$0xf]
        %v2451 = vld [vmem:[#allocation3 + $0x78] sm:$0xf]
        %v2452 = vld [vmem:[#allocation3 + $0x7c] sm:$0xf]
        %v2453 = vld [vmem:[%s1] sm:$0xff]
        %v2454 = vld [vmem:[%s1 + $0x8] sm:$0xff]
        %v2455 = vld [vmem:[%s1 + $0x10] sm:$0xff]
        %v2456 = vld [vmem:[%s1 + $0x18] sm:$0x33]
        %v2489 = vunpack.c.l.b16 %v2421
        %v2490 = vunpack.c.l.b16 %v2422
        %v2491 = vunpack.c.l.b16 %v2423
        %v2492 = vunpack.c.l.b16 %v2424
        %v2493 = vunpack.c.l.b16 %v2425
        %v2494 = vunpack.c.l.b16 %v2426
        %v2495 = vunpack.c.l.b16 %v2427
        %v2496 = vunpack.c.l.b16 %v2428
        %v2497 = vunpack.c.l.b16 %v2429
        %v2498 = vunpack.c.l.b16 %v2430
        %v2499 = vunpack.c.l.b16 %v2431
        %v2500 = vunpack.c.l.b16 %v2432
        %v2501 = vunpack.c.l.b16 %v2433
        %v2502 = vunpack.c.l.b16 %v2434
        %v2503 = vunpack.c.l.b16 %v2435
        %v2504 = vunpack.c.l.b16 %v2436
        %v2505 = vunpack.c.l.b16 %v2437
        %v2506 = vunpack.c.l.b16 %v2438
        %v2507 = vunpack.c.l.b16 %v2439
        %v2508 = vunpack.c.l.b16 %v2440
        %v2509 = vunpack.c.l.b16 %v2441
        %v2510 = vunpack.c.l.b16 %v2442
        %v2511 = vunpack.c.l.b16 %v2443
        %v2512 = vunpack.c.l.b16 %v2444
        %v2513 = vunpack.c.l.b16 %v2445
        %v2514 = vunpack.c.l.b16 %v2446
        %v2515 = vunpack.c.l.b16 %v2447
        %v2516 = vunpack.c.l.b16 %v2448
        %v2517 = vunpack.c.l.b16 %v2449
        %v2518 = vunpack.c.l.b16 %v2450
        %v2519 = vunpack.c.l.b16 %v2451
        %v2520 = vunpack.c.l.b16 %v2452
        %v2521 = vpack.c.b16 %v2490, %v2489
        %v2522 = vpack.c.b16 %v2492, %v2491
        %v2523 = vpack.c.b16 %v2494, %v2493
        %v2524 = vpack.c.b16 %v2496, %v2495
        %v2525 = vpack.c.b16 %v2498, %v2497
        %v2526 = vpack.c.b16 %v2500, %v2499
        %v2527 = vpack.c.b16 %v2502, %v2501
        %v2528 = vpack.c.b16 %v2504, %v2503
        %v2529 = vpack.c.b16 %v2506, %v2505
        %v2530 = vpack.c.b16 %v2508, %v2507
        %v2531 = vpack.c.b16 %v2510, %v2509
        %v2532 = vpack.c.b16 %v2512, %v2511
        %v2533 = vpack.c.b16 %v2514, %v2513
        %v2534 = vpack.c.b16 %v2516, %v2515
        %v2535 = vpack.c.b16 %v2518, %v2517
        %v2536 = vpack.c.b16 %v2520, %v2519
        %v2541 = vunpack.c.l.b16 %v2453
        %v2542 = vunpack.c.h.b16 %v2453
        %v2543 = vunpack.c.l.b16 %v2454
        %v2544 = vunpack.c.h.b16 %v2454
        %v2545 = vunpack.c.l.b16 %v2455
        %v2546 = vunpack.c.h.b16 %v2455
        %v2547 = vunpack.c.l.b16 %v2456
        %v2548 = vunpack.c.h.b16 %v2456
        %v2549 = vpack.c.b16 %v2543, %v2541
        %v2550 = vpack.c.b16 %v2544, %v2542
        %v2551 = vpack.c.b16 %v2547, %v2545
        %v2552 = vpack.c.b16 %v2548, %v2546
        %vm2555 = vcmask 220160
        %v2557 = vsel %vm2555, %v2521, 0
        %v2560 = vsel %vm2555, %v2522, 0
        %v2563 = vsel %vm2555, %v2523, 0
        %v2566 = vsel %vm2555, %v2524, 0
        %v2569 = vsel %vm2555, %v2525, 0
        %v2572 = vsel %vm2555, %v2526, 0
        %v2575 = vsel %vm2555, %v2527, 0
        %v2578 = vsel %vm2555, %v2528, 0
        %v2581 = vsel %vm2555, %v2529, 0
        %v2584 = vsel %vm2555, %v2530, 0
        %v2587 = vsel %vm2555, %v2531, 0
        %v2590 = vsel %vm2555, %v2532, 0
        %v2593 = vsel %vm2555, %v2533, 0
        %v2596 = vsel %vm2555, %v2534, 0
        %v2599 = vsel %vm2555, %v2535, 0
        %v2602 = vsel %vm2555, %v2536, 0
        %vm2604 = vcmask 1044480
        %vm2605 = vcmask 1045504
        %v2606 = vsel %vm2604, 4294967295, 65535
        %v2607 = vsel %vm2605, %v2606, 0
        %v2609 = vand.u32 %v2551, %v2607
        %v2612 = vand.u32 %v2552, %v2607
        %2614 = vmatprep.subr.bf16.mxu0 0
        %2615 = vmatpush1.bf16.msra.mxu0 0
        %2616 = vmatprep.subr.bf16.mxu0 0
        %2617 = vmatpush1.bf16.msra.mxu0 0
        %2618 = vmatprep.subr.bf16.mxu0 0
        %2619 = vmatpush1.bf16.msra.mxu0 0
        %2620 = vmatprep.subr.bf16.mxu0 0
        %2621 = vmatpush1.bf16.msra.mxu0 0
        %2622 = vmatprep.subr.bf16.mxu0 0
        %2623 = vmatpush1.bf16.msra.mxu0 0
        %2624 = vmatprep.subr.bf16.mxu0 0
        %2625 = vmatpush1.bf16.msra.mxu0 0
        %2626 = vmatprep.subr.bf16.mxu0 %v2612
        %2627 = vmatpush1.bf16.msra.mxu0 %v2609
        %2628 = vmatprep.subr.bf16.mxu0 %v2550
        %2629 = vmatpush1.bf16.msra.mxu0 %v2549
        %2630 = vmatprep.subr.bf16.mxu0 0
        %2631 = vmatpush2.bf16.msra.mxu0 0
        %2632 = vmatprep.subr.bf16.mxu0 0
        %2633 = vmatpush2.bf16.msra.mxu0 0
        %2634 = vmatprep.subr.bf16.mxu0 0
        %2635 = vmatpush2.bf16.msra.mxu0 0
        %2636 = vmatprep.subr.bf16.mxu0 0
        %2637 = vmatpush2.bf16.msra.mxu0 0
        %2638 = vmatprep.subr.bf16.mxu0 0
        %2639 = vmatpush2.bf16.msra.mxu0 0
        %2640 = vmatprep.subr.bf16.mxu0 0
        %2641 = vmatpush2.bf16.msra.mxu0 0
        %2642 = vmatprep.subr.bf16.mxu0 0
        %2643 = vmatpush2.bf16.msra.mxu0 0
        %2644 = vmatprep.subr.bf16.mxu0 0
        %2645 = vmatpush2.bf16.msra.mxu0 0
        %2646 = vmatprep.mubr.bf16.mxu0 0
        %2647 = vmatmul.mubr.bf16.gmra.mxu0 %v2557
        %v2648 = vpop.f32.mrf.mxu0
        %v2649 = vadd.f32 0.0, %v2648
        %v2650 = vpop.f32.mrf.mxu0
        %v2651 = vadd.f32 0.0, %v2650
        %v2652 = vpop.f32.mrf.mxu0
        %v2653 = vadd.f32 0.0, %v2652
        %v2654 = vpop.f32.mrf.mxu0
        %v2655 = vadd.f32 0.0, %v2654
        %2656 = vmatprep.mubr.bf16.mxu0 0
        %2657 = vmatmul.mubr.bf16.gmra.mxu0 %v2560
        %v2658 = vpop.f32.mrf.mxu0
        %v2659 = vadd.f32 0.0, %v2658
        %v2660 = vpop.f32.mrf.mxu0
        %v2661 = vadd.f32 0.0, %v2660
        %v2662 = vpop.f32.mrf.mxu0
        %v2663 = vadd.f32 0.0, %v2662
        %v2664 = vpop.f32.mrf.mxu0
        %v2665 = vadd.f32 0.0, %v2664
        %2666 = vmatprep.mubr.bf16.mxu0 0
        %2667 = vmatmul.mubr.bf16.gmra.mxu0 %v2563
        %v2668 = vpop.f32.mrf.mxu0
        %v2669 = vadd.f32 0.0, %v2668
        %v2670 = vpop.f32.mrf.mxu0
        %v2671 = vadd.f32 0.0, %v2670
        %v2672 = vpop.f32.mrf.mxu0
        %v2673 = vadd.f32 0.0, %v2672
        %v2674 = vpop.f32.mrf.mxu0
        %v2675 = vadd.f32 0.0, %v2674
        %2676 = vmatprep.mubr.bf16.mxu0 0
        %2677 = vmatmul.mubr.bf16.gmra.mxu0 %v2566
        %v2678 = vpop.f32.mrf.mxu0
        %v2679 = vadd.f32 0.0, %v2678
        %v2680 = vpop.f32.mrf.mxu0
        %v2681 = vadd.f32 0.0, %v2680
        %v2682 = vpop.f32.mrf.mxu0
        %v2683 = vadd.f32 0.0, %v2682
        %v2684 = vpop.f32.mrf.mxu0
        %v2685 = vadd.f32 0.0, %v2684
        %2686 = vmatprep.mubr.bf16.mxu0 0
        %2687 = vmatmul.mubr.bf16.gmra.mxu0 %v2569
        %v2688 = vpop.f32.mrf.mxu0
        %v2689 = vadd.f32 0.0, %v2688
        %v2690 = vpop.f32.mrf.mxu0
        %v2691 = vadd.f32 0.0, %v2690
        %v2692 = vpop.f32.mrf.mxu0
        %v2693 = vadd.f32 0.0, %v2692
        %v2694 = vpop.f32.mrf.mxu0
        %v2695 = vadd.f32 0.0, %v2694
        %2696 = vmatprep.mubr.bf16.mxu0 0
        %2697 = vmatmul.mubr.bf16.gmra.mxu0 %v2572
        %v2698 = vpop.f32.mrf.mxu0
        %v2699 = vadd.f32 0.0, %v2698
        %v2700 = vpop.f32.mrf.mxu0
        %v2701 = vadd.f32 0.0, %v2700
        %v2702 = vpop.f32.mrf.mxu0
        %v2703 = vadd.f32 0.0, %v2702
        %v2704 = vpop.f32.mrf.mxu0
        %v2705 = vadd.f32 0.0, %v2704
        %2706 = vmatprep.mubr.bf16.mxu0 0
        %2707 = vmatmul.mubr.bf16.gmra.mxu0 %v2575
        %v2708 = vpop.f32.mrf.mxu0
        %v2709 = vadd.f32 0.0, %v2708
        %v2710 = vpop.f32.mrf.mxu0
        %v2711 = vadd.f32 0.0, %v2710
        %v2712 = vpop.f32.mrf.mxu0
        %v2713 = vadd.f32 0.0, %v2712
        %v2714 = vpop.f32.mrf.mxu0
        %v2715 = vadd.f32 0.0, %v2714
        %2716 = vmatprep.mubr.bf16.mxu0 0
        %2717 = vmatmul.mubr.bf16.gmra.mxu0 %v2578
        %v2718 = vpop.f32.mrf.mxu0
        %v2719 = vadd.f32 0.0, %v2718
        %v2720 = vpop.f32.mrf.mxu0
        %v2721 = vadd.f32 0.0, %v2720
        %v2722 = vpop.f32.mrf.mxu0
        %v2723 = vadd.f32 0.0, %v2722
        %v2724 = vpop.f32.mrf.mxu0
        %v2725 = vadd.f32 0.0, %v2724
        %2726 = vmatprep.mubr.bf16.mxu0 0
        %2727 = vmatmul.mubr.bf16.gmra.mxu0 %v2581
        %v2728 = vpop.f32.mrf.mxu0
        %v2729 = vadd.f32 0.0, %v2728
        %v2730 = vpop.f32.mrf.mxu0
        %v2731 = vadd.f32 0.0, %v2730
        %v2732 = vpop.f32.mrf.mxu0
        %v2733 = vadd.f32 0.0, %v2732
        %v2734 = vpop.f32.mrf.mxu0
        %v2735 = vadd.f32 0.0, %v2734
        %2736 = vmatprep.mubr.bf16.mxu0 0
        %2737 = vmatmul.mubr.bf16.gmra.mxu0 %v2584
        %v2738 = vpop.f32.mrf.mxu0
        %v2739 = vadd.f32 0.0, %v2738
        %v2740 = vpop.f32.mrf.mxu0
        %v2741 = vadd.f32 0.0, %v2740
        %v2742 = vpop.f32.mrf.mxu0
        %v2743 = vadd.f32 0.0, %v2742
        %v2744 = vpop.f32.mrf.mxu0
        %v2745 = vadd.f32 0.0, %v2744
        %2746 = vmatprep.mubr.bf16.mxu0 0
        %2747 = vmatmul.mubr.bf16.gmra.mxu0 %v2587
        %v2748 = vpop.f32.mrf.mxu0
        %v2749 = vadd.f32 0.0, %v2748
        %v2750 = vpop.f32.mrf.mxu0
        %v2751 = vadd.f32 0.0, %v2750
        %v2752 = vpop.f32.mrf.mxu0
        %v2753 = vadd.f32 0.0, %v2752
        %v2754 = vpop.f32.mrf.mxu0
        %v2755 = vadd.f32 0.0, %v2754
        %2756 = vmatprep.mubr.bf16.mxu0 0
        %2757 = vmatmul.mubr.bf16.gmra.mxu0 %v2590
        %v2758 = vpop.f32.mrf.mxu0
        %v2759 = vadd.f32 0.0, %v2758
        %v2760 = vpop.f32.mrf.mxu0
        %v2761 = vadd.f32 0.0, %v2760
        %v2762 = vpop.f32.mrf.mxu0
        %v2763 = vadd.f32 0.0, %v2762
        %v2764 = vpop.f32.mrf.mxu0
        %v2765 = vadd.f32 0.0, %v2764
        %2766 = vmatprep.mubr.bf16.mxu0 0
        %2767 = vmatmul.mubr.bf16.gmra.mxu0 %v2593
        %v2768 = vpop.f32.mrf.mxu0
        %v2769 = vadd.f32 0.0, %v2768
        %v2770 = vpop.f32.mrf.mxu0
        %v2771 = vadd.f32 0.0, %v2770
        %v2772 = vpop.f32.mrf.mxu0
        %v2773 = vadd.f32 0.0, %v2772
        %v2774 = vpop.f32.mrf.mxu0
        %v2775 = vadd.f32 0.0, %v2774
        %2776 = vmatprep.mubr.bf16.mxu0 0
        %2777 = vmatmul.mubr.bf16.gmra.mxu0 %v2596
        %v2778 = vpop.f32.mrf.mxu0
        %v2779 = vadd.f32 0.0, %v2778
        %v2780 = vpop.f32.mrf.mxu0
        %v2781 = vadd.f32 0.0, %v2780
        %v2782 = vpop.f32.mrf.mxu0
        %v2783 = vadd.f32 0.0, %v2782
        %v2784 = vpop.f32.mrf.mxu0
        %v2785 = vadd.f32 0.0, %v2784
        %2786 = vmatprep.mubr.bf16.mxu0 0
        %2787 = vmatmul.mubr.bf16.gmra.mxu0 %v2599
        %v2788 = vpop.f32.mrf.mxu0
        %v2789 = vadd.f32 0.0, %v2788
        %v2790 = vpop.f32.mrf.mxu0
        %v2791 = vadd.f32 0.0, %v2790
        %v2792 = vpop.f32.mrf.mxu0
        %v2793 = vadd.f32 0.0, %v2792
        %v2794 = vpop.f32.mrf.mxu0
        %v2795 = vadd.f32 0.0, %v2794
        %2796 = vmatprep.mubr.bf16.mxu0 0
        %2797 = vmatmul.mubr.bf16.gmra.mxu0 %v2602
        %v2798 = vpop.f32.mrf.mxu0
        %v2799 = vadd.f32 0.0, %v2798
        %v2800 = vpop.f32.mrf.mxu0
        %v2801 = vadd.f32 0.0, %v2800
        %v2802 = vpop.f32.mrf.mxu0
        %v2803 = vadd.f32 0.0, %v2802
        %v2804 = vpop.f32.mrf.mxu0
        %v2805 = vadd.f32 0.0, %v2804
        %2806 = vdwg.mxu0
        %vm2807 = vcmp.gt.f32.partialorder %v2649, 0.0
        %vm2808 = vcmp.gt.f32.partialorder %v2653, 0.0
        %vm2809 = vcmp.gt.f32.partialorder %v2659, 0.0
        %vm2810 = vcmp.gt.f32.partialorder %v2663, 0.0
        %vm2811 = vcmp.gt.f32.partialorder %v2669, 0.0
        %vm2812 = vcmp.gt.f32.partialorder %v2673, 0.0
        %vm2813 = vcmp.gt.f32.partialorder %v2679, 0.0
        %vm2814 = vcmp.gt.f32.partialorder %v2683, 0.0
        %vm2815 = vcmp.gt.f32.partialorder %v2689, 0.0
        %vm2816 = vcmp.gt.f32.partialorder %v2693, 0.0
        %vm2817 = vcmp.gt.f32.partialorder %v2699, 0.0
        %vm2818 = vcmp.gt.f32.partialorder %v2703, 0.0
        %vm2819 = vcmp.gt.f32.partialorder %v2709, 0.0
        %vm2820 = vcmp.gt.f32.partialorder %v2713, 0.0
        %vm2821 = vcmp.gt.f32.partialorder %v2719, 0.0
        %vm2822 = vcmp.gt.f32.partialorder %v2723, 0.0
        %vm2823 = vcmp.gt.f32.partialorder %v2729, 0.0
        %vm2824 = vcmp.gt.f32.partialorder %v2733, 0.0
        %vm2825 = vcmp.gt.f32.partialorder %v2739, 0.0
        %vm2826 = vcmp.gt.f32.partialorder %v2743, 0.0
        %vm2827 = vcmp.gt.f32.partialorder %v2749, 0.0
        %vm2828 = vcmp.gt.f32.partialorder %v2753, 0.0
        %vm2829 = vcmp.gt.f32.partialorder %v2759, 0.0
        %vm2830 = vcmp.gt.f32.partialorder %v2763, 0.0
        %vm2831 = vcmp.gt.f32.partialorder %v2769, 0.0
        %vm2832 = vcmp.gt.f32.partialorder %v2773, 0.0
        %vm2833 = vcmp.gt.f32.partialorder %v2779, 0.0
        %vm2834 = vcmp.gt.f32.partialorder %v2783, 0.0
        %vm2835 = vcmp.gt.f32.partialorder %v2789, 0.0
        %vm2836 = vcmp.gt.f32.partialorder %v2793, 0.0
        %vm2837 = vcmp.gt.f32.partialorder %v2799, 0.0
        %vm2838 = vcmp.gt.f32.partialorder %v2803, 0.0
        %v2839 = vmul.f32 %v2649, 0.01
        %v2840 = vmul.f32 %v2653, 0.01
        %v2841 = vmul.f32 %v2659, 0.01
        %v2842 = vmul.f32 %v2663, 0.01
        %v2843 = vmul.f32 %v2669, 0.01
        %v2844 = vmul.f32 %v2673, 0.01
        %v2845 = vmul.f32 %v2679, 0.01
        %v2846 = vmul.f32 %v2683, 0.01
        %v2847 = vmul.f32 %v2689, 0.01
        %v2848 = vmul.f32 %v2693, 0.01
        %v2849 = vmul.f32 %v2699, 0.01
        %v2850 = vmul.f32 %v2703, 0.01
        %v2851 = vmul.f32 %v2709, 0.01
        %v2852 = vmul.f32 %v2713, 0.01
        %v2853 = vmul.f32 %v2719, 0.01
        %v2854 = vmul.f32 %v2723, 0.01
        %v2855 = vmul.f32 %v2729, 0.01
        %v2856 = vmul.f32 %v2733, 0.01
        %v2857 = vmul.f32 %v2739, 0.01
        %v2858 = vmul.f32 %v2743, 0.01
        %v2859 = vmul.f32 %v2749, 0.01
        %v2860 = vmul.f32 %v2753, 0.01
        %v2861 = vmul.f32 %v2759, 0.01
        %v2862 = vmul.f32 %v2763, 0.01
        %v2863 = vmul.f32 %v2769, 0.01
        %v2864 = vmul.f32 %v2773, 0.01
        %v2865 = vmul.f32 %v2779, 0.01
        %v2866 = vmul.f32 %v2783, 0.01
        %v2867 = vmul.f32 %v2789, 0.01
        %v2868 = vmul.f32 %v2793, 0.01
        %v2869 = vmul.f32 %v2799, 0.01
        %v2870 = vmul.f32 %v2803, 0.01
        %v2871 = vsel %vm2807, %v2649, %v2839
        %v2872 = vsel %vm2808, %v2653, %v2840
        %v2873 = vsel %vm2809, %v2659, %v2841
        %v2874 = vsel %vm2810, %v2663, %v2842
        %v2875 = vsel %vm2811, %v2669, %v2843
        %v2876 = vsel %vm2812, %v2673, %v2844
        %v2877 = vsel %vm2813, %v2679, %v2845
        %v2878 = vsel %vm2814, %v2683, %v2846
        %v2879 = vsel %vm2815, %v2689, %v2847
        %v2880 = vsel %vm2816, %v2693, %v2848
        %v2881 = vsel %vm2817, %v2699, %v2849
        %v2882 = vsel %vm2818, %v2703, %v2850
        %v2883 = vsel %vm2819, %v2709, %v2851
        %v2884 = vsel %vm2820, %v2713, %v2852
        %v2885 = vsel %vm2821, %v2719, %v2853
        %v2886 = vsel %vm2822, %v2723, %v2854
        %v2887 = vsel %vm2823, %v2729, %v2855
        %v2888 = vsel %vm2824, %v2733, %v2856
        %v2889 = vsel %vm2825, %v2739, %v2857
        %v2890 = vsel %vm2826, %v2743, %v2858
        %v2891 = vsel %vm2827, %v2749, %v2859
        %v2892 = vsel %vm2828, %v2753, %v2860
        %v2893 = vsel %vm2829, %v2759, %v2861
        %v2894 = vsel %vm2830, %v2763, %v2862
        %v2895 = vsel %vm2831, %v2769, %v2863
        %v2896 = vsel %vm2832, %v2773, %v2864
        %v2897 = vsel %vm2833, %v2779, %v2865
        %v2898 = vsel %vm2834, %v2783, %v2866
        %v2899 = vsel %vm2835, %v2789, %v2867
        %v2900 = vsel %vm2836, %v2793, %v2868
        %v2901 = vsel %vm2837, %v2799, %v2869
        %v2902 = vsel %vm2838, %v2803, %v2870
        %vm2903 = vcmask 130048
        %2904 = vst.msk [vmem:[#allocation2] sm:$0xff] %vm2903, 0.0
        %2905 = vst.msk [vmem:[#allocation2 + $0x8] sm:$0xff] %vm2903, 0.0
        %vm2906 = vcmask 123904
        %2907 = vst.msk [vmem:[#allocation2 + $0x10] sm:$0x3] %vm2906, 0.0
        %s2908 = scalar_lea.vmem [#allocation2], 408
        %2909 = vst.msk [vmem:[%s2908] sm:$0xff] %vm2903, 0.0
        %2910 = vst.msk [vmem:[%s2908 + $0x8] sm:$0xff] %vm2903, 0.0
        %2911 = vst.msk [vmem:[%s2908 + $0x10] sm:$0x3] %vm2906, 0.0
        %vm2912 = vcmask 122880
        %2913 = vst.msk [vmem:[#allocation2] sm:$0x1] %vm2912, 0.0
        %2914 = vst.msk [vmem:[#allocation2 + $0x18] sm:$0x1] %vm2912, 0.0
        %2915 = vst.msk [vmem:[#allocation2 + $0x30] sm:$0x1] %vm2912, 0.0
        %2916 = vst.msk [vmem:[#allocation2 + $0x48] sm:$0x1] %vm2912, 0.0
        %2917 = vst.msk [vmem:[#allocation2 + $0x60] sm:$0x1] %vm2912, 0.0
        %2918 = vst.msk [vmem:[#allocation2 + $0x78] sm:$0x1] %vm2912, 0.0
        %2919 = vst.msk [vmem:[#allocation2 + $0x90] sm:$0x1] %vm2912, 0.0
        %2920 = vst.msk [vmem:[#allocation2 + $0xa8] sm:$0x1] %vm2912, 0.0
        %2921 = vst.msk [vmem:[#allocation2 + $0xc0] sm:$0x1] %vm2912, 0.0
        %2922 = vst.msk [vmem:[#allocation2 + $0xd8] sm:$0x1] %vm2912, 0.0
        %2923 = vst.msk [vmem:[#allocation2 + $0xf0] sm:$0x1] %vm2912, 0.0
        %2924 = vst.msk [vmem:[#allocation2 + $0x108] sm:$0x1] %vm2912, 0.0
        %2925 = vst.msk [vmem:[#allocation2 + $0x120] sm:$0x1] %vm2912, 0.0
        %2926 = vst.msk [vmem:[#allocation2 + $0x138] sm:$0x1] %vm2912, 0.0
        %2927 = vst.msk [vmem:[#allocation2 + $0x150] sm:$0x1] %vm2912, 0.0
        %2928 = vst.msk [vmem:[#allocation2 + $0x168] sm:$0x1] %vm2912, 0.0
        %2929 = vst.msk [vmem:[#allocation2 + $0x180] sm:$0x1] %vm2912, 0.0
        %2930 = vst.msk [vmem:[#allocation2 + $0x198] sm:$0x1] %vm2912, 0.0
        %2931 = vst.msk [vmem:[#allocation2 + $0x11] sm:$0x1] %vm2912, 0.0
        %2932 = vst.msk [vmem:[#allocation2 + $0x29] sm:$0x1] %vm2912, 0.0
        %2933 = vst.msk [vmem:[#allocation2 + $0x41] sm:$0x1] %vm2912, 0.0
        %2934 = vst.msk [vmem:[#allocation2 + $0x59] sm:$0x1] %vm2912, 0.0
        %2935 = vst.msk [vmem:[#allocation2 + $0x71] sm:$0x1] %vm2912, 0.0
        %2936 = vst.msk [vmem:[#allocation2 + $0x89] sm:$0x1] %vm2912, 0.0
        %2937 = vst.msk [vmem:[#allocation2 + $0xa1] sm:$0x1] %vm2912, 0.0
        %2938 = vst.msk [vmem:[#allocation2 + $0xb9] sm:$0x1] %vm2912, 0.0
        %2939 = vst.msk [vmem:[#allocation2 + $0xd1] sm:$0x1] %vm2912, 0.0
        %2940 = vst.msk [vmem:[#allocation2 + $0xe9] sm:$0x1] %vm2912, 0.0
        %2941 = vst.msk [vmem:[#allocation2 + $0x101] sm:$0x1] %vm2912, 0.0
        %2942 = vst.msk [vmem:[#allocation2 + $0x119] sm:$0x1] %vm2912, 0.0
        %2943 = vst.msk [vmem:[#allocation2 + $0x131] sm:$0x1] %vm2912, 0.0
        %2944 = vst.msk [vmem:[#allocation2 + $0x149] sm:$0x1] %vm2912, 0.0
        %2945 = vst.msk [vmem:[#allocation2 + $0x161] sm:$0x1] %vm2912, 0.0
        %2946 = vst.msk [vmem:[#allocation2 + $0x179] sm:$0x1] %vm2912, 0.0
        %2947 = vst.msk [vmem:[#allocation2 + $0x191] sm:$0x1] %vm2912, 0.0
        %2948 = vst.msk [vmem:[#allocation2 + $0x1a9] sm:$0x1] %vm2912, 0.0
        %s2949 = scalar_lea.vmem [#allocation2], 24
        %2950 = vst.msk [vmem:[%s2949 + $0x1] sm:$0xff] %vm2903, %v2871
        %2951 = vst.msk [vmem:[%s2949 + $0x9] sm:$0xff] %vm2903, %v2872
        %2952 = vst.msk [vmem:[%s2949 + $0x19] sm:$0xff] %vm2903, %v2873
        %2953 = vst.msk [vmem:[%s2949 + $0x21] sm:$0xff] %vm2903, %v2874
        %2954 = vst.msk [vmem:[%s2949 + $0x31] sm:$0xff] %vm2903, %v2875
        %2955 = vst.msk [vmem:[%s2949 + $0x39] sm:$0xff] %vm2903, %v2876
        %2956 = vst.msk [vmem:[%s2949 + $0x49] sm:$0xff] %vm2903, %v2877
        %2957 = vst.msk [vmem:[%s2949 + $0x51] sm:$0xff] %vm2903, %v2878
        %2958 = vst.msk [vmem:[%s2949 + $0x61] sm:$0xff] %vm2903, %v2879
        %2959 = vst.msk [vmem:[%s2949 + $0x69] sm:$0xff] %vm2903, %v2880
        %2960 = vst.msk [vmem:[%s2949 + $0x79] sm:$0xff] %vm2903, %v2881
        %2961 = vst.msk [vmem:[%s2949 + $0x81] sm:$0xff] %vm2903, %v2882
        %2962 = vst.msk [vmem:[%s2949 + $0x91] sm:$0xff] %vm2903, %v2883
        %2963 = vst.msk [vmem:[%s2949 + $0x99] sm:$0xff] %vm2903, %v2884
        %2964 = vst.msk [vmem:[%s2949 + $0xa9] sm:$0xff] %vm2903, %v2885
        %2965 = vst.msk [vmem:[%s2949 + $0xb1] sm:$0xff] %vm2903, %v2886
        %2966 = vst.msk [vmem:[%s2949 + $0xc1] sm:$0xff] %vm2903, %v2887
        %2967 = vst.msk [vmem:[%s2949 + $0xc9] sm:$0xff] %vm2903, %v2888
        %2968 = vst.msk [vmem:[%s2949 + $0xd9] sm:$0xff] %vm2903, %v2889
        %2969 = vst.msk [vmem:[%s2949 + $0xe1] sm:$0xff] %vm2903, %v2890
        %2970 = vst.msk [vmem:[%s2949 + $0xf1] sm:$0xff] %vm2903, %v2891
        %2971 = vst.msk [vmem:[%s2949 + $0xf9] sm:$0xff] %vm2903, %v2892
        %2972 = vst.msk [vmem:[%s2949 + $0x109] sm:$0xff] %vm2903, %v2893
        %2973 = vst.msk [vmem:[%s2949 + $0x111] sm:$0xff] %vm2903, %v2894
        %2974 = vst.msk [vmem:[%s2949 + $0x121] sm:$0xff] %vm2903, %v2895
        %2975 = vst.msk [vmem:[%s2949 + $0x129] sm:$0xff] %vm2903, %v2896
        %2976 = vst.msk [vmem:[%s2949 + $0x139] sm:$0xff] %vm2903, %v2897
        %2977 = vst.msk [vmem:[%s2949 + $0x141] sm:$0xff] %vm2903, %v2898
        %2978 = vst.msk [vmem:[%s2949 + $0x151] sm:$0xff] %vm2903, %v2899
        %2979 = vst.msk [vmem:[%s2949 + $0x159] sm:$0xff] %vm2903, %v2900
        %2980 = vst.msk [vmem:[%s2949 + $0x169] sm:$0xff] %vm2903, %v2901
        %2981 = vst.msk [vmem:[%s2949 + $0x171] sm:$0xff] %vm2903, %v2902
        %v2982 = vld [vmem:[#allocation2] sm:$0xff]
        %v2983 = vld [vmem:[#allocation2 + $0x8] sm:$0xff]
        %v2984 = vld [vmem:[#allocation2 + $0x18] sm:$0xff]
        %v2985 = vld [vmem:[#allocation2 + $0x20] sm:$0xff]
        %v2986 = vld [vmem:[#allocation2 + $0x30] sm:$0xff]
        %v2987 = vld [vmem:[#allocation2 + $0x38] sm:$0xff]
        %v2988 = vld [vmem:[#allocation2 + $0x48] sm:$0xff]
        %v2989 = vld [vmem:[#allocation2 + $0x50] sm:$0xff]
        %v2990 = vld [vmem:[#allocation2 + $0x60] sm:$0xff]
        %v2991 = vld [vmem:[#allocation2 + $0x68] sm:$0xff]
        %v2992 = vld [vmem:[#allocation2 + $0x78] sm:$0xff]
        %v2993 = vld [vmem:[#allocation2 + $0x80] sm:$0xff]
        %v2994 = vld [vmem:[#allocation2 + $0x90] sm:$0xff]
        %v2995 = vld [vmem:[#allocation2 + $0x98] sm:$0xff]
        %v2996 = vld [vmem:[#allocation2 + $0xa8] sm:$0xff]
        %v2997 = vld [vmem:[#allocation2 + $0xb0] sm:$0xff]
        %v2998 = vld [vmem:[#allocation2 + $0xc0] sm:$0xff]
        %v2999 = vld [vmem:[#allocation2 + $0xc8] sm:$0xff]
        %v3000 = vld [vmem:[#allocation2 + $0xd8] sm:$0xff]
        %v3001 = vld [vmem:[#allocation2 + $0xe0] sm:$0xff]
        %v3002 = vld [vmem:[#allocation2 + $0xf0] sm:$0xff]
        %v3003 = vld [vmem:[#allocation2 + $0xf8] sm:$0xff]
        %v3004 = vld [vmem:[#allocation2 + $0x108] sm:$0xff]
        %v3005 = vld [vmem:[#allocation2 + $0x110] sm:$0xff]
        %v3006 = vld [vmem:[#allocation2 + $0x120] sm:$0xff]
        %v3007 = vld [vmem:[#allocation2 + $0x128] sm:$0xff]
        %v3008 = vld [vmem:[#allocation2 + $0x138] sm:$0xff]
        %v3009 = vld [vmem:[#allocation2 + $0x140] sm:$0xff]
        %v3010 = vld [vmem:[#allocation2 + $0x150] sm:$0xff]
        %v3011 = vld [vmem:[#allocation2 + $0x158] sm:$0xff]
        %v3012 = vld [vmem:[#allocation2 + $0x168] sm:$0xff]
        %v3013 = vld [vmem:[#allocation2 + $0x170] sm:$0xff]
        %v3014 = vpack.c.bf16 %v2983, %v2982
        %v3015 = vpack.c.bf16 %v2985, %v2984
        %v3016 = vpack.c.bf16 %v2987, %v2986
        %v3017 = vpack.c.bf16 %v2989, %v2988
        %v3018 = vpack.c.bf16 %v2991, %v2990
        %v3019 = vpack.c.bf16 %v2993, %v2992
        %v3020 = vpack.c.bf16 %v2995, %v2994
        %v3021 = vpack.c.bf16 %v2997, %v2996
        %v3022 = vpack.c.bf16 %v2999, %v2998
        %v3023 = vpack.c.bf16 %v3001, %v3000
        %v3024 = vpack.c.bf16 %v3003, %v3002
        %v3025 = vpack.c.bf16 %v3005, %v3004
        %v3026 = vpack.c.bf16 %v3007, %v3006
        %v3027 = vpack.c.bf16 %v3009, %v3008
        %v3028 = vpack.c.bf16 %v3011, %v3010
        %v3029 = vpack.c.bf16 %v3013, %v3012
        %v3046 = vunpack.c.l.b16 %v3014
        %v3047 = vunpack.c.h.b16 %v3014
        %v3048 = vunpack.c.l.b16 %v3015
        %v3049 = vunpack.c.h.b16 %v3015
        %v3050 = vunpack.c.l.b16 %v3016
        %v3051 = vunpack.c.h.b16 %v3016
        %v3052 = vunpack.c.l.b16 %v3017
        %v3053 = vunpack.c.h.b16 %v3017
        %v3054 = vunpack.c.l.b16 %v3018
        %v3055 = vunpack.c.h.b16 %v3018
        %v3056 = vunpack.c.l.b16 %v3019
        %v3057 = vunpack.c.h.b16 %v3019
        %v3058 = vunpack.c.l.b16 %v3020
        %v3059 = vunpack.c.h.b16 %v3020
        %v3060 = vunpack.c.l.b16 %v3021
        %v3061 = vunpack.c.h.b16 %v3021
        %v3062 = vunpack.c.l.b16 %v3022
        %v3063 = vunpack.c.h.b16 %v3022
        %v3064 = vunpack.c.l.b16 %v3023
        %v3065 = vunpack.c.h.b16 %v3023
        %v3066 = vunpack.c.l.b16 %v3024
        %v3067 = vunpack.c.h.b16 %v3024
        %v3068 = vunpack.c.l.b16 %v3025
        %v3069 = vunpack.c.h.b16 %v3025
        %v3070 = vunpack.c.l.b16 %v3026
        %v3071 = vunpack.c.h.b16 %v3026
        %v3072 = vunpack.c.l.b16 %v3027
        %v3073 = vunpack.c.h.b16 %v3027
        %v3074 = vunpack.c.l.b16 %v3028
        %v3075 = vunpack.c.h.b16 %v3028
        %v3076 = vunpack.c.l.b16 %v3029
        %v3077 = vunpack.c.h.b16 %v3029
        %v3078 = vpack.c.b16 %v3046, %v3046
        %v3079 = vpack.c.b16 %v3047, %v3047
        %v3080 = vpack.c.b16 %v3048, %v3048
        %v3081 = vpack.c.b16 %v3049, %v3049
        %v3082 = vpack.c.b16 %v3050, %v3050
        %v3083 = vpack.c.b16 %v3051, %v3051
        %v3084 = vpack.c.b16 %v3052, %v3052
        %v3085 = vpack.c.b16 %v3053, %v3053
        %v3086 = vpack.c.b16 %v3054, %v3054
        %v3087 = vpack.c.b16 %v3055, %v3055
        %v3088 = vpack.c.b16 %v3056, %v3056
        %v3089 = vpack.c.b16 %v3057, %v3057
        %v3090 = vpack.c.b16 %v3058, %v3058
        %v3091 = vpack.c.b16 %v3059, %v3059
        %v3092 = vpack.c.b16 %v3060, %v3060
        %v3093 = vpack.c.b16 %v3061, %v3061
        %v3094 = vpack.c.b16 %v3062, %v3062
        %v3095 = vpack.c.b16 %v3063, %v3063
        %v3096 = vpack.c.b16 %v3064, %v3064
        %v3097 = vpack.c.b16 %v3065, %v3065
        %v3098 = vpack.c.b16 %v3066, %v3066
        %v3099 = vpack.c.b16 %v3067, %v3067
        %v3100 = vpack.c.b16 %v3068, %v3068
        %v3101 = vpack.c.b16 %v3069, %v3069
        %v3102 = vpack.c.b16 %v3070, %v3070
        %v3103 = vpack.c.b16 %v3071, %v3071
        %v3104 = vpack.c.b16 %v3072, %v3072
        %v3105 = vpack.c.b16 %v3073, %v3073
        %v3106 = vpack.c.b16 %v3074, %v3074
        %v3107 = vpack.c.b16 %v3075, %v3075
        %v3108 = vpack.c.b16 %v3076, %v3076
        %v3109 = vpack.c.b16 %v3077, %v3077
        %vm3142 = vcmask 125952
        %3143 = vst.msk [vmem:[#allocation4] sm:$0xf] %vm3142, %v3078
        %3144 = vst.msk [vmem:[#allocation4 + $0x8] sm:$0xf] %vm3142, %v3079
        %3145 = vst.msk [vmem:[#allocation4 + $0x10] sm:$0xf] %vm3142, %v3080
        %3146 = vst.msk [vmem:[#allocation4 + $0x18] sm:$0xf] %vm3142, %v3081
        %3147 = vst.msk [vmem:[#allocation4 + $0x20] sm:$0xf] %vm3142, %v3082
        %3148 = vst.msk [vmem:[#allocation4 + $0x28] sm:$0xf] %vm3142, %v3083
        %3149 = vst.msk [vmem:[#allocation4 + $0x30] sm:$0xf] %vm3142, %v3084
        %3150 = vst.msk [vmem:[#allocation4 + $0x38] sm:$0xf] %vm3142, %v3085
        %3151 = vst.msk [vmem:[#allocation4 + $0x40] sm:$0xf] %vm3142, %v3086
        %3152 = vst.msk [vmem:[#allocation4 + $0x48] sm:$0xf] %vm3142, %v3087
        %3153 = vst.msk [vmem:[#allocation4 + $0x50] sm:$0xf] %vm3142, %v3088
        %3154 = vst.msk [vmem:[#allocation4 + $0x58] sm:$0xf] %vm3142, %v3089
        %3155 = vst.msk [vmem:[#allocation4 + $0x60] sm:$0xf] %vm3142, %v3090
        %3156 = vst.msk [vmem:[#allocation4 + $0x68] sm:$0xf] %vm3142, %v3091
        %3157 = vst.msk [vmem:[#allocation4 + $0x70] sm:$0xf] %vm3142, %v3092
        %3158 = vst.msk [vmem:[#allocation4 + $0x78] sm:$0xf] %vm3142, %v3093
        %3159 = vst.msk [vmem:[#allocation4 + $0x80] sm:$0xf] %vm3142, %v3094
        %3160 = vst.msk [vmem:[#allocation4 + $0x88] sm:$0xf] %vm3142, %v3095
        %3161 = vst.msk [vmem:[#allocation4 + $0x90] sm:$0xf] %vm3142, %v3096
        %3162 = vst.msk [vmem:[#allocation4 + $0x98] sm:$0xf] %vm3142, %v3097
        %3163 = vst.msk [vmem:[#allocation4 + $0xa0] sm:$0xf] %vm3142, %v3098
        %3164 = vst.msk [vmem:[#allocation4 + $0xa8] sm:$0xf] %vm3142, %v3099
        %3165 = vst.msk [vmem:[#allocation4 + $0xb0] sm:$0xf] %vm3142, %v3100
        %3166 = vst.msk [vmem:[#allocation4 + $0xb8] sm:$0xf] %vm3142, %v3101
        %3167 = vst.msk [vmem:[#allocation4 + $0xc0] sm:$0xf] %vm3142, %v3102
        %3168 = vst.msk [vmem:[#allocation4 + $0xc8] sm:$0xf] %vm3142, %v3103
        %3169 = vst.msk [vmem:[#allocation4 + $0xd0] sm:$0xf] %vm3142, %v3104
        %3170 = vst.msk [vmem:[#allocation4 + $0xd8] sm:$0xf] %vm3142, %v3105
        %3171 = vst.msk [vmem:[#allocation4 + $0xe0] sm:$0xf] %vm3142, %v3106
        %3172 = vst.msk [vmem:[#allocation4 + $0xe8] sm:$0xf] %vm3142, %v3107
        %3173 = vst.msk [vmem:[#allocation4 + $0xf0] sm:$0xf] %vm3142, %v3108
        %3174 = vst.msk [vmem:[#allocation4 + $0xf8] sm:$0xf] %vm3142, %v3109
        %v3175 = vld [vmem:[#allocation2 + $0x1] sm:$0xff]
        %v3176 = vld [vmem:[#allocation2 + $0x9] sm:$0xff]
        %v3177 = vld [vmem:[#allocation2 + $0x19] sm:$0xff]
        %v3178 = vld [vmem:[#allocation2 + $0x21] sm:$0xff]
        %v3179 = vld [vmem:[#allocation2 + $0x31] sm:$0xff]
        %v3180 = vld [vmem:[#allocation2 + $0x39] sm:$0xff]
        %v3181 = vld [vmem:[#allocation2 + $0x49] sm:$0xff]
        %v3182 = vld [vmem:[#allocation2 + $0x51] sm:$0xff]
        %v3183 = vld [vmem:[#allocation2 + $0x61] sm:$0xff]
        %v3184 = vld [vmem:[#allocation2 + $0x69] sm:$0xff]
        %v3185 = vld [vmem:[#allocation2 + $0x79] sm:$0xff]
        %v3186 = vld [vmem:[#allocation2 + $0x81] sm:$0xff]
        %v3187 = vld [vmem:[#allocation2 + $0x91] sm:$0xff]
        %v3188 = vld [vmem:[#allocation2 + $0x99] sm:$0xff]
        %v3189 = vld [vmem:[#allocation2 + $0xa9] sm:$0xff]
        %v3190 = vld [vmem:[#allocation2 + $0xb1] sm:$0xff]
        %v3191 = vld [vmem:[#allocation2 + $0xc1] sm:$0xff]
        %v3192 = vld [vmem:[#allocation2 + $0xc9] sm:$0xff]
        %v3193 = vld [vmem:[#allocation2 + $0xd9] sm:$0xff]
        %v3194 = vld [vmem:[#allocation2 + $0xe1] sm:$0xff]
        %v3195 = vld [vmem:[#allocation2 + $0xf1] sm:$0xff]
        %v3196 = vld [vmem:[#allocation2 + $0xf9] sm:$0xff]
        %v3197 = vld [vmem:[#allocation2 + $0x109] sm:$0xff]
        %v3198 = vld [vmem:[#allocation2 + $0x111] sm:$0xff]
        %v3199 = vld [vmem:[#allocation2 + $0x121] sm:$0xff]
        %v3200 = vld [vmem:[#allocation2 + $0x129] sm:$0xff]
        %v3201 = vld [vmem:[#allocation2 + $0x139] sm:$0xff]
        %v3202 = vld [vmem:[#allocation2 + $0x141] sm:$0xff]
        %v3203 = vld [vmem:[#allocation2 + $0x151] sm:$0xff]
        %v3204 = vld [vmem:[#allocation2 + $0x159] sm:$0xff]
        %v3205 = vld [vmem:[#allocation2 + $0x169] sm:$0xff]
        %v3206 = vld [vmem:[#allocation2 + $0x171] sm:$0xff]
        %v3207 = vpack.c.bf16 %v3176, %v3175
        %v3208 = vpack.c.bf16 %v3178, %v3177
        %v3209 = vpack.c.bf16 %v3180, %v3179
        %v3210 = vpack.c.bf16 %v3182, %v3181
        %v3211 = vpack.c.bf16 %v3184, %v3183
        %v3212 = vpack.c.bf16 %v3186, %v3185
        %v3213 = vpack.c.bf16 %v3188, %v3187
        %v3214 = vpack.c.bf16 %v3190, %v3189
        %v3215 = vpack.c.bf16 %v3192, %v3191
        %v3216 = vpack.c.bf16 %v3194, %v3193
        %v3217 = vpack.c.bf16 %v3196, %v3195
        %v3218 = vpack.c.bf16 %v3198, %v3197
        %v3219 = vpack.c.bf16 %v3200, %v3199
        %v3220 = vpack.c.bf16 %v3202, %v3201
        %v3221 = vpack.c.bf16 %v3204, %v3203
        %v3222 = vpack.c.bf16 %v3206, %v3205
        %v3239 = vunpack.c.l.b16 %v3207
        %v3240 = vunpack.c.h.b16 %v3207
        %v3241 = vunpack.c.l.b16 %v3208
        %v3242 = vunpack.c.h.b16 %v3208
        %v3243 = vunpack.c.l.b16 %v3209
        %v3244 = vunpack.c.h.b16 %v3209
        %v3245 = vunpack.c.l.b16 %v3210
        %v3246 = vunpack.c.h.b16 %v3210
        %v3247 = vunpack.c.l.b16 %v3211
        %v3248 = vunpack.c.h.b16 %v3211
        %v3249 = vunpack.c.l.b16 %v3212
        %v3250 = vunpack.c.h.b16 %v3212
        %v3251 = vunpack.c.l.b16 %v3213
        %v3252 = vunpack.c.h.b16 %v3213
        %v3253 = vunpack.c.l.b16 %v3214
        %v3254 = vunpack.c.h.b16 %v3214
        %v3255 = vunpack.c.l.b16 %v3215
        %v3256 = vunpack.c.h.b16 %v3215
        %v3257 = vunpack.c.l.b16 %v3216
        %v3258 = vunpack.c.h.b16 %v3216
        %v3259 = vunpack.c.l.b16 %v3217
        %v3260 = vunpack.c.h.b16 %v3217
        %v3261 = vunpack.c.l.b16 %v3218
        %v3262 = vunpack.c.h.b16 %v3218
        %v3263 = vunpack.c.l.b16 %v3219
        %v3264 = vunpack.c.h.b16 %v3219
        %v3265 = vunpack.c.l.b16 %v3220
        %v3266 = vunpack.c.h.b16 %v3220
        %v3267 = vunpack.c.l.b16 %v3221
        %v3268 = vunpack.c.h.b16 %v3221
        %v3269 = vunpack.c.l.b16 %v3222
        %v3270 = vunpack.c.h.b16 %v3222
        %v3271 = vpack.c.b16 %v3239, %v3239
        %v3272 = vpack.c.b16 %v3240, %v3240
        %v3273 = vpack.c.b16 %v3241, %v3241
        %v3274 = vpack.c.b16 %v3242, %v3242
        %v3275 = vpack.c.b16 %v3243, %v3243
        %v3276 = vpack.c.b16 %v3244, %v3244
        %v3277 = vpack.c.b16 %v3245, %v3245
        %v3278 = vpack.c.b16 %v3246, %v3246
        %v3279 = vpack.c.b16 %v3247, %v3247
        %v3280 = vpack.c.b16 %v3248, %v3248
        %v3281 = vpack.c.b16 %v3249, %v3249
        %v3282 = vpack.c.b16 %v3250, %v3250
        %v3283 = vpack.c.b16 %v3251, %v3251
        %v3284 = vpack.c.b16 %v3252, %v3252
        %v3285 = vpack.c.b16 %v3253, %v3253
        %v3286 = vpack.c.b16 %v3254, %v3254
        %v3287 = vpack.c.b16 %v3255, %v3255
        %v3288 = vpack.c.b16 %v3256, %v3256
        %v3289 = vpack.c.b16 %v3257, %v3257
        %v3290 = vpack.c.b16 %v3258, %v3258
        %v3291 = vpack.c.b16 %v3259, %v3259
        %v3292 = vpack.c.b16 %v3260, %v3260
        %v3293 = vpack.c.b16 %v3261, %v3261
        %v3294 = vpack.c.b16 %v3262, %v3262
        %v3295 = vpack.c.b16 %v3263, %v3263
        %v3296 = vpack.c.b16 %v3264, %v3264
        %v3297 = vpack.c.b16 %v3265, %v3265
        %v3298 = vpack.c.b16 %v3266, %v3266
        %v3299 = vpack.c.b16 %v3267, %v3267
        %v3300 = vpack.c.b16 %v3268, %v3268
        %v3301 = vpack.c.b16 %v3269, %v3269
        %v3302 = vpack.c.b16 %v3270, %v3270
        %3303 = vrot.lane.b32.xlu0 %v3271, 16
        %v3304 = vpop.permute.xlu0 %3303
        %3305 = vrot.lane.b32.xlu0 %v3272, 16
        %v3306 = vpop.permute.xlu0 %3305
        %3307 = vrot.lane.b32.xlu0 %v3273, 16
        %v3308 = vpop.permute.xlu0 %3307
        %3309 = vrot.lane.b32.xlu0 %v3274, 16
        %v3310 = vpop.permute.xlu0 %3309
        %3311 = vrot.lane.b32.xlu0 %v3275, 16
        %v3312 = vpop.permute.xlu0 %3311
        %3313 = vrot.lane.b32.xlu0 %v3276, 16
        %v3314 = vpop.permute.xlu0 %3313
        %3315 = vrot.lane.b32.xlu0 %v3277, 16
        %v3316 = vpop.permute.xlu0 %3315
        %3317 = vrot.lane.b32.xlu0 %v3278, 16
        %v3318 = vpop.permute.xlu0 %3317
        %3319 = vrot.lane.b32.xlu0 %v3279, 16
        %v3320 = vpop.permute.xlu0 %3319
        %3321 = vrot.lane.b32.xlu0 %v3280, 16
        %v3322 = vpop.permute.xlu0 %3321
        %3323 = vrot.lane.b32.xlu0 %v3281, 16
        %v3324 = vpop.permute.xlu0 %3323
        %3325 = vrot.lane.b32.xlu0 %v3282, 16
        %v3326 = vpop.permute.xlu0 %3325
        %3327 = vrot.lane.b32.xlu0 %v3283, 16
        %v3328 = vpop.permute.xlu0 %3327
        %3329 = vrot.lane.b32.xlu0 %v3284, 16
        %v3330 = vpop.permute.xlu0 %3329
        %3331 = vrot.lane.b32.xlu0 %v3285, 16
        %v3332 = vpop.permute.xlu0 %3331
        %3333 = vrot.lane.b32.xlu0 %v3286, 16
        %v3334 = vpop.permute.xlu0 %3333
        %3335 = vrot.lane.b32.xlu0 %v3287, 16
        %v3336 = vpop.permute.xlu0 %3335
        %3337 = vrot.lane.b32.xlu0 %v3288, 16
        %v3338 = vpop.permute.xlu0 %3337
        %3339 = vrot.lane.b32.xlu0 %v3289, 16
        %v3340 = vpop.permute.xlu0 %3339
        %3341 = vrot.lane.b32.xlu0 %v3290, 16
        %v3342 = vpop.permute.xlu0 %3341
        %3343 = vrot.lane.b32.xlu0 %v3291, 16
        %v3344 = vpop.permute.xlu0 %3343
        %3345 = vrot.lane.b32.xlu0 %v3292, 16
        %v3346 = vpop.permute.xlu0 %3345
        %3347 = vrot.lane.b32.xlu0 %v3293, 16
        %v3348 = vpop.permute.xlu0 %3347
        %3349 = vrot.lane.b32.xlu0 %v3294, 16
        %v3350 = vpop.permute.xlu0 %3349
        %3351 = vrot.lane.b32.xlu0 %v3295, 16
        %v3352 = vpop.permute.xlu0 %3351
        %3353 = vrot.lane.b32.xlu0 %v3296, 16
        %v3354 = vpop.permute.xlu0 %3353
        %3355 = vrot.lane.b32.xlu0 %v3297, 16
        %v3356 = vpop.permute.xlu0 %3355
        %3357 = vrot.lane.b32.xlu0 %v3298, 16
        %v3358 = vpop.permute.xlu0 %3357
        %3359 = vrot.lane.b32.xlu0 %v3299, 16
        %v3360 = vpop.permute.xlu0 %3359
        %3361 = vrot.lane.b32.xlu0 %v3300, 16
        %v3362 = vpop.permute.xlu0 %3361
        %3363 = vrot.lane.b32.xlu0 %v3301, 16
        %v3364 = vpop.permute.xlu0 %3363
        %3365 = vrot.lane.b32.xlu0 %v3302, 16
        %v3366 = vpop.permute.xlu0 %3365
        %vm3399 = vcmask 257152
        %3400 = vst.msk [vmem:[#allocation4] sm:$0xf] %vm3399, %v3304
        %3401 = vst.msk [vmem:[#allocation4 + $0x8] sm:$0xf] %vm3399, %v3306
        %3402 = vst.msk [vmem:[#allocation4 + $0x10] sm:$0xf] %vm3399, %v3308
        %3403 = vst.msk [vmem:[#allocation4 + $0x18] sm:$0xf] %vm3399, %v3310
        %3404 = vst.msk [vmem:[#allocation4 + $0x20] sm:$0xf] %vm3399, %v3312
        %3405 = vst.msk [vmem:[#allocation4 + $0x28] sm:$0xf] %vm3399, %v3314
        %3406 = vst.msk [vmem:[#allocation4 + $0x30] sm:$0xf] %vm3399, %v3316
        %3407 = vst.msk [vmem:[#allocation4 + $0x38] sm:$0xf] %vm3399, %v3318
        %3408 = vst.msk [vmem:[#allocation4 + $0x40] sm:$0xf] %vm3399, %v3320
        %3409 = vst.msk [vmem:[#allocation4 + $0x48] sm:$0xf] %vm3399, %v3322
        %3410 = vst.msk [vmem:[#allocation4 + $0x50] sm:$0xf] %vm3399, %v3324
        %3411 = vst.msk [vmem:[#allocation4 + $0x58] sm:$0xf] %vm3399, %v3326
        %3412 = vst.msk [vmem:[#allocation4 + $0x60] sm:$0xf] %vm3399, %v3328
        %3413 = vst.msk [vmem:[#allocation4 + $0x68] sm:$0xf] %vm3399, %v3330
        %3414 = vst.msk [vmem:[#allocation4 + $0x70] sm:$0xf] %vm3399, %v3332
        %3415 = vst.msk [vmem:[#allocation4 + $0x78] sm:$0xf] %vm3399, %v3334
        %3416 = vst.msk [vmem:[#allocation4 + $0x80] sm:$0xf] %vm3399, %v3336
        %3417 = vst.msk [vmem:[#allocation4 + $0x88] sm:$0xf] %vm3399, %v3338
        %3418 = vst.msk [vmem:[#allocation4 + $0x90] sm:$0xf] %vm3399, %v3340
        %3419 = vst.msk [vmem:[#allocation4 + $0x98] sm:$0xf] %vm3399, %v3342
        %3420 = vst.msk [vmem:[#allocation4 + $0xa0] sm:$0xf] %vm3399, %v3344
        %3421 = vst.msk [vmem:[#allocation4 + $0xa8] sm:$0xf] %vm3399, %v3346
        %3422 = vst.msk [vmem:[#allocation4 + $0xb0] sm:$0xf] %vm3399, %v3348
        %3423 = vst.msk [vmem:[#allocation4 + $0xb8] sm:$0xf] %vm3399, %v3350
        %3424 = vst.msk [vmem:[#allocation4 + $0xc0] sm:$0xf] %vm3399, %v3352
        %3425 = vst.msk [vmem:[#allocation4 + $0xc8] sm:$0xf] %vm3399, %v3354
        %3426 = vst.msk [vmem:[#allocation4 + $0xd0] sm:$0xf] %vm3399, %v3356
        %3427 = vst.msk [vmem:[#allocation4 + $0xd8] sm:$0xf] %vm3399, %v3358
        %3428 = vst.msk [vmem:[#allocation4 + $0xe0] sm:$0xf] %vm3399, %v3360
        %3429 = vst.msk [vmem:[#allocation4 + $0xe8] sm:$0xf] %vm3399, %v3362
        %3430 = vst.msk [vmem:[#allocation4 + $0xf0] sm:$0xf] %vm3399, %v3364
        %3431 = vst.msk [vmem:[#allocation4 + $0xf8] sm:$0xf] %vm3399, %v3366
        %v3432 = vld [vmem:[#allocation2 + $0x2] sm:$0xff]
        %v3433 = vld [vmem:[#allocation2 + $0xa] sm:$0xff]
        %v3434 = vld [vmem:[#allocation2 + $0x1a] sm:$0xff]
        %v3435 = vld [vmem:[#allocation2 + $0x22] sm:$0xff]
        %v3436 = vld [vmem:[#allocation2 + $0x32] sm:$0xff]
        %v3437 = vld [vmem:[#allocation2 + $0x3a] sm:$0xff]
        %v3438 = vld [vmem:[#allocation2 + $0x4a] sm:$0xff]
        %v3439 = vld [vmem:[#allocation2 + $0x52] sm:$0xff]
        %v3440 = vld [vmem:[#allocation2 + $0x62] sm:$0xff]
        %v3441 = vld [vmem:[#allocation2 + $0x6a] sm:$0xff]
        %v3442 = vld [vmem:[#allocation2 + $0x7a] sm:$0xff]
        %v3443 = vld [vmem:[#allocation2 + $0x82] sm:$0xff]
        %v3444 = vld [vmem:[#allocation2 + $0x92] sm:$0xff]
        %v3445 = vld [vmem:[#allocation2 + $0x9a] sm:$0xff]
        %v3446 = vld [vmem:[#allocation2 + $0xaa] sm:$0xff]
        %v3447 = vld [vmem:[#allocation2 + $0xb2] sm:$0xff]
        %v3448 = vld [vmem:[#allocation2 + $0xc2] sm:$0xff]
        %v3449 = vld [vmem:[#allocation2 + $0xca] sm:$0xff]
        %v3450 = vld [vmem:[#allocation2 + $0xda] sm:$0xff]
        %v3451 = vld [vmem:[#allocation2 + $0xe2] sm:$0xff]
        %v3452 = vld [vmem:[#allocation2 + $0xf2] sm:$0xff]
        %v3453 = vld [vmem:[#allocation2 + $0xfa] sm:$0xff]
        %v3454 = vld [vmem:[#allocation2 + $0x10a] sm:$0xff]
        %v3455 = vld [vmem:[#allocation2 + $0x112] sm:$0xff]
        %v3456 = vld [vmem:[#allocation2 + $0x122] sm:$0xff]
        %v3457 = vld [vmem:[#allocation2 + $0x12a] sm:$0xff]
        %v3458 = vld [vmem:[#allocation2 + $0x13a] sm:$0xff]
        %v3459 = vld [vmem:[#allocation2 + $0x142] sm:$0xff]
        %v3460 = vld [vmem:[#allocation2 + $0x152] sm:$0xff]
        %v3461 = vld [vmem:[#allocation2 + $0x15a] sm:$0xff]
        %v3462 = vld [vmem:[#allocation2 + $0x16a] sm:$0xff]
        %v3463 = vld [vmem:[#allocation2 + $0x172] sm:$0xff]
        %v3464 = vpack.c.bf16 %v3433, %v3432
        %v3465 = vpack.c.bf16 %v3435, %v3434
        %v3466 = vpack.c.bf16 %v3437, %v3436
        %v3467 = vpack.c.bf16 %v3439, %v3438
        %v3468 = vpack.c.bf16 %v3441, %v3440
        %v3469 = vpack.c.bf16 %v3443, %v3442
        %v3470 = vpack.c.bf16 %v3445, %v3444
        %v3471 = vpack.c.bf16 %v3447, %v3446
        %v3472 = vpack.c.bf16 %v3449, %v3448
        %v3473 = vpack.c.bf16 %v3451, %v3450
        %v3474 = vpack.c.bf16 %v3453, %v3452
        %v3475 = vpack.c.bf16 %v3455, %v3454
        %v3476 = vpack.c.bf16 %v3457, %v3456
        %v3477 = vpack.c.bf16 %v3459, %v3458
        %v3478 = vpack.c.bf16 %v3461, %v3460
        %v3479 = vpack.c.bf16 %v3463, %v3462
        %v3496 = vunpack.c.l.b16 %v3464
        %v3497 = vunpack.c.h.b16 %v3464
        %v3498 = vunpack.c.l.b16 %v3465
        %v3499 = vunpack.c.h.b16 %v3465
        %v3500 = vunpack.c.l.b16 %v3466
        %v3501 = vunpack.c.h.b16 %v3466
        %v3502 = vunpack.c.l.b16 %v3467
        %v3503 = vunpack.c.h.b16 %v3467
        %v3504 = vunpack.c.l.b16 %v3468
        %v3505 = vunpack.c.h.b16 %v3468
        %v3506 = vunpack.c.l.b16 %v3469
        %v3507 = vunpack.c.h.b16 %v3469
        %v3508 = vunpack.c.l.b16 %v3470
        %v3509 = vunpack.c.h.b16 %v3470
        %v3510 = vunpack.c.l.b16 %v3471
        %v3511 = vunpack.c.h.b16 %v3471
        %v3512 = vunpack.c.l.b16 %v3472
        %v3513 = vunpack.c.h.b16 %v3472
        %v3514 = vunpack.c.l.b16 %v3473
        %v3515 = vunpack.c.h.b16 %v3473
        %v3516 = vunpack.c.l.b16 %v3474
        %v3517 = vunpack.c.h.b16 %v3474
        %v3518 = vunpack.c.l.b16 %v3475
        %v3519 = vunpack.c.h.b16 %v3475
        %v3520 = vunpack.c.l.b16 %v3476
        %v3521 = vunpack.c.h.b16 %v3476
        %v3522 = vunpack.c.l.b16 %v3477
        %v3523 = vunpack.c.h.b16 %v3477
        %v3524 = vunpack.c.l.b16 %v3478
        %v3525 = vunpack.c.h.b16 %v3478
        %v3526 = vunpack.c.l.b16 %v3479
        %v3527 = vunpack.c.h.b16 %v3479
        %v3528 = vpack.c.b16 %v3496, %v3496
        %v3529 = vpack.c.b16 %v3497, %v3497
        %v3530 = vpack.c.b16 %v3498, %v3498
        %v3531 = vpack.c.b16 %v3499, %v3499
        %v3532 = vpack.c.b16 %v3500, %v3500
        %v3533 = vpack.c.b16 %v3501, %v3501
        %v3534 = vpack.c.b16 %v3502, %v3502
        %v3535 = vpack.c.b16 %v3503, %v3503
        %v3536 = vpack.c.b16 %v3504, %v3504
        %v3537 = vpack.c.b16 %v3505, %v3505
        %v3538 = vpack.c.b16 %v3506, %v3506
        %v3539 = vpack.c.b16 %v3507, %v3507
        %v3540 = vpack.c.b16 %v3508, %v3508
        %v3541 = vpack.c.b16 %v3509, %v3509
        %v3542 = vpack.c.b16 %v3510, %v3510
        %v3543 = vpack.c.b16 %v3511, %v3511
        %v3544 = vpack.c.b16 %v3512, %v3512
        %v3545 = vpack.c.b16 %v3513, %v3513
        %v3546 = vpack.c.b16 %v3514, %v3514
        %v3547 = vpack.c.b16 %v3515, %v3515
        %v3548 = vpack.c.b16 %v3516, %v3516
        %v3549 = vpack.c.b16 %v3517, %v3517
        %v3550 = vpack.c.b16 %v3518, %v3518
        %v3551 = vpack.c.b16 %v3519, %v3519
        %v3552 = vpack.c.b16 %v3520, %v3520
        %v3553 = vpack.c.b16 %v3521, %v3521
        %v3554 = vpack.c.b16 %v3522, %v3522
        %v3555 = vpack.c.b16 %v3523, %v3523
        %v3556 = vpack.c.b16 %v3524, %v3524
        %v3557 = vpack.c.b16 %v3525, %v3525
        %v3558 = vpack.c.b16 %v3526, %v3526
        %v3559 = vpack.c.b16 %v3527, %v3527
        %3560 = vrot.lane.b32.xlu0 %v3528, 32
        %v3561 = vpop.permute.xlu0 %3560
        %3562 = vrot.lane.b32.xlu0 %v3529, 32
        %v3563 = vpop.permute.xlu0 %3562
        %3564 = vrot.lane.b32.xlu0 %v3530, 32
        %v3565 = vpop.permute.xlu0 %3564
        %3566 = vrot.lane.b32.xlu0 %v3531, 32
        %v3567 = vpop.permute.xlu0 %3566
        %3568 = vrot.lane.b32.xlu0 %v3532, 32
        %v3569 = vpop.permute.xlu0 %3568
        %3570 = vrot.lane.b32.xlu0 %v3533, 32
        %v3571 = vpop.permute.xlu0 %3570
        %3572 = vrot.lane.b32.xlu0 %v3534, 32
        %v3573 = vpop.permute.xlu0 %3572
        %3574 = vrot.lane.b32.xlu0 %v3535, 32
        %v3575 = vpop.permute.xlu0 %3574
        %3576 = vrot.lane.b32.xlu0 %v3536, 32
        %v3577 = vpop.permute.xlu0 %3576
        %3578 = vrot.lane.b32.xlu0 %v3537, 32
        %v3579 = vpop.permute.xlu0 %3578
        %3580 = vrot.lane.b32.xlu0 %v3538, 32
        %v3581 = vpop.permute.xlu0 %3580
        %3582 = vrot.lane.b32.xlu0 %v3539, 32
        %v3583 = vpop.permute.xlu0 %3582
        %3584 = vrot.lane.b32.xlu0 %v3540, 32
        %v3585 = vpop.permute.xlu0 %3584
        %3586 = vrot.lane.b32.xlu0 %v3541, 32
        %v3587 = vpop.permute.xlu0 %3586
        %3588 = vrot.lane.b32.xlu0 %v3542, 32
        %v3589 = vpop.permute.xlu0 %3588
        %3590 = vrot.lane.b32.xlu0 %v3543, 32
        %v3591 = vpop.permute.xlu0 %3590
        %3592 = vrot.lane.b32.xlu0 %v3544, 32
        %v3593 = vpop.permute.xlu0 %3592
        %3594 = vrot.lane.b32.xlu0 %v3545, 32
        %v3595 = vpop.permute.xlu0 %3594
        %3596 = vrot.lane.b32.xlu0 %v3546, 32
        %v3597 = vpop.permute.xlu0 %3596
        %3598 = vrot.lane.b32.xlu0 %v3547, 32
        %v3599 = vpop.permute.xlu0 %3598
        %3600 = vrot.lane.b32.xlu0 %v3548, 32
        %v3601 = vpop.permute.xlu0 %3600
        %3602 = vrot.lane.b32.xlu0 %v3549, 32
        %v3603 = vpop.permute.xlu0 %3602
        %3604 = vrot.lane.b32.xlu0 %v3550, 32
        %v3605 = vpop.permute.xlu0 %3604
        %3606 = vrot.lane.b32.xlu0 %v3551, 32
        %v3607 = vpop.permute.xlu0 %3606
        %3608 = vrot.lane.b32.xlu0 %v3552, 32
        %v3609 = vpop.permute.xlu0 %3608
        %3610 = vrot.lane.b32.xlu0 %v3553, 32
        %v3611 = vpop.permute.xlu0 %3610
        %3612 = vrot.lane.b32.xlu0 %v3554, 32
        %v3613 = vpop.permute.xlu0 %3612
        %3614 = vrot.lane.b32.xlu0 %v3555, 32
        %v3615 = vpop.permute.xlu0 %3614
        %3616 = vrot.lane.b32.xlu0 %v3556, 32
        %v3617 = vpop.permute.xlu0 %3616
        %3618 = vrot.lane.b32.xlu0 %v3557, 32
        %v3619 = vpop.permute.xlu0 %3618
        %3620 = vrot.lane.b32.xlu0 %v3558, 32
        %v3621 = vpop.permute.xlu0 %3620
        %3622 = vrot.lane.b32.xlu0 %v3559, 32
        %v3623 = vpop.permute.xlu0 %3622
        %vm3656 = vcmask 388352
        %3657 = vst.msk [vmem:[#allocation4] sm:$0xf] %vm3656, %v3561
        %3658 = vst.msk [vmem:[#allocation4 + $0x8] sm:$0xf] %vm3656, %v3563
        %3659 = vst.msk [vmem:[#allocation4 + $0x10] sm:$0xf] %vm3656, %v3565
        %3660 = vst.msk [vmem:[#allocation4 + $0x18] sm:$0xf] %vm3656, %v3567
        %3661 = vst.msk [vmem:[#allocation4 + $0x20] sm:$0xf] %vm3656, %v3569
        %3662 = vst.msk [vmem:[#allocation4 + $0x28] sm:$0xf] %vm3656, %v3571
        %3663 = vst.msk [vmem:[#allocation4 + $0x30] sm:$0xf] %vm3656, %v3573
        %3664 = vst.msk [vmem:[#allocation4 + $0x38] sm:$0xf] %vm3656, %v3575
        %3665 = vst.msk [vmem:[#allocation4 + $0x40] sm:$0xf] %vm3656, %v3577
        %3666 = vst.msk [vmem:[#allocation4 + $0x48] sm:$0xf] %vm3656, %v3579
        %3667 = vst.msk [vmem:[#allocation4 + $0x50] sm:$0xf] %vm3656, %v3581
        %3668 = vst.msk [vmem:[#allocation4 + $0x58] sm:$0xf] %vm3656, %v3583
        %3669 = vst.msk [vmem:[#allocation4 + $0x60] sm:$0xf] %vm3656, %v3585
        %3670 = vst.msk [vmem:[#allocation4 + $0x68] sm:$0xf] %vm3656, %v3587
        %3671 = vst.msk [vmem:[#allocation4 + $0x70] sm:$0xf] %vm3656, %v3589
        %3672 = vst.msk [vmem:[#allocation4 + $0x78] sm:$0xf] %vm3656, %v3591
        %3673 = vst.msk [vmem:[#allocation4 + $0x80] sm:$0xf] %vm3656, %v3593
        %3674 = vst.msk [vmem:[#allocation4 + $0x88] sm:$0xf] %vm3656, %v3595
        %3675 = vst.msk [vmem:[#allocation4 + $0x90] sm:$0xf] %vm3656, %v3597
        %3676 = vst.msk [vmem:[#allocation4 + $0x98] sm:$0xf] %vm3656, %v3599
        %3677 = vst.msk [vmem:[#allocation4 + $0xa0] sm:$0xf] %vm3656, %v3601
        %3678 = vst.msk [vmem:[#allocation4 + $0xa8] sm:$0xf] %vm3656, %v3603
        %3679 = vst.msk [vmem:[#allocation4 + $0xb0] sm:$0xf] %vm3656, %v3605
        %3680 = vst.msk [vmem:[#allocation4 + $0xb8] sm:$0xf] %vm3656, %v3607
        %3681 = vst.msk [vmem:[#allocation4 + $0xc0] sm:$0xf] %vm3656, %v3609
        %3682 = vst.msk [vmem:[#allocation4 + $0xc8] sm:$0xf] %vm3656, %v3611
        %3683 = vst.msk [vmem:[#allocation4 + $0xd0] sm:$0xf] %vm3656, %v3613
        %3684 = vst.msk [vmem:[#allocation4 + $0xd8] sm:$0xf] %vm3656, %v3615
        %3685 = vst.msk [vmem:[#allocation4 + $0xe0] sm:$0xf] %vm3656, %v3617
        %3686 = vst.msk [vmem:[#allocation4 + $0xe8] sm:$0xf] %vm3656, %v3619
        %3687 = vst.msk [vmem:[#allocation4 + $0xf0] sm:$0xf] %vm3656, %v3621
        %3688 = vst.msk [vmem:[#allocation4 + $0xf8] sm:$0xf] %vm3656, %v3623
        %v3689 = vld [vmem:[%s2949] sm:$0xff]
        %v3690 = vld [vmem:[%s2949 + $0x8] sm:$0xff]
        %v3691 = vld [vmem:[%s2949 + $0x18] sm:$0xff]
        %v3692 = vld [vmem:[%s2949 + $0x20] sm:$0xff]
        %v3693 = vld [vmem:[%s2949 + $0x30] sm:$0xff]
        %v3694 = vld [vmem:[%s2949 + $0x38] sm:$0xff]
        %v3695 = vld [vmem:[%s2949 + $0x48] sm:$0xff]
        %v3696 = vld [vmem:[%s2949 + $0x50] sm:$0xff]
        %v3697 = vld [vmem:[%s2949 + $0x60] sm:$0xff]
        %v3698 = vld [vmem:[%s2949 + $0x68] sm:$0xff]
        %v3699 = vld [vmem:[%s2949 + $0x78] sm:$0xff]
        %v3700 = vld [vmem:[%s2949 + $0x80] sm:$0xff]
        %v3701 = vld [vmem:[%s2949 + $0x90] sm:$0xff]
        %v3702 = vld [vmem:[%s2949 + $0x98] sm:$0xff]
        %v3703 = vld [vmem:[%s2949 + $0xa8] sm:$0xff]
        %v3704 = vld [vmem:[%s2949 + $0xb0] sm:$0xff]
        %v3705 = vld [vmem:[%s2949 + $0xc0] sm:$0xff]
        %v3706 = vld [vmem:[%s2949 + $0xc8] sm:$0xff]
        %v3707 = vld [vmem:[%s2949 + $0xd8] sm:$0xff]
        %v3708 = vld [vmem:[%s2949 + $0xe0] sm:$0xff]
        %v3709 = vld [vmem:[%s2949 + $0xf0] sm:$0xff]
        %v3710 = vld [vmem:[%s2949 + $0xf8] sm:$0xff]
        %v3711 = vld [vmem:[%s2949 + $0x108] sm:$0xff]
        %v3712 = vld [vmem:[%s2949 + $0x110] sm:$0xff]
        %v3713 = vld [vmem:[%s2949 + $0x120] sm:$0xff]
        %v3714 = vld [vmem:[%s2949 + $0x128] sm:$0xff]
        %v3715 = vld [vmem:[%s2949 + $0x138] sm:$0xff]
        %v3716 = vld [vmem:[%s2949 + $0x140] sm:$0xff]
        %v3717 = vld [vmem:[%s2949 + $0x150] sm:$0xff]
        %v3718 = vld [vmem:[%s2949 + $0x158] sm:$0xff]
        %v3719 = vld [vmem:[%s2949 + $0x168] sm:$0xff]
        %v3720 = vld [vmem:[%s2949 + $0x170] sm:$0xff]
        %v3721 = vpack.c.bf16 %v3690, %v3689
        %v3722 = vpack.c.bf16 %v3692, %v3691
        %v3723 = vpack.c.bf16 %v3694, %v3693
        %v3724 = vpack.c.bf16 %v3696, %v3695
        %v3725 = vpack.c.bf16 %v3698, %v3697
        %v3726 = vpack.c.bf16 %v3700, %v3699
        %v3727 = vpack.c.bf16 %v3702, %v3701
        %v3728 = vpack.c.bf16 %v3704, %v3703
        %v3729 = vpack.c.bf16 %v3706, %v3705
        %v3730 = vpack.c.bf16 %v3708, %v3707
        %v3731 = vpack.c.bf16 %v3710, %v3709
        %v3732 = vpack.c.bf16 %v3712, %v3711
        %v3733 = vpack.c.bf16 %v3714, %v3713
        %v3734 = vpack.c.bf16 %v3716, %v3715
        %v3735 = vpack.c.bf16 %v3718, %v3717
        %v3736 = vpack.c.bf16 %v3720, %v3719
        %v3753 = vunpack.c.l.b16 %v3721
        %v3754 = vunpack.c.h.b16 %v3721
        %v3755 = vunpack.c.l.b16 %v3722
        %v3756 = vunpack.c.h.b16 %v3722
        %v3757 = vunpack.c.l.b16 %v3723
        %v3758 = vunpack.c.h.b16 %v3723
        %v3759 = vunpack.c.l.b16 %v3724
        %v3760 = vunpack.c.h.b16 %v3724
        %v3761 = vunpack.c.l.b16 %v3725
        %v3762 = vunpack.c.h.b16 %v3725
        %v3763 = vunpack.c.l.b16 %v3726
        %v3764 = vunpack.c.h.b16 %v3726
        %v3765 = vunpack.c.l.b16 %v3727
        %v3766 = vunpack.c.h.b16 %v3727
        %v3767 = vunpack.c.l.b16 %v3728
        %v3768 = vunpack.c.h.b16 %v3728
        %v3769 = vunpack.c.l.b16 %v3729
        %v3770 = vunpack.c.h.b16 %v3729
        %v3771 = vunpack.c.l.b16 %v3730
        %v3772 = vunpack.c.h.b16 %v3730
        %v3773 = vunpack.c.l.b16 %v3731
        %v3774 = vunpack.c.h.b16 %v3731
        %v3775 = vunpack.c.l.b16 %v3732
        %v3776 = vunpack.c.h.b16 %v3732
        %v3777 = vunpack.c.l.b16 %v3733
        %v3778 = vunpack.c.h.b16 %v3733
        %v3779 = vunpack.c.l.b16 %v3734
        %v3780 = vunpack.c.h.b16 %v3734
        %v3781 = vunpack.c.l.b16 %v3735
        %v3782 = vunpack.c.h.b16 %v3735
        %v3783 = vunpack.c.l.b16 %v3736
        %v3784 = vunpack.c.h.b16 %v3736
        %v3785 = vpack.c.b16 %v3753, %v3753
        %v3786 = vpack.c.b16 %v3754, %v3754
        %v3787 = vpack.c.b16 %v3755, %v3755
        %v3788 = vpack.c.b16 %v3756, %v3756
        %v3789 = vpack.c.b16 %v3757, %v3757
        %v3790 = vpack.c.b16 %v3758, %v3758
        %v3791 = vpack.c.b16 %v3759, %v3759
        %v3792 = vpack.c.b16 %v3760, %v3760
        %v3793 = vpack.c.b16 %v3761, %v3761
        %v3794 = vpack.c.b16 %v3762, %v3762
        %v3795 = vpack.c.b16 %v3763, %v3763
        %v3796 = vpack.c.b16 %v3764, %v3764
        %v3797 = vpack.c.b16 %v3765, %v3765
        %v3798 = vpack.c.b16 %v3766, %v3766
        %v3799 = vpack.c.b16 %v3767, %v3767
        %v3800 = vpack.c.b16 %v3768, %v3768
        %v3801 = vpack.c.b16 %v3769, %v3769
        %v3802 = vpack.c.b16 %v3770, %v3770
        %v3803 = vpack.c.b16 %v3771, %v3771
        %v3804 = vpack.c.b16 %v3772, %v3772
        %v3805 = vpack.c.b16 %v3773, %v3773
        %v3806 = vpack.c.b16 %v3774, %v3774
        %v3807 = vpack.c.b16 %v3775, %v3775
        %v3808 = vpack.c.b16 %v3776, %v3776
        %v3809 = vpack.c.b16 %v3777, %v3777
        %v3810 = vpack.c.b16 %v3778, %v3778
        %v3811 = vpack.c.b16 %v3779, %v3779
        %v3812 = vpack.c.b16 %v3780, %v3780
        %v3813 = vpack.c.b16 %v3781, %v3781
        %v3814 = vpack.c.b16 %v3782, %v3782
        %v3815 = vpack.c.b16 %v3783, %v3783
        %v3816 = vpack.c.b16 %v3784, %v3784
        %3817 = vrot.lane.b32.xlu0 %v3785, 48
        %v3818 = vpop.permute.xlu0 %3817
        %3819 = vrot.lane.b32.xlu0 %v3786, 48
        %v3820 = vpop.permute.xlu0 %3819
        %3821 = vrot.lane.b32.xlu0 %v3787, 48
        %v3822 = vpop.permute.xlu0 %3821
        %3823 = vrot.lane.b32.xlu0 %v3788, 48
        %v3824 = vpop.permute.xlu0 %3823
        %3825 = vrot.lane.b32.xlu0 %v3789, 48
        %v3826 = vpop.permute.xlu0 %3825
        %3827 = vrot.lane.b32.xlu0 %v3790, 48
        %v3828 = vpop.permute.xlu0 %3827
        %3829 = vrot.lane.b32.xlu0 %v3791, 48
        %v3830 = vpop.permute.xlu0 %3829
        %3831 = vrot.lane.b32.xlu0 %v3792, 48
        %v3832 = vpop.permute.xlu0 %3831
        %3833 = vrot.lane.b32.xlu0 %v3793, 48
        %v3834 = vpop.permute.xlu0 %3833
        %3835 = vrot.lane.b32.xlu0 %v3794, 48
        %v3836 = vpop.permute.xlu0 %3835
        %3837 = vrot.lane.b32.xlu0 %v3795, 48
        %v3838 = vpop.permute.xlu0 %3837
        %3839 = vrot.lane.b32.xlu0 %v3796, 48
        %v3840 = vpop.permute.xlu0 %3839
        %3841 = vrot.lane.b32.xlu0 %v3797, 48
        %v3842 = vpop.permute.xlu0 %3841
        %3843 = vrot.lane.b32.xlu0 %v3798, 48
        %v3844 = vpop.permute.xlu0 %3843
        %3845 = vrot.lane.b32.xlu0 %v3799, 48
        %v3846 = vpop.permute.xlu0 %3845
        %3847 = vrot.lane.b32.xlu0 %v3800, 48
        %v3848 = vpop.permute.xlu0 %3847
        %3849 = vrot.lane.b32.xlu0 %v3801, 48
        %v3850 = vpop.permute.xlu0 %3849
        %3851 = vrot.lane.b32.xlu0 %v3802, 48
        %v3852 = vpop.permute.xlu0 %3851
        %3853 = vrot.lane.b32.xlu0 %v3803, 48
        %v3854 = vpop.permute.xlu0 %3853
        %3855 = vrot.lane.b32.xlu0 %v3804, 48
        %v3856 = vpop.permute.xlu0 %3855
        %3857 = vrot.lane.b32.xlu0 %v3805, 48
        %v3858 = vpop.permute.xlu0 %3857
        %3859 = vrot.lane.b32.xlu0 %v3806, 48
        %v3860 = vpop.permute.xlu0 %3859
        %3861 = vrot.lane.b32.xlu0 %v3807, 48
        %v3862 = vpop.permute.xlu0 %3861
        %3863 = vrot.lane.b32.xlu0 %v3808, 48
        %v3864 = vpop.permute.xlu0 %3863
        %3865 = vrot.lane.b32.xlu0 %v3809, 48
        %v3866 = vpop.permute.xlu0 %3865
        %3867 = vrot.lane.b32.xlu0 %v3810, 48
        %v3868 = vpop.permute.xlu0 %3867
        %3869 = vrot.lane.b32.xlu0 %v3811, 48
        %v3870 = vpop.permute.xlu0 %3869
        %3871 = vrot.lane.b32.xlu0 %v3812, 48
        %v3872 = vpop.permute.xlu0 %3871
        %3873 = vrot.lane.b32.xlu0 %v3813, 48
        %v3874 = vpop.permute.xlu0 %3873
        %3875 = vrot.lane.b32.xlu0 %v3814, 48
        %v3876 = vpop.permute.xlu0 %3875
        %3877 = vrot.lane.b32.xlu0 %v3815, 48
        %v3878 = vpop.permute.xlu0 %3877
        %3879 = vrot.lane.b32.xlu0 %v3816, 48
        %v3880 = vpop.permute.xlu0 %3879
        %vm3913 = vcmask 519552
        %3914 = vst.msk [vmem:[#allocation4] sm:$0xf] %vm3913, %v3818
        %3915 = vst.msk [vmem:[#allocation4 + $0x8] sm:$0xf] %vm3913, %v3820
        %3916 = vst.msk [vmem:[#allocation4 + $0x10] sm:$0xf] %vm3913, %v3822
        %3917 = vst.msk [vmem:[#allocation4 + $0x18] sm:$0xf] %vm3913, %v3824
        %3918 = vst.msk [vmem:[#allocation4 + $0x20] sm:$0xf] %vm3913, %v3826
        %3919 = vst.msk [vmem:[#allocation4 + $0x28] sm:$0xf] %vm3913, %v3828
        %3920 = vst.msk [vmem:[#allocation4 + $0x30] sm:$0xf] %vm3913, %v3830
        %3921 = vst.msk [vmem:[#allocation4 + $0x38] sm:$0xf] %vm3913, %v3832
        %3922 = vst.msk [vmem:[#allocation4 + $0x40] sm:$0xf] %vm3913, %v3834
        %3923 = vst.msk [vmem:[#allocation4 + $0x48] sm:$0xf] %vm3913, %v3836
        %3924 = vst.msk [vmem:[#allocation4 + $0x50] sm:$0xf] %vm3913, %v3838
        %3925 = vst.msk [vmem:[#allocation4 + $0x58] sm:$0xf] %vm3913, %v3840
        %3926 = vst.msk [vmem:[#allocation4 + $0x60] sm:$0xf] %vm3913, %v3842
        %3927 = vst.msk [vmem:[#allocation4 + $0x68] sm:$0xf] %vm3913, %v3844
        %3928 = vst.msk [vmem:[#allocation4 + $0x70] sm:$0xf] %vm3913, %v3846
        %3929 = vst.msk [vmem:[#allocation4 + $0x78] sm:$0xf] %vm3913, %v3848
        %3930 = vst.msk [vmem:[#allocation4 + $0x80] sm:$0xf] %vm3913, %v3850
        %3931 = vst.msk [vmem:[#allocation4 + $0x88] sm:$0xf] %vm3913, %v3852
        %3932 = vst.msk [vmem:[#allocation4 + $0x90] sm:$0xf] %vm3913, %v3854
        %3933 = vst.msk [vmem:[#allocation4 + $0x98] sm:$0xf] %vm3913, %v3856
        %3934 = vst.msk [vmem:[#allocation4 + $0xa0] sm:$0xf] %vm3913, %v3858
        %3935 = vst.msk [vmem:[#allocation4 + $0xa8] sm:$0xf] %vm3913, %v3860
        %3936 = vst.msk [vmem:[#allocation4 + $0xb0] sm:$0xf] %vm3913, %v3862
        %3937 = vst.msk [vmem:[#allocation4 + $0xb8] sm:$0xf] %vm3913, %v3864
        %3938 = vst.msk [vmem:[#allocation4 + $0xc0] sm:$0xf] %vm3913, %v3866
        %3939 = vst.msk [vmem:[#allocation4 + $0xc8] sm:$0xf] %vm3913, %v3868
        %3940 = vst.msk [vmem:[#allocation4 + $0xd0] sm:$0xf] %vm3913, %v3870
        %3941 = vst.msk [vmem:[#allocation4 + $0xd8] sm:$0xf] %vm3913, %v3872
        %3942 = vst.msk [vmem:[#allocation4 + $0xe0] sm:$0xf] %vm3913, %v3874
        %3943 = vst.msk [vmem:[#allocation4 + $0xe8] sm:$0xf] %vm3913, %v3876
        %3944 = vst.msk [vmem:[#allocation4 + $0xf0] sm:$0xf] %vm3913, %v3878
        %3945 = vst.msk [vmem:[#allocation4 + $0xf8] sm:$0xf] %vm3913, %v3880
        %v3946 = vld [vmem:[%s2949 + $0x1] sm:$0xff]
        %v3947 = vld [vmem:[%s2949 + $0x9] sm:$0xff]
        %v3948 = vld [vmem:[%s2949 + $0x19] sm:$0xff]
        %v3949 = vld [vmem:[%s2949 + $0x21] sm:$0xff]
        %v3950 = vld [vmem:[%s2949 + $0x31] sm:$0xff]
        %v3951 = vld [vmem:[%s2949 + $0x39] sm:$0xff]
        %v3952 = vld [vmem:[%s2949 + $0x49] sm:$0xff]
        %v3953 = vld [vmem:[%s2949 + $0x51] sm:$0xff]
        %v3954 = vld [vmem:[%s2949 + $0x61] sm:$0xff]
        %v3955 = vld [vmem:[%s2949 + $0x69] sm:$0xff]
        %v3956 = vld [vmem:[%s2949 + $0x79] sm:$0xff]
        %v3957 = vld [vmem:[%s2949 + $0x81] sm:$0xff]
        %v3958 = vld [vmem:[%s2949 + $0x91] sm:$0xff]
        %v3959 = vld [vmem:[%s2949 + $0x99] sm:$0xff]
        %v3960 = vld [vmem:[%s2949 + $0xa9] sm:$0xff]
        %v3961 = vld [vmem:[%s2949 + $0xb1] sm:$0xff]
        %v3962 = vld [vmem:[%s2949 + $0xc1] sm:$0xff]
        %v3963 = vld [vmem:[%s2949 + $0xc9] sm:$0xff]
        %v3964 = vld [vmem:[%s2949 + $0xd9] sm:$0xff]
        %v3965 = vld [vmem:[%s2949 + $0xe1] sm:$0xff]
        %v3966 = vld [vmem:[%s2949 + $0xf1] sm:$0xff]
        %v3967 = vld [vmem:[%s2949 + $0xf9] sm:$0xff]
        %v3968 = vld [vmem:[%s2949 + $0x109] sm:$0xff]
        %v3969 = vld [vmem:[%s2949 + $0x111] sm:$0xff]
        %v3970 = vld [vmem:[%s2949 + $0x121] sm:$0xff]
        %v3971 = vld [vmem:[%s2949 + $0x129] sm:$0xff]
        %v3972 = vld [vmem:[%s2949 + $0x139] sm:$0xff]
        %v3973 = vld [vmem:[%s2949 + $0x141] sm:$0xff]
        %v3974 = vld [vmem:[%s2949 + $0x151] sm:$0xff]
        %v3975 = vld [vmem:[%s2949 + $0x159] sm:$0xff]
        %v3976 = vld [vmem:[%s2949 + $0x169] sm:$0xff]
        %v3977 = vld [vmem:[%s2949 + $0x171] sm:$0xff]
        %v3978 = vpack.c.bf16 %v3947, %v3946
        %v3979 = vpack.c.bf16 %v3949, %v3948
        %v3980 = vpack.c.bf16 %v3951, %v3950
        %v3981 = vpack.c.bf16 %v3953, %v3952
        %v3982 = vpack.c.bf16 %v3955, %v3954
        %v3983 = vpack.c.bf16 %v3957, %v3956
        %v3984 = vpack.c.bf16 %v3959, %v3958
        %v3985 = vpack.c.bf16 %v3961, %v3960
        %v3986 = vpack.c.bf16 %v3963, %v3962
        %v3987 = vpack.c.bf16 %v3965, %v3964
        %v3988 = vpack.c.bf16 %v3967, %v3966
        %v3989 = vpack.c.bf16 %v3969, %v3968
        %v3990 = vpack.c.bf16 %v3971, %v3970
        %v3991 = vpack.c.bf16 %v3973, %v3972
        %v3992 = vpack.c.bf16 %v3975, %v3974
        %v3993 = vpack.c.bf16 %v3977, %v3976
        %v4010 = vunpack.c.l.b16 %v3978
        %v4011 = vunpack.c.h.b16 %v3978
        %v4012 = vunpack.c.l.b16 %v3979
        %v4013 = vunpack.c.h.b16 %v3979
        %v4014 = vunpack.c.l.b16 %v3980
        %v4015 = vunpack.c.h.b16 %v3980
        %v4016 = vunpack.c.l.b16 %v3981
        %v4017 = vunpack.c.h.b16 %v3981
        %v4018 = vunpack.c.l.b16 %v3982
        %v4019 = vunpack.c.h.b16 %v3982
        %v4020 = vunpack.c.l.b16 %v3983
        %v4021 = vunpack.c.h.b16 %v3983
        %v4022 = vunpack.c.l.b16 %v3984
        %v4023 = vunpack.c.h.b16 %v3984
        %v4024 = vunpack.c.l.b16 %v3985
        %v4025 = vunpack.c.h.b16 %v3985
        %v4026 = vunpack.c.l.b16 %v3986
        %v4027 = vunpack.c.h.b16 %v3986
        %v4028 = vunpack.c.l.b16 %v3987
        %v4029 = vunpack.c.h.b16 %v3987
        %v4030 = vunpack.c.l.b16 %v3988
        %v4031 = vunpack.c.h.b16 %v3988
        %v4032 = vunpack.c.l.b16 %v3989
        %v4033 = vunpack.c.h.b16 %v3989
        %v4034 = vunpack.c.l.b16 %v3990
        %v4035 = vunpack.c.h.b16 %v3990
        %v4036 = vunpack.c.l.b16 %v3991
        %v4037 = vunpack.c.h.b16 %v3991
        %v4038 = vunpack.c.l.b16 %v3992
        %v4039 = vunpack.c.h.b16 %v3992
        %v4040 = vunpack.c.l.b16 %v3993
        %v4041 = vunpack.c.h.b16 %v3993
        %v4042 = vpack.c.b16 %v4010, %v4010
        %v4043 = vpack.c.b16 %v4011, %v4011
        %v4044 = vpack.c.b16 %v4012, %v4012
        %v4045 = vpack.c.b16 %v4013, %v4013
        %v4046 = vpack.c.b16 %v4014, %v4014
        %v4047 = vpack.c.b16 %v4015, %v4015
        %v4048 = vpack.c.b16 %v4016, %v4016
        %v4049 = vpack.c.b16 %v4017, %v4017
        %v4050 = vpack.c.b16 %v4018, %v4018
        %v4051 = vpack.c.b16 %v4019, %v4019
        %v4052 = vpack.c.b16 %v4020, %v4020
        %v4053 = vpack.c.b16 %v4021, %v4021
        %v4054 = vpack.c.b16 %v4022, %v4022
        %v4055 = vpack.c.b16 %v4023, %v4023
        %v4056 = vpack.c.b16 %v4024, %v4024
        %v4057 = vpack.c.b16 %v4025, %v4025
        %v4058 = vpack.c.b16 %v4026, %v4026
        %v4059 = vpack.c.b16 %v4027, %v4027
        %v4060 = vpack.c.b16 %v4028, %v4028
        %v4061 = vpack.c.b16 %v4029, %v4029
        %v4062 = vpack.c.b16 %v4030, %v4030
        %v4063 = vpack.c.b16 %v4031, %v4031
        %v4064 = vpack.c.b16 %v4032, %v4032
        %v4065 = vpack.c.b16 %v4033, %v4033
        %v4066 = vpack.c.b16 %v4034, %v4034
        %v4067 = vpack.c.b16 %v4035, %v4035
        %v4068 = vpack.c.b16 %v4036, %v4036
        %v4069 = vpack.c.b16 %v4037, %v4037
        %v4070 = vpack.c.b16 %v4038, %v4038
        %v4071 = vpack.c.b16 %v4039, %v4039
        %v4072 = vpack.c.b16 %v4040, %v4040
        %v4073 = vpack.c.b16 %v4041, %v4041
        %4074 = vrot.lane.b32.xlu0 %v4042, 64
        %v4075 = vpop.permute.xlu0 %4074
        %4076 = vrot.lane.b32.xlu0 %v4043, 64
        %v4077 = vpop.permute.xlu0 %4076
        %4078 = vrot.lane.b32.xlu0 %v4044, 64
        %v4079 = vpop.permute.xlu0 %4078
        %4080 = vrot.lane.b32.xlu0 %v4045, 64
        %v4081 = vpop.permute.xlu0 %4080
        %4082 = vrot.lane.b32.xlu0 %v4046, 64
        %v4083 = vpop.permute.xlu0 %4082
        %4084 = vrot.lane.b32.xlu0 %v4047, 64
        %v4085 = vpop.permute.xlu0 %4084
        %4086 = vrot.lane.b32.xlu0 %v4048, 64
        %v4087 = vpop.permute.xlu0 %4086
        %4088 = vrot.lane.b32.xlu0 %v4049, 64
        %v4089 = vpop.permute.xlu0 %4088
        %4090 = vrot.lane.b32.xlu0 %v4050, 64
        %v4091 = vpop.permute.xlu0 %4090
        %4092 = vrot.lane.b32.xlu0 %v4051, 64
        %v4093 = vpop.permute.xlu0 %4092
        %4094 = vrot.lane.b32.xlu0 %v4052, 64
        %v4095 = vpop.permute.xlu0 %4094
        %4096 = vrot.lane.b32.xlu0 %v4053, 64
        %v4097 = vpop.permute.xlu0 %4096
        %4098 = vrot.lane.b32.xlu0 %v4054, 64
        %v4099 = vpop.permute.xlu0 %4098
        %4100 = vrot.lane.b32.xlu0 %v4055, 64
        %v4101 = vpop.permute.xlu0 %4100
        %4102 = vrot.lane.b32.xlu0 %v4056, 64
        %v4103 = vpop.permute.xlu0 %4102
        %4104 = vrot.lane.b32.xlu0 %v4057, 64
        %v4105 = vpop.permute.xlu0 %4104
        %4106 = vrot.lane.b32.xlu0 %v4058, 64
        %v4107 = vpop.permute.xlu0 %4106
        %4108 = vrot.lane.b32.xlu0 %v4059, 64
        %v4109 = vpop.permute.xlu0 %4108
        %4110 = vrot.lane.b32.xlu0 %v4060, 64
        %v4111 = vpop.permute.xlu0 %4110
        %4112 = vrot.lane.b32.xlu0 %v4061, 64
        %v4113 = vpop.permute.xlu0 %4112
        %4114 = vrot.lane.b32.xlu0 %v4062, 64
        %v4115 = vpop.permute.xlu0 %4114
        %4116 = vrot.lane.b32.xlu0 %v4063, 64
        %v4117 = vpop.permute.xlu0 %4116
        %4118 = vrot.lane.b32.xlu0 %v4064, 64
        %v4119 = vpop.permute.xlu0 %4118
        %4120 = vrot.lane.b32.xlu0 %v4065, 64
        %v4121 = vpop.permute.xlu0 %4120
        %4122 = vrot.lane.b32.xlu0 %v4066, 64
        %v4123 = vpop.permute.xlu0 %4122
        %4124 = vrot.lane.b32.xlu0 %v4067, 64
        %v4125 = vpop.permute.xlu0 %4124
        %4126 = vrot.lane.b32.xlu0 %v4068, 64
        %v4127 = vpop.permute.xlu0 %4126
        %4128 = vrot.lane.b32.xlu0 %v4069, 64
        %v4129 = vpop.permute.xlu0 %4128
        %4130 = vrot.lane.b32.xlu0 %v4070, 64
        %v4131 = vpop.permute.xlu0 %4130
        %4132 = vrot.lane.b32.xlu0 %v4071, 64
        %v4133 = vpop.permute.xlu0 %4132
        %4134 = vrot.lane.b32.xlu0 %v4072, 64
        %v4135 = vpop.permute.xlu0 %4134
        %4136 = vrot.lane.b32.xlu0 %v4073, 64
        %v4137 = vpop.permute.xlu0 %4136
        %vm4170 = vcmask 650752
        %4171 = vst.msk [vmem:[#allocation4] sm:$0xf] %vm4170, %v4075
        %4172 = vst.msk [vmem:[#allocation4 + $0x8] sm:$0xf] %vm4170, %v4077
        %4173 = vst.msk [vmem:[#allocation4 + $0x10] sm:$0xf] %vm4170, %v4079
        %4174 = vst.msk [vmem:[#allocation4 + $0x18] sm:$0xf] %vm4170, %v4081
        %4175 = vst.msk [vmem:[#allocation4 + $0x20] sm:$0xf] %vm4170, %v4083
        %4176 = vst.msk [vmem:[#allocation4 + $0x28] sm:$0xf] %vm4170, %v4085
        %4177 = vst.msk [vmem:[#allocation4 + $0x30] sm:$0xf] %vm4170, %v4087
        %4178 = vst.msk [vmem:[#allocation4 + $0x38] sm:$0xf] %vm4170, %v4089
        %4179 = vst.msk [vmem:[#allocation4 + $0x40] sm:$0xf] %vm4170, %v4091
        %4180 = vst.msk [vmem:[#allocation4 + $0x48] sm:$0xf] %vm4170, %v4093
        %4181 = vst.msk [vmem:[#allocation4 + $0x50] sm:$0xf] %vm4170, %v4095
        %4182 = vst.msk [vmem:[#allocation4 + $0x58] sm:$0xf] %vm4170, %v4097
        %4183 = vst.msk [vmem:[#allocation4 + $0x60] sm:$0xf] %vm4170, %v4099
        %4184 = vst.msk [vmem:[#allocation4 + $0x68] sm:$0xf] %vm4170, %v4101
        %4185 = vst.msk [vmem:[#allocation4 + $0x70] sm:$0xf] %vm4170, %v4103
        %4186 = vst.msk [vmem:[#allocation4 + $0x78] sm:$0xf] %vm4170, %v4105
        %4187 = vst.msk [vmem:[#allocation4 + $0x80] sm:$0xf] %vm4170, %v4107
        %4188 = vst.msk [vmem:[#allocation4 + $0x88] sm:$0xf] %vm4170, %v4109
        %4189 = vst.msk [vmem:[#allocation4 + $0x90] sm:$0xf] %vm4170, %v4111
        %4190 = vst.msk [vmem:[#allocation4 + $0x98] sm:$0xf] %vm4170, %v4113
        %4191 = vst.msk [vmem:[#allocation4 + $0xa0] sm:$0xf] %vm4170, %v4115
        %4192 = vst.msk [vmem:[#allocation4 + $0xa8] sm:$0xf] %vm4170, %v4117
        %4193 = vst.msk [vmem:[#allocation4 + $0xb0] sm:$0xf] %vm4170, %v4119
        %4194 = vst.msk [vmem:[#allocation4 + $0xb8] sm:$0xf] %vm4170, %v4121
        %4195 = vst.msk [vmem:[#allocation4 + $0xc0] sm:$0xf] %vm4170, %v4123
        %4196 = vst.msk [vmem:[#allocation4 + $0xc8] sm:$0xf] %vm4170, %v4125
        %4197 = vst.msk [vmem:[#allocation4 + $0xd0] sm:$0xf] %vm4170, %v4127
        %4198 = vst.msk [vmem:[#allocation4 + $0xd8] sm:$0xf] %vm4170, %v4129
        %4199 = vst.msk [vmem:[#allocation4 + $0xe0] sm:$0xf] %vm4170, %v4131
        %4200 = vst.msk [vmem:[#allocation4 + $0xe8] sm:$0xf] %vm4170, %v4133
        %4201 = vst.msk [vmem:[#allocation4 + $0xf0] sm:$0xf] %vm4170, %v4135
        %4202 = vst.msk [vmem:[#allocation4 + $0xf8] sm:$0xf] %vm4170, %v4137
        %v4203 = vld [vmem:[%s2949 + $0x2] sm:$0xff]
        %v4204 = vld [vmem:[%s2949 + $0xa] sm:$0xff]
        %v4205 = vld [vmem:[%s2949 + $0x1a] sm:$0xff]
        %v4206 = vld [vmem:[%s2949 + $0x22] sm:$0xff]
        %v4207 = vld [vmem:[%s2949 + $0x32] sm:$0xff]
        %v4208 = vld [vmem:[%s2949 + $0x3a] sm:$0xff]
        %v4209 = vld [vmem:[%s2949 + $0x4a] sm:$0xff]
        %v4210 = vld [vmem:[%s2949 + $0x52] sm:$0xff]
        %v4211 = vld [vmem:[%s2949 + $0x62] sm:$0xff]
        %v4212 = vld [vmem:[%s2949 + $0x6a] sm:$0xff]
        %v4213 = vld [vmem:[%s2949 + $0x7a] sm:$0xff]
        %v4214 = vld [vmem:[%s2949 + $0x82] sm:$0xff]
        %v4215 = vld [vmem:[%s2949 + $0x92] sm:$0xff]
        %v4216 = vld [vmem:[%s2949 + $0x9a] sm:$0xff]
        %v4217 = vld [vmem:[%s2949 + $0xaa] sm:$0xff]
        %v4218 = vld [vmem:[%s2949 + $0xb2] sm:$0xff]
        %v4219 = vld [vmem:[%s2949 + $0xc2] sm:$0xff]
        %v4220 = vld [vmem:[%s2949 + $0xca] sm:$0xff]
        %v4221 = vld [vmem:[%s2949 + $0xda] sm:$0xff]
        %v4222 = vld [vmem:[%s2949 + $0xe2] sm:$0xff]
        %v4223 = vld [vmem:[%s2949 + $0xf2] sm:$0xff]
        %v4224 = vld [vmem:[%s2949 + $0xfa] sm:$0xff]
        %v4225 = vld [vmem:[%s2949 + $0x10a] sm:$0xff]
        %v4226 = vld [vmem:[%s2949 + $0x112] sm:$0xff]
        %v4227 = vld [vmem:[%s2949 + $0x122] sm:$0xff]
        %v4228 = vld [vmem:[%s2949 + $0x12a] sm:$0xff]
        %v4229 = vld [vmem:[%s2949 + $0x13a] sm:$0xff]
        %v4230 = vld [vmem:[%s2949 + $0x142] sm:$0xff]
        %v4231 = vld [vmem:[%s2949 + $0x152] sm:$0xff]
        %v4232 = vld [vmem:[%s2949 + $0x15a] sm:$0xff]
        %v4233 = vld [vmem:[%s2949 + $0x16a] sm:$0xff]
        %v4234 = vld [vmem:[%s2949 + $0x172] sm:$0xff]
        %v4235 = vpack.c.bf16 %v4204, %v4203
        %v4236 = vpack.c.bf16 %v4206, %v4205
        %v4237 = vpack.c.bf16 %v4208, %v4207
        %v4238 = vpack.c.bf16 %v4210, %v4209
        %v4239 = vpack.c.bf16 %v4212, %v4211
        %v4240 = vpack.c.bf16 %v4214, %v4213
        %v4241 = vpack.c.bf16 %v4216, %v4215
        %v4242 = vpack.c.bf16 %v4218, %v4217
        %v4243 = vpack.c.bf16 %v4220, %v4219
        %v4244 = vpack.c.bf16 %v4222, %v4221
        %v4245 = vpack.c.bf16 %v4224, %v4223
        %v4246 = vpack.c.bf16 %v4226, %v4225
        %v4247 = vpack.c.bf16 %v4228, %v4227
        %v4248 = vpack.c.bf16 %v4230, %v4229
        %v4249 = vpack.c.bf16 %v4232, %v4231
        %v4250 = vpack.c.bf16 %v4234, %v4233
        %v4267 = vunpack.c.l.b16 %v4235
        %v4268 = vunpack.c.h.b16 %v4235
        %v4269 = vunpack.c.l.b16 %v4236
        %v4270 = vunpack.c.h.b16 %v4236
        %v4271 = vunpack.c.l.b16 %v4237
        %v4272 = vunpack.c.h.b16 %v4237
        %v4273 = vunpack.c.l.b16 %v4238
        %v4274 = vunpack.c.h.b16 %v4238
        %v4275 = vunpack.c.l.b16 %v4239
        %v4276 = vunpack.c.h.b16 %v4239
        %v4277 = vunpack.c.l.b16 %v4240
        %v4278 = vunpack.c.h.b16 %v4240
        %v4279 = vunpack.c.l.b16 %v4241
        %v4280 = vunpack.c.h.b16 %v4241
        %v4281 = vunpack.c.l.b16 %v4242
        %v4282 = vunpack.c.h.b16 %v4242
        %v4283 = vunpack.c.l.b16 %v4243
        %v4284 = vunpack.c.h.b16 %v4243
        %v4285 = vunpack.c.l.b16 %v4244
        %v4286 = vunpack.c.h.b16 %v4244
        %v4287 = vunpack.c.l.b16 %v4245
        %v4288 = vunpack.c.h.b16 %v4245
        %v4289 = vunpack.c.l.b16 %v4246
        %v4290 = vunpack.c.h.b16 %v4246
        %v4291 = vunpack.c.l.b16 %v4247
        %v4292 = vunpack.c.h.b16 %v4247
        %v4293 = vunpack.c.l.b16 %v4248
        %v4294 = vunpack.c.h.b16 %v4248
        %v4295 = vunpack.c.l.b16 %v4249
        %v4296 = vunpack.c.h.b16 %v4249
        %v4297 = vunpack.c.l.b16 %v4250
        %v4298 = vunpack.c.h.b16 %v4250
        %v4299 = vpack.c.b16 %v4267, %v4267
        %v4300 = vpack.c.b16 %v4268, %v4268
        %v4301 = vpack.c.b16 %v4269, %v4269
        %v4302 = vpack.c.b16 %v4270, %v4270
        %v4303 = vpack.c.b16 %v4271, %v4271
        %v4304 = vpack.c.b16 %v4272, %v4272
        %v4305 = vpack.c.b16 %v4273, %v4273
        %v4306 = vpack.c.b16 %v4274, %v4274
        %v4307 = vpack.c.b16 %v4275, %v4275
        %v4308 = vpack.c.b16 %v4276, %v4276
        %v4309 = vpack.c.b16 %v4277, %v4277
        %v4310 = vpack.c.b16 %v4278, %v4278
        %v4311 = vpack.c.b16 %v4279, %v4279
        %v4312 = vpack.c.b16 %v4280, %v4280
        %v4313 = vpack.c.b16 %v4281, %v4281
        %v4314 = vpack.c.b16 %v4282, %v4282
        %v4315 = vpack.c.b16 %v4283, %v4283
        %v4316 = vpack.c.b16 %v4284, %v4284
        %v4317 = vpack.c.b16 %v4285, %v4285
        %v4318 = vpack.c.b16 %v4286, %v4286
        %v4319 = vpack.c.b16 %v4287, %v4287
        %v4320 = vpack.c.b16 %v4288, %v4288
        %v4321 = vpack.c.b16 %v4289, %v4289
        %v4322 = vpack.c.b16 %v4290, %v4290
        %v4323 = vpack.c.b16 %v4291, %v4291
        %v4324 = vpack.c.b16 %v4292, %v4292
        %v4325 = vpack.c.b16 %v4293, %v4293
        %v4326 = vpack.c.b16 %v4294, %v4294
        %v4327 = vpack.c.b16 %v4295, %v4295
        %v4328 = vpack.c.b16 %v4296, %v4296
        %v4329 = vpack.c.b16 %v4297, %v4297
        %v4330 = vpack.c.b16 %v4298, %v4298
        %4331 = vrot.lane.b32.xlu0 %v4299, 80
        %v4332 = vpop.permute.xlu0 %4331
        %4333 = vrot.lane.b32.xlu0 %v4300, 80
        %v4334 = vpop.permute.xlu0 %4333
        %4335 = vrot.lane.b32.xlu0 %v4301, 80
        %v4336 = vpop.permute.xlu0 %4335
        %4337 = vrot.lane.b32.xlu0 %v4302, 80
        %v4338 = vpop.permute.xlu0 %4337
        %4339 = vrot.lane.b32.xlu0 %v4303, 80
        %v4340 = vpop.permute.xlu0 %4339
        %4341 = vrot.lane.b32.xlu0 %v4304, 80
        %v4342 = vpop.permute.xlu0 %4341
        %4343 = vrot.lane.b32.xlu0 %v4305, 80
        %v4344 = vpop.permute.xlu0 %4343
        %4345 = vrot.lane.b32.xlu0 %v4306, 80
        %v4346 = vpop.permute.xlu0 %4345
        %4347 = vrot.lane.b32.xlu0 %v4307, 80
        %v4348 = vpop.permute.xlu0 %4347
        %4349 = vrot.lane.b32.xlu0 %v4308, 80
        %v4350 = vpop.permute.xlu0 %4349
        %4351 = vrot.lane.b32.xlu0 %v4309, 80
        %v4352 = vpop.permute.xlu0 %4351
        %4353 = vrot.lane.b32.xlu0 %v4310, 80
        %v4354 = vpop.permute.xlu0 %4353
        %4355 = vrot.lane.b32.xlu0 %v4311, 80
        %v4356 = vpop.permute.xlu0 %4355
        %4357 = vrot.lane.b32.xlu0 %v4312, 80
        %v4358 = vpop.permute.xlu0 %4357
        %4359 = vrot.lane.b32.xlu0 %v4313, 80
        %v4360 = vpop.permute.xlu0 %4359
        %4361 = vrot.lane.b32.xlu0 %v4314, 80
        %v4362 = vpop.permute.xlu0 %4361
        %4363 = vrot.lane.b32.xlu0 %v4315, 80
        %v4364 = vpop.permute.xlu0 %4363
        %4365 = vrot.lane.b32.xlu0 %v4316, 80
        %v4366 = vpop.permute.xlu0 %4365
        %4367 = vrot.lane.b32.xlu0 %v4317, 80
        %v4368 = vpop.permute.xlu0 %4367
        %4369 = vrot.lane.b32.xlu0 %v4318, 80
        %v4370 = vpop.permute.xlu0 %4369
        %4371 = vrot.lane.b32.xlu0 %v4319, 80
        %v4372 = vpop.permute.xlu0 %4371
        %4373 = vrot.lane.b32.xlu0 %v4320, 80
        %v4374 = vpop.permute.xlu0 %4373
        %4375 = vrot.lane.b32.xlu0 %v4321, 80
        %v4376 = vpop.permute.xlu0 %4375
        %4377 = vrot.lane.b32.xlu0 %v4322, 80
        %v4378 = vpop.permute.xlu0 %4377
        %4379 = vrot.lane.b32.xlu0 %v4323, 80
        %v4380 = vpop.permute.xlu0 %4379
        %4381 = vrot.lane.b32.xlu0 %v4324, 80
        %v4382 = vpop.permute.xlu0 %4381
        %4383 = vrot.lane.b32.xlu0 %v4325, 80
        %v4384 = vpop.permute.xlu0 %4383
        %4385 = vrot.lane.b32.xlu0 %v4326, 80
        %v4386 = vpop.permute.xlu0 %4385
        %4387 = vrot.lane.b32.xlu0 %v4327, 80
        %v4388 = vpop.permute.xlu0 %4387
        %4389 = vrot.lane.b32.xlu0 %v4328, 80
        %v4390 = vpop.permute.xlu0 %4389
        %4391 = vrot.lane.b32.xlu0 %v4329, 80
        %v4392 = vpop.permute.xlu0 %4391
        %4393 = vrot.lane.b32.xlu0 %v4330, 80
        %v4394 = vpop.permute.xlu0 %4393
        %vm4427 = vcmask 781952
        %4428 = vst.msk [vmem:[#allocation4] sm:$0xf] %vm4427, %v4332
        %4429 = vst.msk [vmem:[#allocation4 + $0x8] sm:$0xf] %vm4427, %v4334
        %4430 = vst.msk [vmem:[#allocation4 + $0x10] sm:$0xf] %vm4427, %v4336
        %4431 = vst.msk [vmem:[#allocation4 + $0x18] sm:$0xf] %vm4427, %v4338
        %4432 = vst.msk [vmem:[#allocation4 + $0x20] sm:$0xf] %vm4427, %v4340
        %4433 = vst.msk [vmem:[#allocation4 + $0x28] sm:$0xf] %vm4427, %v4342
        %4434 = vst.msk [vmem:[#allocation4 + $0x30] sm:$0xf] %vm4427, %v4344
        %4435 = vst.msk [vmem:[#allocation4 + $0x38] sm:$0xf] %vm4427, %v4346
        %4436 = vst.msk [vmem:[#allocation4 + $0x40] sm:$0xf] %vm4427, %v4348
        %4437 = vst.msk [vmem:[#allocation4 + $0x48] sm:$0xf] %vm4427, %v4350
        %4438 = vst.msk [vmem:[#allocation4 + $0x50] sm:$0xf] %vm4427, %v4352
        %4439 = vst.msk [vmem:[#allocation4 + $0x58] sm:$0xf] %vm4427, %v4354
        %4440 = vst.msk [vmem:[#allocation4 + $0x60] sm:$0xf] %vm4427, %v4356
        %4441 = vst.msk [vmem:[#allocation4 + $0x68] sm:$0xf] %vm4427, %v4358
        %4442 = vst.msk [vmem:[#allocation4 + $0x70] sm:$0xf] %vm4427, %v4360
        %4443 = vst.msk [vmem:[#allocation4 + $0x78] sm:$0xf] %vm4427, %v4362
        %4444 = vst.msk [vmem:[#allocation4 + $0x80] sm:$0xf] %vm4427, %v4364
        %4445 = vst.msk [vmem:[#allocation4 + $0x88] sm:$0xf] %vm4427, %v4366
        %4446 = vst.msk [vmem:[#allocation4 + $0x90] sm:$0xf] %vm4427, %v4368
        %4447 = vst.msk [vmem:[#allocation4 + $0x98] sm:$0xf] %vm4427, %v4370
        %4448 = vst.msk [vmem:[#allocation4 + $0xa0] sm:$0xf] %vm4427, %v4372
        %4449 = vst.msk [vmem:[#allocation4 + $0xa8] sm:$0xf] %vm4427, %v4374
        %4450 = vst.msk [vmem:[#allocation4 + $0xb0] sm:$0xf] %vm4427, %v4376
        %4451 = vst.msk [vmem:[#allocation4 + $0xb8] sm:$0xf] %vm4427, %v4378
        %4452 = vst.msk [vmem:[#allocation4 + $0xc0] sm:$0xf] %vm4427, %v4380
        %4453 = vst.msk [vmem:[#allocation4 + $0xc8] sm:$0xf] %vm4427, %v4382
        %4454 = vst.msk [vmem:[#allocation4 + $0xd0] sm:$0xf] %vm4427, %v4384
        %4455 = vst.msk [vmem:[#allocation4 + $0xd8] sm:$0xf] %vm4427, %v4386
        %4456 = vst.msk [vmem:[#allocation4 + $0xe0] sm:$0xf] %vm4427, %v4388
        %4457 = vst.msk [vmem:[#allocation4 + $0xe8] sm:$0xf] %vm4427, %v4390
        %4458 = vst.msk [vmem:[#allocation4 + $0xf0] sm:$0xf] %vm4427, %v4392
        %4459 = vst.msk [vmem:[#allocation4 + $0xf8] sm:$0xf] %vm4427, %v4394
        %s4460 = scalar_lea.vmem [#allocation2], 48
        %v4461 = vld [vmem:[%s4460] sm:$0xff]
        %v4462 = vld [vmem:[%s4460 + $0x8] sm:$0xff]
        %v4463 = vld [vmem:[%s4460 + $0x18] sm:$0xff]
        %v4464 = vld [vmem:[%s4460 + $0x20] sm:$0xff]
        %v4465 = vld [vmem:[%s4460 + $0x30] sm:$0xff]
        %v4466 = vld [vmem:[%s4460 + $0x38] sm:$0xff]
        %v4467 = vld [vmem:[%s4460 + $0x48] sm:$0xff]
        %v4468 = vld [vmem:[%s4460 + $0x50] sm:$0xff]
        %v4469 = vld [vmem:[%s4460 + $0x60] sm:$0xff]
        %v4470 = vld [vmem:[%s4460 + $0x68] sm:$0xff]
        %v4471 = vld [vmem:[%s4460 + $0x78] sm:$0xff]
        %v4472 = vld [vmem:[%s4460 + $0x80] sm:$0xff]
        %v4473 = vld [vmem:[%s4460 + $0x90] sm:$0xff]
        %v4474 = vld [vmem:[%s4460 + $0x98] sm:$0xff]
        %v4475 = vld [vmem:[%s4460 + $0xa8] sm:$0xff]
        %v4476 = vld [vmem:[%s4460 + $0xb0] sm:$0xff]
        %v4477 = vld [vmem:[%s4460 + $0xc0] sm:$0xff]
        %v4478 = vld [vmem:[%s4460 + $0xc8] sm:$0xff]
        %v4479 = vld [vmem:[%s4460 + $0xd8] sm:$0xff]
        %v4480 = vld [vmem:[%s4460 + $0xe0] sm:$0xff]
        %v4481 = vld [vmem:[%s4460 + $0xf0] sm:$0xff]
        %v4482 = vld [vmem:[%s4460 + $0xf8] sm:$0xff]
        %v4483 = vld [vmem:[%s4460 + $0x108] sm:$0xff]
        %v4484 = vld [vmem:[%s4460 + $0x110] sm:$0xff]
        %v4485 = vld [vmem:[%s4460 + $0x120] sm:$0xff]
        %v4486 = vld [vmem:[%s4460 + $0x128] sm:$0xff]
        %v4487 = vld [vmem:[%s4460 + $0x138] sm:$0xff]
        %v4488 = vld [vmem:[%s4460 + $0x140] sm:$0xff]
        %v4489 = vld [vmem:[%s4460 + $0x150] sm:$0xff]
        %v4490 = vld [vmem:[%s4460 + $0x158] sm:$0xff]
        %v4491 = vld [vmem:[%s4460 + $0x168] sm:$0xff]
        %v4492 = vld [vmem:[%s4460 + $0x170] sm:$0xff]
        %v4493 = vpack.c.bf16 %v4462, %v4461
        %v4494 = vpack.c.bf16 %v4464, %v4463
        %v4495 = vpack.c.bf16 %v4466, %v4465
        %v4496 = vpack.c.bf16 %v4468, %v4467
        %v4497 = vpack.c.bf16 %v4470, %v4469
        %v4498 = vpack.c.bf16 %v4472, %v4471
        %v4499 = vpack.c.bf16 %v4474, %v4473
        %v4500 = vpack.c.bf16 %v4476, %v4475
        %v4501 = vpack.c.bf16 %v4478, %v4477
        %v4502 = vpack.c.bf16 %v4480, %v4479
        %v4503 = vpack.c.bf16 %v4482, %v4481
        %v4504 = vpack.c.bf16 %v4484, %v4483
        %v4505 = vpack.c.bf16 %v4486, %v4485
        %v4506 = vpack.c.bf16 %v4488, %v4487
        %v4507 = vpack.c.bf16 %v4490, %v4489
        %v4508 = vpack.c.bf16 %v4492, %v4491
        %v4525 = vunpack.c.l.b16 %v4493
        %v4526 = vunpack.c.h.b16 %v4493
        %v4527 = vunpack.c.l.b16 %v4494
        %v4528 = vunpack.c.h.b16 %v4494
        %v4529 = vunpack.c.l.b16 %v4495
        %v4530 = vunpack.c.h.b16 %v4495
        %v4531 = vunpack.c.l.b16 %v4496
        %v4532 = vunpack.c.h.b16 %v4496
        %v4533 = vunpack.c.l.b16 %v4497
        %v4534 = vunpack.c.h.b16 %v4497
        %v4535 = vunpack.c.l.b16 %v4498
        %v4536 = vunpack.c.h.b16 %v4498
        %v4537 = vunpack.c.l.b16 %v4499
        %v4538 = vunpack.c.h.b16 %v4499
        %v4539 = vunpack.c.l.b16 %v4500
        %v4540 = vunpack.c.h.b16 %v4500
        %v4541 = vunpack.c.l.b16 %v4501
        %v4542 = vunpack.c.h.b16 %v4501
        %v4543 = vunpack.c.l.b16 %v4502
        %v4544 = vunpack.c.h.b16 %v4502
        %v4545 = vunpack.c.l.b16 %v4503
        %v4546 = vunpack.c.h.b16 %v4503
        %v4547 = vunpack.c.l.b16 %v4504
        %v4548 = vunpack.c.h.b16 %v4504
        %v4549 = vunpack.c.l.b16 %v4505
        %v4550 = vunpack.c.h.b16 %v4505
        %v4551 = vunpack.c.l.b16 %v4506
        %v4552 = vunpack.c.h.b16 %v4506
        %v4553 = vunpack.c.l.b16 %v4507
        %v4554 = vunpack.c.h.b16 %v4507
        %v4555 = vunpack.c.l.b16 %v4508
        %v4556 = vunpack.c.h.b16 %v4508
        %v4557 = vpack.c.b16 %v4525, %v4525
        %v4558 = vpack.c.b16 %v4526, %v4526
        %v4559 = vpack.c.b16 %v4527, %v4527
        %v4560 = vpack.c.b16 %v4528, %v4528
        %v4561 = vpack.c.b16 %v4529, %v4529
        %v4562 = vpack.c.b16 %v4530, %v4530
        %v4563 = vpack.c.b16 %v4531, %v4531
        %v4564 = vpack.c.b16 %v4532, %v4532
        %v4565 = vpack.c.b16 %v4533, %v4533
        %v4566 = vpack.c.b16 %v4534, %v4534
        %v4567 = vpack.c.b16 %v4535, %v4535
        %v4568 = vpack.c.b16 %v4536, %v4536
        %v4569 = vpack.c.b16 %v4537, %v4537
        %v4570 = vpack.c.b16 %v4538, %v4538
        %v4571 = vpack.c.b16 %v4539, %v4539
        %v4572 = vpack.c.b16 %v4540, %v4540
        %v4573 = vpack.c.b16 %v4541, %v4541
        %v4574 = vpack.c.b16 %v4542, %v4542
        %v4575 = vpack.c.b16 %v4543, %v4543
        %v4576 = vpack.c.b16 %v4544, %v4544
        %v4577 = vpack.c.b16 %v4545, %v4545
        %v4578 = vpack.c.b16 %v4546, %v4546
        %v4579 = vpack.c.b16 %v4547, %v4547
        %v4580 = vpack.c.b16 %v4548, %v4548
        %v4581 = vpack.c.b16 %v4549, %v4549
        %v4582 = vpack.c.b16 %v4550, %v4550
        %v4583 = vpack.c.b16 %v4551, %v4551
        %v4584 = vpack.c.b16 %v4552, %v4552
        %v4585 = vpack.c.b16 %v4553, %v4553
        %v4586 = vpack.c.b16 %v4554, %v4554
        %v4587 = vpack.c.b16 %v4555, %v4555
        %v4588 = vpack.c.b16 %v4556, %v4556
        %4589 = vrot.lane.b32.xlu0 %v4557, 96
        %v4590 = vpop.permute.xlu0 %4589
        %4591 = vrot.lane.b32.xlu0 %v4558, 96
        %v4592 = vpop.permute.xlu0 %4591
        %4593 = vrot.lane.b32.xlu0 %v4559, 96
        %v4594 = vpop.permute.xlu0 %4593
        %4595 = vrot.lane.b32.xlu0 %v4560, 96
        %v4596 = vpop.permute.xlu0 %4595
        %4597 = vrot.lane.b32.xlu0 %v4561, 96
        %v4598 = vpop.permute.xlu0 %4597
        %4599 = vrot.lane.b32.xlu0 %v4562, 96
        %v4600 = vpop.permute.xlu0 %4599
        %4601 = vrot.lane.b32.xlu0 %v4563, 96
        %v4602 = vpop.permute.xlu0 %4601
        %4603 = vrot.lane.b32.xlu0 %v4564, 96
        %v4604 = vpop.permute.xlu0 %4603
        %4605 = vrot.lane.b32.xlu0 %v4565, 96
        %v4606 = vpop.permute.xlu0 %4605
        %4607 = vrot.lane.b32.xlu0 %v4566, 96
        %v4608 = vpop.permute.xlu0 %4607
        %4609 = vrot.lane.b32.xlu0 %v4567, 96
        %v4610 = vpop.permute.xlu0 %4609
        %4611 = vrot.lane.b32.xlu0 %v4568, 96
        %v4612 = vpop.permute.xlu0 %4611
        %4613 = vrot.lane.b32.xlu0 %v4569, 96
        %v4614 = vpop.permute.xlu0 %4613
        %4615 = vrot.lane.b32.xlu0 %v4570, 96
        %v4616 = vpop.permute.xlu0 %4615
        %4617 = vrot.lane.b32.xlu0 %v4571, 96
        %v4618 = vpop.permute.xlu0 %4617
        %4619 = vrot.lane.b32.xlu0 %v4572, 96
        %v4620 = vpop.permute.xlu0 %4619
        %4621 = vrot.lane.b32.xlu0 %v4573, 96
        %v4622 = vpop.permute.xlu0 %4621
        %4623 = vrot.lane.b32.xlu0 %v4574, 96
        %v4624 = vpop.permute.xlu0 %4623
        %4625 = vrot.lane.b32.xlu0 %v4575, 96
        %v4626 = vpop.permute.xlu0 %4625
        %4627 = vrot.lane.b32.xlu0 %v4576, 96
        %v4628 = vpop.permute.xlu0 %4627
        %4629 = vrot.lane.b32.xlu0 %v4577, 96
        %v4630 = vpop.permute.xlu0 %4629
        %4631 = vrot.lane.b32.xlu0 %v4578, 96
        %v4632 = vpop.permute.xlu0 %4631
        %4633 = vrot.lane.b32.xlu0 %v4579, 96
        %v4634 = vpop.permute.xlu0 %4633
        %4635 = vrot.lane.b32.xlu0 %v4580, 96
        %v4636 = vpop.permute.xlu0 %4635
        %4637 = vrot.lane.b32.xlu0 %v4581, 96
        %v4638 = vpop.permute.xlu0 %4637
        %4639 = vrot.lane.b32.xlu0 %v4582, 96
        %v4640 = vpop.permute.xlu0 %4639
        %4641 = vrot.lane.b32.xlu0 %v4583, 96
        %v4642 = vpop.permute.xlu0 %4641
        %4643 = vrot.lane.b32.xlu0 %v4584, 96
        %v4644 = vpop.permute.xlu0 %4643
        %4645 = vrot.lane.b32.xlu0 %v4585, 96
        %v4646 = vpop.permute.xlu0 %4645
        %4647 = vrot.lane.b32.xlu0 %v4586, 96
        %v4648 = vpop.permute.xlu0 %4647
        %4649 = vrot.lane.b32.xlu0 %v4587, 96
        %v4650 = vpop.permute.xlu0 %4649
        %4651 = vrot.lane.b32.xlu0 %v4588, 96
        %v4652 = vpop.permute.xlu0 %4651
        %vm4685 = vcmask 913152
        %4686 = vst.msk [vmem:[#allocation4] sm:$0xf] %vm4685, %v4590
        %4687 = vst.msk [vmem:[#allocation4 + $0x8] sm:$0xf] %vm4685, %v4592
        %4688 = vst.msk [vmem:[#allocation4 + $0x10] sm:$0xf] %vm4685, %v4594
        %4689 = vst.msk [vmem:[#allocation4 + $0x18] sm:$0xf] %vm4685, %v4596
        %4690 = vst.msk [vmem:[#allocation4 + $0x20] sm:$0xf] %vm4685, %v4598
        %4691 = vst.msk [vmem:[#allocation4 + $0x28] sm:$0xf] %vm4685, %v4600
        %4692 = vst.msk [vmem:[#allocation4 + $0x30] sm:$0xf] %vm4685, %v4602
        %4693 = vst.msk [vmem:[#allocation4 + $0x38] sm:$0xf] %vm4685, %v4604
        %4694 = vst.msk [vmem:[#allocation4 + $0x40] sm:$0xf] %vm4685, %v4606
        %4695 = vst.msk [vmem:[#allocation4 + $0x48] sm:$0xf] %vm4685, %v4608
        %4696 = vst.msk [vmem:[#allocation4 + $0x50] sm:$0xf] %vm4685, %v4610
        %4697 = vst.msk [vmem:[#allocation4 + $0x58] sm:$0xf] %vm4685, %v4612
        %4698 = vst.msk [vmem:[#allocation4 + $0x60] sm:$0xf] %vm4685, %v4614
        %4699 = vst.msk [vmem:[#allocation4 + $0x68] sm:$0xf] %vm4685, %v4616
        %4700 = vst.msk [vmem:[#allocation4 + $0x70] sm:$0xf] %vm4685, %v4618
        %4701 = vst.msk [vmem:[#allocation4 + $0x78] sm:$0xf] %vm4685, %v4620
        %4702 = vst.msk [vmem:[#allocation4 + $0x80] sm:$0xf] %vm4685, %v4622
        %4703 = vst.msk [vmem:[#allocation4 + $0x88] sm:$0xf] %vm4685, %v4624
        %4704 = vst.msk [vmem:[#allocation4 + $0x90] sm:$0xf] %vm4685, %v4626
        %4705 = vst.msk [vmem:[#allocation4 + $0x98] sm:$0xf] %vm4685, %v4628
        %4706 = vst.msk [vmem:[#allocation4 + $0xa0] sm:$0xf] %vm4685, %v4630
        %4707 = vst.msk [vmem:[#allocation4 + $0xa8] sm:$0xf] %vm4685, %v4632
        %4708 = vst.msk [vmem:[#allocation4 + $0xb0] sm:$0xf] %vm4685, %v4634
        %4709 = vst.msk [vmem:[#allocation4 + $0xb8] sm:$0xf] %vm4685, %v4636
        %4710 = vst.msk [vmem:[#allocation4 + $0xc0] sm:$0xf] %vm4685, %v4638
        %4711 = vst.msk [vmem:[#allocation4 + $0xc8] sm:$0xf] %vm4685, %v4640
        %4712 = vst.msk [vmem:[#allocation4 + $0xd0] sm:$0xf] %vm4685, %v4642
        %4713 = vst.msk [vmem:[#allocation4 + $0xd8] sm:$0xf] %vm4685, %v4644
        %4714 = vst.msk [vmem:[#allocation4 + $0xe0] sm:$0xf] %vm4685, %v4646
        %4715 = vst.msk [vmem:[#allocation4 + $0xe8] sm:$0xf] %vm4685, %v4648
        %4716 = vst.msk [vmem:[#allocation4 + $0xf0] sm:$0xf] %vm4685, %v4650
        %4717 = vst.msk [vmem:[#allocation4 + $0xf8] sm:$0xf] %vm4685, %v4652
        %v4718 = vld [vmem:[%s4460 + $0x1] sm:$0xff]
        %v4719 = vld [vmem:[%s4460 + $0x9] sm:$0xff]
        %v4720 = vld [vmem:[%s4460 + $0x19] sm:$0xff]
        %v4721 = vld [vmem:[%s4460 + $0x21] sm:$0xff]
        %v4722 = vld [vmem:[%s4460 + $0x31] sm:$0xff]
        %v4723 = vld [vmem:[%s4460 + $0x39] sm:$0xff]
        %v4724 = vld [vmem:[%s4460 + $0x49] sm:$0xff]
        %v4725 = vld [vmem:[%s4460 + $0x51] sm:$0xff]
        %v4726 = vld [vmem:[%s4460 + $0x61] sm:$0xff]
        %v4727 = vld [vmem:[%s4460 + $0x69] sm:$0xff]
        %v4728 = vld [vmem:[%s4460 + $0x79] sm:$0xff]
        %v4729 = vld [vmem:[%s4460 + $0x81] sm:$0xff]
        %v4730 = vld [vmem:[%s4460 + $0x91] sm:$0xff]
        %v4731 = vld [vmem:[%s4460 + $0x99] sm:$0xff]
        %v4732 = vld [vmem:[%s4460 + $0xa9] sm:$0xff]
        %v4733 = vld [vmem:[%s4460 + $0xb1] sm:$0xff]
        %v4734 = vld [vmem:[%s4460 + $0xc1] sm:$0xff]
        %v4735 = vld [vmem:[%s4460 + $0xc9] sm:$0xff]
        %v4736 = vld [vmem:[%s4460 + $0xd9] sm:$0xff]
        %v4737 = vld [vmem:[%s4460 + $0xe1] sm:$0xff]
        %v4738 = vld [vmem:[%s4460 + $0xf1] sm:$0xff]
        %v4739 = vld [vmem:[%s4460 + $0xf9] sm:$0xff]
        %v4740 = vld [vmem:[%s4460 + $0x109] sm:$0xff]
        %v4741 = vld [vmem:[%s4460 + $0x111] sm:$0xff]
        %v4742 = vld [vmem:[%s4460 + $0x121] sm:$0xff]
        %v4743 = vld [vmem:[%s4460 + $0x129] sm:$0xff]
        %v4744 = vld [vmem:[%s4460 + $0x139] sm:$0xff]
        %v4745 = vld [vmem:[%s4460 + $0x141] sm:$0xff]
        %v4746 = vld [vmem:[%s4460 + $0x151] sm:$0xff]
        %v4747 = vld [vmem:[%s4460 + $0x159] sm:$0xff]
        %v4748 = vld [vmem:[%s4460 + $0x169] sm:$0xff]
        %v4749 = vld [vmem:[%s4460 + $0x171] sm:$0xff]
        %v4750 = vpack.c.bf16 %v4719, %v4718
        %v4751 = vpack.c.bf16 %v4721, %v4720
        %v4752 = vpack.c.bf16 %v4723, %v4722
        %v4753 = vpack.c.bf16 %v4725, %v4724
        %v4754 = vpack.c.bf16 %v4727, %v4726
        %v4755 = vpack.c.bf16 %v4729, %v4728
        %v4756 = vpack.c.bf16 %v4731, %v4730
        %v4757 = vpack.c.bf16 %v4733, %v4732
        %v4758 = vpack.c.bf16 %v4735, %v4734
        %v4759 = vpack.c.bf16 %v4737, %v4736
        %v4760 = vpack.c.bf16 %v4739, %v4738
        %v4761 = vpack.c.bf16 %v4741, %v4740
        %v4762 = vpack.c.bf16 %v4743, %v4742
        %v4763 = vpack.c.bf16 %v4745, %v4744
        %v4764 = vpack.c.bf16 %v4747, %v4746
        %v4765 = vpack.c.bf16 %v4749, %v4748
        %v4782 = vunpack.c.l.b16 %v4750
        %v4783 = vunpack.c.h.b16 %v4750
        %v4784 = vunpack.c.l.b16 %v4751
        %v4785 = vunpack.c.h.b16 %v4751
        %v4786 = vunpack.c.l.b16 %v4752
        %v4787 = vunpack.c.h.b16 %v4752
        %v4788 = vunpack.c.l.b16 %v4753
        %v4789 = vunpack.c.h.b16 %v4753
        %v4790 = vunpack.c.l.b16 %v4754
        %v4791 = vunpack.c.h.b16 %v4754
        %v4792 = vunpack.c.l.b16 %v4755
        %v4793 = vunpack.c.h.b16 %v4755
        %v4794 = vunpack.c.l.b16 %v4756
        %v4795 = vunpack.c.h.b16 %v4756
        %v4796 = vunpack.c.l.b16 %v4757
        %v4797 = vunpack.c.h.b16 %v4757
        %v4798 = vunpack.c.l.b16 %v4758
        %v4799 = vunpack.c.h.b16 %v4758
        %v4800 = vunpack.c.l.b16 %v4759
        %v4801 = vunpack.c.h.b16 %v4759
        %v4802 = vunpack.c.l.b16 %v4760
        %v4803 = vunpack.c.h.b16 %v4760
        %v4804 = vunpack.c.l.b16 %v4761
        %v4805 = vunpack.c.h.b16 %v4761
        %v4806 = vunpack.c.l.b16 %v4762
        %v4807 = vunpack.c.h.b16 %v4762
        %v4808 = vunpack.c.l.b16 %v4763
        %v4809 = vunpack.c.h.b16 %v4763
        %v4810 = vunpack.c.l.b16 %v4764
        %v4811 = vunpack.c.h.b16 %v4764
        %v4812 = vunpack.c.l.b16 %v4765
        %v4813 = vunpack.c.h.b16 %v4765
        %v4814 = vpack.c.b16 %v4782, %v4782
        %v4815 = vpack.c.b16 %v4783, %v4783
        %v4816 = vpack.c.b16 %v4784, %v4784
        %v4817 = vpack.c.b16 %v4785, %v4785
        %v4818 = vpack.c.b16 %v4786, %v4786
        %v4819 = vpack.c.b16 %v4787, %v4787
        %v4820 = vpack.c.b16 %v4788, %v4788
        %v4821 = vpack.c.b16 %v4789, %v4789
        %v4822 = vpack.c.b16 %v4790, %v4790
        %v4823 = vpack.c.b16 %v4791, %v4791
        %v4824 = vpack.c.b16 %v4792, %v4792
        %v4825 = vpack.c.b16 %v4793, %v4793
        %v4826 = vpack.c.b16 %v4794, %v4794
        %v4827 = vpack.c.b16 %v4795, %v4795
        %v4828 = vpack.c.b16 %v4796, %v4796
        %v4829 = vpack.c.b16 %v4797, %v4797
        %v4830 = vpack.c.b16 %v4798, %v4798
        %v4831 = vpack.c.b16 %v4799, %v4799
        %v4832 = vpack.c.b16 %v4800, %v4800
        %v4833 = vpack.c.b16 %v4801, %v4801
        %v4834 = vpack.c.b16 %v4802, %v4802
        %v4835 = vpack.c.b16 %v4803, %v4803
        %v4836 = vpack.c.b16 %v4804, %v4804
        %v4837 = vpack.c.b16 %v4805, %v4805
        %v4838 = vpack.c.b16 %v4806, %v4806
        %v4839 = vpack.c.b16 %v4807, %v4807
        %v4840 = vpack.c.b16 %v4808, %v4808
        %v4841 = vpack.c.b16 %v4809, %v4809
        %v4842 = vpack.c.b16 %v4810, %v4810
        %v4843 = vpack.c.b16 %v4811, %v4811
        %v4844 = vpack.c.b16 %v4812, %v4812
        %v4845 = vpack.c.b16 %v4813, %v4813
        %4846 = vrot.lane.b32.xlu0 %v4814, 112
        %v4847 = vpop.permute.xlu0 %4846
        %4848 = vrot.lane.b32.xlu0 %v4815, 112
        %v4849 = vpop.permute.xlu0 %4848
        %4850 = vrot.lane.b32.xlu0 %v4816, 112
        %v4851 = vpop.permute.xlu0 %4850
        %4852 = vrot.lane.b32.xlu0 %v4817, 112
        %v4853 = vpop.permute.xlu0 %4852
        %4854 = vrot.lane.b32.xlu0 %v4818, 112
        %v4855 = vpop.permute.xlu0 %4854
        %4856 = vrot.lane.b32.xlu0 %v4819, 112
        %v4857 = vpop.permute.xlu0 %4856
        %4858 = vrot.lane.b32.xlu0 %v4820, 112
        %v4859 = vpop.permute.xlu0 %4858
        %4860 = vrot.lane.b32.xlu0 %v4821, 112
        %v4861 = vpop.permute.xlu0 %4860
        %4862 = vrot.lane.b32.xlu0 %v4822, 112
        %v4863 = vpop.permute.xlu0 %4862
        %4864 = vrot.lane.b32.xlu0 %v4823, 112
        %v4865 = vpop.permute.xlu0 %4864
        %4866 = vrot.lane.b32.xlu0 %v4824, 112
        %v4867 = vpop.permute.xlu0 %4866
        %4868 = vrot.lane.b32.xlu0 %v4825, 112
        %v4869 = vpop.permute.xlu0 %4868
        %4870 = vrot.lane.b32.xlu0 %v4826, 112
        %v4871 = vpop.permute.xlu0 %4870
        %4872 = vrot.lane.b32.xlu0 %v4827, 112
        %v4873 = vpop.permute.xlu0 %4872
        %4874 = vrot.lane.b32.xlu0 %v4828, 112
        %v4875 = vpop.permute.xlu0 %4874
        %4876 = vrot.lane.b32.xlu0 %v4829, 112
        %v4877 = vpop.permute.xlu0 %4876
        %4878 = vrot.lane.b32.xlu0 %v4830, 112
        %v4879 = vpop.permute.xlu0 %4878
        %4880 = vrot.lane.b32.xlu0 %v4831, 112
        %v4881 = vpop.permute.xlu0 %4880
        %4882 = vrot.lane.b32.xlu0 %v4832, 112
        %v4883 = vpop.permute.xlu0 %4882
        %4884 = vrot.lane.b32.xlu0 %v4833, 112
        %v4885 = vpop.permute.xlu0 %4884
        %4886 = vrot.lane.b32.xlu0 %v4834, 112
        %v4887 = vpop.permute.xlu0 %4886
        %4888 = vrot.lane.b32.xlu0 %v4835, 112
        %v4889 = vpop.permute.xlu0 %4888
        %4890 = vrot.lane.b32.xlu0 %v4836, 112
        %v4891 = vpop.permute.xlu0 %4890
        %4892 = vrot.lane.b32.xlu0 %v4837, 112
        %v4893 = vpop.permute.xlu0 %4892
        %4894 = vrot.lane.b32.xlu0 %v4838, 112
        %v4895 = vpop.permute.xlu0 %4894
        %4896 = vrot.lane.b32.xlu0 %v4839, 112
        %v4897 = vpop.permute.xlu0 %4896
        %4898 = vrot.lane.b32.xlu0 %v4840, 112
        %v4899 = vpop.permute.xlu0 %4898
        %4900 = vrot.lane.b32.xlu0 %v4841, 112
        %v4901 = vpop.permute.xlu0 %4900
        %4902 = vrot.lane.b32.xlu0 %v4842, 112
        %v4903 = vpop.permute.xlu0 %4902
        %4904 = vrot.lane.b32.xlu0 %v4843, 112
        %v4905 = vpop.permute.xlu0 %4904
        %4906 = vrot.lane.b32.xlu0 %v4844, 112
        %v4907 = vpop.permute.xlu0 %4906
        %4908 = vrot.lane.b32.xlu0 %v4845, 112
        %v4909 = vpop.permute.xlu0 %4908
        %vm4942 = vcmask 1044352
        %4943 = vst.msk [vmem:[#allocation4] sm:$0xf] %vm4942, %v4847
        %4944 = vst.msk [vmem:[#allocation4 + $0x8] sm:$0xf] %vm4942, %v4849
        %4945 = vst.msk [vmem:[#allocation4 + $0x10] sm:$0xf] %vm4942, %v4851
        %4946 = vst.msk [vmem:[#allocation4 + $0x18] sm:$0xf] %vm4942, %v4853
        %4947 = vst.msk [vmem:[#allocation4 + $0x20] sm:$0xf] %vm4942, %v4855
        %4948 = vst.msk [vmem:[#allocation4 + $0x28] sm:$0xf] %vm4942, %v4857
        %4949 = vst.msk [vmem:[#allocation4 + $0x30] sm:$0xf] %vm4942, %v4859
        %4950 = vst.msk [vmem:[#allocation4 + $0x38] sm:$0xf] %vm4942, %v4861
        %4951 = vst.msk [vmem:[#allocation4 + $0x40] sm:$0xf] %vm4942, %v4863
        %4952 = vst.msk [vmem:[#allocation4 + $0x48] sm:$0xf] %vm4942, %v4865
        %4953 = vst.msk [vmem:[#allocation4 + $0x50] sm:$0xf] %vm4942, %v4867
        %4954 = vst.msk [vmem:[#allocation4 + $0x58] sm:$0xf] %vm4942, %v4869
        %4955 = vst.msk [vmem:[#allocation4 + $0x60] sm:$0xf] %vm4942, %v4871
        %4956 = vst.msk [vmem:[#allocation4 + $0x68] sm:$0xf] %vm4942, %v4873
        %4957 = vst.msk [vmem:[#allocation4 + $0x70] sm:$0xf] %vm4942, %v4875
        %4958 = vst.msk [vmem:[#allocation4 + $0x78] sm:$0xf] %vm4942, %v4877
        %4959 = vst.msk [vmem:[#allocation4 + $0x80] sm:$0xf] %vm4942, %v4879
        %4960 = vst.msk [vmem:[#allocation4 + $0x88] sm:$0xf] %vm4942, %v4881
        %4961 = vst.msk [vmem:[#allocation4 + $0x90] sm:$0xf] %vm4942, %v4883
        %4962 = vst.msk [vmem:[#allocation4 + $0x98] sm:$0xf] %vm4942, %v4885
        %4963 = vst.msk [vmem:[#allocation4 + $0xa0] sm:$0xf] %vm4942, %v4887
        %4964 = vst.msk [vmem:[#allocation4 + $0xa8] sm:$0xf] %vm4942, %v4889
        %4965 = vst.msk [vmem:[#allocation4 + $0xb0] sm:$0xf] %vm4942, %v4891
        %4966 = vst.msk [vmem:[#allocation4 + $0xb8] sm:$0xf] %vm4942, %v4893
        %4967 = vst.msk [vmem:[#allocation4 + $0xc0] sm:$0xf] %vm4942, %v4895
        %4968 = vst.msk [vmem:[#allocation4 + $0xc8] sm:$0xf] %vm4942, %v4897
        %4969 = vst.msk [vmem:[#allocation4 + $0xd0] sm:$0xf] %vm4942, %v4899
        %4970 = vst.msk [vmem:[#allocation4 + $0xd8] sm:$0xf] %vm4942, %v4901
        %4971 = vst.msk [vmem:[#allocation4 + $0xe0] sm:$0xf] %vm4942, %v4903
        %4972 = vst.msk [vmem:[#allocation4 + $0xe8] sm:$0xf] %vm4942, %v4905
        %4973 = vst.msk [vmem:[#allocation4 + $0xf0] sm:$0xf] %vm4942, %v4907
        %4974 = vst.msk [vmem:[#allocation4 + $0xf8] sm:$0xf] %vm4942, %v4909
        %v4975 = vld [vmem:[%s4460 + $0x2] sm:$0xff]
        %v4976 = vld [vmem:[%s4460 + $0xa] sm:$0xff]
        %v4977 = vld [vmem:[%s4460 + $0x1a] sm:$0xff]
        %v4978 = vld [vmem:[%s4460 + $0x22] sm:$0xff]
        %v4979 = vld [vmem:[%s4460 + $0x32] sm:$0xff]
        %v4980 = vld [vmem:[%s4460 + $0x3a] sm:$0xff]
        %v4981 = vld [vmem:[%s4460 + $0x4a] sm:$0xff]
        %v4982 = vld [vmem:[%s4460 + $0x52] sm:$0xff]
        %v4983 = vld [vmem:[%s4460 + $0x62] sm:$0xff]
        %v4984 = vld [vmem:[%s4460 + $0x6a] sm:$0xff]
        %v4985 = vld [vmem:[%s4460 + $0x7a] sm:$0xff]
        %v4986 = vld [vmem:[%s4460 + $0x82] sm:$0xff]
        %v4987 = vld [vmem:[%s4460 + $0x92] sm:$0xff]
        %v4988 = vld [vmem:[%s4460 + $0x9a] sm:$0xff]
        %v4989 = vld [vmem:[%s4460 + $0xaa] sm:$0xff]
        %v4990 = vld [vmem:[%s4460 + $0xb2] sm:$0xff]
        %v4991 = vld [vmem:[%s4460 + $0xc2] sm:$0xff]
        %v4992 = vld [vmem:[%s4460 + $0xca] sm:$0xff]
        %v4993 = vld [vmem:[%s4460 + $0xda] sm:$0xff]
        %v4994 = vld [vmem:[%s4460 + $0xe2] sm:$0xff]
        %v4995 = vld [vmem:[%s4460 + $0xf2] sm:$0xff]
        %v4996 = vld [vmem:[%s4460 + $0xfa] sm:$0xff]
        %v4997 = vld [vmem:[%s4460 + $0x10a] sm:$0xff]
        %v4998 = vld [vmem:[%s4460 + $0x112] sm:$0xff]
        %v4999 = vld [vmem:[%s4460 + $0x122] sm:$0xff]
        %v5000 = vld [vmem:[%s4460 + $0x12a] sm:$0xff]
        %v5001 = vld [vmem:[%s4460 + $0x13a] sm:$0xff]
        %v5002 = vld [vmem:[%s4460 + $0x142] sm:$0xff]
        %v5003 = vld [vmem:[%s4460 + $0x152] sm:$0xff]
        %v5004 = vld [vmem:[%s4460 + $0x15a] sm:$0xff]
        %v5005 = vld [vmem:[%s4460 + $0x16a] sm:$0xff]
        %v5006 = vld [vmem:[%s4460 + $0x172] sm:$0xff]
        %v5007 = vpack.c.bf16 %v4976, %v4975
        %v5008 = vpack.c.bf16 %v4978, %v4977
        %v5009 = vpack.c.bf16 %v4980, %v4979
        %v5010 = vpack.c.bf16 %v4982, %v4981
        %v5011 = vpack.c.bf16 %v4984, %v4983
        %v5012 = vpack.c.bf16 %v4986, %v4985
        %v5013 = vpack.c.bf16 %v4988, %v4987
        %v5014 = vpack.c.bf16 %v4990, %v4989
        %v5015 = vpack.c.bf16 %v4992, %v4991
        %v5016 = vpack.c.bf16 %v4994, %v4993
        %v5017 = vpack.c.bf16 %v4996, %v4995
        %v5018 = vpack.c.bf16 %v4998, %v4997
        %v5019 = vpack.c.bf16 %v5000, %v4999
        %v5020 = vpack.c.bf16 %v5002, %v5001
        %v5021 = vpack.c.bf16 %v5004, %v5003
        %v5022 = vpack.c.bf16 %v5006, %v5005
        %v5039 = vunpack.c.l.b16 %v5007
        %v5040 = vunpack.c.h.b16 %v5007
        %v5041 = vunpack.c.l.b16 %v5008
        %v5042 = vunpack.c.h.b16 %v5008
        %v5043 = vunpack.c.l.b16 %v5009
        %v5044 = vunpack.c.h.b16 %v5009
        %v5045 = vunpack.c.l.b16 %v5010
        %v5046 = vunpack.c.h.b16 %v5010
        %v5047 = vunpack.c.l.b16 %v5011
        %v5048 = vunpack.c.h.b16 %v5011
        %v5049 = vunpack.c.l.b16 %v5012
        %v5050 = vunpack.c.h.b16 %v5012
        %v5051 = vunpack.c.l.b16 %v5013
        %v5052 = vunpack.c.h.b16 %v5013
        %v5053 = vunpack.c.l.b16 %v5014
        %v5054 = vunpack.c.h.b16 %v5014
        %v5055 = vunpack.c.l.b16 %v5015
        %v5056 = vunpack.c.h.b16 %v5015
        %v5057 = vunpack.c.l.b16 %v5016
        %v5058 = vunpack.c.h.b16 %v5016
        %v5059 = vunpack.c.l.b16 %v5017
        %v5060 = vunpack.c.h.b16 %v5017
        %v5061 = vunpack.c.l.b16 %v5018
        %v5062 = vunpack.c.h.b16 %v5018
        %v5063 = vunpack.c.l.b16 %v5019
        %v5064 = vunpack.c.h.b16 %v5019
        %v5065 = vunpack.c.l.b16 %v5020
        %v5066 = vunpack.c.h.b16 %v5020
        %v5067 = vunpack.c.l.b16 %v5021
        %v5068 = vunpack.c.h.b16 %v5021
        %v5069 = vunpack.c.l.b16 %v5022
        %v5070 = vunpack.c.h.b16 %v5022
        %v5071 = vpack.c.b16 %v5039, %v5039
        %v5072 = vpack.c.b16 %v5040, %v5040
        %v5073 = vpack.c.b16 %v5041, %v5041
        %v5074 = vpack.c.b16 %v5042, %v5042
        %v5075 = vpack.c.b16 %v5043, %v5043
        %v5076 = vpack.c.b16 %v5044, %v5044
        %v5077 = vpack.c.b16 %v5045, %v5045
        %v5078 = vpack.c.b16 %v5046, %v5046
        %v5079 = vpack.c.b16 %v5047, %v5047
        %v5080 = vpack.c.b16 %v5048, %v5048
        %v5081 = vpack.c.b16 %v5049, %v5049
        %v5082 = vpack.c.b16 %v5050, %v5050
        %v5083 = vpack.c.b16 %v5051, %v5051
        %v5084 = vpack.c.b16 %v5052, %v5052
        %v5085 = vpack.c.b16 %v5053, %v5053
        %v5086 = vpack.c.b16 %v5054, %v5054
        %v5087 = vpack.c.b16 %v5055, %v5055
        %v5088 = vpack.c.b16 %v5056, %v5056
        %v5089 = vpack.c.b16 %v5057, %v5057
        %v5090 = vpack.c.b16 %v5058, %v5058
        %v5091 = vpack.c.b16 %v5059, %v5059
        %v5092 = vpack.c.b16 %v5060, %v5060
        %v5093 = vpack.c.b16 %v5061, %v5061
        %v5094 = vpack.c.b16 %v5062, %v5062
        %v5095 = vpack.c.b16 %v5063, %v5063
        %v5096 = vpack.c.b16 %v5064, %v5064
        %v5097 = vpack.c.b16 %v5065, %v5065
        %v5098 = vpack.c.b16 %v5066, %v5066
        %v5099 = vpack.c.b16 %v5067, %v5067
        %v5100 = vpack.c.b16 %v5068, %v5068
        %v5101 = vpack.c.b16 %v5069, %v5069
        %v5102 = vpack.c.b16 %v5070, %v5070
        %5135 = vst.msk [vmem:[#allocation4 + $0x4] sm:$0xf] %vm3142, %v5071
        %5136 = vst.msk [vmem:[#allocation4 + $0xc] sm:$0xf] %vm3142, %v5072
        %5137 = vst.msk [vmem:[#allocation4 + $0x14] sm:$0xf] %vm3142, %v5073
        %5138 = vst.msk [vmem:[#allocation4 + $0x1c] sm:$0xf] %vm3142, %v5074
        %5139 = vst.msk [vmem:[#allocation4 + $0x24] sm:$0xf] %vm3142, %v5075
        %5140 = vst.msk [vmem:[#allocation4 + $0x2c] sm:$0xf] %vm3142, %v5076
        %5141 = vst.msk [vmem:[#allocation4 + $0x34] sm:$0xf] %vm3142, %v5077
        %5142 = vst.msk [vmem:[#allocation4 + $0x3c] sm:$0xf] %vm3142, %v5078
        %5143 = vst.msk [vmem:[#allocation4 + $0x44] sm:$0xf] %vm3142, %v5079
        %5144 = vst.msk [vmem:[#allocation4 + $0x4c] sm:$0xf] %vm3142, %v5080
        %5145 = vst.msk [vmem:[#allocation4 + $0x54] sm:$0xf] %vm3142, %v5081
        %5146 = vst.msk [vmem:[#allocation4 + $0x5c] sm:$0xf] %vm3142, %v5082
        %5147 = vst.msk [vmem:[#allocation4 + $0x64] sm:$0xf] %vm3142, %v5083
        %5148 = vst.msk [vmem:[#allocation4 + $0x6c] sm:$0xf] %vm3142, %v5084
        %5149 = vst.msk [vmem:[#allocation4 + $0x74] sm:$0xf] %vm3142, %v5085
        %5150 = vst.msk [vmem:[#allocation4 + $0x7c] sm:$0xf] %vm3142, %v5086
        %5151 = vst.msk [vmem:[#allocation4 + $0x84] sm:$0xf] %vm3142, %v5087
        %5152 = vst.msk [vmem:[#allocation4 + $0x8c] sm:$0xf] %vm3142, %v5088
        %5153 = vst.msk [vmem:[#allocation4 + $0x94] sm:$0xf] %vm3142, %v5089
        %5154 = vst.msk [vmem:[#allocation4 + $0x9c] sm:$0xf] %vm3142, %v5090
        %5155 = vst.msk [vmem:[#allocation4 + $0xa4] sm:$0xf] %vm3142, %v5091
        %5156 = vst.msk [vmem:[#allocation4 + $0xac] sm:$0xf] %vm3142, %v5092
        %5157 = vst.msk [vmem:[#allocation4 + $0xb4] sm:$0xf] %vm3142, %v5093
        %5158 = vst.msk [vmem:[#allocation4 + $0xbc] sm:$0xf] %vm3142, %v5094
        %5159 = vst.msk [vmem:[#allocation4 + $0xc4] sm:$0xf] %vm3142, %v5095
        %5160 = vst.msk [vmem:[#allocation4 + $0xcc] sm:$0xf] %vm3142, %v5096
        %5161 = vst.msk [vmem:[#allocation4 + $0xd4] sm:$0xf] %vm3142, %v5097
        %5162 = vst.msk [vmem:[#allocation4 + $0xdc] sm:$0xf] %vm3142, %v5098
        %5163 = vst.msk [vmem:[#allocation4 + $0xe4] sm:$0xf] %vm3142, %v5099
        %5164 = vst.msk [vmem:[#allocation4 + $0xec] sm:$0xf] %vm3142, %v5100
        %5165 = vst.msk [vmem:[#allocation4 + $0xf4] sm:$0xf] %vm3142, %v5101
        %5166 = vst.msk [vmem:[#allocation4 + $0xfc] sm:$0xf] %vm3142, %v5102
        %v5167 = vld [vmem:[#allocation4] sm:$0xff]
        %v5168 = vld [vmem:[#allocation4 + $0x8] sm:$0xff]
        %v5169 = vld [vmem:[#allocation4 + $0x10] sm:$0xff]
        %v5170 = vld [vmem:[#allocation4 + $0x18] sm:$0xff]
        %v5171 = vld [vmem:[#allocation4 + $0x20] sm:$0xff]
        %v5172 = vld [vmem:[#allocation4 + $0x28] sm:$0xff]
        %v5173 = vld [vmem:[#allocation4 + $0x30] sm:$0xff]
        %v5174 = vld [vmem:[#allocation4 + $0x38] sm:$0xff]
        %v5175 = vld [vmem:[#allocation4 + $0x40] sm:$0xff]
        %v5176 = vld [vmem:[#allocation4 + $0x48] sm:$0xff]
        %v5177 = vld [vmem:[#allocation4 + $0x50] sm:$0xff]
        %v5178 = vld [vmem:[#allocation4 + $0x58] sm:$0xff]
        %v5179 = vld [vmem:[#allocation4 + $0x60] sm:$0xff]
        %v5180 = vld [vmem:[#allocation4 + $0x68] sm:$0xff]
        %v5181 = vld [vmem:[#allocation4 + $0x70] sm:$0xff]
        %v5182 = vld [vmem:[#allocation4 + $0x78] sm:$0xff]
        %v5183 = vld [vmem:[#allocation4 + $0x80] sm:$0xff]
        %v5184 = vld [vmem:[#allocation4 + $0x88] sm:$0xff]
        %v5185 = vld [vmem:[#allocation4 + $0x90] sm:$0xff]
        %v5186 = vld [vmem:[#allocation4 + $0x98] sm:$0xff]
        %v5187 = vld [vmem:[#allocation4 + $0xa0] sm:$0xff]
        %v5188 = vld [vmem:[#allocation4 + $0xa8] sm:$0xff]
        %v5189 = vld [vmem:[#allocation4 + $0xb0] sm:$0xff]
        %v5190 = vld [vmem:[#allocation4 + $0xb8] sm:$0xff]
        %v5191 = vld [vmem:[#allocation4 + $0xc0] sm:$0xff]
        %v5192 = vld [vmem:[#allocation4 + $0xc8] sm:$0xff]
        %v5193 = vld [vmem:[#allocation4 + $0xd0] sm:$0xff]
        %v5194 = vld [vmem:[#allocation4 + $0xd8] sm:$0xff]
        %v5195 = vld [vmem:[#allocation4 + $0xe0] sm:$0xff]
        %v5196 = vld [vmem:[#allocation4 + $0xe8] sm:$0xff]
        %v5197 = vld [vmem:[#allocation4 + $0xf0] sm:$0xff]
        %v5198 = vld [vmem:[#allocation4 + $0xf8] sm:$0xff]
        %v5199 = vld [vmem:[%s2] sm:$0xf]
        %v5200 = vld [vmem:[%s2 + $0x4] sm:$0xf]
        %v5201 = vld [vmem:[%s2 + $0x8] sm:$0xf]
        %v5202 = vld [vmem:[%s2 + $0xc] sm:$0xf]
        %v5203 = vld [vmem:[%s2 + $0x10] sm:$0xf]
        %v5204 = vld [vmem:[%s2 + $0x14] sm:$0xf]
        %v5205 = vld [vmem:[%s2 + $0x18] sm:$0xf]
        %v5206 = vld [vmem:[%s2 + $0x1c] sm:$0xf]
        %v5207 = vld [vmem:[%s2 + $0x20] sm:$0xf]
        %v5208 = vld [vmem:[%s2 + $0x24] sm:$0xf]
        %v5209 = vld [vmem:[%s2 + $0x28] sm:$0xf]
        %v5210 = vld [vmem:[%s2 + $0x2c] sm:$0xf]
        %v5211 = vld [vmem:[%s2 + $0x30] sm:$0xf]
        %v5212 = vld [vmem:[%s2 + $0x34] sm:$0xf]
        %v5213 = vld [vmem:[%s2 + $0x38] sm:$0xf]
        %v5214 = vld [vmem:[%s2 + $0x3c] sm:$0xf]
        %v5215 = vld [vmem:[%s2 + $0x40] sm:$0xf]
        %v5216 = vld [vmem:[%s2 + $0x44] sm:$0xf]
        %v5249 = vunpack.c.l.b16 %v5167
        %v5250 = vunpack.c.h.b16 %v5167
        %v5251 = vunpack.c.l.b16 %v5168
        %v5252 = vunpack.c.h.b16 %v5168
        %v5253 = vunpack.c.l.b16 %v5169
        %v5254 = vunpack.c.h.b16 %v5169
        %v5255 = vunpack.c.l.b16 %v5170
        %v5256 = vunpack.c.h.b16 %v5170
        %v5257 = vunpack.c.l.b16 %v5171
        %v5258 = vunpack.c.h.b16 %v5171
        %v5259 = vunpack.c.l.b16 %v5172
        %v5260 = vunpack.c.h.b16 %v5172
        %v5261 = vunpack.c.l.b16 %v5173
        %v5262 = vunpack.c.h.b16 %v5173
        %v5263 = vunpack.c.l.b16 %v5174
        %v5264 = vunpack.c.h.b16 %v5174
        %v5265 = vunpack.c.l.b16 %v5175
        %v5266 = vunpack.c.h.b16 %v5175
        %v5267 = vunpack.c.l.b16 %v5176
        %v5268 = vunpack.c.h.b16 %v5176
        %v5269 = vunpack.c.l.b16 %v5177
        %v5270 = vunpack.c.h.b16 %v5177
        %v5271 = vunpack.c.l.b16 %v5178
        %v5272 = vunpack.c.h.b16 %v5178
        %v5273 = vunpack.c.l.b16 %v5179
        %v5274 = vunpack.c.h.b16 %v5179
        %v5275 = vunpack.c.l.b16 %v5180
        %v5276 = vunpack.c.h.b16 %v5180
        %v5277 = vunpack.c.l.b16 %v5181
        %v5278 = vunpack.c.h.b16 %v5181
        %v5279 = vunpack.c.l.b16 %v5182
        %v5280 = vunpack.c.h.b16 %v5182
        %v5281 = vunpack.c.l.b16 %v5183
        %v5282 = vunpack.c.h.b16 %v5183
        %v5283 = vunpack.c.l.b16 %v5184
        %v5284 = vunpack.c.h.b16 %v5184
        %v5285 = vunpack.c.l.b16 %v5185
        %v5286 = vunpack.c.h.b16 %v5185
        %v5287 = vunpack.c.l.b16 %v5186
        %v5288 = vunpack.c.h.b16 %v5186
        %v5289 = vunpack.c.l.b16 %v5187
        %v5290 = vunpack.c.h.b16 %v5187
        %v5291 = vunpack.c.l.b16 %v5188
        %v5292 = vunpack.c.h.b16 %v5188
        %v5293 = vunpack.c.l.b16 %v5189
        %v5294 = vunpack.c.h.b16 %v5189
        %v5295 = vunpack.c.l.b16 %v5190
        %v5296 = vunpack.c.h.b16 %v5190
        %v5297 = vunpack.c.l.b16 %v5191
        %v5298 = vunpack.c.h.b16 %v5191
        %v5299 = vunpack.c.l.b16 %v5192
        %v5300 = vunpack.c.h.b16 %v5192
        %v5301 = vunpack.c.l.b16 %v5193
        %v5302 = vunpack.c.h.b16 %v5193
        %v5303 = vunpack.c.l.b16 %v5194
        %v5304 = vunpack.c.h.b16 %v5194
        %v5305 = vunpack.c.l.b16 %v5195
        %v5306 = vunpack.c.h.b16 %v5195
        %v5307 = vunpack.c.l.b16 %v5196
        %v5308 = vunpack.c.h.b16 %v5196
        %v5309 = vunpack.c.l.b16 %v5197
        %v5310 = vunpack.c.h.b16 %v5197
        %v5311 = vunpack.c.l.b16 %v5198
        %v5312 = vunpack.c.h.b16 %v5198
        %v5313 = vpack.c.b16 %v5251, %v5249
        %v5314 = vpack.c.b16 %v5252, %v5250
        %v5315 = vpack.c.b16 %v5255, %v5253
        %v5316 = vpack.c.b16 %v5256, %v5254
        %v5317 = vpack.c.b16 %v5259, %v5257
        %v5318 = vpack.c.b16 %v5260, %v5258
        %v5319 = vpack.c.b16 %v5263, %v5261
        %v5320 = vpack.c.b16 %v5264, %v5262
        %v5321 = vpack.c.b16 %v5267, %v5265
        %v5322 = vpack.c.b16 %v5268, %v5266
        %v5323 = vpack.c.b16 %v5271, %v5269
        %v5324 = vpack.c.b16 %v5272, %v5270
        %v5325 = vpack.c.b16 %v5275, %v5273
        %v5326 = vpack.c.b16 %v5276, %v5274
        %v5327 = vpack.c.b16 %v5279, %v5277
        %v5328 = vpack.c.b16 %v5280, %v5278
        %v5329 = vpack.c.b16 %v5283, %v5281
        %v5330 = vpack.c.b16 %v5284, %v5282
        %v5331 = vpack.c.b16 %v5287, %v5285
        %v5332 = vpack.c.b16 %v5288, %v5286
        %v5333 = vpack.c.b16 %v5291, %v5289
        %v5334 = vpack.c.b16 %v5292, %v5290
        %v5335 = vpack.c.b16 %v5295, %v5293
        %v5336 = vpack.c.b16 %v5296, %v5294
        %v5337 = vpack.c.b16 %v5299, %v5297
        %v5338 = vpack.c.b16 %v5300, %v5298
        %v5339 = vpack.c.b16 %v5303, %v5301
        %v5340 = vpack.c.b16 %v5304, %v5302
        %v5341 = vpack.c.b16 %v5307, %v5305
        %v5342 = vpack.c.b16 %v5308, %v5306
        %v5343 = vpack.c.b16 %v5311, %v5309
        %v5344 = vpack.c.b16 %v5312, %v5310
        %v5379 = vunpack.c.l.b16 %v5199
        %v5380 = vunpack.c.l.b16 %v5200
        %v5381 = vunpack.c.l.b16 %v5201
        %v5382 = vunpack.c.l.b16 %v5202
        %v5383 = vunpack.c.l.b16 %v5203
        %v5384 = vunpack.c.l.b16 %v5204
        %v5385 = vunpack.c.l.b16 %v5205
        %v5386 = vunpack.c.l.b16 %v5206
        %v5387 = vunpack.c.l.b16 %v5207
        %v5388 = vunpack.c.l.b16 %v5208
        %v5389 = vunpack.c.l.b16 %v5209
        %v5390 = vunpack.c.l.b16 %v5210
        %v5391 = vunpack.c.l.b16 %v5211
        %v5392 = vunpack.c.l.b16 %v5212
        %v5393 = vunpack.c.l.b16 %v5213
        %v5394 = vunpack.c.l.b16 %v5214
        %v5395 = vunpack.c.l.b16 %v5215
        %v5396 = vunpack.c.l.b16 %v5216
        %v5397 = vpack.c.b16 %v5380, %v5379
        %v5398 = vpack.c.b16 %v5382, %v5381
        %v5399 = vpack.c.b16 %v5384, %v5383
        %v5400 = vpack.c.b16 %v5386, %v5385
        %v5401 = vpack.c.b16 %v5388, %v5387
        %v5402 = vpack.c.b16 %v5390, %v5389
        %v5403 = vpack.c.b16 %v5392, %v5391
        %v5404 = vpack.c.b16 %v5394, %v5393
        %v5405 = vpack.c.b16 %v5396, %v5395
        %v5416 = vsel %vm2903, %v5314, 0
        %v5419 = vsel %vm2903, %v5316, 0
        %v5422 = vsel %vm2903, %v5318, 0
        %v5425 = vsel %vm2903, %v5320, 0
        %v5428 = vsel %vm2903, %v5322, 0
        %v5431 = vsel %vm2903, %v5324, 0
        %v5434 = vsel %vm2903, %v5326, 0
        %v5437 = vsel %vm2903, %v5328, 0
        %v5440 = vsel %vm2903, %v5330, 0
        %v5443 = vsel %vm2903, %v5332, 0
        %v5446 = vsel %vm2903, %v5334, 0
        %v5449 = vsel %vm2903, %v5336, 0
        %v5452 = vsel %vm2903, %v5338, 0
        %v5455 = vsel %vm2903, %v5340, 0
        %v5458 = vsel %vm2903, %v5342, 0
        %v5461 = vsel %vm2903, %v5344, 0
        %5463 = vmatprep.subr.bf16.mxu0 0
        %5464 = vmatpush1.bf16.msra.mxu0 %v5404
        %5465 = vmatprep.subr.bf16.mxu0 0
        %5466 = vmatpush1.bf16.msra.mxu0 %v5403
        %5467 = vmatprep.subr.bf16.mxu0 0
        %5468 = vmatpush1.bf16.msra.mxu0 %v5402
        %5469 = vmatprep.subr.bf16.mxu0 0
        %5470 = vmatpush1.bf16.msra.mxu0 %v5401
        %5471 = vmatprep.subr.bf16.mxu0 0
        %5472 = vmatpush1.bf16.msra.mxu0 %v5400
        %5473 = vmatprep.subr.bf16.mxu0 0
        %5474 = vmatpush1.bf16.msra.mxu0 %v5399
        %5475 = vmatprep.subr.bf16.mxu0 0
        %5476 = vmatpush1.bf16.msra.mxu0 %v5398
        %5477 = vmatprep.subr.bf16.mxu0 0
        %5478 = vmatpush1.bf16.msra.mxu0 %v5397
        %5479 = vmatprep.subr.bf16.mxu0 0
        %5480 = vmatpush2.bf16.msra.mxu0 0
        %5481 = vmatprep.subr.bf16.mxu0 0
        %5482 = vmatpush2.bf16.msra.mxu0 0
        %5483 = vmatprep.subr.bf16.mxu0 0
        %5484 = vmatpush2.bf16.msra.mxu0 0
        %5485 = vmatprep.subr.bf16.mxu0 0
        %5486 = vmatpush2.bf16.msra.mxu0 0
        %5487 = vmatprep.subr.bf16.mxu0 0
        %5488 = vmatpush2.bf16.msra.mxu0 0
        %5489 = vmatprep.subr.bf16.mxu0 0
        %5490 = vmatpush2.bf16.msra.mxu0 0
        %5491 = vmatprep.subr.bf16.mxu0 0
        %5492 = vmatpush2.bf16.msra.mxu0 0
        %5493 = vmatprep.subr.bf16.mxu0 0
        %5494 = vmatpush2.bf16.msra.mxu0 %v5405
        %5495 = vmatprep.mubr.bf16.mxu0 %v5416
        %5496 = vmatmul.mubr.bf16.gmra.mxu0 %v5313
        %v5497 = vpop.f32.mrf.mxu0
        %v5498 = vadd.f32 0.0, %v5497
        %v5499 = vpop.f32.mrf.mxu0
        %v5500 = vpop.f32.mrf.mxu0
        %v5501 = vadd.f32 0.0, %v5500
        %v5502 = vpop.f32.mrf.mxu0
        %5503 = vmatprep.mubr.bf16.mxu0 %v5419
        %5504 = vmatmul.mubr.bf16.gmra.mxu0 %v5315
        %v5505 = vpop.f32.mrf.mxu0
        %v5506 = vadd.f32 0.0, %v5505
        %v5507 = vpop.f32.mrf.mxu0
        %v5508 = vpop.f32.mrf.mxu0
        %v5509 = vadd.f32 0.0, %v5508
        %v5510 = vpop.f32.mrf.mxu0
        %5511 = vmatprep.mubr.bf16.mxu0 %v5422
        %5512 = vmatmul.mubr.bf16.gmra.mxu0 %v5317
        %v5513 = vpop.f32.mrf.mxu0
        %v5514 = vadd.f32 0.0, %v5513
        %v5515 = vpop.f32.mrf.mxu0
        %v5516 = vpop.f32.mrf.mxu0
        %v5517 = vadd.f32 0.0, %v5516
        %v5518 = vpop.f32.mrf.mxu0
        %5519 = vmatprep.mubr.bf16.mxu0 %v5425
        %5520 = vmatmul.mubr.bf16.gmra.mxu0 %v5319
        %v5521 = vpop.f32.mrf.mxu0
        %v5522 = vadd.f32 0.0, %v5521
        %v5523 = vpop.f32.mrf.mxu0
        %v5524 = vpop.f32.mrf.mxu0
        %v5525 = vadd.f32 0.0, %v5524
        %v5526 = vpop.f32.mrf.mxu0
        %5527 = vmatprep.mubr.bf16.mxu0 %v5428
        %5528 = vmatmul.mubr.bf16.gmra.mxu0 %v5321
        %v5529 = vpop.f32.mrf.mxu0
        %v5530 = vadd.f32 0.0, %v5529
        %v5531 = vpop.f32.mrf.mxu0
        %v5532 = vpop.f32.mrf.mxu0
        %v5533 = vadd.f32 0.0, %v5532
        %v5534 = vpop.f32.mrf.mxu0
        %5535 = vmatprep.mubr.bf16.mxu0 %v5431
        %5536 = vmatmul.mubr.bf16.gmra.mxu0 %v5323
        %v5537 = vpop.f32.mrf.mxu0
        %v5538 = vadd.f32 0.0, %v5537
        %v5539 = vpop.f32.mrf.mxu0
        %v5540 = vpop.f32.mrf.mxu0
        %v5541 = vadd.f32 0.0, %v5540
        %v5542 = vpop.f32.mrf.mxu0
        %5543 = vmatprep.mubr.bf16.mxu0 %v5434
        %5544 = vmatmul.mubr.bf16.gmra.mxu0 %v5325
        %v5545 = vpop.f32.mrf.mxu0
        %v5546 = vadd.f32 0.0, %v5545
        %v5547 = vpop.f32.mrf.mxu0
        %v5548 = vpop.f32.mrf.mxu0
        %v5549 = vadd.f32 0.0, %v5548
        %v5550 = vpop.f32.mrf.mxu0
        %5551 = vmatprep.mubr.bf16.mxu0 %v5437
        %5552 = vmatmul.mubr.bf16.gmra.mxu0 %v5327
        %v5553 = vpop.f32.mrf.mxu0
        %v5554 = vadd.f32 0.0, %v5553
        %v5555 = vpop.f32.mrf.mxu0
        %v5556 = vpop.f32.mrf.mxu0
        %v5557 = vadd.f32 0.0, %v5556
        %v5558 = vpop.f32.mrf.mxu0
        %5559 = vmatprep.mubr.bf16.mxu0 %v5440
        %5560 = vmatmul.mubr.bf16.gmra.mxu0 %v5329
        %v5561 = vpop.f32.mrf.mxu0
        %v5562 = vadd.f32 0.0, %v5561
        %v5563 = vpop.f32.mrf.mxu0
        %v5564 = vpop.f32.mrf.mxu0
        %v5565 = vadd.f32 0.0, %v5564
        %v5566 = vpop.f32.mrf.mxu0
        %5567 = vmatprep.mubr.bf16.mxu0 %v5443
        %5568 = vmatmul.mubr.bf16.gmra.mxu0 %v5331
        %v5569 = vpop.f32.mrf.mxu0
        %v5570 = vadd.f32 0.0, %v5569
        %v5571 = vpop.f32.mrf.mxu0
        %v5572 = vpop.f32.mrf.mxu0
        %v5573 = vadd.f32 0.0, %v5572
        %v5574 = vpop.f32.mrf.mxu0
        %5575 = vmatprep.mubr.bf16.mxu0 %v5446
        %5576 = vmatmul.mubr.bf16.gmra.mxu0 %v5333
        %v5577 = vpop.f32.mrf.mxu0
        %v5578 = vadd.f32 0.0, %v5577
        %v5579 = vpop.f32.mrf.mxu0
        %v5580 = vpop.f32.mrf.mxu0
        %v5581 = vadd.f32 0.0, %v5580
        %v5582 = vpop.f32.mrf.mxu0
        %5583 = vmatprep.mubr.bf16.mxu0 %v5449
        %5584 = vmatmul.mubr.bf16.gmra.mxu0 %v5335
        %v5585 = vpop.f32.mrf.mxu0
        %v5586 = vadd.f32 0.0, %v5585
        %v5587 = vpop.f32.mrf.mxu0
        %v5588 = vpop.f32.mrf.mxu0
        %v5589 = vadd.f32 0.0, %v5588
        %v5590 = vpop.f32.mrf.mxu0
        %5591 = vmatprep.mubr.bf16.mxu0 %v5452
        %5592 = vmatmul.mubr.bf16.gmra.mxu0 %v5337
        %v5593 = vpop.f32.mrf.mxu0
        %v5594 = vadd.f32 0.0, %v5593
        %v5595 = vpop.f32.mrf.mxu0
        %v5596 = vpop.f32.mrf.mxu0
        %v5597 = vadd.f32 0.0, %v5596
        %v5598 = vpop.f32.mrf.mxu0
        %5599 = vmatprep.mubr.bf16.mxu0 %v5455
        %5600 = vmatmul.mubr.bf16.gmra.mxu0 %v5339
        %v5601 = vpop.f32.mrf.mxu0
        %v5602 = vadd.f32 0.0, %v5601
        %v5603 = vpop.f32.mrf.mxu0
        %v5604 = vpop.f32.mrf.mxu0
        %v5605 = vadd.f32 0.0, %v5604
        %v5606 = vpop.f32.mrf.mxu0
        %5607 = vmatprep.mubr.bf16.mxu0 %v5458
        %5608 = vmatmul.mubr.bf16.gmra.mxu0 %v5341
        %v5609 = vpop.f32.mrf.mxu0
        %v5610 = vadd.f32 0.0, %v5609
        %v5611 = vpop.f32.mrf.mxu0
        %v5612 = vpop.f32.mrf.mxu0
        %v5613 = vadd.f32 0.0, %v5612
        %v5614 = vpop.f32.mrf.mxu0
        %5615 = vmatprep.mubr.bf16.mxu0 %v5461
        %5616 = vmatmul.mubr.bf16.gmra.mxu0 %v5343
        %v5617 = vpop.f32.mrf.mxu0
        %v5618 = vadd.f32 0.0, %v5617
        %v5619 = vpop.f32.mrf.mxu0
        %v5620 = vpop.f32.mrf.mxu0
        %v5621 = vadd.f32 0.0, %v5620
        %v5622 = vpop.f32.mrf.mxu0
        %5623 = vdwg.mxu0
        %vm5624 = vcmp.gt.f32.partialorder %v5498, 0.0
        %vm5625 = vcmp.gt.f32.partialorder %v5501, 0.0
        %vm5626 = vcmp.gt.f32.partialorder %v5506, 0.0
        %vm5627 = vcmp.gt.f32.partialorder %v5509, 0.0
        %vm5628 = vcmp.gt.f32.partialorder %v5514, 0.0
        %vm5629 = vcmp.gt.f32.partialorder %v5517, 0.0
        %vm5630 = vcmp.gt.f32.partialorder %v5522, 0.0
        %vm5631 = vcmp.gt.f32.partialorder %v5525, 0.0
        %vm5632 = vcmp.gt.f32.partialorder %v5530, 0.0
        %vm5633 = vcmp.gt.f32.partialorder %v5533, 0.0
        %vm5634 = vcmp.gt.f32.partialorder %v5538, 0.0
        %vm5635 = vcmp.gt.f32.partialorder %v5541, 0.0
        %vm5636 = vcmp.gt.f32.partialorder %v5546, 0.0
        %vm5637 = vcmp.gt.f32.partialorder %v5549, 0.0
        %vm5638 = vcmp.gt.f32.partialorder %v5554, 0.0
        %vm5639 = vcmp.gt.f32.partialorder %v5557, 0.0
        %vm5640 = vcmp.gt.f32.partialorder %v5562, 0.0
        %vm5641 = vcmp.gt.f32.partialorder %v5565, 0.0
        %vm5642 = vcmp.gt.f32.partialorder %v5570, 0.0
        %vm5643 = vcmp.gt.f32.partialorder %v5573, 0.0
        %vm5644 = vcmp.gt.f32.partialorder %v5578, 0.0
        %vm5645 = vcmp.gt.f32.partialorder %v5581, 0.0
        %vm5646 = vcmp.gt.f32.partialorder %v5586, 0.0
        %vm5647 = vcmp.gt.f32.partialorder %v5589, 0.0
        %vm5648 = vcmp.gt.f32.partialorder %v5594, 0.0
        %vm5649 = vcmp.gt.f32.partialorder %v5597, 0.0
        %vm5650 = vcmp.gt.f32.partialorder %v5602, 0.0
        %vm5651 = vcmp.gt.f32.partialorder %v5605, 0.0
        %vm5652 = vcmp.gt.f32.partialorder %v5610, 0.0
        %vm5653 = vcmp.gt.f32.partialorder %v5613, 0.0
        %vm5654 = vcmp.gt.f32.partialorder %v5618, 0.0
        %vm5655 = vcmp.gt.f32.partialorder %v5621, 0.0
        %v5656 = vmul.f32 %v5498, 0.01
        %v5657 = vmul.f32 %v5501, 0.01
        %v5658 = vmul.f32 %v5506, 0.01
        %v5659 = vmul.f32 %v5509, 0.01
        %v5660 = vmul.f32 %v5514, 0.01
        %v5661 = vmul.f32 %v5517, 0.01
        %v5662 = vmul.f32 %v5522, 0.01
        %v5663 = vmul.f32 %v5525, 0.01
        %v5664 = vmul.f32 %v5530, 0.01
        %v5665 = vmul.f32 %v5533, 0.01
        %v5666 = vmul.f32 %v5538, 0.01
        %v5667 = vmul.f32 %v5541, 0.01
        %v5668 = vmul.f32 %v5546, 0.01
        %v5669 = vmul.f32 %v5549, 0.01
        %v5670 = vmul.f32 %v5554, 0.01
        %v5671 = vmul.f32 %v5557, 0.01
        %v5672 = vmul.f32 %v5562, 0.01
        %v5673 = vmul.f32 %v5565, 0.01
        %v5674 = vmul.f32 %v5570, 0.01
        %v5675 = vmul.f32 %v5573, 0.01
        %v5676 = vmul.f32 %v5578, 0.01
        %v5677 = vmul.f32 %v5581, 0.01
        %v5678 = vmul.f32 %v5586, 0.01
        %v5679 = vmul.f32 %v5589, 0.01
        %v5680 = vmul.f32 %v5594, 0.01
        %v5681 = vmul.f32 %v5597, 0.01
        %v5682 = vmul.f32 %v5602, 0.01
        %v5683 = vmul.f32 %v5605, 0.01
        %v5684 = vmul.f32 %v5610, 0.01
        %v5685 = vmul.f32 %v5613, 0.01
        %v5686 = vmul.f32 %v5618, 0.01
        %v5687 = vmul.f32 %v5621, 0.01
        %v5688 = vsel %vm5624, %v5498, %v5656
        %v5689 = vsel %vm5625, %v5501, %v5657
        %v5690 = vsel %vm5626, %v5506, %v5658
        %v5691 = vsel %vm5627, %v5509, %v5659
        %v5692 = vsel %vm5628, %v5514, %v5660
        %v5693 = vsel %vm5629, %v5517, %v5661
        %v5694 = vsel %vm5630, %v5522, %v5662
        %v5695 = vsel %vm5631, %v5525, %v5663
        %v5696 = vsel %vm5632, %v5530, %v5664
        %v5697 = vsel %vm5633, %v5533, %v5665
        %v5698 = vsel %vm5634, %v5538, %v5666
        %v5699 = vsel %vm5635, %v5541, %v5667
        %v5700 = vsel %vm5636, %v5546, %v5668
        %v5701 = vsel %vm5637, %v5549, %v5669
        %v5702 = vsel %vm5638, %v5554, %v5670
        %v5703 = vsel %vm5639, %v5557, %v5671
        %v5704 = vsel %vm5640, %v5562, %v5672
        %v5705 = vsel %vm5641, %v5565, %v5673
        %v5706 = vsel %vm5642, %v5570, %v5674
        %v5707 = vsel %vm5643, %v5573, %v5675
        %v5708 = vsel %vm5644, %v5578, %v5676
        %v5709 = vsel %vm5645, %v5581, %v5677
        %v5710 = vsel %vm5646, %v5586, %v5678
        %v5711 = vsel %vm5647, %v5589, %v5679
        %v5712 = vsel %vm5648, %v5594, %v5680
        %v5713 = vsel %vm5649, %v5597, %v5681
        %v5714 = vsel %vm5650, %v5602, %v5682
        %v5715 = vsel %vm5651, %v5605, %v5683
        %v5716 = vsel %vm5652, %v5610, %v5684
        %v5717 = vsel %vm5653, %v5613, %v5685
        %v5718 = vsel %vm5654, %v5618, %v5686
        %v5719 = vsel %vm5655, %v5621, %v5687
        %v5720 = vmax.f32 %v5688, %v5690
        %v5721 = vmax.f32 %v5689, %v5691
        %v5722 = vmax.f32 %v5692, %v5694
        %v5723 = vmax.f32 %v5693, %v5695
        %v5724 = vmax.f32 %v5696, %v5698
        %v5725 = vmax.f32 %v5697, %v5699
        %v5726 = vmax.f32 %v5700, %v5702
        %v5727 = vmax.f32 %v5701, %v5703
        %v5728 = vmax.f32 %v5704, %v5706
        %v5729 = vmax.f32 %v5705, %v5707
        %v5730 = vmax.f32 %v5708, %v5710
        %v5731 = vmax.f32 %v5709, %v5711
        %v5732 = vmax.f32 %v5712, %v5714
        %v5733 = vmax.f32 %v5713, %v5715
        %v5734 = vmax.f32 %v5716, %v5718
        %v5735 = vmax.f32 %v5717, %v5719
        %5736 = vst.msk [vmem:[#allocation5] sm:$0xff] %vm2903, %v5720
        %5737 = vst.msk [vmem:[#allocation5 + $0x8] sm:$0xff] %vm2903, %v5721
        %5738 = vst.msk [vmem:[#allocation5 + $0x10] sm:$0xff] %vm2903, %v5722
        %5739 = vst.msk [vmem:[#allocation5 + $0x18] sm:$0xff] %vm2903, %v5723
        %5740 = vst.msk [vmem:[#allocation5 + $0x20] sm:$0xff] %vm2903, %v5724
        %5741 = vst.msk [vmem:[#allocation5 + $0x28] sm:$0xff] %vm2903, %v5725
        %5742 = vst.msk [vmem:[#allocation5 + $0x30] sm:$0xff] %vm2903, %v5726
        %5743 = vst.msk [vmem:[#allocation5 + $0x38] sm:$0xff] %vm2903, %v5727
        %5744 = vst.msk [vmem:[#allocation5 + $0x40] sm:$0xff] %vm2903, %v5728
        %5745 = vst.msk [vmem:[#allocation5 + $0x48] sm:$0xff] %vm2903, %v5729
        %5746 = vst.msk [vmem:[#allocation5 + $0x50] sm:$0xff] %vm2903, %v5730
        %5747 = vst.msk [vmem:[#allocation5 + $0x58] sm:$0xff] %vm2903, %v5731
        %5748 = vst.msk [vmem:[#allocation5 + $0x60] sm:$0xff] %vm2903, %v5732
        %5749 = vst.msk [vmem:[#allocation5 + $0x68] sm:$0xff] %vm2903, %v5733
        %5750 = vst.msk [vmem:[#allocation5 + $0x70] sm:$0xff] %vm2903, %v5734
        %5751 = vst.msk [vmem:[#allocation5 + $0x78] sm:$0xff] %vm2903, %v5735
        %v5752 = vmax.f32 %v2651, %v2661
        %v5753 = vmax.f32 %v2655, %v2665
        %v5754 = vmax.f32 %v2671, %v2681
        %v5755 = vmax.f32 %v2675, %v2685
        %v5756 = vmax.f32 %v2691, %v2701
        %v5757 = vmax.f32 %v2695, %v2705
        %v5758 = vmax.f32 %v2711, %v2721
        %v5759 = vmax.f32 %v2715, %v2725
        %v5760 = vmax.f32 %v2731, %v2741
        %v5761 = vmax.f32 %v2735, %v2745
        %v5762 = vmax.f32 %v2751, %v2761
        %v5763 = vmax.f32 %v2755, %v2765
        %v5764 = vmax.f32 %v2771, %v2781
        %v5765 = vmax.f32 %v2775, %v2785
        %v5766 = vmax.f32 %v2791, %v2801
        %v5767 = vmax.f32 %v2795, %v2805
        %5768 = vst.msk [vmem:[#allocation6] sm:$0xff] %vm2903, %v5752
        %5769 = vst.msk [vmem:[#allocation6 + $0x8] sm:$0xff] %vm2903, %v5753
        %5770 = vst.msk [vmem:[#allocation6 + $0x10] sm:$0xff] %vm2903, %v5754
        %5771 = vst.msk [vmem:[#allocation6 + $0x18] sm:$0xff] %vm2903, %v5755
        %5772 = vst.msk [vmem:[#allocation6 + $0x20] sm:$0xff] %vm2903, %v5756
        %5773 = vst.msk [vmem:[#allocation6 + $0x28] sm:$0xff] %vm2903, %v5757
        %5774 = vst.msk [vmem:[#allocation6 + $0x30] sm:$0xff] %vm2903, %v5758
        %5775 = vst.msk [vmem:[#allocation6 + $0x38] sm:$0xff] %vm2903, %v5759
        %5776 = vst.msk [vmem:[#allocation6 + $0x40] sm:$0xff] %vm2903, %v5760
        %5777 = vst.msk [vmem:[#allocation6 + $0x48] sm:$0xff] %vm2903, %v5761
        %5778 = vst.msk [vmem:[#allocation6 + $0x50] sm:$0xff] %vm2903, %v5762
        %5779 = vst.msk [vmem:[#allocation6 + $0x58] sm:$0xff] %vm2903, %v5763
        %5780 = vst.msk [vmem:[#allocation6 + $0x60] sm:$0xff] %vm2903, %v5764
        %5781 = vst.msk [vmem:[#allocation6 + $0x68] sm:$0xff] %vm2903, %v5765
        %5782 = vst.msk [vmem:[#allocation6 + $0x70] sm:$0xff] %vm2903, %v5766
        %5783 = vst.msk [vmem:[#allocation6 + $0x78] sm:$0xff] %vm2903, %v5767
        %v5784 = vld [vmem:[#allocation5] sm:$0x1]
        %v5785 = vld [vmem:[#allocation5 + $0x10] sm:$0x1]
        %v5786 = vld [vmem:[#allocation5 + $0x20] sm:$0x1]
        %v5787 = vld [vmem:[#allocation5 + $0x30] sm:$0x1]
        %v5788 = vld [vmem:[#allocation5 + $0x40] sm:$0x1]
        %v5789 = vld [vmem:[#allocation5 + $0x50] sm:$0x1]
        %v5790 = vld [vmem:[#allocation5 + $0x60] sm:$0x1]
        %v5791 = vld [vmem:[#allocation5 + $0x70] sm:$0x1]
        %v5792 = vld [vmem:[#allocation5 + $0x1] sm:$0x1]
        %v5793 = vld [vmem:[#allocation5 + $0x11] sm:$0x1]
        %v5794 = vld [vmem:[#allocation5 + $0x21] sm:$0x1]
        %v5795 = vld [vmem:[#allocation5 + $0x31] sm:$0x1]
        %v5796 = vld [vmem:[#allocation5 + $0x41] sm:$0x1]
        %v5797 = vld [vmem:[#allocation5 + $0x51] sm:$0x1]
        %v5798 = vld [vmem:[#allocation5 + $0x61] sm:$0x1]
        %v5799 = vld [vmem:[#allocation5 + $0x71] sm:$0x1]
        %v5800 = vmax.f32 %v5784, %v5792
        %v5801 = vmax.f32 %v5785, %v5793
        %v5802 = vmax.f32 %v5786, %v5794
        %v5803 = vmax.f32 %v5787, %v5795
        %v5804 = vmax.f32 %v5788, %v5796
        %v5805 = vmax.f32 %v5789, %v5797
        %v5806 = vmax.f32 %v5790, %v5798
        %v5807 = vmax.f32 %v5791, %v5799
        %v5808 = vld [vmem:[#allocation6] sm:$0x1]
        %v5809 = vld [vmem:[#allocation6 + $0x10] sm:$0x1]
        %v5810 = vld [vmem:[#allocation6 + $0x20] sm:$0x1]
        %v5811 = vld [vmem:[#allocation6 + $0x30] sm:$0x1]
        %v5812 = vld [vmem:[#allocation6 + $0x40] sm:$0x1]
        %v5813 = vld [vmem:[#allocation6 + $0x50] sm:$0x1]
        %v5814 = vld [vmem:[#allocation6 + $0x60] sm:$0x1]
        %v5815 = vld [vmem:[#allocation6 + $0x70] sm:$0x1]
        %v5816 = vld [vmem:[#allocation6 + $0x1] sm:$0x1]
        %v5817 = vld [vmem:[#allocation6 + $0x11] sm:$0x1]
        %v5818 = vld [vmem:[#allocation6 + $0x21] sm:$0x1]
        %v5819 = vld [vmem:[#allocation6 + $0x31] sm:$0x1]
        %v5820 = vld [vmem:[#allocation6 + $0x41] sm:$0x1]
        %v5821 = vld [vmem:[#allocation6 + $0x51] sm:$0x1]
        %v5822 = vld [vmem:[#allocation6 + $0x61] sm:$0x1]
        %v5823 = vld [vmem:[#allocation6 + $0x71] sm:$0x1]
        %v5824 = vmax.f32 %v5808, %v5816
        %v5825 = vmax.f32 %v5809, %v5817
        %v5826 = vmax.f32 %v5810, %v5818
        %v5827 = vmax.f32 %v5811, %v5819
        %v5828 = vmax.f32 %v5812, %v5820
        %v5829 = vmax.f32 %v5813, %v5821
        %v5830 = vmax.f32 %v5814, %v5822
        %v5831 = vmax.f32 %v5815, %v5823
        %v5832 = vadd.f32 %v5800, %v5824
        %v5833 = vadd.f32 %v5801, %v5825
        %v5834 = vadd.f32 %v5802, %v5826
        %v5835 = vadd.f32 %v5803, %v5827
        %v5836 = vadd.f32 %v5804, %v5828
        %v5837 = vadd.f32 %v5805, %v5829
        %v5838 = vadd.f32 %v5806, %v5830
        %v5839 = vadd.f32 %v5807, %v5831
        %v5848 = vrot.slane %v5833, 7
        %vm5849 = vcmask 1041409
        %v5850 = vsel %vm5849, %v5848, %v5832
        %v5851 = vrot.slane %v5834, 6
        %vm5852 = vcmask 1042434
        %v5853 = vsel %vm5852, %v5851, %v5850
        %v5854 = vrot.slane %v5835, 5
        %vm5855 = vcmask 1043459
        %v5856 = vsel %vm5855, %v5854, %v5853
        %v5857 = vrot.slane %v5836, 4
        %vm5858 = vcmask 1044484
        %v5859 = vsel %vm5858, %v5857, %v5856
        %v5860 = vrot.slane %v5837, 3
        %vm5861 = vcmask 1045509
        %v5862 = vsel %vm5861, %v5860, %v5859
        %v5863 = vrot.slane %v5838, 2
        %vm5864 = vcmask 1046534
        %v5865 = vsel %vm5864, %v5863, %v5862
        %v5866 = vrot.slane %v5839, 1
        %vm5867 = vcmask 1047559
        %v5868 = vsel %vm5867, %v5866, %v5865
        %5870 = vst.msk [vmem:[%s163] sm:$0xff] %vm2903, %v5868
        %v5871 = vld [vmem:[#allocation5 + $0x2] sm:$0x1]
        %v5872 = vld [vmem:[#allocation5 + $0x12] sm:$0x1]
        %v5873 = vld [vmem:[#allocation5 + $0x22] sm:$0x1]
        %v5874 = vld [vmem:[#allocation5 + $0x32] sm:$0x1]
        %v5875 = vld [vmem:[#allocation5 + $0x42] sm:$0x1]
        %v5876 = vld [vmem:[#allocation5 + $0x52] sm:$0x1]
        %v5877 = vld [vmem:[#allocation5 + $0x62] sm:$0x1]
        %v5878 = vld [vmem:[#allocation5 + $0x72] sm:$0x1]
        %v5879 = vld [vmem:[#allocation5 + $0x3] sm:$0x1]
        %v5880 = vld [vmem:[#allocation5 + $0x13] sm:$0x1]
        %v5881 = vld [vmem:[#allocation5 + $0x23] sm:$0x1]
        %v5882 = vld [vmem:[#allocation5 + $0x33] sm:$0x1]
        %v5883 = vld [vmem:[#allocation5 + $0x43] sm:$0x1]
        %v5884 = vld [vmem:[#allocation5 + $0x53] sm:$0x1]
        %v5885 = vld [vmem:[#allocation5 + $0x63] sm:$0x1]
        %v5886 = vld [vmem:[#allocation5 + $0x73] sm:$0x1]
        %v5887 = vmax.f32 %v5871, %v5879
        %v5888 = vmax.f32 %v5872, %v5880
        %v5889 = vmax.f32 %v5873, %v5881
        %v5890 = vmax.f32 %v5874, %v5882
        %v5891 = vmax.f32 %v5875, %v5883
        %v5892 = vmax.f32 %v5876, %v5884
        %v5893 = vmax.f32 %v5877, %v5885
        %v5894 = vmax.f32 %v5878, %v5886
        %v5895 = vld [vmem:[#allocation6 + $0x2] sm:$0x1]
        %v5896 = vld [vmem:[#allocation6 + $0x12] sm:$0x1]
        %v5897 = vld [vmem:[#allocation6 + $0x22] sm:$0x1]
        %v5898 = vld [vmem:[#allocation6 + $0x32] sm:$0x1]
        %v5899 = vld [vmem:[#allocation6 + $0x42] sm:$0x1]
        %v5900 = vld [vmem:[#allocation6 + $0x52] sm:$0x1]
        %v5901 = vld [vmem:[#allocation6 + $0x62] sm:$0x1]
        %v5902 = vld [vmem:[#allocation6 + $0x72] sm:$0x1]
        %v5903 = vld [vmem:[#allocation6 + $0x3] sm:$0x1]
        %v5904 = vld [vmem:[#allocation6 + $0x13] sm:$0x1]
        %v5905 = vld [vmem:[#allocation6 + $0x23] sm:$0x1]
        %v5906 = vld [vmem:[#allocation6 + $0x33] sm:$0x1]
        %v5907 = vld [vmem:[#allocation6 + $0x43] sm:$0x1]
        %v5908 = vld [vmem:[#allocation6 + $0x53] sm:$0x1]
        %v5909 = vld [vmem:[#allocation6 + $0x63] sm:$0x1]
        %v5910 = vld [vmem:[#allocation6 + $0x73] sm:$0x1]
        %v5911 = vmax.f32 %v5895, %v5903
        %v5912 = vmax.f32 %v5896, %v5904
        %v5913 = vmax.f32 %v5897, %v5905
        %v5914 = vmax.f32 %v5898, %v5906
        %v5915 = vmax.f32 %v5899, %v5907
        %v5916 = vmax.f32 %v5900, %v5908
        %v5917 = vmax.f32 %v5901, %v5909
        %v5918 = vmax.f32 %v5902, %v5910
        %v5919 = vadd.f32 %v5887, %v5911
        %v5920 = vadd.f32 %v5888, %v5912
        %v5921 = vadd.f32 %v5889, %v5913
        %v5922 = vadd.f32 %v5890, %v5914
        %v5923 = vadd.f32 %v5891, %v5915
        %v5924 = vadd.f32 %v5892, %v5916
        %v5925 = vadd.f32 %v5893, %v5917
        %v5926 = vadd.f32 %v5894, %v5918
        %v5935 = vrot.slane %v5920, 7
        %v5936 = vsel %vm5849, %v5935, %v5919
        %v5937 = vrot.slane %v5921, 6
        %v5938 = vsel %vm5852, %v5937, %v5936
        %v5939 = vrot.slane %v5922, 5
        %v5940 = vsel %vm5855, %v5939, %v5938
        %v5941 = vrot.slane %v5923, 4
        %v5942 = vsel %vm5858, %v5941, %v5940
        %v5943 = vrot.slane %v5924, 3
        %v5944 = vsel %vm5861, %v5943, %v5942
        %v5945 = vrot.slane %v5925, 2
        %v5946 = vsel %vm5864, %v5945, %v5944
        %v5947 = vrot.slane %v5926, 1
        %v5948 = vsel %vm5867, %v5947, %v5946
        %5949 = vrot.lane.b32.xlu0 %v5948, 16
        %v5950 = vpop.permute.xlu0 %5949
        %vm5952 = vcmask 261248
        %5953 = vst.msk [vmem:[%s163] sm:$0xff] %vm5952, %v5950
        %v5954 = vld [vmem:[#allocation5 + $0x4] sm:$0x1]
        %v5955 = vld [vmem:[#allocation5 + $0x14] sm:$0x1]
        %v5956 = vld [vmem:[#allocation5 + $0x24] sm:$0x1]
        %v5957 = vld [vmem:[#allocation5 + $0x34] sm:$0x1]
        %v5958 = vld [vmem:[#allocation5 + $0x44] sm:$0x1]
        %v5959 = vld [vmem:[#allocation5 + $0x54] sm:$0x1]
        %v5960 = vld [vmem:[#allocation5 + $0x64] sm:$0x1]
        %v5961 = vld [vmem:[#allocation5 + $0x74] sm:$0x1]
        %v5962 = vld [vmem:[#allocation5 + $0x5] sm:$0x1]
        %v5963 = vld [vmem:[#allocation5 + $0x15] sm:$0x1]
        %v5964 = vld [vmem:[#allocation5 + $0x25] sm:$0x1]
        %v5965 = vld [vmem:[#allocation5 + $0x35] sm:$0x1]
        %v5966 = vld [vmem:[#allocation5 + $0x45] sm:$0x1]
        %v5967 = vld [vmem:[#allocation5 + $0x55] sm:$0x1]
        %v5968 = vld [vmem:[#allocation5 + $0x65] sm:$0x1]
        %v5969 = vld [vmem:[#allocation5 + $0x75] sm:$0x1]
        %v5970 = vmax.f32 %v5954, %v5962
        %v5971 = vmax.f32 %v5955, %v5963
        %v5972 = vmax.f32 %v5956, %v5964
        %v5973 = vmax.f32 %v5957, %v5965
        %v5974 = vmax.f32 %v5958, %v5966
        %v5975 = vmax.f32 %v5959, %v5967
        %v5976 = vmax.f32 %v5960, %v5968
        %v5977 = vmax.f32 %v5961, %v5969
        %v5978 = vld [vmem:[#allocation6 + $0x4] sm:$0x1]
        %v5979 = vld [vmem:[#allocation6 + $0x14] sm:$0x1]
        %v5980 = vld [vmem:[#allocation6 + $0x24] sm:$0x1]
        %v5981 = vld [vmem:[#allocation6 + $0x34] sm:$0x1]
        %v5982 = vld [vmem:[#allocation6 + $0x44] sm:$0x1]
        %v5983 = vld [vmem:[#allocation6 + $0x54] sm:$0x1]
        %v5984 = vld [vmem:[#allocation6 + $0x64] sm:$0x1]
        %v5985 = vld [vmem:[#allocation6 + $0x74] sm:$0x1]
        %v5986 = vld [vmem:[#allocation6 + $0x5] sm:$0x1]
        %v5987 = vld [vmem:[#allocation6 + $0x15] sm:$0x1]
        %v5988 = vld [vmem:[#allocation6 + $0x25] sm:$0x1]
        %v5989 = vld [vmem:[#allocation6 + $0x35] sm:$0x1]
        %v5990 = vld [vmem:[#allocation6 + $0x45] sm:$0x1]
        %v5991 = vld [vmem:[#allocation6 + $0x55] sm:$0x1]
        %v5992 = vld [vmem:[#allocation6 + $0x65] sm:$0x1]
        %v5993 = vld [vmem:[#allocation6 + $0x75] sm:$0x1]
        %v5994 = vmax.f32 %v5978, %v5986
        %v5995 = vmax.f32 %v5979, %v5987
        %v5996 = vmax.f32 %v5980, %v5988
        %v5997 = vmax.f32 %v5981, %v5989
        %v5998 = vmax.f32 %v5982, %v5990
        %v5999 = vmax.f32 %v5983, %v5991
        %v6000 = vmax.f32 %v5984, %v5992
        %v6001 = vmax.f32 %v5985, %v5993
        %v6002 = vadd.f32 %v5970, %v5994
        %v6003 = vadd.f32 %v5971, %v5995
        %v6004 = vadd.f32 %v5972, %v5996
        %v6005 = vadd.f32 %v5973, %v5997
        %v6006 = vadd.f32 %v5974, %v5998
        %v6007 = vadd.f32 %v5975, %v5999
        %v6008 = vadd.f32 %v5976, %v6000
        %v6009 = vadd.f32 %v5977, %v6001
        %v6018 = vrot.slane %v6003, 7
        %v6019 = vsel %vm5849, %v6018, %v6002
        %v6020 = vrot.slane %v6004, 6
        %v6021 = vsel %vm5852, %v6020, %v6019
        %v6022 = vrot.slane %v6005, 5
        %v6023 = vsel %vm5855, %v6022, %v6021
        %v6024 = vrot.slane %v6006, 4
        %v6025 = vsel %vm5858, %v6024, %v6023
        %v6026 = vrot.slane %v6007, 3
        %v6027 = vsel %vm5861, %v6026, %v6025
        %v6028 = vrot.slane %v6008, 2
        %v6029 = vsel %vm5864, %v6028, %v6027
        %v6030 = vrot.slane %v6009, 1
        %v6031 = vsel %vm5867, %v6030, %v6029
        %6032 = vrot.lane.b32.xlu0 %v6031, 32
        %v6033 = vpop.permute.xlu0 %6032
        %vm6035 = vcmask 392448
        %6036 = vst.msk [vmem:[%s163] sm:$0xff] %vm6035, %v6033
        %v6037 = vld [vmem:[#allocation5 + $0x6] sm:$0x1]
        %v6038 = vld [vmem:[#allocation5 + $0x16] sm:$0x1]
        %v6039 = vld [vmem:[#allocation5 + $0x26] sm:$0x1]
        %v6040 = vld [vmem:[#allocation5 + $0x36] sm:$0x1]
        %v6041 = vld [vmem:[#allocation5 + $0x46] sm:$0x1]
        %v6042 = vld [vmem:[#allocation5 + $0x56] sm:$0x1]
        %v6043 = vld [vmem:[#allocation5 + $0x66] sm:$0x1]
        %v6044 = vld [vmem:[#allocation5 + $0x76] sm:$0x1]
        %v6045 = vld [vmem:[#allocation5 + $0x7] sm:$0x1]
        %v6046 = vld [vmem:[#allocation5 + $0x17] sm:$0x1]
        %v6047 = vld [vmem:[#allocation5 + $0x27] sm:$0x1]
        %v6048 = vld [vmem:[#allocation5 + $0x37] sm:$0x1]
        %v6049 = vld [vmem:[#allocation5 + $0x47] sm:$0x1]
        %v6050 = vld [vmem:[#allocation5 + $0x57] sm:$0x1]
        %v6051 = vld [vmem:[#allocation5 + $0x67] sm:$0x1]
        %v6052 = vld [vmem:[#allocation5 + $0x77] sm:$0x1]
        %v6053 = vmax.f32 %v6037, %v6045
        %v6054 = vmax.f32 %v6038, %v6046
        %v6055 = vmax.f32 %v6039, %v6047
        %v6056 = vmax.f32 %v6040, %v6048
        %v6057 = vmax.f32 %v6041, %v6049
        %v6058 = vmax.f32 %v6042, %v6050
        %v6059 = vmax.f32 %v6043, %v6051
        %v6060 = vmax.f32 %v6044, %v6052
        %v6061 = vld [vmem:[#allocation6 + $0x6] sm:$0x1]
        %v6062 = vld [vmem:[#allocation6 + $0x16] sm:$0x1]
        %v6063 = vld [vmem:[#allocation6 + $0x26] sm:$0x1]
        %v6064 = vld [vmem:[#allocation6 + $0x36] sm:$0x1]
        %v6065 = vld [vmem:[#allocation6 + $0x46] sm:$0x1]
        %v6066 = vld [vmem:[#allocation6 + $0x56] sm:$0x1]
        %v6067 = vld [vmem:[#allocation6 + $0x66] sm:$0x1]
        %v6068 = vld [vmem:[#allocation6 + $0x76] sm:$0x1]
        %v6069 = vld [vmem:[#allocation6 + $0x7] sm:$0x1]
        %v6070 = vld [vmem:[#allocation6 + $0x17] sm:$0x1]
        %v6071 = vld [vmem:[#allocation6 + $0x27] sm:$0x1]
        %v6072 = vld [vmem:[#allocation6 + $0x37] sm:$0x1]
        %v6073 = vld [vmem:[#allocation6 + $0x47] sm:$0x1]
        %v6074 = vld [vmem:[#allocation6 + $0x57] sm:$0x1]
        %v6075 = vld [vmem:[#allocation6 + $0x67] sm:$0x1]
        %v6076 = vld [vmem:[#allocation6 + $0x77] sm:$0x1]
        %v6077 = vmax.f32 %v6061, %v6069
        %v6078 = vmax.f32 %v6062, %v6070
        %v6079 = vmax.f32 %v6063, %v6071
        %v6080 = vmax.f32 %v6064, %v6072
        %v6081 = vmax.f32 %v6065, %v6073
        %v6082 = vmax.f32 %v6066, %v6074
        %v6083 = vmax.f32 %v6067, %v6075
        %v6084 = vmax.f32 %v6068, %v6076
        %v6085 = vadd.f32 %v6053, %v6077
        %v6086 = vadd.f32 %v6054, %v6078
        %v6087 = vadd.f32 %v6055, %v6079
        %v6088 = vadd.f32 %v6056, %v6080
        %v6089 = vadd.f32 %v6057, %v6081
        %v6090 = vadd.f32 %v6058, %v6082
        %v6091 = vadd.f32 %v6059, %v6083
        %v6092 = vadd.f32 %v6060, %v6084
        %v6101 = vrot.slane %v6086, 7
        %v6102 = vsel %vm5849, %v6101, %v6085
        %v6103 = vrot.slane %v6087, 6
        %v6104 = vsel %vm5852, %v6103, %v6102
        %v6105 = vrot.slane %v6088, 5
        %v6106 = vsel %vm5855, %v6105, %v6104
        %v6107 = vrot.slane %v6089, 4
        %v6108 = vsel %vm5858, %v6107, %v6106
        %v6109 = vrot.slane %v6090, 3
        %v6110 = vsel %vm5861, %v6109, %v6108
        %v6111 = vrot.slane %v6091, 2
        %v6112 = vsel %vm5864, %v6111, %v6110
        %v6113 = vrot.slane %v6092, 1
        %v6114 = vsel %vm5867, %v6113, %v6112
        %6115 = vrot.lane.b32.xlu0 %v6114, 48
        %v6116 = vpop.permute.xlu0 %6115
        %vm6118 = vcmask 523648
        %6119 = vst.msk [vmem:[%s163] sm:$0xff] %vm6118, %v6116
        %v6120 = vld [vmem:[#allocation5 + $0x8] sm:$0x1]
        %v6121 = vld [vmem:[#allocation5 + $0x18] sm:$0x1]
        %v6122 = vld [vmem:[#allocation5 + $0x28] sm:$0x1]
        %v6123 = vld [vmem:[#allocation5 + $0x38] sm:$0x1]
        %v6124 = vld [vmem:[#allocation5 + $0x48] sm:$0x1]
        %v6125 = vld [vmem:[#allocation5 + $0x58] sm:$0x1]
        %v6126 = vld [vmem:[#allocation5 + $0x68] sm:$0x1]
        %v6127 = vld [vmem:[#allocation5 + $0x78] sm:$0x1]
        %v6128 = vld [vmem:[#allocation5 + $0x9] sm:$0x1]
        %v6129 = vld [vmem:[#allocation5 + $0x19] sm:$0x1]
        %v6130 = vld [vmem:[#allocation5 + $0x29] sm:$0x1]
        %v6131 = vld [vmem:[#allocation5 + $0x39] sm:$0x1]
        %v6132 = vld [vmem:[#allocation5 + $0x49] sm:$0x1]
        %v6133 = vld [vmem:[#allocation5 + $0x59] sm:$0x1]
        %v6134 = vld [vmem:[#allocation5 + $0x69] sm:$0x1]
        %v6135 = vld [vmem:[#allocation5 + $0x79] sm:$0x1]
        %v6136 = vmax.f32 %v6120, %v6128
        %v6137 = vmax.f32 %v6121, %v6129
        %v6138 = vmax.f32 %v6122, %v6130
        %v6139 = vmax.f32 %v6123, %v6131
        %v6140 = vmax.f32 %v6124, %v6132
        %v6141 = vmax.f32 %v6125, %v6133
        %v6142 = vmax.f32 %v6126, %v6134
        %v6143 = vmax.f32 %v6127, %v6135
        %v6144 = vld [vmem:[#allocation6 + $0x8] sm:$0x1]
        %v6145 = vld [vmem:[#allocation6 + $0x18] sm:$0x1]
        %v6146 = vld [vmem:[#allocation6 + $0x28] sm:$0x1]
        %v6147 = vld [vmem:[#allocation6 + $0x38] sm:$0x1]
        %v6148 = vld [vmem:[#allocation6 + $0x48] sm:$0x1]
        %v6149 = vld [vmem:[#allocation6 + $0x58] sm:$0x1]
        %v6150 = vld [vmem:[#allocation6 + $0x68] sm:$0x1]
        %v6151 = vld [vmem:[#allocation6 + $0x78] sm:$0x1]
        %v6152 = vld [vmem:[#allocation6 + $0x9] sm:$0x1]
        %v6153 = vld [vmem:[#allocation6 + $0x19] sm:$0x1]
        %v6154 = vld [vmem:[#allocation6 + $0x29] sm:$0x1]
        %v6155 = vld [vmem:[#allocation6 + $0x39] sm:$0x1]
        %v6156 = vld [vmem:[#allocation6 + $0x49] sm:$0x1]
        %v6157 = vld [vmem:[#allocation6 + $0x59] sm:$0x1]
        %v6158 = vld [vmem:[#allocation6 + $0x69] sm:$0x1]
        %v6159 = vld [vmem:[#allocation6 + $0x79] sm:$0x1]
        %v6160 = vmax.f32 %v6144, %v6152
        %v6161 = vmax.f32 %v6145, %v6153
        %v6162 = vmax.f32 %v6146, %v6154
        %v6163 = vmax.f32 %v6147, %v6155
        %v6164 = vmax.f32 %v6148, %v6156
        %v6165 = vmax.f32 %v6149, %v6157
        %v6166 = vmax.f32 %v6150, %v6158
        %v6167 = vmax.f32 %v6151, %v6159
        %v6168 = vadd.f32 %v6136, %v6160
        %v6169 = vadd.f32 %v6137, %v6161
        %v6170 = vadd.f32 %v6138, %v6162
        %v6171 = vadd.f32 %v6139, %v6163
        %v6172 = vadd.f32 %v6140, %v6164
        %v6173 = vadd.f32 %v6141, %v6165
        %v6174 = vadd.f32 %v6142, %v6166
        %v6175 = vadd.f32 %v6143, %v6167
        %v6184 = vrot.slane %v6169, 7
        %v6185 = vsel %vm5849, %v6184, %v6168
        %v6186 = vrot.slane %v6170, 6
        %v6187 = vsel %vm5852, %v6186, %v6185
        %v6188 = vrot.slane %v6171, 5
        %v6189 = vsel %vm5855, %v6188, %v6187
        %v6190 = vrot.slane %v6172, 4
        %v6191 = vsel %vm5858, %v6190, %v6189
        %v6192 = vrot.slane %v6173, 3
        %v6193 = vsel %vm5861, %v6192, %v6191
        %v6194 = vrot.slane %v6174, 2
        %v6195 = vsel %vm5864, %v6194, %v6193
        %v6196 = vrot.slane %v6175, 1
        %v6197 = vsel %vm5867, %v6196, %v6195
        %6198 = vrot.lane.b32.xlu0 %v6197, 64
        %v6199 = vpop.permute.xlu0 %6198
        %vm6201 = vcmask 654848
        %6202 = vst.msk [vmem:[%s163] sm:$0xff] %vm6201, %v6199
        %v6203 = vld [vmem:[#allocation5 + $0xa] sm:$0x1]
        %v6204 = vld [vmem:[#allocation5 + $0x1a] sm:$0x1]
        %v6205 = vld [vmem:[#allocation5 + $0x2a] sm:$0x1]
        %v6206 = vld [vmem:[#allocation5 + $0x3a] sm:$0x1]
        %v6207 = vld [vmem:[#allocation5 + $0x4a] sm:$0x1]
        %v6208 = vld [vmem:[#allocation5 + $0x5a] sm:$0x1]
        %v6209 = vld [vmem:[#allocation5 + $0x6a] sm:$0x1]
        %v6210 = vld [vmem:[#allocation5 + $0x7a] sm:$0x1]
        %v6211 = vld [vmem:[#allocation5 + $0xb] sm:$0x1]
        %v6212 = vld [vmem:[#allocation5 + $0x1b] sm:$0x1]
        %v6213 = vld [vmem:[#allocation5 + $0x2b] sm:$0x1]
        %v6214 = vld [vmem:[#allocation5 + $0x3b] sm:$0x1]
        %v6215 = vld [vmem:[#allocation5 + $0x4b] sm:$0x1]
        %v6216 = vld [vmem:[#allocation5 + $0x5b] sm:$0x1]
        %v6217 = vld [vmem:[#allocation5 + $0x6b] sm:$0x1]
        %v6218 = vld [vmem:[#allocation5 + $0x7b] sm:$0x1]
        %v6219 = vmax.f32 %v6203, %v6211
        %v6220 = vmax.f32 %v6204, %v6212
        %v6221 = vmax.f32 %v6205, %v6213
        %v6222 = vmax.f32 %v6206, %v6214
        %v6223 = vmax.f32 %v6207, %v6215
        %v6224 = vmax.f32 %v6208, %v6216
        %v6225 = vmax.f32 %v6209, %v6217
        %v6226 = vmax.f32 %v6210, %v6218
        %v6227 = vld [vmem:[#allocation6 + $0xa] sm:$0x1]
        %v6228 = vld [vmem:[#allocation6 + $0x1a] sm:$0x1]
        %v6229 = vld [vmem:[#allocation6 + $0x2a] sm:$0x1]
        %v6230 = vld [vmem:[#allocation6 + $0x3a] sm:$0x1]
        %v6231 = vld [vmem:[#allocation6 + $0x4a] sm:$0x1]
        %v6232 = vld [vmem:[#allocation6 + $0x5a] sm:$0x1]
        %v6233 = vld [vmem:[#allocation6 + $0x6a] sm:$0x1]
        %v6234 = vld [vmem:[#allocation6 + $0x7a] sm:$0x1]
        %v6235 = vld [vmem:[#allocation6 + $0xb] sm:$0x1]
        %v6236 = vld [vmem:[#allocation6 + $0x1b] sm:$0x1]
        %v6237 = vld [vmem:[#allocation6 + $0x2b] sm:$0x1]
        %v6238 = vld [vmem:[#allocation6 + $0x3b] sm:$0x1]
        %v6239 = vld [vmem:[#allocation6 + $0x4b] sm:$0x1]
        %v6240 = vld [vmem:[#allocation6 + $0x5b] sm:$0x1]
        %v6241 = vld [vmem:[#allocation6 + $0x6b] sm:$0x1]
        %v6242 = vld [vmem:[#allocation6 + $0x7b] sm:$0x1]
        %v6243 = vmax.f32 %v6227, %v6235
        %v6244 = vmax.f32 %v6228, %v6236
        %v6245 = vmax.f32 %v6229, %v6237
        %v6246 = vmax.f32 %v6230, %v6238
        %v6247 = vmax.f32 %v6231, %v6239
        %v6248 = vmax.f32 %v6232, %v6240
        %v6249 = vmax.f32 %v6233, %v6241
        %v6250 = vmax.f32 %v6234, %v6242
        %v6251 = vadd.f32 %v6219, %v6243
        %v6252 = vadd.f32 %v6220, %v6244
        %v6253 = vadd.f32 %v6221, %v6245
        %v6254 = vadd.f32 %v6222, %v6246
        %v6255 = vadd.f32 %v6223, %v6247
        %v6256 = vadd.f32 %v6224, %v6248
        %v6257 = vadd.f32 %v6225, %v6249
        %v6258 = vadd.f32 %v6226, %v6250
        %v6267 = vrot.slane %v6252, 7
        %v6268 = vsel %vm5849, %v6267, %v6251
        %v6269 = vrot.slane %v6253, 6
        %v6270 = vsel %vm5852, %v6269, %v6268
        %v6271 = vrot.slane %v6254, 5
        %v6272 = vsel %vm5855, %v6271, %v6270
        %v6273 = vrot.slane %v6255, 4
        %v6274 = vsel %vm5858, %v6273, %v6272
        %v6275 = vrot.slane %v6256, 3
        %v6276 = vsel %vm5861, %v6275, %v6274
        %v6277 = vrot.slane %v6257, 2
        %v6278 = vsel %vm5864, %v6277, %v6276
        %v6279 = vrot.slane %v6258, 1
        %v6280 = vsel %vm5867, %v6279, %v6278
        %6281 = vrot.lane.b32.xlu0 %v6280, 80
        %v6282 = vpop.permute.xlu0 %6281
        %vm6284 = vcmask 786048
        %6285 = vst.msk [vmem:[%s163] sm:$0xff] %vm6284, %v6282
        %v6286 = vld [vmem:[#allocation5 + $0xc] sm:$0x1]
        %v6287 = vld [vmem:[#allocation5 + $0x1c] sm:$0x1]
        %v6288 = vld [vmem:[#allocation5 + $0x2c] sm:$0x1]
        %v6289 = vld [vmem:[#allocation5 + $0x3c] sm:$0x1]
        %v6290 = vld [vmem:[#allocation5 + $0x4c] sm:$0x1]
        %v6291 = vld [vmem:[#allocation5 + $0x5c] sm:$0x1]
        %v6292 = vld [vmem:[#allocation5 + $0x6c] sm:$0x1]
        %v6293 = vld [vmem:[#allocation5 + $0x7c] sm:$0x1]
        %v6294 = vld [vmem:[#allocation5 + $0xd] sm:$0x1]
        %v6295 = vld [vmem:[#allocation5 + $0x1d] sm:$0x1]
        %v6296 = vld [vmem:[#allocation5 + $0x2d] sm:$0x1]
        %v6297 = vld [vmem:[#allocation5 + $0x3d] sm:$0x1]
        %v6298 = vld [vmem:[#allocation5 + $0x4d] sm:$0x1]
        %v6299 = vld [vmem:[#allocation5 + $0x5d] sm:$0x1]
        %v6300 = vld [vmem:[#allocation5 + $0x6d] sm:$0x1]
        %v6301 = vld [vmem:[#allocation5 + $0x7d] sm:$0x1]
        %v6302 = vmax.f32 %v6286, %v6294
        %v6303 = vmax.f32 %v6287, %v6295
        %v6304 = vmax.f32 %v6288, %v6296
        %v6305 = vmax.f32 %v6289, %v6297
        %v6306 = vmax.f32 %v6290, %v6298
        %v6307 = vmax.f32 %v6291, %v6299
        %v6308 = vmax.f32 %v6292, %v6300
        %v6309 = vmax.f32 %v6293, %v6301
        %v6310 = vld [vmem:[#allocation6 + $0xc] sm:$0x1]
        %v6311 = vld [vmem:[#allocation6 + $0x1c] sm:$0x1]
        %v6312 = vld [vmem:[#allocation6 + $0x2c] sm:$0x1]
        %v6313 = vld [vmem:[#allocation6 + $0x3c] sm:$0x1]
        %v6314 = vld [vmem:[#allocation6 + $0x4c] sm:$0x1]
        %v6315 = vld [vmem:[#allocation6 + $0x5c] sm:$0x1]
        %v6316 = vld [vmem:[#allocation6 + $0x6c] sm:$0x1]
        %v6317 = vld [vmem:[#allocation6 + $0x7c] sm:$0x1]
        %v6318 = vld [vmem:[#allocation6 + $0xd] sm:$0x1]
        %v6319 = vld [vmem:[#allocation6 + $0x1d] sm:$0x1]
        %v6320 = vld [vmem:[#allocation6 + $0x2d] sm:$0x1]
        %v6321 = vld [vmem:[#allocation6 + $0x3d] sm:$0x1]
        %v6322 = vld [vmem:[#allocation6 + $0x4d] sm:$0x1]
        %v6323 = vld [vmem:[#allocation6 + $0x5d] sm:$0x1]
        %v6324 = vld [vmem:[#allocation6 + $0x6d] sm:$0x1]
        %v6325 = vld [vmem:[#allocation6 + $0x7d] sm:$0x1]
        %v6326 = vmax.f32 %v6310, %v6318
        %v6327 = vmax.f32 %v6311, %v6319
        %v6328 = vmax.f32 %v6312, %v6320
        %v6329 = vmax.f32 %v6313, %v6321
        %v6330 = vmax.f32 %v6314, %v6322
        %v6331 = vmax.f32 %v6315, %v6323
        %v6332 = vmax.f32 %v6316, %v6324
        %v6333 = vmax.f32 %v6317, %v6325
        %v6334 = vadd.f32 %v6302, %v6326
        %v6335 = vadd.f32 %v6303, %v6327
        %v6336 = vadd.f32 %v6304, %v6328
        %v6337 = vadd.f32 %v6305, %v6329
        %v6338 = vadd.f32 %v6306, %v6330
        %v6339 = vadd.f32 %v6307, %v6331
        %v6340 = vadd.f32 %v6308, %v6332
        %v6341 = vadd.f32 %v6309, %v6333
        %v6350 = vrot.slane %v6335, 7
        %v6351 = vsel %vm5849, %v6350, %v6334
        %v6352 = vrot.slane %v6336, 6
        %v6353 = vsel %vm5852, %v6352, %v6351
        %v6354 = vrot.slane %v6337, 5
        %v6355 = vsel %vm5855, %v6354, %v6353
        %v6356 = vrot.slane %v6338, 4
        %v6357 = vsel %vm5858, %v6356, %v6355
        %v6358 = vrot.slane %v6339, 3
        %v6359 = vsel %vm5861, %v6358, %v6357
        %v6360 = vrot.slane %v6340, 2
        %v6361 = vsel %vm5864, %v6360, %v6359
        %v6362 = vrot.slane %v6341, 1
        %v6363 = vsel %vm5867, %v6362, %v6361
        %6364 = vrot.lane.b32.xlu0 %v6363, 96
        %v6365 = vpop.permute.xlu0 %6364
        %vm6367 = vcmask 917248
        %6368 = vst.msk [vmem:[%s163] sm:$0xff] %vm6367, %v6365
        %v6369 = vld [vmem:[#allocation5 + $0xe] sm:$0x1]
        %v6370 = vld [vmem:[#allocation5 + $0x1e] sm:$0x1]
        %v6371 = vld [vmem:[#allocation5 + $0x2e] sm:$0x1]
        %v6372 = vld [vmem:[#allocation5 + $0x3e] sm:$0x1]
        %v6373 = vld [vmem:[#allocation5 + $0x4e] sm:$0x1]
        %v6374 = vld [vmem:[#allocation5 + $0x5e] sm:$0x1]
        %v6375 = vld [vmem:[#allocation5 + $0x6e] sm:$0x1]
        %v6376 = vld [vmem:[#allocation5 + $0x7e] sm:$0x1]
        %v6377 = vld [vmem:[#allocation5 + $0xf] sm:$0x1]
        %v6378 = vld [vmem:[#allocation5 + $0x1f] sm:$0x1]
        %v6379 = vld [vmem:[#allocation5 + $0x2f] sm:$0x1]
        %v6380 = vld [vmem:[#allocation5 + $0x3f] sm:$0x1]
        %v6381 = vld [vmem:[#allocation5 + $0x4f] sm:$0x1]
        %v6382 = vld [vmem:[#allocation5 + $0x5f] sm:$0x1]
        %v6383 = vld [vmem:[#allocation5 + $0x6f] sm:$0x1]
        %v6384 = vld [vmem:[#allocation5 + $0x7f] sm:$0x1]
        %v6385 = vmax.f32 %v6369, %v6377
        %v6386 = vmax.f32 %v6370, %v6378
        %v6387 = vmax.f32 %v6371, %v6379
        %v6388 = vmax.f32 %v6372, %v6380
        %v6389 = vmax.f32 %v6373, %v6381
        %v6390 = vmax.f32 %v6374, %v6382
        %v6391 = vmax.f32 %v6375, %v6383
        %v6392 = vmax.f32 %v6376, %v6384
        %v6393 = vld [vmem:[#allocation6 + $0xe] sm:$0x1]
        %v6394 = vld [vmem:[#allocation6 + $0x1e] sm:$0x1]
        %v6395 = vld [vmem:[#allocation6 + $0x2e] sm:$0x1]
        %v6396 = vld [vmem:[#allocation6 + $0x3e] sm:$0x1]
        %v6397 = vld [vmem:[#allocation6 + $0x4e] sm:$0x1]
        %v6398 = vld [vmem:[#allocation6 + $0x5e] sm:$0x1]
        %v6399 = vld [vmem:[#allocation6 + $0x6e] sm:$0x1]
        %v6400 = vld [vmem:[#allocation6 + $0x7e] sm:$0x1]
        %v6401 = vld [vmem:[#allocation6 + $0xf] sm:$0x1]
        %v6402 = vld [vmem:[#allocation6 + $0x1f] sm:$0x1]
        %v6403 = vld [vmem:[#allocation6 + $0x2f] sm:$0x1]
        %v6404 = vld [vmem:[#allocation6 + $0x3f] sm:$0x1]
        %v6405 = vld [vmem:[#allocation6 + $0x4f] sm:$0x1]
        %v6406 = vld [vmem:[#allocation6 + $0x5f] sm:$0x1]
        %v6407 = vld [vmem:[#allocation6 + $0x6f] sm:$0x1]
        %v6408 = vld [vmem:[#allocation6 + $0x7f] sm:$0x1]
        %v6409 = vmax.f32 %v6393, %v6401
        %v6410 = vmax.f32 %v6394, %v6402
        %v6411 = vmax.f32 %v6395, %v6403
        %v6412 = vmax.f32 %v6396, %v6404
        %v6413 = vmax.f32 %v6397, %v6405
        %v6414 = vmax.f32 %v6398, %v6406
        %v6415 = vmax.f32 %v6399, %v6407
        %v6416 = vmax.f32 %v6400, %v6408
        %v6417 = vadd.f32 %v6385, %v6409
        %v6418 = vadd.f32 %v6386, %v6410
        %v6419 = vadd.f32 %v6387, %v6411
        %v6420 = vadd.f32 %v6388, %v6412
        %v6421 = vadd.f32 %v6389, %v6413
        %v6422 = vadd.f32 %v6390, %v6414
        %v6423 = vadd.f32 %v6391, %v6415
        %v6424 = vadd.f32 %v6392, %v6416
        %v6433 = vrot.slane %v6418, 7
        %v6434 = vsel %vm5849, %v6433, %v6417
        %v6435 = vrot.slane %v6419, 6
        %v6436 = vsel %vm5852, %v6435, %v6434
        %v6437 = vrot.slane %v6420, 5
        %v6438 = vsel %vm5855, %v6437, %v6436
        %v6439 = vrot.slane %v6421, 4
        %v6440 = vsel %vm5858, %v6439, %v6438
        %v6441 = vrot.slane %v6422, 3
        %v6442 = vsel %vm5861, %v6441, %v6440
        %v6443 = vrot.slane %v6423, 2
        %v6444 = vsel %vm5864, %v6443, %v6442
        %v6445 = vrot.slane %v6424, 1
        %v6446 = vsel %vm5867, %v6445, %v6444
        %6447 = vrot.lane.b32.xlu0 %v6446, 112
        %v6448 = vpop.permute.xlu0 %6447
        %vm6450 = vcmask 1048448
        %6451 = vst.msk [vmem:[%s163] sm:$0xff] %vm6450, %v6448
        %s6452 = sand.u32 %s93, 1
        %s6453 = scalar_lea.sflag [#allocation8], %s6452
        %s6454 = sand.u32 %s93, 1
        %s6455 = smul.addr %s6454, 8
        %s6456 = scalar_lea.vmem [#allocation7], %s6455
        // Predicated region
        $region33: #{tpu_custom_call.1} parent=31 // pred_check
          %p6457 = pneg %p103
        $region34: #{tpu_custom_call.1} parent=31 // pred_check_branch
          %6459 = sbr.rel (%p6457) target = $region36
        $region35: #{tpu_custom_call.1} parent=31 // pred_region
          %s6461 = ssub.s32 128, 128
          %6462 = vsyncadd %s6453, %s6461
          %s6463 = smul.addr %s17, 128
          %s6464 = scalar_lea.hbm %s3, %s6463
          %s6466 = sshll.u32 %s6456, 4
          %s6467 = int_to_ptr.vmem [resolvable:$true] %s6466
          %6469 = dma.vmem_to_hbm [thread:$0]  %s6467, 128, %s6464, %s6453
        $region36: #{tpu_custom_call.1} parent=31 // pred_fallthru
          _
      $region32: #{tpu_custom_call.1} parent=5 // pred_fallthru
        _
      %p6470 = scmp.le.s32.totalorder 2, %s12
      // Predicated region
      $region37: #{tpu_custom_call.1} parent=5 // pred_check
        %p6471 = pneg %p6470
      $region38: #{tpu_custom_call.1} parent=5 // pred_check_branch
        %6473 = sbr.rel (%p6471) target = $region40
      $region39: #{tpu_custom_call.1} parent=5 // pred_region
        %s6474 = ssub.s32 %s12, 2
        // Predicated region
        $region41: #{tpu_custom_call.1} parent=39 // pred_check
          %p6475 = pneg %p109
        $region42: #{tpu_custom_call.1} parent=39 // pred_check_branch
          %6477 = sbr.rel (%p6475) target = $region44
        $region43: #{tpu_custom_call.1} parent=39 // pred_region
          %s6478 = sand.u32 %s94, 1
          %s6479 = scalar_lea.sflag [#allocation8], %s6478
          %s6480 = sand.u32 %s94, 1
          %s6481 = smul.addr %s6480, 8
          %s6482 = scalar_lea.vmem [#allocation7], %s6481
          %6483 = dma.done %s6479, 128
        $region44: #{tpu_custom_call.1} parent=39 // pred_fallthru
          _
      $region40: #{tpu_custom_call.1} parent=5 // pred_fallthru
        _
    $region6: #{tpu_custom_call.1} parent=1 // loop_footer
      %s16 = sadd.s32 1, %s12
    $region7: #{tpu_custom_call.1} parent=1 // loop_footer_branch
      %11 = sbr.rel target = $region3
    $region8: #{tpu_custom_call.1} parent=1 // loop_exit
      _
    %6484 = vsyncpa [#allocation8], 1
    %s6485 = scalar_lea.sflag [#allocation8], 1
    %6486 = vsyncpa %s6485, 1

</llo_original>
